<compile_context>
chip_gen: v7x
topology: tpu7x:2x2x1
jax: 0.10.0
libtpu: 0.0.40
codegen_flags: <defaults>
</compile_context>

<pallas_src>
import jax
import jax.numpy as jnp
import numpy as np
from jax.experimental import pallas as pl
from jax.experimental.pallas import tpu as pltpu

# ---- model hyper-params (small, consistent with the module's __init__) -------
PTS_CH = 3
VIEW_CH = 3
DEPTH = 8          # D
WIDTH = 32         # W  (hidden; module default is 256 — kept small per test spec)
SKIPS = (4,)       # skip connection after layer index 4


# ------------------------------------------------------------------------------
# Kernel
# ------------------------------------------------------------------------------
def nerf_kernel(x_ref, *refs):
    """refs = [prepared params..., out_ref] (see prepare_kernel_params order)."""
    out_ref = refs[-1]
    it = iter(refs[:-1])

    x = x_ref[...]                                   # (tm, 6) f32
    pts_x = x[:, :PTS_CH]                            # (tm, 3) f32
    view_x = x[:, PTS_CH:PTS_CH + VIEW_CH]           # (tm, 3) f32

    # ---- layer 0 (K=3): VPU broadcast FMAs, f32 (frees one MXU push per step) --
    w0 = next(it)[...]                               # (3, W) f32
    b0 = next(it)[...]                               # (1, W) f32
    h = (b0
         + pts_x[:, 0:1] * w0[0:1, :]
         + pts_x[:, 1:2] * w0[1:2, :]
         + pts_x[:, 2:3] * w0[2:3, :])
    h = jnp.maximum(h, 0.0)

    # ---- layers 1..D-1 (skip layer uses split weights: MXU 32-wide + VPU 3-wide)
    for i in range(1, DEPTH):
        if (i - 1) in SKIPS:
            w_p = next(it)[...]                      # (3, W)  f32  (pts_x part)
            w_h = next(it)[...]                      # (W, W)  bf16 (h part)
            b = next(it)[...]                        # (1, W)  f32
            acc = jnp.dot(h.astype(jnp.bfloat16), w_h,
                          preferred_element_type=jnp.float32)
            acc = (acc
                   + pts_x[:, 0:1] * w_p[0:1, :]
                   + pts_x[:, 1:2] * w_p[1:2, :]
                   + pts_x[:, 2:3] * w_p[2:3, :])
            h = jnp.maximum(acc + b, 0.0)
        else:
            w = next(it)[...]                        # (W, W)  bf16
            b = next(it)[...]                        # (1, W)  f32
            h = jnp.maximum(
                jnp.dot(h.astype(jnp.bfloat16), w,
                        preferred_element_type=jnp.float32) + b, 0.0)

    # ---- fused feature + alpha head: one (W, W+1) matmul --------------------
    w_fa = next(it)[...]                             # (W, W+1) bf16
    b_fa = next(it)[...]                             # (1, W+1) f32
    y = jnp.dot(h.astype(jnp.bfloat16), w_fa,
                preferred_element_type=jnp.float32) + b_fa
    feat = y[:, :WIDTH]                              # feature(h)
    alpha = jnp.maximum(y[:, WIDTH:WIDTH + 1], 0.0)  # relu(out_alpha(h))

    # ---- view head: split weight (MXU 32-wide part + VPU 3-wide view part) ----
    w_vh = next(it)[...]                             # (W, W//2)  bf16
    w_vv = next(it)[...]                             # (3, W//2)  f32
    b_v = next(it)[...]                              # (1, W//2)  f32
    hv = jnp.dot(feat.astype(jnp.bfloat16), w_vh,
                 preferred_element_type=jnp.float32)
    hv = (hv
          + view_x[:, 0:1] * w_vv[0:1, :]
          + view_x[:, 1:2] * w_vv[1:2, :]
          + view_x[:, 2:3] * w_vv[2:3, :])
    hv = jnp.maximum(hv + b_v, 0.0)

    # ---- rgb head ------------------------------------------------------------
    w_rgb = next(it)[...]                            # (W//2, 3) bf16
    b_rgb = next(it)[...]                            # (1, 3)    f32
    rgb = jnp.dot(hv.astype(jnp.bfloat16), w_rgb,
                  preferred_element_type=jnp.float32) + b_rgb
    rgb = jax.nn.sigmoid(rgb)

    # single dense store of the concatenated result
    out_ref[...] = jnp.concatenate([rgb, alpha], axis=-1).astype(out_ref.dtype)


# ------------------------------------------------------------------------------
# Wrapper-side weight preparation (done once, not per grid step)
# ------------------------------------------------------------------------------
def prepare_kernel_params(params):
    """Split / fuse / cast raw (in,out)-layout params for the kernel."""
    it = iter(params)
    pts = [(next(it), next(it)) for _ in range(DEPTH)]
    w_feat, b_feat = next(it), next(it)
    w_alpha, b_alpha = next(it), next(it)
    w_view, b_view = next(it), next(it)
    w_rgb, b_rgb = next(it), next(it)

    prepared = []
    # layer 0: VPU path, keep f32
    prepared += [pts[0][0].astype(jnp.float32), pts[0][1].astype(jnp.float32)]
    for i in range(1, DEPTH):
        w, b = pts[i]
        if (i - 1) in SKIPS:
            # concat order in torch is [pts_x, h] -> rows 0:3 are pts_x, 3: are h
            prepared += [w[:PTS_CH, :].astype(jnp.float32),    # VPU part (f32)
                         w[PTS_CH:, :].astype(jnp.bfloat16),   # MXU part (bf16)
                         b.astype(jnp.float32)]
        else:
            prepared += [w.astype(jnp.bfloat16), b.astype(jnp.float32)]
    # fused feature + alpha head
    prepared += [jnp.concatenate([w_feat, w_alpha], axis=1).astype(jnp.bfloat16),
                 jnp.concatenate([b_feat, b_alpha], axis=1).astype(jnp.float32)]
    # split view head: concat order in torch is [h, view_x]
    prepared += [w_view[:WIDTH, :].astype(jnp.bfloat16),
                 w_view[WIDTH:, :].astype(jnp.float32),
                 b_view.astype(jnp.float32)]
    # rgb head
    prepared += [w_rgb.astype(jnp.bfloat16), b_rgb.astype(jnp.float32)]
    return prepared


def nerf_forward(x, params, *, tm=512):
    """x: (N, PTS_CH + VIEW_CH); params: flat list of (in,out) weights / (1,out) biases.

    tm: batch tile (rows per grid step).  512 amortizes per-step overhead and MXU
    weight push/drain; raise to 1024-2048 for very large N (VMEM stays far below
    even v7x's 64 MiB), but keep N // tm >= 2 so both v7x TensorCores get work.
    """
    N, C = x.shape
    assert C == PTS_CH + VIEW_CH
    assert N % tm == 0, f"N={N} must be divisible by tm={tm}"

    prepared = prepare_kernel_params(params)

    # x / out tiled along rows; every parameter is a full (untiled) VMEM block.
    x_spec = pl.BlockSpec((tm, C), lambda i: (i, 0))
    param_specs = [pl.BlockSpec(p.shape, lambda i: (0, 0)) for p in prepared]
    out_spec = pl.BlockSpec((tm, 4), lambda i: (i, 0))

    return pl.pallas_call(
        nerf_kernel,
        out_shape=jax.ShapeDtypeStruct((N, 4), jnp.float32),
        grid_spec=pltpu.PrefetchScalarGridSpec(
            num_scalar_prefetch=0,
            grid=(N // tm,),
            in_specs=[x_spec] + param_specs,
            out_specs=out_spec,
        ),
        compiler_params=pltpu.CompilerParams(
            dimension_semantics=("parallel",)),
    )(x, *prepared)


# ---- deterministic parameter construction (synthetic, no checkpoint) ---------
def make_params(key):
    def linear(key, fan_in, fan_out):
        kw, kb = jax.random.split(key)
        # torch default init: U(-1/sqrt(fan_in), 1/sqrt(fan_in)); store W as (in, out)
        bound = 1.0 / np.sqrt(fan_in)
        w = jax.random.uniform(kw, (fan_in, fan_out), jnp.float32, -bound, bound)
        b = jax.random.uniform(kb, (1, fan_out), jnp.float32, -bound, bound)
        return w, b

    params = []
    keys = jax.random.split(key, DEPTH + 4)
    for i in range(DEPTH):
        if i == 0:
            fan_in = PTS_CH
        elif (i - 1) in SKIPS:
            fan_in = WIDTH + PTS_CH
        else:
            fan_in = WIDTH
        params.extend(linear(keys[i], fan_in, WIDTH))
    params.extend(linear(keys[DEPTH + 0], WIDTH, WIDTH))                 # feature
    params.extend(linear(keys[DEPTH + 1], WIDTH, 1))                     # out_alpha
    params.extend(linear(keys[DEPTH + 2], WIDTH + VIEW_CH, WIDTH // 2))  # view_linear
    params.extend(linear(keys[DEPTH + 3], WIDTH // 2, 3))                # out_rgb
    return params


# ---- pure-JAX f32 reference (mirrors the torch forward exactly) ---------------
def nerf_reference(x, params):
    idx = 0
    pts_w, pts_b = [], []
    for _ in range(DEPTH):
        pts_w.append(params[idx]); idx += 1
        pts_b.append(params[idx]); idx += 1
    (w_feat, b_feat, w_alpha, b_alpha, w_view, b_view, w_rgb, b_rgb) = params[idx:]

    pts_x = x[:, :PTS_CH]
    view_x = x[:, PTS_CH:]
    h = pts_x
    for i in range(DEPTH):
        h = jax.nn.relu(h @ pts_w[i] + pts_b[i])
        if i in SKIPS:
            h = jnp.concatenate([pts_x, h], axis=-1)
    alpha = jax.nn.relu(h @ w_alpha + b_alpha)
    h = h @ w_feat + b_feat
    h = jnp.concatenate([h, view_x], axis=-1)
    h = jax.nn.relu(h @ w_view + b_view)
    rgb = jax.nn.sigmoid(h @ w_rgb + b_rgb)
    return jnp.concatenate([rgb, alpha], axis=-1)


if __name__ == "__main__":
    key = jax.random.PRNGKey(0)
    k_x, k_p = jax.random.split(key)

    # 1024 sample points (rays x samples), tiled in 512-row chunks -> 2 grid steps
    # (keeps both v7x TensorCores busy via the "parallel" grid axis).
    N = 1024
    x = jax.random.normal(k_x, (N, PTS_CH + VIEW_CH), jnp.float32)
    params = make_params(k_p)

    out = nerf_forward(x, params, tm=512)
    out = jax.block_until_ready(out)

    # Reference is pure f32; kernel uses bf16 MXU operands with f32 accumulation,
    # so tolerance is relaxed accordingly (~1e-3 typical, 3e-2 bound).
    ref = nerf_reference(x, params)
    np.testing.assert_allclose(np.asarray(out), np.asarray(ref), rtol=3e-2, atol=3e-2)

    print("KERNEL_OK")
</pallas_src>

<mosaic_0001>
module attributes {stable_mosaic.version = 11 : i64} {
  func.func @nerf_kernel(%arg0: i32, %arg1: memref<512x6xf32, #tpu.memory_space<vmem>>, %arg2: memref<3x32xf32, #tpu.memory_space<vmem>>, %arg3: memref<1x32xf32, #tpu.memory_space<vmem>>, %arg4: memref<32x32xbf16, #tpu.memory_space<vmem>>, %arg5: memref<1x32xf32, #tpu.memory_space<vmem>>, %arg6: memref<32x32xbf16, #tpu.memory_space<vmem>>, %arg7: memref<1x32xf32, #tpu.memory_space<vmem>>, %arg8: memref<32x32xbf16, #tpu.memory_space<vmem>>, %arg9: memref<1x32xf32, #tpu.memory_space<vmem>>, %arg10: memref<32x32xbf16, #tpu.memory_space<vmem>>, %arg11: memref<1x32xf32, #tpu.memory_space<vmem>>, %arg12: memref<3x32xf32, #tpu.memory_space<vmem>>, %arg13: memref<32x32xbf16, #tpu.memory_space<vmem>>, %arg14: memref<1x32xf32, #tpu.memory_space<vmem>>, %arg15: memref<32x32xbf16, #tpu.memory_space<vmem>>, %arg16: memref<1x32xf32, #tpu.memory_space<vmem>>, %arg17: memref<32x32xbf16, #tpu.memory_space<vmem>>, %arg18: memref<1x32xf32, #tpu.memory_space<vmem>>, %arg19: memref<32x33xbf16, #tpu.memory_space<vmem>>, %arg20: memref<1x33xf32, #tpu.memory_space<vmem>>, %arg21: memref<32x16xbf16, #tpu.memory_space<vmem>>, %arg22: memref<3x16xf32, #tpu.memory_space<vmem>>, %arg23: memref<1x16xf32, #tpu.memory_space<vmem>>, %arg24: memref<16x3xbf16, #tpu.memory_space<vmem>>, %arg25: memref<1x3xf32, #tpu.memory_space<vmem>>, %arg26: memref<512x4xf32, #tpu.memory_space<vmem>>) attributes {dimension_semantics = [#tpu.dimension_semantics<parallel>], iteration_bounds = array<i64: 2>, scalar_prefetch = 0 : i64, scratch_operands = 0 : i64, tpu.core_type = #tpu.core_type<tc>, window_params = [{transform_indices = @transform_0, window_bounds = array<i64: 512, 6>}, {pipeline_mode = #tpu.pipeline_mode<synchronous>, transform_indices = @transform_1, window_bounds = array<i64: 3, 32>}, {pipeline_mode = #tpu.pipeline_mode<synchronous>, transform_indices = @transform_2, window_bounds = array<i64: 1, 32>}, {pipeline_mode = #tpu.pipeline_mode<synchronous>, transform_indices = @transform_3, window_bounds = array<i64: 32, 32>}, {pipeline_mode = #tpu.pipeline_mode<synchronous>, transform_indices = @transform_4, window_bounds = array<i64: 1, 32>}, {pipeline_mode = #tpu.pipeline_mode<synchronous>, transform_indices = @transform_5, window_bounds = array<i64: 32, 32>}, {pipeline_mode = #tpu.pipeline_mode<synchronous>, transform_indices = @transform_6, window_bounds = array<i64: 1, 32>}, {pipeline_mode = #tpu.pipeline_mode<synchronous>, transform_indices = @transform_7, window_bounds = array<i64: 32, 32>}, {pipeline_mode = #tpu.pipeline_mode<synchronous>, transform_indices = @transform_8, window_bounds = array<i64: 1, 32>}, {pipeline_mode = #tpu.pipeline_mode<synchronous>, transform_indices = @transform_9, window_bounds = array<i64: 32, 32>}, {pipeline_mode = #tpu.pipeline_mode<synchronous>, transform_indices = @transform_10, window_bounds = array<i64: 1, 32>}, {pipeline_mode = #tpu.pipeline_mode<synchronous>, transform_indices = @transform_11, window_bounds = array<i64: 3, 32>}, {pipeline_mode = #tpu.pipeline_mode<synchronous>, transform_indices = @transform_12, window_bounds = array<i64: 32, 32>}, {pipeline_mode = #tpu.pipeline_mode<synchronous>, transform_indices = @transform_13, window_bounds = array<i64: 1, 32>}, {pipeline_mode = #tpu.pipeline_mode<synchronous>, transform_indices = @transform_14, window_bounds = array<i64: 32, 32>}, {pipeline_mode = #tpu.pipeline_mode<synchronous>, transform_indices = @transform_15, window_bounds = array<i64: 1, 32>}, {pipeline_mode = #tpu.pipeline_mode<synchronous>, transform_indices = @transform_16, window_bounds = array<i64: 32, 32>}, {pipeline_mode = #tpu.pipeline_mode<synchronous>, transform_indices = @transform_17, window_bounds = array<i64: 1, 32>}, {pipeline_mode = #tpu.pipeline_mode<synchronous>, transform_indices = @transform_18, window_bounds = array<i64: 32, 33>}, {pipeline_mode = #tpu.pipeline_mode<synchronous>, transform_indices = @transform_19, window_bounds = array<i64: 1, 33>}, {pipeline_mode = #tpu.pipeline_mode<synchronous>, transform_indices = @transform_20, window_bounds = array<i64: 32, 16>}, {pipeline_mode = #tpu.pipeline_mode<synchronous>, transform_indices = @transform_21, window_bounds = array<i64: 3, 16>}, {pipeline_mode = #tpu.pipeline_mode<synchronous>, transform_indices = @transform_22, window_bounds = array<i64: 1, 16>}, {pipeline_mode = #tpu.pipeline_mode<synchronous>, transform_indices = @transform_23, window_bounds = array<i64: 16, 3>}, {pipeline_mode = #tpu.pipeline_mode<synchronous>, transform_indices = @transform_24, window_bounds = array<i64: 1, 3>}, {transform_indices = @transform_25, window_bounds = array<i64: 512, 4>}]} {
    %c0 = arith.constant 0 : index
    %c0_0 = arith.constant 0 : index
    %0 = vector.load %arg1[%c0, %c0_0] : memref<512x6xf32, #tpu.memory_space<vmem>>, vector<512x6xf32>
    %1 = vector.extract_strided_slice %0 {offsets = [0, 0], sizes = [512, 3], strides = [1, 1]} : vector<512x6xf32> to vector<512x3xf32>
    %2 = vector.extract_strided_slice %0 {offsets = [0, 3], sizes = [512, 3], strides = [1, 1]} : vector<512x6xf32> to vector<512x3xf32>
    %c0_1 = arith.constant 0 : index
    %c0_2 = arith.constant 0 : index
    %3 = vector.load %arg2[%c0_1, %c0_2] : memref<3x32xf32, #tpu.memory_space<vmem>>, vector<3x32xf32>
    %c0_3 = arith.constant 0 : index
    %c0_4 = arith.constant 0 : index
    %4 = vector.load %arg3[%c0_3, %c0_4] : memref<1x32xf32, #tpu.memory_space<vmem>>, vector<1x32xf32>
    %5 = vector.extract_strided_slice %1 {offsets = [0, 0], sizes = [512, 1], strides = [1, 1]} : vector<512x3xf32> to vector<512x1xf32>
    %6 = vector.extract_strided_slice %3 {offsets = [0, 0], sizes = [1, 32], strides = [1, 1]} : vector<3x32xf32> to vector<1x32xf32>
    %7 = vector.broadcast %5 : vector<512x1xf32> to vector<512x32xf32>
    %8 = vector.broadcast %6 : vector<1x32xf32> to vector<512x32xf32>
    %9 = arith.mulf %7, %8 : vector<512x32xf32>
    %10 = vector.broadcast %4 : vector<1x32xf32> to vector<512x32xf32>
    %11 = arith.addf %10, %9 : vector<512x32xf32>
    %12 = vector.extract_strided_slice %1 {offsets = [0, 1], sizes = [512, 1], strides = [1, 1]} : vector<512x3xf32> to vector<512x1xf32>
    %13 = vector.extract_strided_slice %3 {offsets = [1, 0], sizes = [1, 32], strides = [1, 1]} : vector<3x32xf32> to vector<1x32xf32>
    %14 = vector.broadcast %12 : vector<512x1xf32> to vector<512x32xf32>
    %15 = vector.broadcast %13 : vector<1x32xf32> to vector<512x32xf32>
    %16 = arith.mulf %14, %15 : vector<512x32xf32>
    %17 = arith.addf %11, %16 : vector<512x32xf32>
    %18 = vector.extract_strided_slice %1 {offsets = [0, 2], sizes = [512, 1], strides = [1, 1]} : vector<512x3xf32> to vector<512x1xf32>
    %19 = vector.extract_strided_slice %3 {offsets = [2, 0], sizes = [1, 32], strides = [1, 1]} : vector<3x32xf32> to vector<1x32xf32>
    %20 = vector.broadcast %18 : vector<512x1xf32> to vector<512x32xf32>
    %21 = vector.broadcast %19 : vector<1x32xf32> to vector<512x32xf32>
    %22 = arith.mulf %20, %21 : vector<512x32xf32>
    %23 = arith.addf %17, %22 : vector<512x32xf32>
    %cst = arith.constant 0.000000e+00 : f32
    %24 = vector.broadcast %cst : f32 to vector<512x32xf32>
    %25 = arith.maximumf %23, %24 : vector<512x32xf32>
    %c0_5 = arith.constant 0 : index
    %c0_6 = arith.constant 0 : index
    %26 = vector.load %arg4[%c0_5, %c0_6] : memref<32x32xbf16, #tpu.memory_space<vmem>>, vector<32x32xbf16>
    %c0_7 = arith.constant 0 : index
    %c0_8 = arith.constant 0 : index
    %27 = vector.load %arg5[%c0_7, %c0_8] : memref<1x32xf32, #tpu.memory_space<vmem>>, vector<1x32xf32>
    %28 = arith.truncf %25 : vector<512x32xf32> to vector<512x32xbf16>
    %cst_9 = arith.constant dense<0.000000e+00> : vector<512x32xf32>
    %29 = tpu.matmul %28, %26, %cst_9 {dimension_numbers = #tpu.dot_dimension_numbers<[1], [0], [0], [1], [0, 0, 1, 1], [], []>} : vector<512x32xbf16>, vector<32x32xbf16>, vector<512x32xf32> -> vector<512x32xf32>
    %30 = vector.broadcast %27 : vector<1x32xf32> to vector<512x32xf32>
    %31 = arith.addf %29, %30 : vector<512x32xf32>
    %cst_10 = arith.constant 0.000000e+00 : f32
    %32 = vector.broadcast %cst_10 : f32 to vector<512x32xf32>
    %33 = arith.maximumf %31, %32 : vector<512x32xf32>
    %c0_11 = arith.constant 0 : index
    %c0_12 = arith.constant 0 : index
    %34 = vector.load %arg6[%c0_11, %c0_12] : memref<32x32xbf16, #tpu.memory_space<vmem>>, vector<32x32xbf16>
    %c0_13 = arith.constant 0 : index
    %c0_14 = arith.constant 0 : index
    %35 = vector.load %arg7[%c0_13, %c0_14] : memref<1x32xf32, #tpu.memory_space<vmem>>, vector<1x32xf32>
    %36 = arith.truncf %33 : vector<512x32xf32> to vector<512x32xbf16>
    %cst_15 = arith.constant dense<0.000000e+00> : vector<512x32xf32>
    %37 = tpu.matmul %36, %34, %cst_15 {dimension_numbers = #tpu.dot_dimension_numbers<[1], [0], [0], [1], [0, 0, 1, 1], [], []>} : vector<512x32xbf16>, vector<32x32xbf16>, vector<512x32xf32> -> vector<512x32xf32>
    %38 = vector.broadcast %35 : vector<1x32xf32> to vector<512x32xf32>
    %39 = arith.addf %37, %38 : vector<512x32xf32>
    %cst_16 = arith.constant 0.000000e+00 : f32
    %40 = vector.broadcast %cst_16 : f32 to vector<512x32xf32>
    %41 = arith.maximumf %39, %40 : vector<512x32xf32>
    %c0_17 = arith.constant 0 : index
    %c0_18 = arith.constant 0 : index
    %42 = vector.load %arg8[%c0_17, %c0_18] : memref<32x32xbf16, #tpu.memory_space<vmem>>, vector<32x32xbf16>
    %c0_19 = arith.constant 0 : index
    %c0_20 = arith.constant 0 : index
    %43 = vector.load %arg9[%c0_19, %c0_20] : memref<1x32xf32, #tpu.memory_space<vmem>>, vector<1x32xf32>
    %44 = arith.truncf %41 : vector<512x32xf32> to vector<512x32xbf16>
    %cst_21 = arith.constant dense<0.000000e+00> : vector<512x32xf32>
    %45 = tpu.matmul %44, %42, %cst_21 {dimension_numbers = #tpu.dot_dimension_numbers<[1], [0], [0], [1], [0, 0, 1, 1], [], []>} : vector<512x32xbf16>, vector<32x32xbf16>, vector<512x32xf32> -> vector<512x32xf32>
    %46 = vector.broadcast %43 : vector<1x32xf32> to vector<512x32xf32>
    %47 = arith.addf %45, %46 : vector<512x32xf32>
    %cst_22 = arith.constant 0.000000e+00 : f32
    %48 = vector.broadcast %cst_22 : f32 to vector<512x32xf32>
    %49 = arith.maximumf %47, %48 : vector<512x32xf32>
    %c0_23 = arith.constant 0 : index
    %c0_24 = arith.constant 0 : index
    %50 = vector.load %arg10[%c0_23, %c0_24] : memref<32x32xbf16, #tpu.memory_space<vmem>>, vector<32x32xbf16>
    %c0_25 = arith.constant 0 : index
    %c0_26 = arith.constant 0 : index
    %51 = vector.load %arg11[%c0_25, %c0_26] : memref<1x32xf32, #tpu.memory_space<vmem>>, vector<1x32xf32>
    %52 = arith.truncf %49 : vector<512x32xf32> to vector<512x32xbf16>
    %cst_27 = arith.constant dense<0.000000e+00> : vector<512x32xf32>
    %53 = tpu.matmul %52, %50, %cst_27 {dimension_numbers = #tpu.dot_dimension_numbers<[1], [0], [0], [1], [0, 0, 1, 1], [], []>} : vector<512x32xbf16>, vector<32x32xbf16>, vector<512x32xf32> -> vector<512x32xf32>
    %54 = vector.broadcast %51 : vector<1x32xf32> to vector<512x32xf32>
    %55 = arith.addf %53, %54 : vector<512x32xf32>
    %cst_28 = arith.constant 0.000000e+00 : f32
    %56 = vector.broadcast %cst_28 : f32 to vector<512x32xf32>
    %57 = arith.maximumf %55, %56 : vector<512x32xf32>
    %c0_29 = arith.constant 0 : index
    %c0_30 = arith.constant 0 : index
    %58 = vector.load %arg12[%c0_29, %c0_30] : memref<3x32xf32, #tpu.memory_space<vmem>>, vector<3x32xf32>
    %c0_31 = arith.constant 0 : index
    %c0_32 = arith.constant 0 : index
    %59 = vector.load %arg13[%c0_31, %c0_32] : memref<32x32xbf16, #tpu.memory_space<vmem>>, vector<32x32xbf16>
    %c0_33 = arith.constant 0 : index
    %c0_34 = arith.constant 0 : index
    %60 = vector.load %arg14[%c0_33, %c0_34] : memref<1x32xf32, #tpu.memory_space<vmem>>, vector<1x32xf32>
    %61 = arith.truncf %57 : vector<512x32xf32> to vector<512x32xbf16>
    %cst_35 = arith.constant dense<0.000000e+00> : vector<512x32xf32>
    %62 = tpu.matmul %61, %59, %cst_35 {dimension_numbers = #tpu.dot_dimension_numbers<[1], [0], [0], [1], [0, 0, 1, 1], [], []>} : vector<512x32xbf16>, vector<32x32xbf16>, vector<512x32xf32> -> vector<512x32xf32>
    %63 = vector.extract_strided_slice %1 {offsets = [0, 0], sizes = [512, 1], strides = [1, 1]} : vector<512x3xf32> to vector<512x1xf32>
    %64 = vector.extract_strided_slice %58 {offsets = [0, 0], sizes = [1, 32], strides = [1, 1]} : vector<3x32xf32> to vector<1x32xf32>
    %65 = vector.broadcast %63 : vector<512x1xf32> to vector<512x32xf32>
    %66 = vector.broadcast %64 : vector<1x32xf32> to vector<512x32xf32>
    %67 = arith.mulf %65, %66 : vector<512x32xf32>
    %68 = arith.addf %62, %67 : vector<512x32xf32>
    %69 = vector.extract_strided_slice %1 {offsets = [0, 1], sizes = [512, 1], strides = [1, 1]} : vector<512x3xf32> to vector<512x1xf32>
    %70 = vector.extract_strided_slice %58 {offsets = [1, 0], sizes = [1, 32], strides = [1, 1]} : vector<3x32xf32> to vector<1x32xf32>
    %71 = vector.broadcast %69 : vector<512x1xf32> to vector<512x32xf32>
    %72 = vector.broadcast %70 : vector<1x32xf32> to vector<512x32xf32>
    %73 = arith.mulf %71, %72 : vector<512x32xf32>
    %74 = arith.addf %68, %73 : vector<512x32xf32>
    %75 = vector.extract_strided_slice %1 {offsets = [0, 2], sizes = [512, 1], strides = [1, 1]} : vector<512x3xf32> to vector<512x1xf32>
    %76 = vector.extract_strided_slice %58 {offsets = [2, 0], sizes = [1, 32], strides = [1, 1]} : vector<3x32xf32> to vector<1x32xf32>
    %77 = vector.broadcast %75 : vector<512x1xf32> to vector<512x32xf32>
    %78 = vector.broadcast %76 : vector<1x32xf32> to vector<512x32xf32>
    %79 = arith.mulf %77, %78 : vector<512x32xf32>
    %80 = arith.addf %74, %79 : vector<512x32xf32>
    %81 = vector.broadcast %60 : vector<1x32xf32> to vector<512x32xf32>
    %82 = arith.addf %80, %81 : vector<512x32xf32>
    %cst_36 = arith.constant 0.000000e+00 : f32
    %83 = vector.broadcast %cst_36 : f32 to vector<512x32xf32>
    %84 = arith.maximumf %82, %83 : vector<512x32xf32>
    %c0_37 = arith.constant 0 : index
    %c0_38 = arith.constant 0 : index
    %85 = vector.load %arg15[%c0_37, %c0_38] : memref<32x32xbf16, #tpu.memory_space<vmem>>, vector<32x32xbf16>
    %c0_39 = arith.constant 0 : index
    %c0_40 = arith.constant 0 : index
    %86 = vector.load %arg16[%c0_39, %c0_40] : memref<1x32xf32, #tpu.memory_space<vmem>>, vector<1x32xf32>
    %87 = arith.truncf %84 : vector<512x32xf32> to vector<512x32xbf16>
    %cst_41 = arith.constant dense<0.000000e+00> : vector<512x32xf32>
    %88 = tpu.matmul %87, %85, %cst_41 {dimension_numbers = #tpu.dot_dimension_numbers<[1], [0], [0], [1], [0, 0, 1, 1], [], []>} : vector<512x32xbf16>, vector<32x32xbf16>, vector<512x32xf32> -> vector<512x32xf32>
    %89 = vector.broadcast %86 : vector<1x32xf32> to vector<512x32xf32>
    %90 = arith.addf %88, %89 : vector<512x32xf32>
    %cst_42 = arith.constant 0.000000e+00 : f32
    %91 = vector.broadcast %cst_42 : f32 to vector<512x32xf32>
    %92 = arith.maximumf %90, %91 : vector<512x32xf32>
    %c0_43 = arith.constant 0 : index
    %c0_44 = arith.constant 0 : index
    %93 = vector.load %arg17[%c0_43, %c0_44] : memref<32x32xbf16, #tpu.memory_space<vmem>>, vector<32x32xbf16>
    %c0_45 = arith.constant 0 : index
    %c0_46 = arith.constant 0 : index
    %94 = vector.load %arg18[%c0_45, %c0_46] : memref<1x32xf32, #tpu.memory_space<vmem>>, vector<1x32xf32>
    %95 = arith.truncf %92 : vector<512x32xf32> to vector<512x32xbf16>
    %cst_47 = arith.constant dense<0.000000e+00> : vector<512x32xf32>
    %96 = tpu.matmul %95, %93, %cst_47 {dimension_numbers = #tpu.dot_dimension_numbers<[1], [0], [0], [1], [0, 0, 1, 1], [], []>} : vector<512x32xbf16>, vector<32x32xbf16>, vector<512x32xf32> -> vector<512x32xf32>
    %97 = vector.broadcast %94 : vector<1x32xf32> to vector<512x32xf32>
    %98 = arith.addf %96, %97 : vector<512x32xf32>
    %cst_48 = arith.constant 0.000000e+00 : f32
    %99 = vector.broadcast %cst_48 : f32 to vector<512x32xf32>
    %100 = arith.maximumf %98, %99 : vector<512x32xf32>
    %c0_49 = arith.constant 0 : index
    %c0_50 = arith.constant 0 : index
    %101 = vector.load %arg19[%c0_49, %c0_50] : memref<32x33xbf16, #tpu.memory_space<vmem>>, vector<32x33xbf16>
    %c0_51 = arith.constant 0 : index
    %c0_52 = arith.constant 0 : index
    %102 = vector.load %arg20[%c0_51, %c0_52] : memref<1x33xf32, #tpu.memory_space<vmem>>, vector<1x33xf32>
    %103 = arith.truncf %100 : vector<512x32xf32> to vector<512x32xbf16>
    %cst_53 = arith.constant dense<0.000000e+00> : vector<512x33xf32>
    %104 = tpu.matmul %103, %101, %cst_53 {dimension_numbers = #tpu.dot_dimension_numbers<[1], [0], [0], [1], [0, 0, 1, 1], [], []>} : vector<512x32xbf16>, vector<32x33xbf16>, vector<512x33xf32> -> vector<512x33xf32>
    %105 = vector.broadcast %102 : vector<1x33xf32> to vector<512x33xf32>
    %106 = arith.addf %104, %105 : vector<512x33xf32>
    %107 = vector.extract_strided_slice %106 {offsets = [0, 0], sizes = [512, 32], strides = [1, 1]} : vector<512x33xf32> to vector<512x32xf32>
    %108 = vector.extract_strided_slice %106 {offsets = [0, 32], sizes = [512, 1], strides = [1, 1]} : vector<512x33xf32> to vector<512x1xf32>
    %cst_54 = arith.constant 0.000000e+00 : f32
    %109 = vector.broadcast %cst_54 : f32 to vector<512x1xf32>
    %110 = arith.maximumf %108, %109 : vector<512x1xf32>
    %c0_55 = arith.constant 0 : index
    %c0_56 = arith.constant 0 : index
    %111 = vector.load %arg21[%c0_55, %c0_56] : memref<32x16xbf16, #tpu.memory_space<vmem>>, vector<32x16xbf16>
    %c0_57 = arith.constant 0 : index
    %c0_58 = arith.constant 0 : index
    %112 = vector.load %arg22[%c0_57, %c0_58] : memref<3x16xf32, #tpu.memory_space<vmem>>, vector<3x16xf32>
    %c0_59 = arith.constant 0 : index
    %c0_60 = arith.constant 0 : index
    %113 = vector.load %arg23[%c0_59, %c0_60] : memref<1x16xf32, #tpu.memory_space<vmem>>, vector<1x16xf32>
    %114 = arith.truncf %107 : vector<512x32xf32> to vector<512x32xbf16>
    %cst_61 = arith.constant dense<0.000000e+00> : vector<512x16xf32>
    %115 = tpu.matmul %114, %111, %cst_61 {dimension_numbers = #tpu.dot_dimension_numbers<[1], [0], [0], [1], [0, 0, 1, 1], [], []>} : vector<512x32xbf16>, vector<32x16xbf16>, vector<512x16xf32> -> vector<512x16xf32>
    %116 = vector.extract_strided_slice %2 {offsets = [0, 0], sizes = [512, 1], strides = [1, 1]} : vector<512x3xf32> to vector<512x1xf32>
    %117 = vector.extract_strided_slice %112 {offsets = [0, 0], sizes = [1, 16], strides = [1, 1]} : vector<3x16xf32> to vector<1x16xf32>
    %118 = vector.broadcast %116 : vector<512x1xf32> to vector<512x16xf32>
    %119 = vector.broadcast %117 : vector<1x16xf32> to vector<512x16xf32>
    %120 = arith.mulf %118, %119 : vector<512x16xf32>
    %121 = arith.addf %115, %120 : vector<512x16xf32>
    %122 = vector.extract_strided_slice %2 {offsets = [0, 1], sizes = [512, 1], strides = [1, 1]} : vector<512x3xf32> to vector<512x1xf32>
    %123 = vector.extract_strided_slice %112 {offsets = [1, 0], sizes = [1, 16], strides = [1, 1]} : vector<3x16xf32> to vector<1x16xf32>
    %124 = vector.broadcast %122 : vector<512x1xf32> to vector<512x16xf32>
    %125 = vector.broadcast %123 : vector<1x16xf32> to vector<512x16xf32>
    %126 = arith.mulf %124, %125 : vector<512x16xf32>
    %127 = arith.addf %121, %126 : vector<512x16xf32>
    %128 = vector.extract_strided_slice %2 {offsets = [0, 2], sizes = [512, 1], strides = [1, 1]} : vector<512x3xf32> to vector<512x1xf32>
    %129 = vector.extract_strided_slice %112 {offsets = [2, 0], sizes = [1, 16], strides = [1, 1]} : vector<3x16xf32> to vector<1x16xf32>
    %130 = vector.broadcast %128 : vector<512x1xf32> to vector<512x16xf32>
    %131 = vector.broadcast %129 : vector<1x16xf32> to vector<512x16xf32>
    %132 = arith.mulf %130, %131 : vector<512x16xf32>
    %133 = arith.addf %127, %132 : vector<512x16xf32>
    %134 = vector.broadcast %113 : vector<1x16xf32> to vector<512x16xf32>
    %135 = arith.addf %133, %134 : vector<512x16xf32>
    %cst_62 = arith.constant 0.000000e+00 : f32
    %136 = vector.broadcast %cst_62 : f32 to vector<512x16xf32>
    %137 = arith.maximumf %135, %136 : vector<512x16xf32>
    %c0_63 = arith.constant 0 : index
    %c0_64 = arith.constant 0 : index
    %138 = vector.load %arg24[%c0_63, %c0_64] : memref<16x3xbf16, #tpu.memory_space<vmem>>, vector<16x3xbf16>
    %c0_65 = arith.constant 0 : index
    %c0_66 = arith.constant 0 : index
    %139 = vector.load %arg25[%c0_65, %c0_66] : memref<1x3xf32, #tpu.memory_space<vmem>>, vector<1x3xf32>
    %140 = arith.truncf %137 : vector<512x16xf32> to vector<512x16xbf16>
    %cst_67 = arith.constant dense<0.000000e+00> : vector<512x3xf32>
    %141 = tpu.matmul %140, %138, %cst_67 {dimension_numbers = #tpu.dot_dimension_numbers<[1], [0], [0], [1], [0, 0, 1, 1], [], []>} : vector<512x16xbf16>, vector<16x3xbf16>, vector<512x3xf32> -> vector<512x3xf32>
    %142 = vector.broadcast %139 : vector<1x3xf32> to vector<512x3xf32>
    %143 = arith.addf %141, %142 : vector<512x3xf32>
    %144 = arith.negf %143 : vector<512x3xf32>
    %145 = math.exp %144 : vector<512x3xf32>
    %cst_68 = arith.constant 1.000000e+00 : f32
    %146 = vector.broadcast %cst_68 : f32 to vector<512x3xf32>
    %147 = arith.addf %146, %145 : vector<512x3xf32>
    %148 = arith.divf %146, %147 : vector<512x3xf32>
    %149 = tpu.concatenate %148, %110 in 1 : vector<512x3xf32>, vector<512x1xf32> -> vector<512x4xf32>
    %c0_69 = arith.constant 0 : index
    %c0_70 = arith.constant 0 : index
    %150 = vector.load %arg26[%c0_69, %c0_70] : memref<512x4xf32, #tpu.memory_space<vmem>>, vector<512x4xf32>
    tpu.vector_store %arg26[%c0_69, %c0_70], %149 {strides = array<i32>} : memref<512x4xf32, #tpu.memory_space<vmem>>, vector<512x4xf32>,
    return
  }
  func.func @transform_0(%arg0: i32) -> (i32, i32) {
    %c0_i32 = arith.constant 0 : i32
    %c0_i32_0 = arith.constant 0 : i32
    return %arg0, %c0_i32 : i32, i32
  }
  func.func @transform_1(%arg0: i32) -> (i32, i32) {
    %c0_i32 = arith.constant 0 : i32
    %c0_i32_0 = arith.constant 0 : i32
    %c0_i32_1 = arith.constant 0 : i32
    return %c0_i32, %c0_i32_0 : i32, i32
  }
  func.func @transform_2(%arg0: i32) -> (i32, i32) {
    %c0_i32 = arith.constant 0 : i32
    %c0_i32_0 = arith.constant 0 : i32
    %c0_i32_1 = arith.constant 0 : i32
    return %c0_i32, %c0_i32_0 : i32, i32
  }
  func.func @transform_3(%arg0: i32) -> (i32, i32) {
    %c0_i32 = arith.constant 0 : i32
    %c0_i32_0 = arith.constant 0 : i32
    %c0_i32_1 = arith.constant 0 : i32
    return %c0_i32, %c0_i32_0 : i32, i32
  }
  func.func @transform_4(%arg0: i32) -> (i32, i32) {
    %c0_i32 = arith.constant 0 : i32
    %c0_i32_0 = arith.constant 0 : i32
    %c0_i32_1 = arith.constant 0 : i32
    return %c0_i32, %c0_i32_0 : i32, i32
  }
  func.func @transform_5(%arg0: i32) -> (i32, i32) {
    %c0_i32 = arith.constant 0 : i32
    %c0_i32_0 = arith.constant 0 : i32
    %c0_i32_1 = arith.constant 0 : i32
    return %c0_i32, %c0_i32_0 : i32, i32
  }
  func.func @transform_6(%arg0: i32) -> (i32, i32) {
    %c0_i32 = arith.constant 0 : i32
    %c0_i32_0 = arith.constant 0 : i32
    %c0_i32_1 = arith.constant 0 : i32
    return %c0_i32, %c0_i32_0 : i32, i32
  }
  func.func @transform_7(%arg0: i32) -> (i32, i32) {
    %c0_i32 = arith.constant 0 : i32
    %c0_i32_0 = arith.constant 0 : i32
    %c0_i32_1 = arith.constant 0 : i32
    return %c0_i32, %c0_i32_0 : i32, i32
  }
  func.func @transform_8(%arg0: i32) -> (i32, i32) {
    %c0_i32 = arith.constant 0 : i32
    %c0_i32_0 = arith.constant 0 : i32
    %c0_i32_1 = arith.constant 0 : i32
    return %c0_i32, %c0_i32_0 : i32, i32
  }
  func.func @transform_9(%arg0: i32) -> (i32, i32) {
    %c0_i32 = arith.constant 0 : i32
    %c0_i32_0 = arith.constant 0 : i32
    %c0_i32_1 = arith.constant 0 : i32
    return %c0_i32, %c0_i32_0 : i32, i32
  }
  func.func @transform_10(%arg0: i32) -> (i32, i32) {
    %c0_i32 = arith.constant 0 : i32
    %c0_i32_0 = arith.constant 0 : i32
    %c0_i32_1 = arith.constant 0 : i32
    return %c0_i32, %c0_i32_0 : i32, i32
  }
  func.func @transform_11(%arg0: i32) -> (i32, i32) {
    %c0_i32 = arith.constant 0 : i32
    %c0_i32_0 = arith.constant 0 : i32
    %c0_i32_1 = arith.constant 0 : i32
    return %c0_i32, %c0_i32_0 : i32, i32
  }
  func.func @transform_12(%arg0: i32) -> (i32, i32) {
    %c0_i32 = arith.constant 0 : i32
    %c0_i32_0 = arith.constant 0 : i32
    %c0_i32_1 = arith.constant 0 : i32
    return %c0_i32, %c0_i32_0 : i32, i32
  }
  func.func @transform_13(%arg0: i32) -> (i32, i32) {
    %c0_i32 = arith.constant 0 : i32
    %c0_i32_0 = arith.constant 0 : i32
    %c0_i32_1 = arith.constant 0 : i32
    return %c0_i32, %c0_i32_0 : i32, i32
  }
  func.func @transform_14(%arg0: i32) -> (i32, i32) {
    %c0_i32 = arith.constant 0 : i32
    %c0_i32_0 = arith.constant 0 : i32
    %c0_i32_1 = arith.constant 0 : i32
    return %c0_i32, %c0_i32_0 : i32, i32
  }
  func.func @transform_15(%arg0: i32) -> (i32, i32) {
    %c0_i32 = arith.constant 0 : i32
    %c0_i32_0 = arith.constant 0 : i32
    %c0_i32_1 = arith.constant 0 : i32
    return %c0_i32, %c0_i32_0 : i32, i32
  }
  func.func @transform_16(%arg0: i32) -> (i32, i32) {
    %c0_i32 = arith.constant 0 : i32
    %c0_i32_0 = arith.constant 0 : i32
    %c0_i32_1 = arith.constant 0 : i32
    return %c0_i32, %c0_i32_0 : i32, i32
  }
  func.func @transform_17(%arg0: i32) -> (i32, i32) {
    %c0_i32 = arith.constant 0 : i32
    %c0_i32_0 = arith.constant 0 : i32
    %c0_i32_1 = arith.constant 0 : i32
    return %c0_i32, %c0_i32_0 : i32, i32
  }
  func.func @transform_18(%arg0: i32) -> (i32, i32) {
    %c0_i32 = arith.constant 0 : i32
    %c0_i32_0 = arith.constant 0 : i32
    %c0_i32_1 = arith.constant 0 : i32
    return %c0_i32, %c0_i32_0 : i32, i32
  }
  func.func @transform_19(%arg0: i32) -> (i32, i32) {
    %c0_i32 = arith.constant 0 : i32
    %c0_i32_0 = arith.constant 0 : i32
    %c0_i32_1 = arith.constant 0 : i32
    return %c0_i32, %c0_i32_0 : i32, i32
  }
  func.func @transform_20(%arg0: i32) -> (i32, i32) {
    %c0_i32 = arith.constant 0 : i32
    %c0_i32_0 = arith.constant 0 : i32
    %c0_i32_1 = arith.constant 0 : i32
    return %c0_i32, %c0_i32_0 : i32, i32
  }
  func.func @transform_21(%arg0: i32) -> (i32, i32) {
    %c0_i32 = arith.constant 0 : i32
    %c0_i32_0 = arith.constant 0 : i32
    %c0_i32_1 = arith.constant 0 : i32
    return %c0_i32, %c0_i32_0 : i32, i32
  }
  func.func @transform_22(%arg0: i32) -> (i32, i32) {
    %c0_i32 = arith.constant 0 : i32
    %c0_i32_0 = arith.constant 0 : i32
    %c0_i32_1 = arith.constant 0 : i32
    return %c0_i32, %c0_i32_0 : i32, i32
  }
  func.func @transform_23(%arg0: i32) -> (i32, i32) {
    %c0_i32 = arith.constant 0 : i32
    %c0_i32_0 = arith.constant 0 : i32
    %c0_i32_1 = arith.constant 0 : i32
    return %c0_i32, %c0_i32_0 : i32, i32
  }
  func.func @transform_24(%arg0: i32) -> (i32, i32) {
    %c0_i32 = arith.constant 0 : i32
    %c0_i32_0 = arith.constant 0 : i32
    %c0_i32_1 = arith.constant 0 : i32
    return %c0_i32, %c0_i32_0 : i32, i32
  }
  func.func @transform_25(%arg0: i32) -> (i32, i32) {
    %c0_i32 = arith.constant 0 : i32
    %c0_i32_0 = arith.constant 0 : i32
    return %arg0, %c0_i32 : i32, i32
  }
}

</mosaic_0001>

<llo_original>
// kernel: tpu_custom_call.1
$region0: #{tpu_custom_call.1}
  #allocation0 [shape = 'u32[]', space=smem, size = 0x4, offset = 0x4, fixed_abs, tag = 'smem constant byte address 0x4 - core index']
  #allocation1 [shape = 'u32[144,128]{1,0:T(1,128)}', space=vmem, size = 0x12000, scoped, tag = 'internal scratch']
  %s0 = inlined_call_operand.vmem [shape: f32[1024,6], index: 0, kind: input, shape index: {}]
  %s1 = inlined_call_operand.vmem [shape: f32[3,32], index: 1, kind: input, shape index: {}]
  %s2 = inlined_call_operand.vmem [shape: f32[1,32], index: 2, kind: input, shape index: {}]
  %s3 = inlined_call_operand.vmem [shape: bf16[32,32], index: 3, kind: input, shape index: {}]
  %s4 = inlined_call_operand.vmem [shape: f32[1,32], index: 4, kind: input, shape index: {}]
  %s5 = inlined_call_operand.vmem [shape: bf16[32,32], index: 5, kind: input, shape index: {}]
  %s6 = inlined_call_operand.vmem [shape: f32[1,32], index: 6, kind: input, shape index: {}]
  %s7 = inlined_call_operand.vmem [shape: bf16[32,32], index: 7, kind: input, shape index: {}]
  %s8 = inlined_call_operand.vmem [shape: f32[1,32], index: 8, kind: input, shape index: {}]
  %s9 = inlined_call_operand.vmem [shape: bf16[32,32], index: 9, kind: input, shape index: {}]
  %s10 = inlined_call_operand.vmem [shape: f32[1,32], index: 10, kind: input, shape index: {}]
  %s11 = inlined_call_operand.vmem [shape: f32[3,32], index: 11, kind: input, shape index: {}]
  %s12 = inlined_call_operand.vmem [shape: bf16[32,32], index: 12, kind: input, shape index: {}]
  %s13 = inlined_call_operand.vmem [shape: f32[1,32], index: 13, kind: input, shape index: {}]
  %s14 = inlined_call_operand.vmem [shape: bf16[32,32], index: 14, kind: input, shape index: {}]
  %s15 = inlined_call_operand.vmem [shape: f32[1,32], index: 15, kind: input, shape index: {}]
  %s16 = inlined_call_operand.vmem [shape: bf16[32,32], index: 16, kind: input, shape index: {}]
  %s17 = inlined_call_operand.vmem [shape: f32[1,32], index: 17, kind: input, shape index: {}]
  %s18 = inlined_call_operand.vmem [shape: bf16[32,33], index: 18, kind: input, shape index: {}]
  %s19 = inlined_call_operand.vmem [shape: f32[1,33], index: 19, kind: input, shape index: {}]
  %s20 = inlined_call_operand.vmem [shape: bf16[32,16], index: 20, kind: input, shape index: {}]
  %s21 = inlined_call_operand.vmem [shape: f32[3,16], index: 21, kind: input, shape index: {}]
  %s22 = inlined_call_operand.vmem [shape: f32[1,16], index: 22, kind: input, shape index: {}]
  %s23 = inlined_call_operand.vmem [shape: bf16[16,3], index: 23, kind: input, shape index: {}]
  %s24 = inlined_call_operand.vmem [shape: f32[1,3], index: 24, kind: input, shape index: {}]
  %s25 = inlined_call_operand.vmem [shape: f32[1024,4], index: 25, kind: output, shape index: {}]
  %s26 = sld [smem:[#allocation0]]
  $region133: #{tpu_custom_call.1} parent=0
    _
  %s28 = ssub.s32 1, %s26
  %s29 = scalar_select 0, %s28, %s26
  loop: start=0, step=1, limit=4
  $region2: #{tpu_custom_call.1} parent=0 // loop_pre_header
    _
  $region3: #{tpu_custom_call.1} parent=0 // loop_header
    %s31 = sphi 0, %s35
    %p32 = scmp.ge.s32.totalorder %s31, 4
    %s41 = sphi 0, %s43
    %s44 = sphi 0, %s41
    %s45 = sphi 0, %s44
    %s61 = sphi 0, %s45
    %s65 = sphi 0, %s65
    %s67 = sphi 0, %s65
    %s68 = sphi 0, %s67
    %s82 = sphi 0, %s68
    %s86 = sphi 0, %s86
    %s88 = sphi 0, %s86
    %s89 = sphi 0, %s88
    %s103 = sphi 0, %s89
    %s107 = sphi 0, %s107
    %s109 = sphi 0, %s107
    %s110 = sphi 0, %s109
    %s124 = sphi 0, %s110
    %s128 = sphi 0, %s128
    %s130 = sphi 0, %s128
    %s131 = sphi 0, %s130
    %s145 = sphi 0, %s131
    %s149 = sphi 0, %s149
    %s151 = sphi 0, %s149
    %s152 = sphi 0, %s151
    %s166 = sphi 0, %s152
    %s170 = sphi 0, %s170
    %s172 = sphi 0, %s170
    %s173 = sphi 0, %s172
    %s187 = sphi 0, %s173
    %s191 = sphi 0, %s191
    %s193 = sphi 0, %s191
    %s194 = sphi 0, %s193
    %s208 = sphi 0, %s194
    %s212 = sphi 0, %s212
    %s214 = sphi 0, %s212
    %s215 = sphi 0, %s214
    %s229 = sphi 0, %s215
    %s233 = sphi 0, %s233
    %s235 = sphi 0, %s233
    %s236 = sphi 0, %s235
    %s250 = sphi 0, %s236
    %s254 = sphi 0, %s254
    %s256 = sphi 0, %s254
    %s257 = sphi 0, %s256
    %s271 = sphi 0, %s257
    %s275 = sphi 0, %s275
    %s277 = sphi 0, %s275
    %s278 = sphi 0, %s277
    %s292 = sphi 0, %s278
    %s296 = sphi 0, %s296
    %s298 = sphi 0, %s296
    %s299 = sphi 0, %s298
    %s313 = sphi 0, %s299
    %s317 = sphi 0, %s317
    %s319 = sphi 0, %s317
    %s320 = sphi 0, %s319
    %s334 = sphi 0, %s320
    %s338 = sphi 0, %s338
    %s340 = sphi 0, %s338
    %s341 = sphi 0, %s340
    %s355 = sphi 0, %s341
    %s359 = sphi 0, %s359
    %s361 = sphi 0, %s359
    %s362 = sphi 0, %s361
    %s376 = sphi 0, %s362
    %s380 = sphi 0, %s380
    %s382 = sphi 0, %s380
    %s383 = sphi 0, %s382
    %s397 = sphi 0, %s383
    %s401 = sphi 0, %s401
    %s403 = sphi 0, %s401
    %s404 = sphi 0, %s403
    %s418 = sphi 0, %s404
    %s422 = sphi 0, %s422
    %s424 = sphi 0, %s422
    %s425 = sphi 0, %s424
    %s439 = sphi 0, %s425
    %s443 = sphi 0, %s443
    %s445 = sphi 0, %s443
    %s446 = sphi 0, %s445
    %s460 = sphi 0, %s446
    %s464 = sphi 0, %s464
    %s466 = sphi 0, %s464
    %s467 = sphi 0, %s466
    %s481 = sphi 0, %s467
    %s485 = sphi 0, %s485
    %s487 = sphi 0, %s485
    %s488 = sphi 0, %s487
    %s502 = sphi 0, %s488
    %s506 = sphi 0, %s506
    %s508 = sphi 0, %s506
    %s509 = sphi 0, %s508
    %s523 = sphi 0, %s509
    %s527 = sphi 0, %s527
    %s529 = sphi 0, %s527
    %s530 = sphi 0, %s529
    %s544 = sphi 0, %s530
    %s548 = sphi 0, %s548
    %s550 = sphi 0, %s548
    %s551 = sphi 0, %s550
    %s565 = sphi 0, %s551
    %s571 = sphi 0, %s573
    %s574 = sphi 0, %s571
    %s575 = sphi 0, %s574
    %s591 = sphi 0, %s575
  $region4: #{tpu_custom_call.1} parent=0 // loop_header_branch
    %34 = sbr.rel (%p32) target = $region8
  $region5: #{tpu_custom_call.1} parent=0 // loop_body
    %s36 = ssub.s32 %s31, 1
    %s37 = ssub.s32 %s31, 2
    %s38 = sadd.s32 %s31, 1
    %s39 = ssub.s32 %s31, %s38
    %p40 = scmp.eq.s32.totalorder %s39, 0
    %s42 = sadd.s32 %s41, 1
    %s43 = scalar_select %p40, %s41, %s42
    %p46 = pneg %p40
    %p47 = scmp.eq.s32.totalorder %s31, 1
    %p48 = por %p46, %p47
    %p49 = scmp.ne.s32.totalorder %s41, %s44
    %p50 = scmp.eq.s32.totalorder %s31, 0
    %p51 = por %p49, %p50
    %p52 = scmp.ne.s32.totalorder %s41, %s44
    %p53 = scmp.eq.s32.totalorder %s36, 1
    %p54 = por %p52, %p53
    %p55 = scmp.ne.s32.totalorder %s44, %s45
    %p56 = scmp.eq.s32.totalorder %s36, 0
    %p57 = por %p55, %p56
    %p58 = scmp.ne.s32.totalorder %s44, %s45
    %p59 = scmp.eq.s32.totalorder %s37, 1
    %p60 = por %p58, %p59
    %p62 = scmp.ne.s32.totalorder %s45, %s61
    %p63 = scmp.eq.s32.totalorder %s37, 0
    %p64 = por %p62, %p63
    %s66 = sadd.s32 %s65, 1
    %p69 = scmp.eq.s32.totalorder %s31, 1
    %p70 = scmp.ne.s32.totalorder %s65, %s67
    %p71 = scmp.eq.s32.totalorder %s31, 0
    %p72 = por %p70, %p71
    %p73 = scmp.ne.s32.totalorder %s65, %s67
    %p74 = scmp.eq.s32.totalorder %s36, 1
    %p75 = por %p73, %p74
    %p76 = scmp.ne.s32.totalorder %s67, %s68
    %p77 = scmp.eq.s32.totalorder %s36, 0
    %p78 = por %p76, %p77
    %p79 = scmp.ne.s32.totalorder %s67, %s68
    %p80 = scmp.eq.s32.totalorder %s37, 1
    %p81 = por %p79, %p80
    %p83 = scmp.ne.s32.totalorder %s68, %s82
    %p84 = scmp.eq.s32.totalorder %s37, 0
    %p85 = por %p83, %p84
    %s87 = sadd.s32 %s86, 1
    %p90 = scmp.eq.s32.totalorder %s31, 1
    %p91 = scmp.ne.s32.totalorder %s86, %s88
    %p92 = scmp.eq.s32.totalorder %s31, 0
    %p93 = por %p91, %p92
    %p94 = scmp.ne.s32.totalorder %s86, %s88
    %p95 = scmp.eq.s32.totalorder %s36, 1
    %p96 = por %p94, %p95
    %p97 = scmp.ne.s32.totalorder %s88, %s89
    %p98 = scmp.eq.s32.totalorder %s36, 0
    %p99 = por %p97, %p98
    %p100 = scmp.ne.s32.totalorder %s88, %s89
    %p101 = scmp.eq.s32.totalorder %s37, 1
    %p102 = por %p100, %p101
    %p104 = scmp.ne.s32.totalorder %s89, %s103
    %p105 = scmp.eq.s32.totalorder %s37, 0
    %p106 = por %p104, %p105
    %s108 = sadd.s32 %s107, 1
    %p111 = scmp.eq.s32.totalorder %s31, 1
    %p112 = scmp.ne.s32.totalorder %s107, %s109
    %p113 = scmp.eq.s32.totalorder %s31, 0
    %p114 = por %p112, %p113
    %p115 = scmp.ne.s32.totalorder %s107, %s109
    %p116 = scmp.eq.s32.totalorder %s36, 1
    %p117 = por %p115, %p116
    %p118 = scmp.ne.s32.totalorder %s109, %s110
    %p119 = scmp.eq.s32.totalorder %s36, 0
    %p120 = por %p118, %p119
    %p121 = scmp.ne.s32.totalorder %s109, %s110
    %p122 = scmp.eq.s32.totalorder %s37, 1
    %p123 = por %p121, %p122
    %p125 = scmp.ne.s32.totalorder %s110, %s124
    %p126 = scmp.eq.s32.totalorder %s37, 0
    %p127 = por %p125, %p126
    %s129 = sadd.s32 %s128, 1
    %p132 = scmp.eq.s32.totalorder %s31, 1
    %p133 = scmp.ne.s32.totalorder %s128, %s130
    %p134 = scmp.eq.s32.totalorder %s31, 0
    %p135 = por %p133, %p134
    %p136 = scmp.ne.s32.totalorder %s128, %s130
    %p137 = scmp.eq.s32.totalorder %s36, 1
    %p138 = por %p136, %p137
    %p139 = scmp.ne.s32.totalorder %s130, %s131
    %p140 = scmp.eq.s32.totalorder %s36, 0
    %p141 = por %p139, %p140
    %p142 = scmp.ne.s32.totalorder %s130, %s131
    %p143 = scmp.eq.s32.totalorder %s37, 1
    %p144 = por %p142, %p143
    %p146 = scmp.ne.s32.totalorder %s131, %s145
    %p147 = scmp.eq.s32.totalorder %s37, 0
    %p148 = por %p146, %p147
    %s150 = sadd.s32 %s149, 1
    %p153 = scmp.eq.s32.totalorder %s31, 1
    %p154 = scmp.ne.s32.totalorder %s149, %s151
    %p155 = scmp.eq.s32.totalorder %s31, 0
    %p156 = por %p154, %p155
    %p157 = scmp.ne.s32.totalorder %s149, %s151
    %p158 = scmp.eq.s32.totalorder %s36, 1
    %p159 = por %p157, %p158
    %p160 = scmp.ne.s32.totalorder %s151, %s152
    %p161 = scmp.eq.s32.totalorder %s36, 0
    %p162 = por %p160, %p161
    %p163 = scmp.ne.s32.totalorder %s151, %s152
    %p164 = scmp.eq.s32.totalorder %s37, 1
    %p165 = por %p163, %p164
    %p167 = scmp.ne.s32.totalorder %s152, %s166
    %p168 = scmp.eq.s32.totalorder %s37, 0
    %p169 = por %p167, %p168
    %s171 = sadd.s32 %s170, 1
    %p174 = scmp.eq.s32.totalorder %s31, 1
    %p175 = scmp.ne.s32.totalorder %s170, %s172
    %p176 = scmp.eq.s32.totalorder %s31, 0
    %p177 = por %p175, %p176
    %p178 = scmp.ne.s32.totalorder %s170, %s172
    %p179 = scmp.eq.s32.totalorder %s36, 1
    %p180 = por %p178, %p179
    %p181 = scmp.ne.s32.totalorder %s172, %s173
    %p182 = scmp.eq.s32.totalorder %s36, 0
    %p183 = por %p181, %p182
    %p184 = scmp.ne.s32.totalorder %s172, %s173
    %p185 = scmp.eq.s32.totalorder %s37, 1
    %p186 = por %p184, %p185
    %p188 = scmp.ne.s32.totalorder %s173, %s187
    %p189 = scmp.eq.s32.totalorder %s37, 0
    %p190 = por %p188, %p189
    %s192 = sadd.s32 %s191, 1
    %p195 = scmp.eq.s32.totalorder %s31, 1
    %p196 = scmp.ne.s32.totalorder %s191, %s193
    %p197 = scmp.eq.s32.totalorder %s31, 0
    %p198 = por %p196, %p197
    %p199 = scmp.ne.s32.totalorder %s191, %s193
    %p200 = scmp.eq.s32.totalorder %s36, 1
    %p201 = por %p199, %p200
    %p202 = scmp.ne.s32.totalorder %s193, %s194
    %p203 = scmp.eq.s32.totalorder %s36, 0
    %p204 = por %p202, %p203
    %p205 = scmp.ne.s32.totalorder %s193, %s194
    %p206 = scmp.eq.s32.totalorder %s37, 1
    %p207 = por %p205, %p206
    %p209 = scmp.ne.s32.totalorder %s194, %s208
    %p210 = scmp.eq.s32.totalorder %s37, 0
    %p211 = por %p209, %p210
    %s213 = sadd.s32 %s212, 1
    %p216 = scmp.eq.s32.totalorder %s31, 1
    %p217 = scmp.ne.s32.totalorder %s212, %s214
    %p218 = scmp.eq.s32.totalorder %s31, 0
    %p219 = por %p217, %p218
    %p220 = scmp.ne.s32.totalorder %s212, %s214
    %p221 = scmp.eq.s32.totalorder %s36, 1
    %p222 = por %p220, %p221
    %p223 = scmp.ne.s32.totalorder %s214, %s215
    %p224 = scmp.eq.s32.totalorder %s36, 0
    %p225 = por %p223, %p224
    %p226 = scmp.ne.s32.totalorder %s214, %s215
    %p227 = scmp.eq.s32.totalorder %s37, 1
    %p228 = por %p226, %p227
    %p230 = scmp.ne.s32.totalorder %s215, %s229
    %p231 = scmp.eq.s32.totalorder %s37, 0
    %p232 = por %p230, %p231
    %s234 = sadd.s32 %s233, 1
    %p237 = scmp.eq.s32.totalorder %s31, 1
    %p238 = scmp.ne.s32.totalorder %s233, %s235
    %p239 = scmp.eq.s32.totalorder %s31, 0
    %p240 = por %p238, %p239
    %p241 = scmp.ne.s32.totalorder %s233, %s235
    %p242 = scmp.eq.s32.totalorder %s36, 1
    %p243 = por %p241, %p242
    %p244 = scmp.ne.s32.totalorder %s235, %s236
    %p245 = scmp.eq.s32.totalorder %s36, 0
    %p246 = por %p244, %p245
    %p247 = scmp.ne.s32.totalorder %s235, %s236
    %p248 = scmp.eq.s32.totalorder %s37, 1
    %p249 = por %p247, %p248
    %p251 = scmp.ne.s32.totalorder %s236, %s250
    %p252 = scmp.eq.s32.totalorder %s37, 0
    %p253 = por %p251, %p252
    %s255 = sadd.s32 %s254, 1
    %p258 = scmp.eq.s32.totalorder %s31, 1
    %p259 = scmp.ne.s32.totalorder %s254, %s256
    %p260 = scmp.eq.s32.totalorder %s31, 0
    %p261 = por %p259, %p260
    %p262 = scmp.ne.s32.totalorder %s254, %s256
    %p263 = scmp.eq.s32.totalorder %s36, 1
    %p264 = por %p262, %p263
    %p265 = scmp.ne.s32.totalorder %s256, %s257
    %p266 = scmp.eq.s32.totalorder %s36, 0
    %p267 = por %p265, %p266
    %p268 = scmp.ne.s32.totalorder %s256, %s257
    %p269 = scmp.eq.s32.totalorder %s37, 1
    %p270 = por %p268, %p269
    %p272 = scmp.ne.s32.totalorder %s257, %s271
    %p273 = scmp.eq.s32.totalorder %s37, 0
    %p274 = por %p272, %p273
    %s276 = sadd.s32 %s275, 1
    %p279 = scmp.eq.s32.totalorder %s31, 1
    %p280 = scmp.ne.s32.totalorder %s275, %s277
    %p281 = scmp.eq.s32.totalorder %s31, 0
    %p282 = por %p280, %p281
    %p283 = scmp.ne.s32.totalorder %s275, %s277
    %p284 = scmp.eq.s32.totalorder %s36, 1
    %p285 = por %p283, %p284
    %p286 = scmp.ne.s32.totalorder %s277, %s278
    %p287 = scmp.eq.s32.totalorder %s36, 0
    %p288 = por %p286, %p287
    %p289 = scmp.ne.s32.totalorder %s277, %s278
    %p290 = scmp.eq.s32.totalorder %s37, 1
    %p291 = por %p289, %p290
    %p293 = scmp.ne.s32.totalorder %s278, %s292
    %p294 = scmp.eq.s32.totalorder %s37, 0
    %p295 = por %p293, %p294
    %s297 = sadd.s32 %s296, 1
    %p300 = scmp.eq.s32.totalorder %s31, 1
    %p301 = scmp.ne.s32.totalorder %s296, %s298
    %p302 = scmp.eq.s32.totalorder %s31, 0
    %p303 = por %p301, %p302
    %p304 = scmp.ne.s32.totalorder %s296, %s298
    %p305 = scmp.eq.s32.totalorder %s36, 1
    %p306 = por %p304, %p305
    %p307 = scmp.ne.s32.totalorder %s298, %s299
    %p308 = scmp.eq.s32.totalorder %s36, 0
    %p309 = por %p307, %p308
    %p310 = scmp.ne.s32.totalorder %s298, %s299
    %p311 = scmp.eq.s32.totalorder %s37, 1
    %p312 = por %p310, %p311
    %p314 = scmp.ne.s32.totalorder %s299, %s313
    %p315 = scmp.eq.s32.totalorder %s37, 0
    %p316 = por %p314, %p315
    %s318 = sadd.s32 %s317, 1
    %p321 = scmp.eq.s32.totalorder %s31, 1
    %p322 = scmp.ne.s32.totalorder %s317, %s319
    %p323 = scmp.eq.s32.totalorder %s31, 0
    %p324 = por %p322, %p323
    %p325 = scmp.ne.s32.totalorder %s317, %s319
    %p326 = scmp.eq.s32.totalorder %s36, 1
    %p327 = por %p325, %p326
    %p328 = scmp.ne.s32.totalorder %s319, %s320
    %p329 = scmp.eq.s32.totalorder %s36, 0
    %p330 = por %p328, %p329
    %p331 = scmp.ne.s32.totalorder %s319, %s320
    %p332 = scmp.eq.s32.totalorder %s37, 1
    %p333 = por %p331, %p332
    %p335 = scmp.ne.s32.totalorder %s320, %s334
    %p336 = scmp.eq.s32.totalorder %s37, 0
    %p337 = por %p335, %p336
    %s339 = sadd.s32 %s338, 1
    %p342 = scmp.eq.s32.totalorder %s31, 1
    %p343 = scmp.ne.s32.totalorder %s338, %s340
    %p344 = scmp.eq.s32.totalorder %s31, 0
    %p345 = por %p343, %p344
    %p346 = scmp.ne.s32.totalorder %s338, %s340
    %p347 = scmp.eq.s32.totalorder %s36, 1
    %p348 = por %p346, %p347
    %p349 = scmp.ne.s32.totalorder %s340, %s341
    %p350 = scmp.eq.s32.totalorder %s36, 0
    %p351 = por %p349, %p350
    %p352 = scmp.ne.s32.totalorder %s340, %s341
    %p353 = scmp.eq.s32.totalorder %s37, 1
    %p354 = por %p352, %p353
    %p356 = scmp.ne.s32.totalorder %s341, %s355
    %p357 = scmp.eq.s32.totalorder %s37, 0
    %p358 = por %p356, %p357
    %s360 = sadd.s32 %s359, 1
    %p363 = scmp.eq.s32.totalorder %s31, 1
    %p364 = scmp.ne.s32.totalorder %s359, %s361
    %p365 = scmp.eq.s32.totalorder %s31, 0
    %p366 = por %p364, %p365
    %p367 = scmp.ne.s32.totalorder %s359, %s361
    %p368 = scmp.eq.s32.totalorder %s36, 1
    %p369 = por %p367, %p368
    %p370 = scmp.ne.s32.totalorder %s361, %s362
    %p371 = scmp.eq.s32.totalorder %s36, 0
    %p372 = por %p370, %p371
    %p373 = scmp.ne.s32.totalorder %s361, %s362
    %p374 = scmp.eq.s32.totalorder %s37, 1
    %p375 = por %p373, %p374
    %p377 = scmp.ne.s32.totalorder %s362, %s376
    %p378 = scmp.eq.s32.totalorder %s37, 0
    %p379 = por %p377, %p378
    %s381 = sadd.s32 %s380, 1
    %p384 = scmp.eq.s32.totalorder %s31, 1
    %p385 = scmp.ne.s32.totalorder %s380, %s382
    %p386 = scmp.eq.s32.totalorder %s31, 0
    %p387 = por %p385, %p386
    %p388 = scmp.ne.s32.totalorder %s380, %s382
    %p389 = scmp.eq.s32.totalorder %s36, 1
    %p390 = por %p388, %p389
    %p391 = scmp.ne.s32.totalorder %s382, %s383
    %p392 = scmp.eq.s32.totalorder %s36, 0
    %p393 = por %p391, %p392
    %p394 = scmp.ne.s32.totalorder %s382, %s383
    %p395 = scmp.eq.s32.totalorder %s37, 1
    %p396 = por %p394, %p395
    %p398 = scmp.ne.s32.totalorder %s383, %s397
    %p399 = scmp.eq.s32.totalorder %s37, 0
    %p400 = por %p398, %p399
    %s402 = sadd.s32 %s401, 1
    %p405 = scmp.eq.s32.totalorder %s31, 1
    %p406 = scmp.ne.s32.totalorder %s401, %s403
    %p407 = scmp.eq.s32.totalorder %s31, 0
    %p408 = por %p406, %p407
    %p409 = scmp.ne.s32.totalorder %s401, %s403
    %p410 = scmp.eq.s32.totalorder %s36, 1
    %p411 = por %p409, %p410
    %p412 = scmp.ne.s32.totalorder %s403, %s404
    %p413 = scmp.eq.s32.totalorder %s36, 0
    %p414 = por %p412, %p413
    %p415 = scmp.ne.s32.totalorder %s403, %s404
    %p416 = scmp.eq.s32.totalorder %s37, 1
    %p417 = por %p415, %p416
    %p419 = scmp.ne.s32.totalorder %s404, %s418
    %p420 = scmp.eq.s32.totalorder %s37, 0
    %p421 = por %p419, %p420
    %s423 = sadd.s32 %s422, 1
    %p426 = scmp.eq.s32.totalorder %s31, 1
    %p427 = scmp.ne.s32.totalorder %s422, %s424
    %p428 = scmp.eq.s32.totalorder %s31, 0
    %p429 = por %p427, %p428
    %p430 = scmp.ne.s32.totalorder %s422, %s424
    %p431 = scmp.eq.s32.totalorder %s36, 1
    %p432 = por %p430, %p431
    %p433 = scmp.ne.s32.totalorder %s424, %s425
    %p434 = scmp.eq.s32.totalorder %s36, 0
    %p435 = por %p433, %p434
    %p436 = scmp.ne.s32.totalorder %s424, %s425
    %p437 = scmp.eq.s32.totalorder %s37, 1
    %p438 = por %p436, %p437
    %p440 = scmp.ne.s32.totalorder %s425, %s439
    %p441 = scmp.eq.s32.totalorder %s37, 0
    %p442 = por %p440, %p441
    %s444 = sadd.s32 %s443, 1
    %p447 = scmp.eq.s32.totalorder %s31, 1
    %p448 = scmp.ne.s32.totalorder %s443, %s445
    %p449 = scmp.eq.s32.totalorder %s31, 0
    %p450 = por %p448, %p449
    %p451 = scmp.ne.s32.totalorder %s443, %s445
    %p452 = scmp.eq.s32.totalorder %s36, 1
    %p453 = por %p451, %p452
    %p454 = scmp.ne.s32.totalorder %s445, %s446
    %p455 = scmp.eq.s32.totalorder %s36, 0
    %p456 = por %p454, %p455
    %p457 = scmp.ne.s32.totalorder %s445, %s446
    %p458 = scmp.eq.s32.totalorder %s37, 1
    %p459 = por %p457, %p458
    %p461 = scmp.ne.s32.totalorder %s446, %s460
    %p462 = scmp.eq.s32.totalorder %s37, 0
    %p463 = por %p461, %p462
    %s465 = sadd.s32 %s464, 1
    %p468 = scmp.eq.s32.totalorder %s31, 1
    %p469 = scmp.ne.s32.totalorder %s464, %s466
    %p470 = scmp.eq.s32.totalorder %s31, 0
    %p471 = por %p469, %p470
    %p472 = scmp.ne.s32.totalorder %s464, %s466
    %p473 = scmp.eq.s32.totalorder %s36, 1
    %p474 = por %p472, %p473
    %p475 = scmp.ne.s32.totalorder %s466, %s467
    %p476 = scmp.eq.s32.totalorder %s36, 0
    %p477 = por %p475, %p476
    %p478 = scmp.ne.s32.totalorder %s466, %s467
    %p479 = scmp.eq.s32.totalorder %s37, 1
    %p480 = por %p478, %p479
    %p482 = scmp.ne.s32.totalorder %s467, %s481
    %p483 = scmp.eq.s32.totalorder %s37, 0
    %p484 = por %p482, %p483
    %s486 = sadd.s32 %s485, 1
    %p489 = scmp.eq.s32.totalorder %s31, 1
    %p490 = scmp.ne.s32.totalorder %s485, %s487
    %p491 = scmp.eq.s32.totalorder %s31, 0
    %p492 = por %p490, %p491
    %p493 = scmp.ne.s32.totalorder %s485, %s487
    %p494 = scmp.eq.s32.totalorder %s36, 1
    %p495 = por %p493, %p494
    %p496 = scmp.ne.s32.totalorder %s487, %s488
    %p497 = scmp.eq.s32.totalorder %s36, 0
    %p498 = por %p496, %p497
    %p499 = scmp.ne.s32.totalorder %s487, %s488
    %p500 = scmp.eq.s32.totalorder %s37, 1
    %p501 = por %p499, %p500
    %p503 = scmp.ne.s32.totalorder %s488, %s502
    %p504 = scmp.eq.s32.totalorder %s37, 0
    %p505 = por %p503, %p504
    %s507 = sadd.s32 %s506, 1
    %p510 = scmp.eq.s32.totalorder %s31, 1
    %p511 = scmp.ne.s32.totalorder %s506, %s508
    %p512 = scmp.eq.s32.totalorder %s31, 0
    %p513 = por %p511, %p512
    %p514 = scmp.ne.s32.totalorder %s506, %s508
    %p515 = scmp.eq.s32.totalorder %s36, 1
    %p516 = por %p514, %p515
    %p517 = scmp.ne.s32.totalorder %s508, %s509
    %p518 = scmp.eq.s32.totalorder %s36, 0
    %p519 = por %p517, %p518
    %p520 = scmp.ne.s32.totalorder %s508, %s509
    %p521 = scmp.eq.s32.totalorder %s37, 1
    %p522 = por %p520, %p521
    %p524 = scmp.ne.s32.totalorder %s509, %s523
    %p525 = scmp.eq.s32.totalorder %s37, 0
    %p526 = por %p524, %p525
    %s528 = sadd.s32 %s527, 1
    %p531 = scmp.eq.s32.totalorder %s31, 1
    %p532 = scmp.ne.s32.totalorder %s527, %s529
    %p533 = scmp.eq.s32.totalorder %s31, 0
    %p534 = por %p532, %p533
    %p535 = scmp.ne.s32.totalorder %s527, %s529
    %p536 = scmp.eq.s32.totalorder %s36, 1
    %p537 = por %p535, %p536
    %p538 = scmp.ne.s32.totalorder %s529, %s530
    %p539 = scmp.eq.s32.totalorder %s36, 0
    %p540 = por %p538, %p539
    %p541 = scmp.ne.s32.totalorder %s529, %s530
    %p542 = scmp.eq.s32.totalorder %s37, 1
    %p543 = por %p541, %p542
    %p545 = scmp.ne.s32.totalorder %s530, %s544
    %p546 = scmp.eq.s32.totalorder %s37, 0
    %p547 = por %p545, %p546
    %s549 = sadd.s32 %s548, 1
    %p552 = scmp.eq.s32.totalorder %s31, 1
    %p553 = scmp.ne.s32.totalorder %s548, %s550
    %p554 = scmp.eq.s32.totalorder %s31, 0
    %p555 = por %p553, %p554
    %p556 = scmp.ne.s32.totalorder %s548, %s550
    %p557 = scmp.eq.s32.totalorder %s36, 1
    %p558 = por %p556, %p557
    %p559 = scmp.ne.s32.totalorder %s550, %s551
    %p560 = scmp.eq.s32.totalorder %s36, 0
    %p561 = por %p559, %p560
    %p562 = scmp.ne.s32.totalorder %s550, %s551
    %p563 = scmp.eq.s32.totalorder %s37, 1
    %p564 = por %p562, %p563
    %p566 = scmp.ne.s32.totalorder %s551, %s565
    %p567 = scmp.eq.s32.totalorder %s37, 0
    %p568 = por %p566, %p567
    %s569 = ssub.s32 %s31, %s38
    %p570 = scmp.eq.s32.totalorder %s569, 0
    %s572 = sadd.s32 %s571, 1
    %s573 = scalar_select %p570, %s571, %s572
    %p576 = pneg %p570
    %p577 = scmp.eq.s32.totalorder %s31, 1
    %p578 = por %p576, %p577
    %p579 = scmp.ne.s32.totalorder %s571, %s574
    %p580 = scmp.eq.s32.totalorder %s31, 0
    %p581 = por %p579, %p580
    %p582 = scmp.ne.s32.totalorder %s571, %s574
    %p583 = scmp.eq.s32.totalorder %s36, 1
    %p584 = por %p582, %p583
    %p585 = scmp.ne.s32.totalorder %s574, %s575
    %p586 = scmp.eq.s32.totalorder %s36, 0
    %p587 = por %p585, %p586
    %p588 = scmp.ne.s32.totalorder %s574, %s575
    %p589 = scmp.eq.s32.totalorder %s37, 1
    %p590 = por %p588, %p589
    %p592 = scmp.ne.s32.totalorder %s575, %s591
    %p593 = scmp.eq.s32.totalorder %s37, 0
    %p594 = por %p592, %p593
    %p595 = scmp.le.s32.totalorder 1, %s31
    %p596 = scmp.lt.s32.totalorder %s31, 3
    %p597 = pnand %p595, %p596
    %p598 = pneg %p597
    // Predicated region
    $region9: #{tpu_custom_call.1} parent=5 // pred_check
      _
    $region10: #{tpu_custom_call.1} parent=5 // pred_check_branch
      %600 = sbr.rel (%p597) target = $region12
    $region11: #{tpu_custom_call.1} parent=5 // pred_region
      %s601 = ssub.s32 %s31, 1
      // Predicated region
      $region13: #{tpu_custom_call.1} parent=11 // pred_check
        %p602 = pneg %p78
      $region14: #{tpu_custom_call.1} parent=11 // pred_check_branch
        %604 = sbr.rel (%p602) target = $region16
      $region15: #{tpu_custom_call.1} parent=11 // pred_region
        _
      $region16: #{tpu_custom_call.1} parent=11 // pred_fallthru
        _
      // Predicated region
      $region17: #{tpu_custom_call.1} parent=11 // pred_check
        %p605 = pneg %p99
      $region18: #{tpu_custom_call.1} parent=11 // pred_check_branch
        %607 = sbr.rel (%p605) target = $region20
      $region19: #{tpu_custom_call.1} parent=11 // pred_region
        _
      $region20: #{tpu_custom_call.1} parent=11 // pred_fallthru
        _
      // Predicated region
      $region21: #{tpu_custom_call.1} parent=11 // pred_check
        %p608 = pneg %p120
      $region22: #{tpu_custom_call.1} parent=11 // pred_check_branch
        %610 = sbr.rel (%p608) target = $region24
      $region23: #{tpu_custom_call.1} parent=11 // pred_region
        _
      $region24: #{tpu_custom_call.1} parent=11 // pred_fallthru
        _
      // Predicated region
      $region25: #{tpu_custom_call.1} parent=11 // pred_check
        %p611 = pneg %p141
      $region26: #{tpu_custom_call.1} parent=11 // pred_check_branch
        %613 = sbr.rel (%p611) target = $region28
      $region27: #{tpu_custom_call.1} parent=11 // pred_region
        _
      $region28: #{tpu_custom_call.1} parent=11 // pred_fallthru
        _
      // Predicated region
      $region29: #{tpu_custom_call.1} parent=11 // pred_check
        %p614 = pneg %p162
      $region30: #{tpu_custom_call.1} parent=11 // pred_check_branch
        %616 = sbr.rel (%p614) target = $region32
      $region31: #{tpu_custom_call.1} parent=11 // pred_region
        _
      $region32: #{tpu_custom_call.1} parent=11 // pred_fallthru
        _
      // Predicated region
      $region33: #{tpu_custom_call.1} parent=11 // pred_check
        %p617 = pneg %p183
      $region34: #{tpu_custom_call.1} parent=11 // pred_check_branch
        %619 = sbr.rel (%p617) target = $region36
      $region35: #{tpu_custom_call.1} parent=11 // pred_region
        _
      $region36: #{tpu_custom_call.1} parent=11 // pred_fallthru
        _
      // Predicated region
      $region37: #{tpu_custom_call.1} parent=11 // pred_check
        %p620 = pneg %p204
      $region38: #{tpu_custom_call.1} parent=11 // pred_check_branch
        %622 = sbr.rel (%p620) target = $region40
      $region39: #{tpu_custom_call.1} parent=11 // pred_region
        _
      $region40: #{tpu_custom_call.1} parent=11 // pred_fallthru
        _
      // Predicated region
      $region41: #{tpu_custom_call.1} parent=11 // pred_check
        %p623 = pneg %p225
      $region42: #{tpu_custom_call.1} parent=11 // pred_check_branch
        %625 = sbr.rel (%p623) target = $region44
      $region43: #{tpu_custom_call.1} parent=11 // pred_region
        _
      $region44: #{tpu_custom_call.1} parent=11 // pred_fallthru
        _
      // Predicated region
      $region45: #{tpu_custom_call.1} parent=11 // pred_check
        %p626 = pneg %p246
      $region46: #{tpu_custom_call.1} parent=11 // pred_check_branch
        %628 = sbr.rel (%p626) target = $region48
      $region47: #{tpu_custom_call.1} parent=11 // pred_region
        _
      $region48: #{tpu_custom_call.1} parent=11 // pred_fallthru
        _
      // Predicated region
      $region49: #{tpu_custom_call.1} parent=11 // pred_check
        %p629 = pneg %p267
      $region50: #{tpu_custom_call.1} parent=11 // pred_check_branch
        %631 = sbr.rel (%p629) target = $region52
      $region51: #{tpu_custom_call.1} parent=11 // pred_region
        _
      $region52: #{tpu_custom_call.1} parent=11 // pred_fallthru
        _
      // Predicated region
      $region53: #{tpu_custom_call.1} parent=11 // pred_check
        %p632 = pneg %p288
      $region54: #{tpu_custom_call.1} parent=11 // pred_check_branch
        %634 = sbr.rel (%p632) target = $region56
      $region55: #{tpu_custom_call.1} parent=11 // pred_region
        _
      $region56: #{tpu_custom_call.1} parent=11 // pred_fallthru
        _
      // Predicated region
      $region57: #{tpu_custom_call.1} parent=11 // pred_check
        %p635 = pneg %p309
      $region58: #{tpu_custom_call.1} parent=11 // pred_check_branch
        %637 = sbr.rel (%p635) target = $region60
      $region59: #{tpu_custom_call.1} parent=11 // pred_region
        _
      $region60: #{tpu_custom_call.1} parent=11 // pred_fallthru
        _
      // Predicated region
      $region61: #{tpu_custom_call.1} parent=11 // pred_check
        %p638 = pneg %p330
      $region62: #{tpu_custom_call.1} parent=11 // pred_check_branch
        %640 = sbr.rel (%p638) target = $region64
      $region63: #{tpu_custom_call.1} parent=11 // pred_region
        _
      $region64: #{tpu_custom_call.1} parent=11 // pred_fallthru
        _
      // Predicated region
      $region65: #{tpu_custom_call.1} parent=11 // pred_check
        %p641 = pneg %p351
      $region66: #{tpu_custom_call.1} parent=11 // pred_check_branch
        %643 = sbr.rel (%p641) target = $region68
      $region67: #{tpu_custom_call.1} parent=11 // pred_region
        _
      $region68: #{tpu_custom_call.1} parent=11 // pred_fallthru
        _
      // Predicated region
      $region69: #{tpu_custom_call.1} parent=11 // pred_check
        %p644 = pneg %p372
      $region70: #{tpu_custom_call.1} parent=11 // pred_check_branch
        %646 = sbr.rel (%p644) target = $region72
      $region71: #{tpu_custom_call.1} parent=11 // pred_region
        _
      $region72: #{tpu_custom_call.1} parent=11 // pred_fallthru
        _
      // Predicated region
      $region73: #{tpu_custom_call.1} parent=11 // pred_check
        %p647 = pneg %p393
      $region74: #{tpu_custom_call.1} parent=11 // pred_check_branch
        %649 = sbr.rel (%p647) target = $region76
      $region75: #{tpu_custom_call.1} parent=11 // pred_region
        _
      $region76: #{tpu_custom_call.1} parent=11 // pred_fallthru
        _
      // Predicated region
      $region77: #{tpu_custom_call.1} parent=11 // pred_check
        %p650 = pneg %p414
      $region78: #{tpu_custom_call.1} parent=11 // pred_check_branch
        %652 = sbr.rel (%p650) target = $region80
      $region79: #{tpu_custom_call.1} parent=11 // pred_region
        _
      $region80: #{tpu_custom_call.1} parent=11 // pred_fallthru
        _
      // Predicated region
      $region81: #{tpu_custom_call.1} parent=11 // pred_check
        %p653 = pneg %p435
      $region82: #{tpu_custom_call.1} parent=11 // pred_check_branch
        %655 = sbr.rel (%p653) target = $region84
      $region83: #{tpu_custom_call.1} parent=11 // pred_region
        _
      $region84: #{tpu_custom_call.1} parent=11 // pred_fallthru
        _
      // Predicated region
      $region85: #{tpu_custom_call.1} parent=11 // pred_check
        %p656 = pneg %p456
      $region86: #{tpu_custom_call.1} parent=11 // pred_check_branch
        %658 = sbr.rel (%p656) target = $region88
      $region87: #{tpu_custom_call.1} parent=11 // pred_region
        _
      $region88: #{tpu_custom_call.1} parent=11 // pred_fallthru
        _
      // Predicated region
      $region89: #{tpu_custom_call.1} parent=11 // pred_check
        %p659 = pneg %p477
      $region90: #{tpu_custom_call.1} parent=11 // pred_check_branch
        %661 = sbr.rel (%p659) target = $region92
      $region91: #{tpu_custom_call.1} parent=11 // pred_region
        _
      $region92: #{tpu_custom_call.1} parent=11 // pred_fallthru
        _
      // Predicated region
      $region93: #{tpu_custom_call.1} parent=11 // pred_check
        %p662 = pneg %p498
      $region94: #{tpu_custom_call.1} parent=11 // pred_check_branch
        %664 = sbr.rel (%p662) target = $region96
      $region95: #{tpu_custom_call.1} parent=11 // pred_region
        _
      $region96: #{tpu_custom_call.1} parent=11 // pred_fallthru
        _
      // Predicated region
      $region97: #{tpu_custom_call.1} parent=11 // pred_check
        %p665 = pneg %p519
      $region98: #{tpu_custom_call.1} parent=11 // pred_check_branch
        %667 = sbr.rel (%p665) target = $region100
      $region99: #{tpu_custom_call.1} parent=11 // pred_region
        _
      $region100: #{tpu_custom_call.1} parent=11 // pred_fallthru
        _
      // Predicated region
      $region101: #{tpu_custom_call.1} parent=11 // pred_check
        %p668 = pneg %p540
      $region102: #{tpu_custom_call.1} parent=11 // pred_check_branch
        %670 = sbr.rel (%p668) target = $region104
      $region103: #{tpu_custom_call.1} parent=11 // pred_region
        _
      $region104: #{tpu_custom_call.1} parent=11 // pred_fallthru
        _
      // Predicated region
      $region105: #{tpu_custom_call.1} parent=11 // pred_check
        %p671 = pneg %p561
      $region106: #{tpu_custom_call.1} parent=11 // pred_check_branch
        %673 = sbr.rel (%p671) target = $region108
      $region107: #{tpu_custom_call.1} parent=11 // pred_region
        _
      $region108: #{tpu_custom_call.1} parent=11 // pred_fallthru
        _
    $region12: #{tpu_custom_call.1} parent=5 // pred_fallthru
      _
    %p674 = scmp.lt.s32.totalorder %s31, 2
    // Predicated region
    $region109: #{tpu_custom_call.1} parent=5 // pred_check
      %p675 = pneg %p674
    $region110: #{tpu_custom_call.1} parent=5 // pred_check_branch
      %677 = sbr.rel (%p675) target = $region112
    $region111: #{tpu_custom_call.1} parent=5 // pred_region
      // Predicated region
      $region113: #{tpu_custom_call.1} parent=111 // pred_check
        %p678 = pneg %p51
      $region114: #{tpu_custom_call.1} parent=111 // pred_check_branch
        %680 = sbr.rel (%p678) target = $region116
      $region115: #{tpu_custom_call.1} parent=111 // pred_region
        %s681 = smul.u32 64, %s31
        %p682 = scmp.lt.s32.totalorder %s681, 127
        %s683 = scalar_select %p682, %s681, 127
        %s684 = smul.addr %s683, 8
        %s685 = scalar_lea.vmem %s0, %s684
        %s686 = smul.u32 64, %s31
      $region116: #{tpu_custom_call.1} parent=111 // pred_fallthru
        _
    $region112: #{tpu_custom_call.1} parent=5 // pred_fallthru
      _
    %p687 = scmp.le.s32.totalorder 1, %s31
    %p688 = scmp.lt.s32.totalorder %s31, 3
    %p689 = pnand %p687, %p688
    %p690 = pneg %p689
    // Predicated region
    $region117: #{tpu_custom_call.1} parent=5 // pred_check
      _
    $region118: #{tpu_custom_call.1} parent=5 // pred_check_branch
      %692 = sbr.rel (%p689) target = $region120
    $region119: #{tpu_custom_call.1} parent=5 // pred_region
      %s693 = ssub.s32 %s31, 1
      %s694 = smul.u32 64, %s36
      %p695 = scmp.lt.s32.totalorder %s694, 127
      %s696 = scalar_select %p695, %s694, 127
      %s697 = smul.addr %s696, 8
      %s698 = scalar_lea.vmem %s0, %s697
      %p699 = pneg %p57
      %p700 = pneg %p54
      %p701 = pneg %p78
      %p702 = pneg %p75
      %p703 = pneg %p99
      %p704 = pneg %p96
      %p705 = pneg %p120
      %p706 = pneg %p117
      %p707 = pneg %p141
      %p708 = pneg %p138
      %p709 = pneg %p162
      %p710 = pneg %p159
      %p711 = pneg %p183
      %p712 = pneg %p180
      %p713 = pneg %p204
      %p714 = pneg %p201
      %p715 = pneg %p225
      %p716 = pneg %p222
      %p717 = pneg %p246
      %p718 = pneg %p243
      %p719 = pneg %p267
      %p720 = pneg %p264
      %p721 = pneg %p288
      %p722 = pneg %p285
      %p723 = pneg %p309
      %p724 = pneg %p306
      %p725 = pneg %p330
      %p726 = pneg %p327
      %p727 = pneg %p351
      %p728 = pneg %p348
      %p729 = pneg %p372
      %p730 = pneg %p369
      %p731 = pneg %p393
      %p732 = pneg %p390
      %p733 = pneg %p414
      %p734 = pneg %p411
      %p735 = pneg %p435
      %p736 = pneg %p432
      %p737 = pneg %p456
      %p738 = pneg %p453
      %p739 = pneg %p477
      %p740 = pneg %p474
      %p741 = pneg %p498
      %p742 = pneg %p495
      %p743 = pneg %p519
      %p744 = pneg %p516
      %p745 = pneg %p540
      %p746 = pneg %p537
      %p747 = pneg %p561
      %p748 = pneg %p558
      %p749 = pneg %p587
      %p750 = pneg %p584
      %s751 = smul.u32 64, %s36
      %p752 = scmp.lt.s32.totalorder %s751, 127
      %s753 = scalar_select %p752, %s751, 127
      %s754 = smul.addr %s753, 8
      %s755 = scalar_lea.vmem %s25, %s754
      %s756 = smul.u32 64, %s36
      %p757 = scmp.lt.s32.totalorder %s756, 127
      %s758 = scalar_select %p757, %s756, 127
      %s759 = smul.addr %s758, 8
      %s760 = scalar_lea.vmem %s0, %s759
      %s761 = smul.u32 64, %s36
      %s762 = smul.u32 64, %s36
      %p763 = scmp.lt.s32.totalorder %s762, 127
      %s764 = scalar_select %p763, %s762, 127
      %s765 = smul.addr %s764, 8
      %s766 = scalar_lea.vmem %s25, %s765
      %s767 = smul.u32 64, %s36
      %v769 = vld [vmem:[%s760] sm:$0xff]
      %v770 = vld [vmem:[%s760 + $0x8] sm:$0xff]
      %v771 = vld [vmem:[%s760 + $0x10] sm:$0xff]
      %v772 = vld [vmem:[%s760 + $0x18] sm:$0xff]
      %v773 = vld [vmem:[%s760 + $0x20] sm:$0xff]
      %v774 = vld [vmem:[%s760 + $0x28] sm:$0xff]
      %v775 = vld [vmem:[%s760 + $0x30] sm:$0xff]
      %v776 = vld [vmem:[%s760 + $0x38] sm:$0xff]
      %v777 = vld [vmem:[%s760 + $0x40] sm:$0xff]
      %v778 = vld [vmem:[%s760 + $0x48] sm:$0xff]
      %v779 = vld [vmem:[%s760 + $0x50] sm:$0xff]
      %v780 = vld [vmem:[%s760 + $0x58] sm:$0xff]
      %v781 = vld [vmem:[%s760 + $0x60] sm:$0xff]
      %v782 = vld [vmem:[%s760 + $0x68] sm:$0xff]
      %v783 = vld [vmem:[%s760 + $0x70] sm:$0xff]
      %v784 = vld [vmem:[%s760 + $0x78] sm:$0xff]
      %v785 = vld [vmem:[%s760 + $0x80] sm:$0xff]
      %v786 = vld [vmem:[%s760 + $0x88] sm:$0xff]
      %v787 = vld [vmem:[%s760 + $0x90] sm:$0xff]
      %v788 = vld [vmem:[%s760 + $0x98] sm:$0xff]
      %v789 = vld [vmem:[%s760 + $0xa0] sm:$0xff]
      %v790 = vld [vmem:[%s760 + $0xa8] sm:$0xff]
      %v791 = vld [vmem:[%s760 + $0xb0] sm:$0xff]
      %v792 = vld [vmem:[%s760 + $0xb8] sm:$0xff]
      %v793 = vld [vmem:[%s760 + $0xc0] sm:$0xff]
      %v794 = vld [vmem:[%s760 + $0xc8] sm:$0xff]
      %v795 = vld [vmem:[%s760 + $0xd0] sm:$0xff]
      %v796 = vld [vmem:[%s760 + $0xd8] sm:$0xff]
      %v797 = vld [vmem:[%s760 + $0xe0] sm:$0xff]
      %v798 = vld [vmem:[%s760 + $0xe8] sm:$0xff]
      %v799 = vld [vmem:[%s760 + $0xf0] sm:$0xff]
      %v800 = vld [vmem:[%s760 + $0xf8] sm:$0xff]
      %v801 = vld [vmem:[%s760 + $0x100] sm:$0xff]
      %v802 = vld [vmem:[%s760 + $0x108] sm:$0xff]
      %v803 = vld [vmem:[%s760 + $0x110] sm:$0xff]
      %v804 = vld [vmem:[%s760 + $0x118] sm:$0xff]
      %v805 = vld [vmem:[%s760 + $0x120] sm:$0xff]
      %v806 = vld [vmem:[%s760 + $0x128] sm:$0xff]
      %v807 = vld [vmem:[%s760 + $0x130] sm:$0xff]
      %v808 = vld [vmem:[%s760 + $0x138] sm:$0xff]
      %v809 = vld [vmem:[%s760 + $0x140] sm:$0xff]
      %v810 = vld [vmem:[%s760 + $0x148] sm:$0xff]
      %v811 = vld [vmem:[%s760 + $0x150] sm:$0xff]
      %v812 = vld [vmem:[%s760 + $0x158] sm:$0xff]
      %v813 = vld [vmem:[%s760 + $0x160] sm:$0xff]
      %v814 = vld [vmem:[%s760 + $0x168] sm:$0xff]
      %v815 = vld [vmem:[%s760 + $0x170] sm:$0xff]
      %v816 = vld [vmem:[%s760 + $0x178] sm:$0xff]
      %v817 = vld [vmem:[%s760 + $0x180] sm:$0xff]
      %v818 = vld [vmem:[%s760 + $0x188] sm:$0xff]
      %v819 = vld [vmem:[%s760 + $0x190] sm:$0xff]
      %v820 = vld [vmem:[%s760 + $0x198] sm:$0xff]
      %v821 = vld [vmem:[%s760 + $0x1a0] sm:$0xff]
      %v822 = vld [vmem:[%s760 + $0x1a8] sm:$0xff]
      %v823 = vld [vmem:[%s760 + $0x1b0] sm:$0xff]
      %v824 = vld [vmem:[%s760 + $0x1b8] sm:$0xff]
      %v825 = vld [vmem:[%s760 + $0x1c0] sm:$0xff]
      %v826 = vld [vmem:[%s760 + $0x1c8] sm:$0xff]
      %v827 = vld [vmem:[%s760 + $0x1d0] sm:$0xff]
      %v828 = vld [vmem:[%s760 + $0x1d8] sm:$0xff]
      %v829 = vld [vmem:[%s760 + $0x1e0] sm:$0xff]
      %v830 = vld [vmem:[%s760 + $0x1e8] sm:$0xff]
      %v831 = vld [vmem:[%s760 + $0x1f0] sm:$0xff]
      %v832 = vld [vmem:[%s760 + $0x1f8] sm:$0xff]
      %v833 = vld [vmem:[%s1] sm:$0x7]
      %v834 = vld [vmem:[%s2] sm:$0x1]
      %836 = vset.pattern.permute.xlu0 0
      %837 = vperm.xlu0 %836, %v769
      %v838 = vpop.permute.xlu0 %837
      %841 = vset.pattern.permute.xlu0 0
      %842 = vperm.xlu0 %841, %v770
      %v843 = vpop.permute.xlu0 %842
      %846 = vset.pattern.permute.xlu0 0
      %847 = vperm.xlu0 %846, %v771
      %v848 = vpop.permute.xlu0 %847
      %851 = vset.pattern.permute.xlu0 0
      %852 = vperm.xlu0 %851, %v772
      %v853 = vpop.permute.xlu0 %852
      %856 = vset.pattern.permute.xlu0 0
      %857 = vperm.xlu0 %856, %v773
      %v858 = vpop.permute.xlu0 %857
      %861 = vset.pattern.permute.xlu0 0
      %862 = vperm.xlu0 %861, %v774
      %v863 = vpop.permute.xlu0 %862
      %866 = vset.pattern.permute.xlu0 0
      %867 = vperm.xlu0 %866, %v775
      %v868 = vpop.permute.xlu0 %867
      %871 = vset.pattern.permute.xlu0 0
      %872 = vperm.xlu0 %871, %v776
      %v873 = vpop.permute.xlu0 %872
      %876 = vset.pattern.permute.xlu0 0
      %877 = vperm.xlu0 %876, %v777
      %v878 = vpop.permute.xlu0 %877
      %881 = vset.pattern.permute.xlu0 0
      %882 = vperm.xlu0 %881, %v778
      %v883 = vpop.permute.xlu0 %882
      %886 = vset.pattern.permute.xlu0 0
      %887 = vperm.xlu0 %886, %v779
      %v888 = vpop.permute.xlu0 %887
      %891 = vset.pattern.permute.xlu0 0
      %892 = vperm.xlu0 %891, %v780
      %v893 = vpop.permute.xlu0 %892
      %896 = vset.pattern.permute.xlu0 0
      %897 = vperm.xlu0 %896, %v781
      %v898 = vpop.permute.xlu0 %897
      %901 = vset.pattern.permute.xlu0 0
      %902 = vperm.xlu0 %901, %v782
      %v903 = vpop.permute.xlu0 %902
      %906 = vset.pattern.permute.xlu0 0
      %907 = vperm.xlu0 %906, %v783
      %v908 = vpop.permute.xlu0 %907
      %911 = vset.pattern.permute.xlu0 0
      %912 = vperm.xlu0 %911, %v784
      %v913 = vpop.permute.xlu0 %912
      %916 = vset.pattern.permute.xlu0 0
      %917 = vperm.xlu0 %916, %v785
      %v918 = vpop.permute.xlu0 %917
      %921 = vset.pattern.permute.xlu0 0
      %922 = vperm.xlu0 %921, %v786
      %v923 = vpop.permute.xlu0 %922
      %926 = vset.pattern.permute.xlu0 0
      %927 = vperm.xlu0 %926, %v787
      %v928 = vpop.permute.xlu0 %927
      %931 = vset.pattern.permute.xlu0 0
      %932 = vperm.xlu0 %931, %v788
      %v933 = vpop.permute.xlu0 %932
      %936 = vset.pattern.permute.xlu0 0
      %937 = vperm.xlu0 %936, %v789
      %v938 = vpop.permute.xlu0 %937
      %941 = vset.pattern.permute.xlu0 0
      %942 = vperm.xlu0 %941, %v790
      %v943 = vpop.permute.xlu0 %942
      %946 = vset.pattern.permute.xlu0 0
      %947 = vperm.xlu0 %946, %v791
      %v948 = vpop.permute.xlu0 %947
      %951 = vset.pattern.permute.xlu0 0
      %952 = vperm.xlu0 %951, %v792
      %v953 = vpop.permute.xlu0 %952
      %956 = vset.pattern.permute.xlu0 0
      %957 = vperm.xlu0 %956, %v793
      %v958 = vpop.permute.xlu0 %957
      %961 = vset.pattern.permute.xlu0 0
      %962 = vperm.xlu0 %961, %v794
      %v963 = vpop.permute.xlu0 %962
      %966 = vset.pattern.permute.xlu0 0
      %967 = vperm.xlu0 %966, %v795
      %v968 = vpop.permute.xlu0 %967
      %971 = vset.pattern.permute.xlu0 0
      %972 = vperm.xlu0 %971, %v796
      %v973 = vpop.permute.xlu0 %972
      %976 = vset.pattern.permute.xlu0 0
      %977 = vperm.xlu0 %976, %v797
      %v978 = vpop.permute.xlu0 %977
      %981 = vset.pattern.permute.xlu0 0
      %982 = vperm.xlu0 %981, %v798
      %v983 = vpop.permute.xlu0 %982
      %986 = vset.pattern.permute.xlu0 0
      %987 = vperm.xlu0 %986, %v799
      %v988 = vpop.permute.xlu0 %987
      %991 = vset.pattern.permute.xlu0 0
      %992 = vperm.xlu0 %991, %v800
      %v993 = vpop.permute.xlu0 %992
      %996 = vset.pattern.permute.xlu0 0
      %997 = vperm.xlu0 %996, %v801
      %v998 = vpop.permute.xlu0 %997
      %1001 = vset.pattern.permute.xlu0 0
      %1002 = vperm.xlu0 %1001, %v802
      %v1003 = vpop.permute.xlu0 %1002
      %1006 = vset.pattern.permute.xlu0 0
      %1007 = vperm.xlu0 %1006, %v803
      %v1008 = vpop.permute.xlu0 %1007
      %1011 = vset.pattern.permute.xlu0 0
      %1012 = vperm.xlu0 %1011, %v804
      %v1013 = vpop.permute.xlu0 %1012
      %1016 = vset.pattern.permute.xlu0 0
      %1017 = vperm.xlu0 %1016, %v805
      %v1018 = vpop.permute.xlu0 %1017
      %1021 = vset.pattern.permute.xlu0 0
      %1022 = vperm.xlu0 %1021, %v806
      %v1023 = vpop.permute.xlu0 %1022
      %1026 = vset.pattern.permute.xlu0 0
      %1027 = vperm.xlu0 %1026, %v807
      %v1028 = vpop.permute.xlu0 %1027
      %1031 = vset.pattern.permute.xlu0 0
      %1032 = vperm.xlu0 %1031, %v808
      %v1033 = vpop.permute.xlu0 %1032
      %1036 = vset.pattern.permute.xlu0 0
      %1037 = vperm.xlu0 %1036, %v809
      %v1038 = vpop.permute.xlu0 %1037
      %1041 = vset.pattern.permute.xlu0 0
      %1042 = vperm.xlu0 %1041, %v810
      %v1043 = vpop.permute.xlu0 %1042
      %1046 = vset.pattern.permute.xlu0 0
      %1047 = vperm.xlu0 %1046, %v811
      %v1048 = vpop.permute.xlu0 %1047
      %1051 = vset.pattern.permute.xlu0 0
      %1052 = vperm.xlu0 %1051, %v812
      %v1053 = vpop.permute.xlu0 %1052
      %1056 = vset.pattern.permute.xlu0 0
      %1057 = vperm.xlu0 %1056, %v813
      %v1058 = vpop.permute.xlu0 %1057
      %1061 = vset.pattern.permute.xlu0 0
      %1062 = vperm.xlu0 %1061, %v814
      %v1063 = vpop.permute.xlu0 %1062
      %1066 = vset.pattern.permute.xlu0 0
      %1067 = vperm.xlu0 %1066, %v815
      %v1068 = vpop.permute.xlu0 %1067
      %1071 = vset.pattern.permute.xlu0 0
      %1072 = vperm.xlu0 %1071, %v816
      %v1073 = vpop.permute.xlu0 %1072
      %1076 = vset.pattern.permute.xlu0 0
      %1077 = vperm.xlu0 %1076, %v817
      %v1078 = vpop.permute.xlu0 %1077
      %1081 = vset.pattern.permute.xlu0 0
      %1082 = vperm.xlu0 %1081, %v818
      %v1083 = vpop.permute.xlu0 %1082
      %1086 = vset.pattern.permute.xlu0 0
      %1087 = vperm.xlu0 %1086, %v819
      %v1088 = vpop.permute.xlu0 %1087
      %1091 = vset.pattern.permute.xlu0 0
      %1092 = vperm.xlu0 %1091, %v820
      %v1093 = vpop.permute.xlu0 %1092
      %1096 = vset.pattern.permute.xlu0 0
      %1097 = vperm.xlu0 %1096, %v821
      %v1098 = vpop.permute.xlu0 %1097
      %1101 = vset.pattern.permute.xlu0 0
      %1102 = vperm.xlu0 %1101, %v822
      %v1103 = vpop.permute.xlu0 %1102
      %1106 = vset.pattern.permute.xlu0 0
      %1107 = vperm.xlu0 %1106, %v823
      %v1108 = vpop.permute.xlu0 %1107
      %1111 = vset.pattern.permute.xlu0 0
      %1112 = vperm.xlu0 %1111, %v824
      %v1113 = vpop.permute.xlu0 %1112
      %1116 = vset.pattern.permute.xlu0 0
      %1117 = vperm.xlu0 %1116, %v825
      %v1118 = vpop.permute.xlu0 %1117
      %1121 = vset.pattern.permute.xlu0 0
      %1122 = vperm.xlu0 %1121, %v826
      %v1123 = vpop.permute.xlu0 %1122
      %1126 = vset.pattern.permute.xlu0 0
      %1127 = vperm.xlu0 %1126, %v827
      %v1128 = vpop.permute.xlu0 %1127
      %1131 = vset.pattern.permute.xlu0 0
      %1132 = vperm.xlu0 %1131, %v828
      %v1133 = vpop.permute.xlu0 %1132
      %1136 = vset.pattern.permute.xlu0 0
      %1137 = vperm.xlu0 %1136, %v829
      %v1138 = vpop.permute.xlu0 %1137
      %1141 = vset.pattern.permute.xlu0 0
      %1142 = vperm.xlu0 %1141, %v830
      %v1143 = vpop.permute.xlu0 %1142
      %1146 = vset.pattern.permute.xlu0 0
      %1147 = vperm.xlu0 %1146, %v831
      %v1148 = vpop.permute.xlu0 %1147
      %1151 = vset.pattern.permute.xlu0 0
      %1152 = vperm.xlu0 %1151, %v832
      %v1153 = vpop.permute.xlu0 %1152
      %v1155 = vlaneseq
      %v1156 = vshrl.u32 %v1155, 7
      %v1157 = vsub.s32 0, %v1156
      %v1158 = vrot.slane %v833, %v1157
      %v1159 = vmul.f32 %v838, %v1158
      %v1160 = vmul.f32 %v843, %v1158
      %v1161 = vmul.f32 %v848, %v1158
      %v1162 = vmul.f32 %v853, %v1158
      %v1163 = vmul.f32 %v858, %v1158
      %v1164 = vmul.f32 %v863, %v1158
      %v1165 = vmul.f32 %v868, %v1158
      %v1166 = vmul.f32 %v873, %v1158
      %v1167 = vmul.f32 %v878, %v1158
      %v1168 = vmul.f32 %v883, %v1158
      %v1169 = vmul.f32 %v888, %v1158
      %v1170 = vmul.f32 %v893, %v1158
      %v1171 = vmul.f32 %v898, %v1158
      %v1172 = vmul.f32 %v903, %v1158
      %v1173 = vmul.f32 %v908, %v1158
      %v1174 = vmul.f32 %v913, %v1158
      %v1175 = vmul.f32 %v918, %v1158
      %v1176 = vmul.f32 %v923, %v1158
      %v1177 = vmul.f32 %v928, %v1158
      %v1178 = vmul.f32 %v933, %v1158
      %v1179 = vmul.f32 %v938, %v1158
      %v1180 = vmul.f32 %v943, %v1158
      %v1181 = vmul.f32 %v948, %v1158
      %v1182 = vmul.f32 %v953, %v1158
      %v1183 = vmul.f32 %v958, %v1158
      %v1184 = vmul.f32 %v963, %v1158
      %v1185 = vmul.f32 %v968, %v1158
      %v1186 = vmul.f32 %v973, %v1158
      %v1187 = vmul.f32 %v978, %v1158
      %v1188 = vmul.f32 %v983, %v1158
      %v1189 = vmul.f32 %v988, %v1158
      %v1190 = vmul.f32 %v993, %v1158
      %v1191 = vmul.f32 %v998, %v1158
      %v1192 = vmul.f32 %v1003, %v1158
      %v1193 = vmul.f32 %v1008, %v1158
      %v1194 = vmul.f32 %v1013, %v1158
      %v1195 = vmul.f32 %v1018, %v1158
      %v1196 = vmul.f32 %v1023, %v1158
      %v1197 = vmul.f32 %v1028, %v1158
      %v1198 = vmul.f32 %v1033, %v1158
      %v1199 = vmul.f32 %v1038, %v1158
      %v1200 = vmul.f32 %v1043, %v1158
      %v1201 = vmul.f32 %v1048, %v1158
      %v1202 = vmul.f32 %v1053, %v1158
      %v1203 = vmul.f32 %v1058, %v1158
      %v1204 = vmul.f32 %v1063, %v1158
      %v1205 = vmul.f32 %v1068, %v1158
      %v1206 = vmul.f32 %v1073, %v1158
      %v1207 = vmul.f32 %v1078, %v1158
      %v1208 = vmul.f32 %v1083, %v1158
      %v1209 = vmul.f32 %v1088, %v1158
      %v1210 = vmul.f32 %v1093, %v1158
      %v1211 = vmul.f32 %v1098, %v1158
      %v1212 = vmul.f32 %v1103, %v1158
      %v1213 = vmul.f32 %v1108, %v1158
      %v1214 = vmul.f32 %v1113, %v1158
      %v1215 = vmul.f32 %v1118, %v1158
      %v1216 = vmul.f32 %v1123, %v1158
      %v1217 = vmul.f32 %v1128, %v1158
      %v1218 = vmul.f32 %v1133, %v1158
      %v1219 = vmul.f32 %v1138, %v1158
      %v1220 = vmul.f32 %v1143, %v1158
      %v1221 = vmul.f32 %v1148, %v1158
      %v1222 = vmul.f32 %v1153, %v1158
      %v1224 = vlaneseq
      %v1225 = vshrl.u32 %v1224, 7
      %v1226 = vsub.s32 0, %v1225
      %v1227 = vrot.slane %v834, %v1226
      %v1229 = vadd.f32 %v1227, %v1159
      %v1230 = vadd.f32 %v1227, %v1160
      %v1231 = vadd.f32 %v1227, %v1161
      %v1232 = vadd.f32 %v1227, %v1162
      %v1233 = vadd.f32 %v1227, %v1163
      %v1234 = vadd.f32 %v1227, %v1164
      %v1235 = vadd.f32 %v1227, %v1165
      %v1236 = vadd.f32 %v1227, %v1166
      %v1237 = vadd.f32 %v1227, %v1167
      %v1238 = vadd.f32 %v1227, %v1168
      %v1239 = vadd.f32 %v1227, %v1169
      %v1240 = vadd.f32 %v1227, %v1170
      %v1241 = vadd.f32 %v1227, %v1171
      %v1242 = vadd.f32 %v1227, %v1172
      %v1243 = vadd.f32 %v1227, %v1173
      %v1244 = vadd.f32 %v1227, %v1174
      %v1245 = vadd.f32 %v1227, %v1175
      %v1246 = vadd.f32 %v1227, %v1176
      %v1247 = vadd.f32 %v1227, %v1177
      %v1248 = vadd.f32 %v1227, %v1178
      %v1249 = vadd.f32 %v1227, %v1179
      %v1250 = vadd.f32 %v1227, %v1180
      %v1251 = vadd.f32 %v1227, %v1181
      %v1252 = vadd.f32 %v1227, %v1182
      %v1253 = vadd.f32 %v1227, %v1183
      %v1254 = vadd.f32 %v1227, %v1184
      %v1255 = vadd.f32 %v1227, %v1185
      %v1256 = vadd.f32 %v1227, %v1186
      %v1257 = vadd.f32 %v1227, %v1187
      %v1258 = vadd.f32 %v1227, %v1188
      %v1259 = vadd.f32 %v1227, %v1189
      %v1260 = vadd.f32 %v1227, %v1190
      %v1261 = vadd.f32 %v1227, %v1191
      %v1262 = vadd.f32 %v1227, %v1192
      %v1263 = vadd.f32 %v1227, %v1193
      %v1264 = vadd.f32 %v1227, %v1194
      %v1265 = vadd.f32 %v1227, %v1195
      %v1266 = vadd.f32 %v1227, %v1196
      %v1267 = vadd.f32 %v1227, %v1197
      %v1268 = vadd.f32 %v1227, %v1198
      %v1269 = vadd.f32 %v1227, %v1199
      %v1270 = vadd.f32 %v1227, %v1200
      %v1271 = vadd.f32 %v1227, %v1201
      %v1272 = vadd.f32 %v1227, %v1202
      %v1273 = vadd.f32 %v1227, %v1203
      %v1274 = vadd.f32 %v1227, %v1204
      %v1275 = vadd.f32 %v1227, %v1205
      %v1276 = vadd.f32 %v1227, %v1206
      %v1277 = vadd.f32 %v1227, %v1207
      %v1278 = vadd.f32 %v1227, %v1208
      %v1279 = vadd.f32 %v1227, %v1209
      %v1280 = vadd.f32 %v1227, %v1210
      %v1281 = vadd.f32 %v1227, %v1211
      %v1282 = vadd.f32 %v1227, %v1212
      %v1283 = vadd.f32 %v1227, %v1213
      %v1284 = vadd.f32 %v1227, %v1214
      %v1285 = vadd.f32 %v1227, %v1215
      %v1286 = vadd.f32 %v1227, %v1216
      %v1287 = vadd.f32 %v1227, %v1217
      %v1288 = vadd.f32 %v1227, %v1218
      %v1289 = vadd.f32 %v1227, %v1219
      %v1290 = vadd.f32 %v1227, %v1220
      %v1291 = vadd.f32 %v1227, %v1221
      %v1292 = vadd.f32 %v1227, %v1222
      %1293 = vset.pattern.permute.xlu0 1
      %1294 = vperm.xlu0 %1293, %v769
      %v1295 = vpop.permute.xlu0 %1294
      %1297 = vset.pattern.permute.xlu0 1
      %1298 = vperm.xlu0 %1297, %v770
      %v1299 = vpop.permute.xlu0 %1298
      %1301 = vset.pattern.permute.xlu0 1
      %1302 = vperm.xlu0 %1301, %v771
      %v1303 = vpop.permute.xlu0 %1302
      %1305 = vset.pattern.permute.xlu0 1
      %1306 = vperm.xlu0 %1305, %v772
      %v1307 = vpop.permute.xlu0 %1306
      %1309 = vset.pattern.permute.xlu0 1
      %1310 = vperm.xlu0 %1309, %v773
      %v1311 = vpop.permute.xlu0 %1310
      %1313 = vset.pattern.permute.xlu0 1
      %1314 = vperm.xlu0 %1313, %v774
      %v1315 = vpop.permute.xlu0 %1314
      %1317 = vset.pattern.permute.xlu0 1
      %1318 = vperm.xlu0 %1317, %v775
      %v1319 = vpop.permute.xlu0 %1318
      %1321 = vset.pattern.permute.xlu0 1
      %1322 = vperm.xlu0 %1321, %v776
      %v1323 = vpop.permute.xlu0 %1322
      %1325 = vset.pattern.permute.xlu0 1
      %1326 = vperm.xlu0 %1325, %v777
      %v1327 = vpop.permute.xlu0 %1326
      %1329 = vset.pattern.permute.xlu0 1
      %1330 = vperm.xlu0 %1329, %v778
      %v1331 = vpop.permute.xlu0 %1330
      %1333 = vset.pattern.permute.xlu0 1
      %1334 = vperm.xlu0 %1333, %v779
      %v1335 = vpop.permute.xlu0 %1334
      %1337 = vset.pattern.permute.xlu0 1
      %1338 = vperm.xlu0 %1337, %v780
      %v1339 = vpop.permute.xlu0 %1338
      %1341 = vset.pattern.permute.xlu0 1
      %1342 = vperm.xlu0 %1341, %v781
      %v1343 = vpop.permute.xlu0 %1342
      %1345 = vset.pattern.permute.xlu0 1
      %1346 = vperm.xlu0 %1345, %v782
      %v1347 = vpop.permute.xlu0 %1346
      %1349 = vset.pattern.permute.xlu0 1
      %1350 = vperm.xlu0 %1349, %v783
      %v1351 = vpop.permute.xlu0 %1350
      %1353 = vset.pattern.permute.xlu0 1
      %1354 = vperm.xlu0 %1353, %v784
      %v1355 = vpop.permute.xlu0 %1354
      %1357 = vset.pattern.permute.xlu0 1
      %1358 = vperm.xlu0 %1357, %v785
      %v1359 = vpop.permute.xlu0 %1358
      %1361 = vset.pattern.permute.xlu0 1
      %1362 = vperm.xlu0 %1361, %v786
      %v1363 = vpop.permute.xlu0 %1362
      %1365 = vset.pattern.permute.xlu0 1
      %1366 = vperm.xlu0 %1365, %v787
      %v1367 = vpop.permute.xlu0 %1366
      %1369 = vset.pattern.permute.xlu0 1
      %1370 = vperm.xlu0 %1369, %v788
      %v1371 = vpop.permute.xlu0 %1370
      %1373 = vset.pattern.permute.xlu0 1
      %1374 = vperm.xlu0 %1373, %v789
      %v1375 = vpop.permute.xlu0 %1374
      %1377 = vset.pattern.permute.xlu0 1
      %1378 = vperm.xlu0 %1377, %v790
      %v1379 = vpop.permute.xlu0 %1378
      %1381 = vset.pattern.permute.xlu0 1
      %1382 = vperm.xlu0 %1381, %v791
      %v1383 = vpop.permute.xlu0 %1382
      %1385 = vset.pattern.permute.xlu0 1
      %1386 = vperm.xlu0 %1385, %v792
      %v1387 = vpop.permute.xlu0 %1386
      %1389 = vset.pattern.permute.xlu0 1
      %1390 = vperm.xlu0 %1389, %v793
      %v1391 = vpop.permute.xlu0 %1390
      %1393 = vset.pattern.permute.xlu0 1
      %1394 = vperm.xlu0 %1393, %v794
      %v1395 = vpop.permute.xlu0 %1394
      %1397 = vset.pattern.permute.xlu0 1
      %1398 = vperm.xlu0 %1397, %v795
      %v1399 = vpop.permute.xlu0 %1398
      %1401 = vset.pattern.permute.xlu0 1
      %1402 = vperm.xlu0 %1401, %v796
      %v1403 = vpop.permute.xlu0 %1402
      %1405 = vset.pattern.permute.xlu0 1
      %1406 = vperm.xlu0 %1405, %v797
      %v1407 = vpop.permute.xlu0 %1406
      %1409 = vset.pattern.permute.xlu0 1
      %1410 = vperm.xlu0 %1409, %v798
      %v1411 = vpop.permute.xlu0 %1410
      %1413 = vset.pattern.permute.xlu0 1
      %1414 = vperm.xlu0 %1413, %v799
      %v1415 = vpop.permute.xlu0 %1414
      %1417 = vset.pattern.permute.xlu0 1
      %1418 = vperm.xlu0 %1417, %v800
      %v1419 = vpop.permute.xlu0 %1418
      %1421 = vset.pattern.permute.xlu0 1
      %1422 = vperm.xlu0 %1421, %v801
      %v1423 = vpop.permute.xlu0 %1422
      %1425 = vset.pattern.permute.xlu0 1
      %1426 = vperm.xlu0 %1425, %v802
      %v1427 = vpop.permute.xlu0 %1426
      %1429 = vset.pattern.permute.xlu0 1
      %1430 = vperm.xlu0 %1429, %v803
      %v1431 = vpop.permute.xlu0 %1430
      %1433 = vset.pattern.permute.xlu0 1
      %1434 = vperm.xlu0 %1433, %v804
      %v1435 = vpop.permute.xlu0 %1434
      %1437 = vset.pattern.permute.xlu0 1
      %1438 = vperm.xlu0 %1437, %v805
      %v1439 = vpop.permute.xlu0 %1438
      %1441 = vset.pattern.permute.xlu0 1
      %1442 = vperm.xlu0 %1441, %v806
      %v1443 = vpop.permute.xlu0 %1442
      %1445 = vset.pattern.permute.xlu0 1
      %1446 = vperm.xlu0 %1445, %v807
      %v1447 = vpop.permute.xlu0 %1446
      %1449 = vset.pattern.permute.xlu0 1
      %1450 = vperm.xlu0 %1449, %v808
      %v1451 = vpop.permute.xlu0 %1450
      %1453 = vset.pattern.permute.xlu0 1
      %1454 = vperm.xlu0 %1453, %v809
      %v1455 = vpop.permute.xlu0 %1454
      %1457 = vset.pattern.permute.xlu0 1
      %1458 = vperm.xlu0 %1457, %v810
      %v1459 = vpop.permute.xlu0 %1458
      %1461 = vset.pattern.permute.xlu0 1
      %1462 = vperm.xlu0 %1461, %v811
      %v1463 = vpop.permute.xlu0 %1462
      %1465 = vset.pattern.permute.xlu0 1
      %1466 = vperm.xlu0 %1465, %v812
      %v1467 = vpop.permute.xlu0 %1466
      %1469 = vset.pattern.permute.xlu0 1
      %1470 = vperm.xlu0 %1469, %v813
      %v1471 = vpop.permute.xlu0 %1470
      %1473 = vset.pattern.permute.xlu0 1
      %1474 = vperm.xlu0 %1473, %v814
      %v1475 = vpop.permute.xlu0 %1474
      %1477 = vset.pattern.permute.xlu0 1
      %1478 = vperm.xlu0 %1477, %v815
      %v1479 = vpop.permute.xlu0 %1478
      %1481 = vset.pattern.permute.xlu0 1
      %1482 = vperm.xlu0 %1481, %v816
      %v1483 = vpop.permute.xlu0 %1482
      %1485 = vset.pattern.permute.xlu0 1
      %1486 = vperm.xlu0 %1485, %v817
      %v1487 = vpop.permute.xlu0 %1486
      %1489 = vset.pattern.permute.xlu0 1
      %1490 = vperm.xlu0 %1489, %v818
      %v1491 = vpop.permute.xlu0 %1490
      %1493 = vset.pattern.permute.xlu0 1
      %1494 = vperm.xlu0 %1493, %v819
      %v1495 = vpop.permute.xlu0 %1494
      %1497 = vset.pattern.permute.xlu0 1
      %1498 = vperm.xlu0 %1497, %v820
      %v1499 = vpop.permute.xlu0 %1498
      %1501 = vset.pattern.permute.xlu0 1
      %1502 = vperm.xlu0 %1501, %v821
      %v1503 = vpop.permute.xlu0 %1502
      %1505 = vset.pattern.permute.xlu0 1
      %1506 = vperm.xlu0 %1505, %v822
      %v1507 = vpop.permute.xlu0 %1506
      %1509 = vset.pattern.permute.xlu0 1
      %1510 = vperm.xlu0 %1509, %v823
      %v1511 = vpop.permute.xlu0 %1510
      %1513 = vset.pattern.permute.xlu0 1
      %1514 = vperm.xlu0 %1513, %v824
      %v1515 = vpop.permute.xlu0 %1514
      %1517 = vset.pattern.permute.xlu0 1
      %1518 = vperm.xlu0 %1517, %v825
      %v1519 = vpop.permute.xlu0 %1518
      %1521 = vset.pattern.permute.xlu0 1
      %1522 = vperm.xlu0 %1521, %v826
      %v1523 = vpop.permute.xlu0 %1522
      %1525 = vset.pattern.permute.xlu0 1
      %1526 = vperm.xlu0 %1525, %v827
      %v1527 = vpop.permute.xlu0 %1526
      %1529 = vset.pattern.permute.xlu0 1
      %1530 = vperm.xlu0 %1529, %v828
      %v1531 = vpop.permute.xlu0 %1530
      %1533 = vset.pattern.permute.xlu0 1
      %1534 = vperm.xlu0 %1533, %v829
      %v1535 = vpop.permute.xlu0 %1534
      %1537 = vset.pattern.permute.xlu0 1
      %1538 = vperm.xlu0 %1537, %v830
      %v1539 = vpop.permute.xlu0 %1538
      %1541 = vset.pattern.permute.xlu0 1
      %1542 = vperm.xlu0 %1541, %v831
      %v1543 = vpop.permute.xlu0 %1542
      %1545 = vset.pattern.permute.xlu0 1
      %1546 = vperm.xlu0 %1545, %v832
      %v1547 = vpop.permute.xlu0 %1546
      %v1549 = vlaneseq
      %v1550 = vshrl.u32 %v1549, 7
      %v1551 = vsub.s32 1, %v1550
      %v1552 = vrot.slane %v833, %v1551
      %v1553 = vmul.f32 %v1295, %v1552
      %v1554 = vmul.f32 %v1299, %v1552
      %v1555 = vmul.f32 %v1303, %v1552
      %v1556 = vmul.f32 %v1307, %v1552
      %v1557 = vmul.f32 %v1311, %v1552
      %v1558 = vmul.f32 %v1315, %v1552
      %v1559 = vmul.f32 %v1319, %v1552
      %v1560 = vmul.f32 %v1323, %v1552
      %v1561 = vmul.f32 %v1327, %v1552
      %v1562 = vmul.f32 %v1331, %v1552
      %v1563 = vmul.f32 %v1335, %v1552
      %v1564 = vmul.f32 %v1339, %v1552
      %v1565 = vmul.f32 %v1343, %v1552
      %v1566 = vmul.f32 %v1347, %v1552
      %v1567 = vmul.f32 %v1351, %v1552
      %v1568 = vmul.f32 %v1355, %v1552
      %v1569 = vmul.f32 %v1359, %v1552
      %v1570 = vmul.f32 %v1363, %v1552
      %v1571 = vmul.f32 %v1367, %v1552
      %v1572 = vmul.f32 %v1371, %v1552
      %v1573 = vmul.f32 %v1375, %v1552
      %v1574 = vmul.f32 %v1379, %v1552
      %v1575 = vmul.f32 %v1383, %v1552
      %v1576 = vmul.f32 %v1387, %v1552
      %v1577 = vmul.f32 %v1391, %v1552
      %v1578 = vmul.f32 %v1395, %v1552
      %v1579 = vmul.f32 %v1399, %v1552
      %v1580 = vmul.f32 %v1403, %v1552
      %v1581 = vmul.f32 %v1407, %v1552
      %v1582 = vmul.f32 %v1411, %v1552
      %v1583 = vmul.f32 %v1415, %v1552
      %v1584 = vmul.f32 %v1419, %v1552
      %v1585 = vmul.f32 %v1423, %v1552
      %v1586 = vmul.f32 %v1427, %v1552
      %v1587 = vmul.f32 %v1431, %v1552
      %v1588 = vmul.f32 %v1435, %v1552
      %v1589 = vmul.f32 %v1439, %v1552
      %v1590 = vmul.f32 %v1443, %v1552
      %v1591 = vmul.f32 %v1447, %v1552
      %v1592 = vmul.f32 %v1451, %v1552
      %v1593 = vmul.f32 %v1455, %v1552
      %v1594 = vmul.f32 %v1459, %v1552
      %v1595 = vmul.f32 %v1463, %v1552
      %v1596 = vmul.f32 %v1467, %v1552
      %v1597 = vmul.f32 %v1471, %v1552
      %v1598 = vmul.f32 %v1475, %v1552
      %v1599 = vmul.f32 %v1479, %v1552
      %v1600 = vmul.f32 %v1483, %v1552
      %v1601 = vmul.f32 %v1487, %v1552
      %v1602 = vmul.f32 %v1491, %v1552
      %v1603 = vmul.f32 %v1495, %v1552
      %v1604 = vmul.f32 %v1499, %v1552
      %v1605 = vmul.f32 %v1503, %v1552
      %v1606 = vmul.f32 %v1507, %v1552
      %v1607 = vmul.f32 %v1511, %v1552
      %v1608 = vmul.f32 %v1515, %v1552
      %v1609 = vmul.f32 %v1519, %v1552
      %v1610 = vmul.f32 %v1523, %v1552
      %v1611 = vmul.f32 %v1527, %v1552
      %v1612 = vmul.f32 %v1531, %v1552
      %v1613 = vmul.f32 %v1535, %v1552
      %v1614 = vmul.f32 %v1539, %v1552
      %v1615 = vmul.f32 %v1543, %v1552
      %v1616 = vmul.f32 %v1547, %v1552
      %v1617 = vadd.f32 %v1229, %v1553
      %v1618 = vadd.f32 %v1230, %v1554
      %v1619 = vadd.f32 %v1231, %v1555
      %v1620 = vadd.f32 %v1232, %v1556
      %v1621 = vadd.f32 %v1233, %v1557
      %v1622 = vadd.f32 %v1234, %v1558
      %v1623 = vadd.f32 %v1235, %v1559
      %v1624 = vadd.f32 %v1236, %v1560
      %v1625 = vadd.f32 %v1237, %v1561
      %v1626 = vadd.f32 %v1238, %v1562
      %v1627 = vadd.f32 %v1239, %v1563
      %v1628 = vadd.f32 %v1240, %v1564
      %v1629 = vadd.f32 %v1241, %v1565
      %v1630 = vadd.f32 %v1242, %v1566
      %v1631 = vadd.f32 %v1243, %v1567
      %v1632 = vadd.f32 %v1244, %v1568
      %v1633 = vadd.f32 %v1245, %v1569
      %v1634 = vadd.f32 %v1246, %v1570
      %v1635 = vadd.f32 %v1247, %v1571
      %v1636 = vadd.f32 %v1248, %v1572
      %v1637 = vadd.f32 %v1249, %v1573
      %v1638 = vadd.f32 %v1250, %v1574
      %v1639 = vadd.f32 %v1251, %v1575
      %v1640 = vadd.f32 %v1252, %v1576
      %v1641 = vadd.f32 %v1253, %v1577
      %v1642 = vadd.f32 %v1254, %v1578
      %v1643 = vadd.f32 %v1255, %v1579
      %v1644 = vadd.f32 %v1256, %v1580
      %v1645 = vadd.f32 %v1257, %v1581
      %v1646 = vadd.f32 %v1258, %v1582
      %v1647 = vadd.f32 %v1259, %v1583
      %v1648 = vadd.f32 %v1260, %v1584
      %v1649 = vadd.f32 %v1261, %v1585
      %v1650 = vadd.f32 %v1262, %v1586
      %v1651 = vadd.f32 %v1263, %v1587
      %v1652 = vadd.f32 %v1264, %v1588
      %v1653 = vadd.f32 %v1265, %v1589
      %v1654 = vadd.f32 %v1266, %v1590
      %v1655 = vadd.f32 %v1267, %v1591
      %v1656 = vadd.f32 %v1268, %v1592
      %v1657 = vadd.f32 %v1269, %v1593
      %v1658 = vadd.f32 %v1270, %v1594
      %v1659 = vadd.f32 %v1271, %v1595
      %v1660 = vadd.f32 %v1272, %v1596
      %v1661 = vadd.f32 %v1273, %v1597
      %v1662 = vadd.f32 %v1274, %v1598
      %v1663 = vadd.f32 %v1275, %v1599
      %v1664 = vadd.f32 %v1276, %v1600
      %v1665 = vadd.f32 %v1277, %v1601
      %v1666 = vadd.f32 %v1278, %v1602
      %v1667 = vadd.f32 %v1279, %v1603
      %v1668 = vadd.f32 %v1280, %v1604
      %v1669 = vadd.f32 %v1281, %v1605
      %v1670 = vadd.f32 %v1282, %v1606
      %v1671 = vadd.f32 %v1283, %v1607
      %v1672 = vadd.f32 %v1284, %v1608
      %v1673 = vadd.f32 %v1285, %v1609
      %v1674 = vadd.f32 %v1286, %v1610
      %v1675 = vadd.f32 %v1287, %v1611
      %v1676 = vadd.f32 %v1288, %v1612
      %v1677 = vadd.f32 %v1289, %v1613
      %v1678 = vadd.f32 %v1290, %v1614
      %v1679 = vadd.f32 %v1291, %v1615
      %v1680 = vadd.f32 %v1292, %v1616
      %1681 = vset.pattern.permute.xlu0 2
      %1682 = vperm.xlu0 %1681, %v769
      %v1683 = vpop.permute.xlu0 %1682
      %1685 = vset.pattern.permute.xlu0 2
      %1686 = vperm.xlu0 %1685, %v770
      %v1687 = vpop.permute.xlu0 %1686
      %1689 = vset.pattern.permute.xlu0 2
      %1690 = vperm.xlu0 %1689, %v771
      %v1691 = vpop.permute.xlu0 %1690
      %1693 = vset.pattern.permute.xlu0 2
      %1694 = vperm.xlu0 %1693, %v772
      %v1695 = vpop.permute.xlu0 %1694
      %1697 = vset.pattern.permute.xlu0 2
      %1698 = vperm.xlu0 %1697, %v773
      %v1699 = vpop.permute.xlu0 %1698
      %1701 = vset.pattern.permute.xlu0 2
      %1702 = vperm.xlu0 %1701, %v774
      %v1703 = vpop.permute.xlu0 %1702
      %1705 = vset.pattern.permute.xlu0 2
      %1706 = vperm.xlu0 %1705, %v775
      %v1707 = vpop.permute.xlu0 %1706
      %1709 = vset.pattern.permute.xlu0 2
      %1710 = vperm.xlu0 %1709, %v776
      %v1711 = vpop.permute.xlu0 %1710
      %1713 = vset.pattern.permute.xlu0 2
      %1714 = vperm.xlu0 %1713, %v777
      %v1715 = vpop.permute.xlu0 %1714
      %1717 = vset.pattern.permute.xlu0 2
      %1718 = vperm.xlu0 %1717, %v778
      %v1719 = vpop.permute.xlu0 %1718
      %1721 = vset.pattern.permute.xlu0 2
      %1722 = vperm.xlu0 %1721, %v779
      %v1723 = vpop.permute.xlu0 %1722
      %1725 = vset.pattern.permute.xlu0 2
      %1726 = vperm.xlu0 %1725, %v780
      %v1727 = vpop.permute.xlu0 %1726
      %1729 = vset.pattern.permute.xlu0 2
      %1730 = vperm.xlu0 %1729, %v781
      %v1731 = vpop.permute.xlu0 %1730
      %1733 = vset.pattern.permute.xlu0 2
      %1734 = vperm.xlu0 %1733, %v782
      %v1735 = vpop.permute.xlu0 %1734
      %1737 = vset.pattern.permute.xlu0 2
      %1738 = vperm.xlu0 %1737, %v783
      %v1739 = vpop.permute.xlu0 %1738
      %1741 = vset.pattern.permute.xlu0 2
      %1742 = vperm.xlu0 %1741, %v784
      %v1743 = vpop.permute.xlu0 %1742
      %1745 = vset.pattern.permute.xlu0 2
      %1746 = vperm.xlu0 %1745, %v785
      %v1747 = vpop.permute.xlu0 %1746
      %1749 = vset.pattern.permute.xlu0 2
      %1750 = vperm.xlu0 %1749, %v786
      %v1751 = vpop.permute.xlu0 %1750
      %1753 = vset.pattern.permute.xlu0 2
      %1754 = vperm.xlu0 %1753, %v787
      %v1755 = vpop.permute.xlu0 %1754
      %1757 = vset.pattern.permute.xlu0 2
      %1758 = vperm.xlu0 %1757, %v788
      %v1759 = vpop.permute.xlu0 %1758
      %1761 = vset.pattern.permute.xlu0 2
      %1762 = vperm.xlu0 %1761, %v789
      %v1763 = vpop.permute.xlu0 %1762
      %1765 = vset.pattern.permute.xlu0 2
      %1766 = vperm.xlu0 %1765, %v790
      %v1767 = vpop.permute.xlu0 %1766
      %1769 = vset.pattern.permute.xlu0 2
      %1770 = vperm.xlu0 %1769, %v791
      %v1771 = vpop.permute.xlu0 %1770
      %1773 = vset.pattern.permute.xlu0 2
      %1774 = vperm.xlu0 %1773, %v792
      %v1775 = vpop.permute.xlu0 %1774
      %1777 = vset.pattern.permute.xlu0 2
      %1778 = vperm.xlu0 %1777, %v793
      %v1779 = vpop.permute.xlu0 %1778
      %1781 = vset.pattern.permute.xlu0 2
      %1782 = vperm.xlu0 %1781, %v794
      %v1783 = vpop.permute.xlu0 %1782
      %1785 = vset.pattern.permute.xlu0 2
      %1786 = vperm.xlu0 %1785, %v795
      %v1787 = vpop.permute.xlu0 %1786
      %1789 = vset.pattern.permute.xlu0 2
      %1790 = vperm.xlu0 %1789, %v796
      %v1791 = vpop.permute.xlu0 %1790
      %1793 = vset.pattern.permute.xlu0 2
      %1794 = vperm.xlu0 %1793, %v797
      %v1795 = vpop.permute.xlu0 %1794
      %1797 = vset.pattern.permute.xlu0 2
      %1798 = vperm.xlu0 %1797, %v798
      %v1799 = vpop.permute.xlu0 %1798
      %1801 = vset.pattern.permute.xlu0 2
      %1802 = vperm.xlu0 %1801, %v799
      %v1803 = vpop.permute.xlu0 %1802
      %1805 = vset.pattern.permute.xlu0 2
      %1806 = vperm.xlu0 %1805, %v800
      %v1807 = vpop.permute.xlu0 %1806
      %1809 = vset.pattern.permute.xlu0 2
      %1810 = vperm.xlu0 %1809, %v801
      %v1811 = vpop.permute.xlu0 %1810
      %1813 = vset.pattern.permute.xlu0 2
      %1814 = vperm.xlu0 %1813, %v802
      %v1815 = vpop.permute.xlu0 %1814
      %1817 = vset.pattern.permute.xlu0 2
      %1818 = vperm.xlu0 %1817, %v803
      %v1819 = vpop.permute.xlu0 %1818
      %1821 = vset.pattern.permute.xlu0 2
      %1822 = vperm.xlu0 %1821, %v804
      %v1823 = vpop.permute.xlu0 %1822
      %1825 = vset.pattern.permute.xlu0 2
      %1826 = vperm.xlu0 %1825, %v805
      %v1827 = vpop.permute.xlu0 %1826
      %1829 = vset.pattern.permute.xlu0 2
      %1830 = vperm.xlu0 %1829, %v806
      %v1831 = vpop.permute.xlu0 %1830
      %1833 = vset.pattern.permute.xlu0 2
      %1834 = vperm.xlu0 %1833, %v807
      %v1835 = vpop.permute.xlu0 %1834
      %1837 = vset.pattern.permute.xlu0 2
      %1838 = vperm.xlu0 %1837, %v808
      %v1839 = vpop.permute.xlu0 %1838
      %1841 = vset.pattern.permute.xlu0 2
      %1842 = vperm.xlu0 %1841, %v809
      %v1843 = vpop.permute.xlu0 %1842
      %1845 = vset.pattern.permute.xlu0 2
      %1846 = vperm.xlu0 %1845, %v810
      %v1847 = vpop.permute.xlu0 %1846
      %1849 = vset.pattern.permute.xlu0 2
      %1850 = vperm.xlu0 %1849, %v811
      %v1851 = vpop.permute.xlu0 %1850
      %1853 = vset.pattern.permute.xlu0 2
      %1854 = vperm.xlu0 %1853, %v812
      %v1855 = vpop.permute.xlu0 %1854
      %1857 = vset.pattern.permute.xlu0 2
      %1858 = vperm.xlu0 %1857, %v813
      %v1859 = vpop.permute.xlu0 %1858
      %1861 = vset.pattern.permute.xlu0 2
      %1862 = vperm.xlu0 %1861, %v814
      %v1863 = vpop.permute.xlu0 %1862
      %1865 = vset.pattern.permute.xlu0 2
      %1866 = vperm.xlu0 %1865, %v815
      %v1867 = vpop.permute.xlu0 %1866
      %1869 = vset.pattern.permute.xlu0 2
      %1870 = vperm.xlu0 %1869, %v816
      %v1871 = vpop.permute.xlu0 %1870
      %1873 = vset.pattern.permute.xlu0 2
      %1874 = vperm.xlu0 %1873, %v817
      %v1875 = vpop.permute.xlu0 %1874
      %1877 = vset.pattern.permute.xlu0 2
      %1878 = vperm.xlu0 %1877, %v818
      %v1879 = vpop.permute.xlu0 %1878
      %1881 = vset.pattern.permute.xlu0 2
      %1882 = vperm.xlu0 %1881, %v819
      %v1883 = vpop.permute.xlu0 %1882
      %1885 = vset.pattern.permute.xlu0 2
      %1886 = vperm.xlu0 %1885, %v820
      %v1887 = vpop.permute.xlu0 %1886
      %1889 = vset.pattern.permute.xlu0 2
      %1890 = vperm.xlu0 %1889, %v821
      %v1891 = vpop.permute.xlu0 %1890
      %1893 = vset.pattern.permute.xlu0 2
      %1894 = vperm.xlu0 %1893, %v822
      %v1895 = vpop.permute.xlu0 %1894
      %1897 = vset.pattern.permute.xlu0 2
      %1898 = vperm.xlu0 %1897, %v823
      %v1899 = vpop.permute.xlu0 %1898
      %1901 = vset.pattern.permute.xlu0 2
      %1902 = vperm.xlu0 %1901, %v824
      %v1903 = vpop.permute.xlu0 %1902
      %1905 = vset.pattern.permute.xlu0 2
      %1906 = vperm.xlu0 %1905, %v825
      %v1907 = vpop.permute.xlu0 %1906
      %1909 = vset.pattern.permute.xlu0 2
      %1910 = vperm.xlu0 %1909, %v826
      %v1911 = vpop.permute.xlu0 %1910
      %1913 = vset.pattern.permute.xlu0 2
      %1914 = vperm.xlu0 %1913, %v827
      %v1915 = vpop.permute.xlu0 %1914
      %1917 = vset.pattern.permute.xlu0 2
      %1918 = vperm.xlu0 %1917, %v828
      %v1919 = vpop.permute.xlu0 %1918
      %1921 = vset.pattern.permute.xlu0 2
      %1922 = vperm.xlu0 %1921, %v829
      %v1923 = vpop.permute.xlu0 %1922
      %1925 = vset.pattern.permute.xlu0 2
      %1926 = vperm.xlu0 %1925, %v830
      %v1927 = vpop.permute.xlu0 %1926
      %1929 = vset.pattern.permute.xlu0 2
      %1930 = vperm.xlu0 %1929, %v831
      %v1931 = vpop.permute.xlu0 %1930
      %1933 = vset.pattern.permute.xlu0 2
      %1934 = vperm.xlu0 %1933, %v832
      %v1935 = vpop.permute.xlu0 %1934
      %v1937 = vlaneseq
      %v1938 = vshrl.u32 %v1937, 7
      %v1939 = vsub.s32 2, %v1938
      %v1940 = vrot.slane %v833, %v1939
      %v1941 = vmul.f32 %v1683, %v1940
      %v1942 = vmul.f32 %v1687, %v1940
      %v1943 = vmul.f32 %v1691, %v1940
      %v1944 = vmul.f32 %v1695, %v1940
      %v1945 = vmul.f32 %v1699, %v1940
      %v1946 = vmul.f32 %v1703, %v1940
      %v1947 = vmul.f32 %v1707, %v1940
      %v1948 = vmul.f32 %v1711, %v1940
      %v1949 = vmul.f32 %v1715, %v1940
      %v1950 = vmul.f32 %v1719, %v1940
      %v1951 = vmul.f32 %v1723, %v1940
      %v1952 = vmul.f32 %v1727, %v1940
      %v1953 = vmul.f32 %v1731, %v1940
      %v1954 = vmul.f32 %v1735, %v1940
      %v1955 = vmul.f32 %v1739, %v1940
      %v1956 = vmul.f32 %v1743, %v1940
      %v1957 = vmul.f32 %v1747, %v1940
      %v1958 = vmul.f32 %v1751, %v1940
      %v1959 = vmul.f32 %v1755, %v1940
      %v1960 = vmul.f32 %v1759, %v1940
      %v1961 = vmul.f32 %v1763, %v1940
      %v1962 = vmul.f32 %v1767, %v1940
      %v1963 = vmul.f32 %v1771, %v1940
      %v1964 = vmul.f32 %v1775, %v1940
      %v1965 = vmul.f32 %v1779, %v1940
      %v1966 = vmul.f32 %v1783, %v1940
      %v1967 = vmul.f32 %v1787, %v1940
      %v1968 = vmul.f32 %v1791, %v1940
      %v1969 = vmul.f32 %v1795, %v1940
      %v1970 = vmul.f32 %v1799, %v1940
      %v1971 = vmul.f32 %v1803, %v1940
      %v1972 = vmul.f32 %v1807, %v1940
      %v1973 = vmul.f32 %v1811, %v1940
      %v1974 = vmul.f32 %v1815, %v1940
      %v1975 = vmul.f32 %v1819, %v1940
      %v1976 = vmul.f32 %v1823, %v1940
      %v1977 = vmul.f32 %v1827, %v1940
      %v1978 = vmul.f32 %v1831, %v1940
      %v1979 = vmul.f32 %v1835, %v1940
      %v1980 = vmul.f32 %v1839, %v1940
      %v1981 = vmul.f32 %v1843, %v1940
      %v1982 = vmul.f32 %v1847, %v1940
      %v1983 = vmul.f32 %v1851, %v1940
      %v1984 = vmul.f32 %v1855, %v1940
      %v1985 = vmul.f32 %v1859, %v1940
      %v1986 = vmul.f32 %v1863, %v1940
      %v1987 = vmul.f32 %v1867, %v1940
      %v1988 = vmul.f32 %v1871, %v1940
      %v1989 = vmul.f32 %v1875, %v1940
      %v1990 = vmul.f32 %v1879, %v1940
      %v1991 = vmul.f32 %v1883, %v1940
      %v1992 = vmul.f32 %v1887, %v1940
      %v1993 = vmul.f32 %v1891, %v1940
      %v1994 = vmul.f32 %v1895, %v1940
      %v1995 = vmul.f32 %v1899, %v1940
      %v1996 = vmul.f32 %v1903, %v1940
      %v1997 = vmul.f32 %v1907, %v1940
      %v1998 = vmul.f32 %v1911, %v1940
      %v1999 = vmul.f32 %v1915, %v1940
      %v2000 = vmul.f32 %v1919, %v1940
      %v2001 = vmul.f32 %v1923, %v1940
      %v2002 = vmul.f32 %v1927, %v1940
      %v2003 = vmul.f32 %v1931, %v1940
      %v2004 = vmul.f32 %v1935, %v1940
      %v2005 = vadd.f32 %v1617, %v1941
      %v2006 = vadd.f32 %v1618, %v1942
      %v2007 = vadd.f32 %v1619, %v1943
      %v2008 = vadd.f32 %v1620, %v1944
      %v2009 = vadd.f32 %v1621, %v1945
      %v2010 = vadd.f32 %v1622, %v1946
      %v2011 = vadd.f32 %v1623, %v1947
      %v2012 = vadd.f32 %v1624, %v1948
      %v2013 = vadd.f32 %v1625, %v1949
      %v2014 = vadd.f32 %v1626, %v1950
      %v2015 = vadd.f32 %v1627, %v1951
      %v2016 = vadd.f32 %v1628, %v1952
      %v2017 = vadd.f32 %v1629, %v1953
      %v2018 = vadd.f32 %v1630, %v1954
      %v2019 = vadd.f32 %v1631, %v1955
      %v2020 = vadd.f32 %v1632, %v1956
      %v2021 = vadd.f32 %v1633, %v1957
      %v2022 = vadd.f32 %v1634, %v1958
      %v2023 = vadd.f32 %v1635, %v1959
      %v2024 = vadd.f32 %v1636, %v1960
      %v2025 = vadd.f32 %v1637, %v1961
      %v2026 = vadd.f32 %v1638, %v1962
      %v2027 = vadd.f32 %v1639, %v1963
      %v2028 = vadd.f32 %v1640, %v1964
      %v2029 = vadd.f32 %v1641, %v1965
      %v2030 = vadd.f32 %v1642, %v1966
      %v2031 = vadd.f32 %v1643, %v1967
      %v2032 = vadd.f32 %v1644, %v1968
      %v2033 = vadd.f32 %v1645, %v1969
      %v2034 = vadd.f32 %v1646, %v1970
      %v2035 = vadd.f32 %v1647, %v1971
      %v2036 = vadd.f32 %v1648, %v1972
      %v2037 = vadd.f32 %v1649, %v1973
      %v2038 = vadd.f32 %v1650, %v1974
      %v2039 = vadd.f32 %v1651, %v1975
      %v2040 = vadd.f32 %v1652, %v1976
      %v2041 = vadd.f32 %v1653, %v1977
      %v2042 = vadd.f32 %v1654, %v1978
      %v2043 = vadd.f32 %v1655, %v1979
      %v2044 = vadd.f32 %v1656, %v1980
      %v2045 = vadd.f32 %v1657, %v1981
      %v2046 = vadd.f32 %v1658, %v1982
      %v2047 = vadd.f32 %v1659, %v1983
      %v2048 = vadd.f32 %v1660, %v1984
      %v2049 = vadd.f32 %v1661, %v1985
      %v2050 = vadd.f32 %v1662, %v1986
      %v2051 = vadd.f32 %v1663, %v1987
      %v2052 = vadd.f32 %v1664, %v1988
      %v2053 = vadd.f32 %v1665, %v1989
      %v2054 = vadd.f32 %v1666, %v1990
      %v2055 = vadd.f32 %v1667, %v1991
      %v2056 = vadd.f32 %v1668, %v1992
      %v2057 = vadd.f32 %v1669, %v1993
      %v2058 = vadd.f32 %v1670, %v1994
      %v2059 = vadd.f32 %v1671, %v1995
      %v2060 = vadd.f32 %v1672, %v1996
      %v2061 = vadd.f32 %v1673, %v1997
      %v2062 = vadd.f32 %v1674, %v1998
      %v2063 = vadd.f32 %v1675, %v1999
      %v2064 = vadd.f32 %v1676, %v2000
      %v2065 = vadd.f32 %v1677, %v2001
      %v2066 = vadd.f32 %v1678, %v2002
      %v2067 = vadd.f32 %v1679, %v2003
      %v2068 = vadd.f32 %v1680, %v2004
      %v2069 = vmax.f32 %v2005, 0.0
      %v2070 = vmax.f32 %v2006, 0.0
      %v2071 = vmax.f32 %v2007, 0.0
      %v2072 = vmax.f32 %v2008, 0.0
      %v2073 = vmax.f32 %v2009, 0.0
      %v2074 = vmax.f32 %v2010, 0.0
      %v2075 = vmax.f32 %v2011, 0.0
      %v2076 = vmax.f32 %v2012, 0.0
      %v2077 = vmax.f32 %v2013, 0.0
      %v2078 = vmax.f32 %v2014, 0.0
      %v2079 = vmax.f32 %v2015, 0.0
      %v2080 = vmax.f32 %v2016, 0.0
      %v2081 = vmax.f32 %v2017, 0.0
      %v2082 = vmax.f32 %v2018, 0.0
      %v2083 = vmax.f32 %v2019, 0.0
      %v2084 = vmax.f32 %v2020, 0.0
      %v2085 = vmax.f32 %v2021, 0.0
      %v2086 = vmax.f32 %v2022, 0.0
      %v2087 = vmax.f32 %v2023, 0.0
      %v2088 = vmax.f32 %v2024, 0.0
      %v2089 = vmax.f32 %v2025, 0.0
      %v2090 = vmax.f32 %v2026, 0.0
      %v2091 = vmax.f32 %v2027, 0.0
      %v2092 = vmax.f32 %v2028, 0.0
      %v2093 = vmax.f32 %v2029, 0.0
      %v2094 = vmax.f32 %v2030, 0.0
      %v2095 = vmax.f32 %v2031, 0.0
      %v2096 = vmax.f32 %v2032, 0.0
      %v2097 = vmax.f32 %v2033, 0.0
      %v2098 = vmax.f32 %v2034, 0.0
      %v2099 = vmax.f32 %v2035, 0.0
      %v2100 = vmax.f32 %v2036, 0.0
      %v2101 = vmax.f32 %v2037, 0.0
      %v2102 = vmax.f32 %v2038, 0.0
      %v2103 = vmax.f32 %v2039, 0.0
      %v2104 = vmax.f32 %v2040, 0.0
      %v2105 = vmax.f32 %v2041, 0.0
      %v2106 = vmax.f32 %v2042, 0.0
      %v2107 = vmax.f32 %v2043, 0.0
      %v2108 = vmax.f32 %v2044, 0.0
      %v2109 = vmax.f32 %v2045, 0.0
      %v2110 = vmax.f32 %v2046, 0.0
      %v2111 = vmax.f32 %v2047, 0.0
      %v2112 = vmax.f32 %v2048, 0.0
      %v2113 = vmax.f32 %v2049, 0.0
      %v2114 = vmax.f32 %v2050, 0.0
      %v2115 = vmax.f32 %v2051, 0.0
      %v2116 = vmax.f32 %v2052, 0.0
      %v2117 = vmax.f32 %v2053, 0.0
      %v2118 = vmax.f32 %v2054, 0.0
      %v2119 = vmax.f32 %v2055, 0.0
      %v2120 = vmax.f32 %v2056, 0.0
      %v2121 = vmax.f32 %v2057, 0.0
      %v2122 = vmax.f32 %v2058, 0.0
      %v2123 = vmax.f32 %v2059, 0.0
      %v2124 = vmax.f32 %v2060, 0.0
      %v2125 = vmax.f32 %v2061, 0.0
      %v2126 = vmax.f32 %v2062, 0.0
      %v2127 = vmax.f32 %v2063, 0.0
      %v2128 = vmax.f32 %v2064, 0.0
      %v2129 = vmax.f32 %v2065, 0.0
      %v2130 = vmax.f32 %v2066, 0.0
      %v2131 = vmax.f32 %v2067, 0.0
      %v2132 = vmax.f32 %v2068, 0.0
      %v2133 = vld [vmem:[%s3] sm:$0xf]
      %v2134 = vld [vmem:[%s3 + $0x4] sm:$0xf]
      %v2135 = vld [vmem:[%s3 + $0x8] sm:$0xf]
      %v2136 = vld [vmem:[%s3 + $0xc] sm:$0xf]
      %v2137 = vld [vmem:[%s4] sm:$0x1]
      %v2138 = vpack.c.bf16 %v2070, %v2069
      %v2139 = vpack.c.bf16 %v2072, %v2071
      %v2140 = vpack.c.bf16 %v2074, %v2073
      %v2141 = vpack.c.bf16 %v2076, %v2075
      %v2142 = vpack.c.bf16 %v2078, %v2077
      %v2143 = vpack.c.bf16 %v2080, %v2079
      %v2144 = vpack.c.bf16 %v2082, %v2081
      %v2145 = vpack.c.bf16 %v2084, %v2083
      %v2146 = vpack.c.bf16 %v2086, %v2085
      %v2147 = vpack.c.bf16 %v2088, %v2087
      %v2148 = vpack.c.bf16 %v2090, %v2089
      %v2149 = vpack.c.bf16 %v2092, %v2091
      %v2150 = vpack.c.bf16 %v2094, %v2093
      %v2151 = vpack.c.bf16 %v2096, %v2095
      %v2152 = vpack.c.bf16 %v2098, %v2097
      %v2153 = vpack.c.bf16 %v2100, %v2099
      %v2154 = vpack.c.bf16 %v2102, %v2101
      %v2155 = vpack.c.bf16 %v2104, %v2103
      %v2156 = vpack.c.bf16 %v2106, %v2105
      %v2157 = vpack.c.bf16 %v2108, %v2107
      %v2158 = vpack.c.bf16 %v2110, %v2109
      %v2159 = vpack.c.bf16 %v2112, %v2111
      %v2160 = vpack.c.bf16 %v2114, %v2113
      %v2161 = vpack.c.bf16 %v2116, %v2115
      %v2162 = vpack.c.bf16 %v2118, %v2117
      %v2163 = vpack.c.bf16 %v2120, %v2119
      %v2164 = vpack.c.bf16 %v2122, %v2121
      %v2165 = vpack.c.bf16 %v2124, %v2123
      %v2166 = vpack.c.bf16 %v2126, %v2125
      %v2167 = vpack.c.bf16 %v2128, %v2127
      %v2168 = vpack.c.bf16 %v2130, %v2129
      %v2169 = vpack.c.bf16 %v2132, %v2131
      %v2171 = vlaneseq
      %v2172 = vshrl.u32 %v2171, 7
      %v2173 = vsub.s32 0, %v2172
      %v2174 = vrot.slane %v2137, %v2173
      %v2180 = vunpack.c.l.b16 %v2133
      %v2181 = vunpack.c.l.b16 %v2134
      %v2182 = vunpack.c.l.b16 %v2135
      %v2183 = vunpack.c.l.b16 %v2136
      %v2184 = vpack.c.b16 %v2181, %v2180
      %v2185 = vpack.c.b16 %v2183, %v2182
      %vm2188 = vcmask 261120
      %v2190 = vsel %vm2188, %v2138, 0
      %v2193 = vsel %vm2188, %v2139, 0
      %v2196 = vsel %vm2188, %v2140, 0
      %v2199 = vsel %vm2188, %v2141, 0
      %v2202 = vsel %vm2188, %v2142, 0
      %v2205 = vsel %vm2188, %v2143, 0
      %v2208 = vsel %vm2188, %v2144, 0
      %v2211 = vsel %vm2188, %v2145, 0
      %v2214 = vsel %vm2188, %v2146, 0
      %v2217 = vsel %vm2188, %v2147, 0
      %v2220 = vsel %vm2188, %v2148, 0
      %v2223 = vsel %vm2188, %v2149, 0
      %v2226 = vsel %vm2188, %v2150, 0
      %v2229 = vsel %vm2188, %v2151, 0
      %v2232 = vsel %vm2188, %v2152, 0
      %v2235 = vsel %vm2188, %v2153, 0
      %v2238 = vsel %vm2188, %v2154, 0
      %v2241 = vsel %vm2188, %v2155, 0
      %v2244 = vsel %vm2188, %v2156, 0
      %v2247 = vsel %vm2188, %v2157, 0
      %v2250 = vsel %vm2188, %v2158, 0
      %v2253 = vsel %vm2188, %v2159, 0
      %v2256 = vsel %vm2188, %v2160, 0
      %v2259 = vsel %vm2188, %v2161, 0
      %v2262 = vsel %vm2188, %v2162, 0
      %v2265 = vsel %vm2188, %v2163, 0
      %v2268 = vsel %vm2188, %v2164, 0
      %v2271 = vsel %vm2188, %v2165, 0
      %v2274 = vsel %vm2188, %v2166, 0
      %v2277 = vsel %vm2188, %v2167, 0
      %v2280 = vsel %vm2188, %v2168, 0
      %v2283 = vsel %vm2188, %v2169, 0
      %2285 = vmatprep.subr.bf16.mxu0 0
      %2286 = vmatpush1.bf16.msra.mxu0 %v2184
      %2287 = vmatprep.subr.bf16.mxu0 0
      %2288 = vmatpush1.bf16.msra.mxu0 %v2185
      %2289 = vmatprep.subr.bf16.mxu0 0
      %2290 = vmatpush1.bf16.msra.mxu0 0
      %2291 = vmatprep.subr.bf16.mxu0 0
      %2292 = vmatpush1.bf16.msra.mxu0 0
      %2293 = vmatprep.subr.bf16.mxu0 0
      %2294 = vmatpush1.bf16.msra.mxu0 0
      %2295 = vmatprep.subr.bf16.mxu0 0
      %2296 = vmatpush1.bf16.msra.mxu0 0
      %2297 = vmatprep.subr.bf16.mxu0 0
      %2298 = vmatpush1.bf16.msra.mxu0 0
      %2299 = vmatprep.subr.bf16.mxu0 0
      %2300 = vmatpush1.bf16.msra.mxu0 0
      %2301 = vmatprep.subr.bf16.mxu0 0
      %2302 = vmatpush1.bf16.msra.mxu0 0
      %2303 = vmatprep.subr.bf16.mxu0 0
      %2304 = vmatpush1.bf16.msra.mxu0 0
      %2305 = vmatprep.subr.bf16.mxu0 0
      %2306 = vmatpush1.bf16.msra.mxu0 0
      %2307 = vmatprep.subr.bf16.mxu0 0
      %2308 = vmatpush1.bf16.msra.mxu0 0
      %2309 = vmatprep.subr.bf16.mxu0 0
      %2310 = vmatpush1.bf16.msra.mxu0 0
      %2311 = vmatprep.subr.bf16.mxu0 0
      %2312 = vmatpush1.bf16.msra.mxu0 0
      %2313 = vmatprep.subr.bf16.mxu0 0
      %2314 = vmatpush1.bf16.msra.mxu0 0
      %2315 = vmatprep.subr.bf16.mxu0 0
      %2316 = vmatpush1.bf16.msra.mxu0 0
      %2317 = vmatprep.mubr.bf16.mxu0 0
      %2318 = vmatmul.mubr.bf16.gmra.mrb[0].mxu0 %v2190
      %v2319 = vpop.f32.mrb[0].mxu0
      %v2320 = vadd.f32 %v2174, %v2319
      %v2321 = vpop.f32.mrb[0].mxu0
      %v2322 = vpop.f32.mrb[0].mxu0
      %v2323 = vadd.f32 %v2174, %v2322
      %v2324 = vpop.f32.mrb[0].mxu0
      %2325 = vmatprep.mubr.bf16.mxu0 0
      %2326 = vmatmul.mubr.bf16.gmra.mrb[0].mxu0 %v2193
      %v2327 = vpop.f32.mrb[0].mxu0
      %v2328 = vadd.f32 %v2174, %v2327
      %v2329 = vpop.f32.mrb[0].mxu0
      %v2330 = vpop.f32.mrb[0].mxu0
      %v2331 = vadd.f32 %v2174, %v2330
      %v2332 = vpop.f32.mrb[0].mxu0
      %2333 = vmatprep.mubr.bf16.mxu0 0
      %2334 = vmatmul.mubr.bf16.gmra.mrb[0].mxu0 %v2196
      %v2335 = vpop.f32.mrb[0].mxu0
      %v2336 = vadd.f32 %v2174, %v2335
      %v2337 = vpop.f32.mrb[0].mxu0
      %v2338 = vpop.f32.mrb[0].mxu0
      %v2339 = vadd.f32 %v2174, %v2338
      %v2340 = vpop.f32.mrb[0].mxu0
      %2341 = vmatprep.mubr.bf16.mxu0 0
      %2342 = vmatmul.mubr.bf16.gmra.mrb[0].mxu0 %v2199
      %v2343 = vpop.f32.mrb[0].mxu0
      %v2344 = vadd.f32 %v2174, %v2343
      %v2345 = vpop.f32.mrb[0].mxu0
      %v2346 = vpop.f32.mrb[0].mxu0
      %v2347 = vadd.f32 %v2174, %v2346
      %v2348 = vpop.f32.mrb[0].mxu0
      %2349 = vmatprep.mubr.bf16.mxu0 0
      %2350 = vmatmul.mubr.bf16.gmra.mrb[0].mxu0 %v2202
      %v2351 = vpop.f32.mrb[0].mxu0
      %v2352 = vadd.f32 %v2174, %v2351
      %v2353 = vpop.f32.mrb[0].mxu0
      %v2354 = vpop.f32.mrb[0].mxu0
      %v2355 = vadd.f32 %v2174, %v2354
      %v2356 = vpop.f32.mrb[0].mxu0
      %2357 = vmatprep.mubr.bf16.mxu0 0
      %2358 = vmatmul.mubr.bf16.gmra.mrb[0].mxu0 %v2205
      %v2359 = vpop.f32.mrb[0].mxu0
      %v2360 = vadd.f32 %v2174, %v2359
      %v2361 = vpop.f32.mrb[0].mxu0
      %v2362 = vpop.f32.mrb[0].mxu0
      %v2363 = vadd.f32 %v2174, %v2362
      %v2364 = vpop.f32.mrb[0].mxu0
      %2365 = vmatprep.mubr.bf16.mxu0 0
      %2366 = vmatmul.mubr.bf16.gmra.mrb[0].mxu0 %v2208
      %v2367 = vpop.f32.mrb[0].mxu0
      %v2368 = vadd.f32 %v2174, %v2367
      %v2369 = vpop.f32.mrb[0].mxu0
      %v2370 = vpop.f32.mrb[0].mxu0
      %v2371 = vadd.f32 %v2174, %v2370
      %v2372 = vpop.f32.mrb[0].mxu0
      %2373 = vmatprep.mubr.bf16.mxu0 0
      %2374 = vmatmul.mubr.bf16.gmra.mrb[0].mxu0 %v2211
      %v2375 = vpop.f32.mrb[0].mxu0
      %v2376 = vadd.f32 %v2174, %v2375
      %v2377 = vpop.f32.mrb[0].mxu0
      %v2378 = vpop.f32.mrb[0].mxu0
      %v2379 = vadd.f32 %v2174, %v2378
      %v2380 = vpop.f32.mrb[0].mxu0
      %2381 = vmatprep.mubr.bf16.mxu0 0
      %2382 = vmatmul.mubr.bf16.gmra.mrb[0].mxu0 %v2214
      %v2383 = vpop.f32.mrb[0].mxu0
      %v2384 = vadd.f32 %v2174, %v2383
      %v2385 = vpop.f32.mrb[0].mxu0
      %v2386 = vpop.f32.mrb[0].mxu0
      %v2387 = vadd.f32 %v2174, %v2386
      %v2388 = vpop.f32.mrb[0].mxu0
      %2389 = vmatprep.mubr.bf16.mxu0 0
      %2390 = vmatmul.mubr.bf16.gmra.mrb[0].mxu0 %v2217
      %v2391 = vpop.f32.mrb[0].mxu0
      %v2392 = vadd.f32 %v2174, %v2391
      %v2393 = vpop.f32.mrb[0].mxu0
      %v2394 = vpop.f32.mrb[0].mxu0
      %v2395 = vadd.f32 %v2174, %v2394
      %v2396 = vpop.f32.mrb[0].mxu0
      %2397 = vmatprep.mubr.bf16.mxu0 0
      %2398 = vmatmul.mubr.bf16.gmra.mrb[0].mxu0 %v2220
      %v2399 = vpop.f32.mrb[0].mxu0
      %v2400 = vadd.f32 %v2174, %v2399
      %v2401 = vpop.f32.mrb[0].mxu0
      %v2402 = vpop.f32.mrb[0].mxu0
      %v2403 = vadd.f32 %v2174, %v2402
      %v2404 = vpop.f32.mrb[0].mxu0
      %2405 = vmatprep.mubr.bf16.mxu0 0
      %2406 = vmatmul.mubr.bf16.gmra.mrb[0].mxu0 %v2223
      %v2407 = vpop.f32.mrb[0].mxu0
      %v2408 = vadd.f32 %v2174, %v2407
      %v2409 = vpop.f32.mrb[0].mxu0
      %v2410 = vpop.f32.mrb[0].mxu0
      %v2411 = vadd.f32 %v2174, %v2410
      %v2412 = vpop.f32.mrb[0].mxu0
      %2413 = vmatprep.mubr.bf16.mxu0 0
      %2414 = vmatmul.mubr.bf16.gmra.mrb[0].mxu0 %v2226
      %v2415 = vpop.f32.mrb[0].mxu0
      %v2416 = vadd.f32 %v2174, %v2415
      %v2417 = vpop.f32.mrb[0].mxu0
      %v2418 = vpop.f32.mrb[0].mxu0
      %v2419 = vadd.f32 %v2174, %v2418
      %v2420 = vpop.f32.mrb[0].mxu0
      %2421 = vmatprep.mubr.bf16.mxu0 0
      %2422 = vmatmul.mubr.bf16.gmra.mrb[0].mxu0 %v2229
      %v2423 = vpop.f32.mrb[0].mxu0
      %v2424 = vadd.f32 %v2174, %v2423
      %v2425 = vpop.f32.mrb[0].mxu0
      %v2426 = vpop.f32.mrb[0].mxu0
      %v2427 = vadd.f32 %v2174, %v2426
      %v2428 = vpop.f32.mrb[0].mxu0
      %2429 = vmatprep.mubr.bf16.mxu0 0
      %2430 = vmatmul.mubr.bf16.gmra.mrb[0].mxu0 %v2232
      %v2431 = vpop.f32.mrb[0].mxu0
      %v2432 = vadd.f32 %v2174, %v2431
      %v2433 = vpop.f32.mrb[0].mxu0
      %v2434 = vpop.f32.mrb[0].mxu0
      %v2435 = vadd.f32 %v2174, %v2434
      %v2436 = vpop.f32.mrb[0].mxu0
      %2437 = vmatprep.mubr.bf16.mxu0 0
      %2438 = vmatmul.mubr.bf16.gmra.mrb[0].mxu0 %v2235
      %v2439 = vpop.f32.mrb[0].mxu0
      %v2440 = vadd.f32 %v2174, %v2439
      %v2441 = vpop.f32.mrb[0].mxu0
      %v2442 = vpop.f32.mrb[0].mxu0
      %v2443 = vadd.f32 %v2174, %v2442
      %v2444 = vpop.f32.mrb[0].mxu0
      %2445 = vmatprep.mubr.bf16.mxu0 0
      %2446 = vmatmul.mubr.bf16.gmra.mrb[0].mxu0 %v2238
      %v2447 = vpop.f32.mrb[0].mxu0
      %v2448 = vadd.f32 %v2174, %v2447
      %v2449 = vpop.f32.mrb[0].mxu0
      %v2450 = vpop.f32.mrb[0].mxu0
      %v2451 = vadd.f32 %v2174, %v2450
      %v2452 = vpop.f32.mrb[0].mxu0
      %2453 = vmatprep.mubr.bf16.mxu0 0
      %2454 = vmatmul.mubr.bf16.gmra.mrb[0].mxu0 %v2241
      %v2455 = vpop.f32.mrb[0].mxu0
      %v2456 = vadd.f32 %v2174, %v2455
      %v2457 = vpop.f32.mrb[0].mxu0
      %v2458 = vpop.f32.mrb[0].mxu0
      %v2459 = vadd.f32 %v2174, %v2458
      %v2460 = vpop.f32.mrb[0].mxu0
      %2461 = vmatprep.mubr.bf16.mxu0 0
      %2462 = vmatmul.mubr.bf16.gmra.mrb[0].mxu0 %v2244
      %v2463 = vpop.f32.mrb[0].mxu0
      %v2464 = vadd.f32 %v2174, %v2463
      %v2465 = vpop.f32.mrb[0].mxu0
      %v2466 = vpop.f32.mrb[0].mxu0
      %v2467 = vadd.f32 %v2174, %v2466
      %v2468 = vpop.f32.mrb[0].mxu0
      %2469 = vmatprep.mubr.bf16.mxu0 0
      %2470 = vmatmul.mubr.bf16.gmra.mrb[0].mxu0 %v2247
      %v2471 = vpop.f32.mrb[0].mxu0
      %v2472 = vadd.f32 %v2174, %v2471
      %v2473 = vpop.f32.mrb[0].mxu0
      %v2474 = vpop.f32.mrb[0].mxu0
      %v2475 = vadd.f32 %v2174, %v2474
      %v2476 = vpop.f32.mrb[0].mxu0
      %2477 = vmatprep.mubr.bf16.mxu0 0
      %2478 = vmatmul.mubr.bf16.gmra.mrb[0].mxu0 %v2250
      %v2479 = vpop.f32.mrb[0].mxu0
      %v2480 = vadd.f32 %v2174, %v2479
      %v2481 = vpop.f32.mrb[0].mxu0
      %v2482 = vpop.f32.mrb[0].mxu0
      %v2483 = vadd.f32 %v2174, %v2482
      %v2484 = vpop.f32.mrb[0].mxu0
      %2485 = vmatprep.mubr.bf16.mxu0 0
      %2486 = vmatmul.mubr.bf16.gmra.mrb[0].mxu0 %v2253
      %v2487 = vpop.f32.mrb[0].mxu0
      %v2488 = vadd.f32 %v2174, %v2487
      %v2489 = vpop.f32.mrb[0].mxu0
      %v2490 = vpop.f32.mrb[0].mxu0
      %v2491 = vadd.f32 %v2174, %v2490
      %v2492 = vpop.f32.mrb[0].mxu0
      %2493 = vmatprep.mubr.bf16.mxu0 0
      %2494 = vmatmul.mubr.bf16.gmra.mrb[0].mxu0 %v2256
      %v2495 = vpop.f32.mrb[0].mxu0
      %v2496 = vadd.f32 %v2174, %v2495
      %v2497 = vpop.f32.mrb[0].mxu0
      %v2498 = vpop.f32.mrb[0].mxu0
      %v2499 = vadd.f32 %v2174, %v2498
      %v2500 = vpop.f32.mrb[0].mxu0
      %2501 = vmatprep.mubr.bf16.mxu0 0
      %2502 = vmatmul.mubr.bf16.gmra.mrb[0].mxu0 %v2259
      %v2503 = vpop.f32.mrb[0].mxu0
      %v2504 = vadd.f32 %v2174, %v2503
      %v2505 = vpop.f32.mrb[0].mxu0
      %v2506 = vpop.f32.mrb[0].mxu0
      %v2507 = vadd.f32 %v2174, %v2506
      %v2508 = vpop.f32.mrb[0].mxu0
      %2509 = vmatprep.mubr.bf16.mxu0 0
      %2510 = vmatmul.mubr.bf16.gmra.mrb[0].mxu0 %v2262
      %v2511 = vpop.f32.mrb[0].mxu0
      %v2512 = vadd.f32 %v2174, %v2511
      %v2513 = vpop.f32.mrb[0].mxu0
      %v2514 = vpop.f32.mrb[0].mxu0
      %v2515 = vadd.f32 %v2174, %v2514
      %v2516 = vpop.f32.mrb[0].mxu0
      %2517 = vmatprep.mubr.bf16.mxu0 0
      %2518 = vmatmul.mubr.bf16.gmra.mrb[0].mxu0 %v2265
      %v2519 = vpop.f32.mrb[0].mxu0
      %v2520 = vadd.f32 %v2174, %v2519
      %v2521 = vpop.f32.mrb[0].mxu0
      %v2522 = vpop.f32.mrb[0].mxu0
      %v2523 = vadd.f32 %v2174, %v2522
      %v2524 = vpop.f32.mrb[0].mxu0
      %2525 = vmatprep.mubr.bf16.mxu0 0
      %2526 = vmatmul.mubr.bf16.gmra.mrb[0].mxu0 %v2268
      %v2527 = vpop.f32.mrb[0].mxu0
      %v2528 = vadd.f32 %v2174, %v2527
      %v2529 = vpop.f32.mrb[0].mxu0
      %v2530 = vpop.f32.mrb[0].mxu0
      %v2531 = vadd.f32 %v2174, %v2530
      %v2532 = vpop.f32.mrb[0].mxu0
      %2533 = vmatprep.mubr.bf16.mxu0 0
      %2534 = vmatmul.mubr.bf16.gmra.mrb[0].mxu0 %v2271
      %v2535 = vpop.f32.mrb[0].mxu0
      %v2536 = vadd.f32 %v2174, %v2535
      %v2537 = vpop.f32.mrb[0].mxu0
      %v2538 = vpop.f32.mrb[0].mxu0
      %v2539 = vadd.f32 %v2174, %v2538
      %v2540 = vpop.f32.mrb[0].mxu0
      %2541 = vmatprep.mubr.bf16.mxu0 0
      %2542 = vmatmul.mubr.bf16.gmra.mrb[0].mxu0 %v2274
      %v2543 = vpop.f32.mrb[0].mxu0
      %v2544 = vadd.f32 %v2174, %v2543
      %v2545 = vpop.f32.mrb[0].mxu0
      %v2546 = vpop.f32.mrb[0].mxu0
      %v2547 = vadd.f32 %v2174, %v2546
      %v2548 = vpop.f32.mrb[0].mxu0
      %2549 = vmatprep.mubr.bf16.mxu0 0
      %2550 = vmatmul.mubr.bf16.gmra.mrb[0].mxu0 %v2277
      %v2551 = vpop.f32.mrb[0].mxu0
      %v2552 = vadd.f32 %v2174, %v2551
      %v2553 = vpop.f32.mrb[0].mxu0
      %v2554 = vpop.f32.mrb[0].mxu0
      %v2555 = vadd.f32 %v2174, %v2554
      %v2556 = vpop.f32.mrb[0].mxu0
      %2557 = vmatprep.mubr.bf16.mxu0 0
      %2558 = vmatmul.mubr.bf16.gmra.mrb[0].mxu0 %v2280
      %v2559 = vpop.f32.mrb[0].mxu0
      %v2560 = vadd.f32 %v2174, %v2559
      %v2561 = vpop.f32.mrb[0].mxu0
      %v2562 = vpop.f32.mrb[0].mxu0
      %v2563 = vadd.f32 %v2174, %v2562
      %v2564 = vpop.f32.mrb[0].mxu0
      %2565 = vmatprep.mubr.bf16.mxu0 0
      %2566 = vmatmul.mubr.bf16.gmra.mrb[0].mxu0 %v2283
      %v2567 = vpop.f32.mrb[0].mxu0
      %v2568 = vadd.f32 %v2174, %v2567
      %v2569 = vpop.f32.mrb[0].mxu0
      %v2570 = vpop.f32.mrb[0].mxu0
      %v2571 = vadd.f32 %v2174, %v2570
      %v2572 = vpop.f32.mrb[0].mxu0
      %2573 = vdwg.mxu0
      %v2574 = vmax.f32 %v2320, 0.0
      %v2575 = vmax.f32 %v2323, 0.0
      %v2576 = vmax.f32 %v2328, 0.0
      %v2577 = vmax.f32 %v2331, 0.0
      %v2578 = vmax.f32 %v2336, 0.0
      %v2579 = vmax.f32 %v2339, 0.0
      %v2580 = vmax.f32 %v2344, 0.0
      %v2581 = vmax.f32 %v2347, 0.0
      %v2582 = vmax.f32 %v2352, 0.0
      %v2583 = vmax.f32 %v2355, 0.0
      %v2584 = vmax.f32 %v2360, 0.0
      %v2585 = vmax.f32 %v2363, 0.0
      %v2586 = vmax.f32 %v2368, 0.0
      %v2587 = vmax.f32 %v2371, 0.0
      %v2588 = vmax.f32 %v2376, 0.0
      %v2589 = vmax.f32 %v2379, 0.0
      %v2590 = vmax.f32 %v2384, 0.0
      %v2591 = vmax.f32 %v2387, 0.0
      %v2592 = vmax.f32 %v2392, 0.0
      %v2593 = vmax.f32 %v2395, 0.0
      %v2594 = vmax.f32 %v2400, 0.0
      %v2595 = vmax.f32 %v2403, 0.0
      %v2596 = vmax.f32 %v2408, 0.0
      %v2597 = vmax.f32 %v2411, 0.0
      %v2598 = vmax.f32 %v2416, 0.0
      %v2599 = vmax.f32 %v2419, 0.0
      %v2600 = vmax.f32 %v2424, 0.0
      %v2601 = vmax.f32 %v2427, 0.0
      %v2602 = vmax.f32 %v2432, 0.0
      %v2603 = vmax.f32 %v2435, 0.0
      %v2604 = vmax.f32 %v2440, 0.0
      %v2605 = vmax.f32 %v2443, 0.0
      %v2606 = vmax.f32 %v2448, 0.0
      %v2607 = vmax.f32 %v2451, 0.0
      %v2608 = vmax.f32 %v2456, 0.0
      %v2609 = vmax.f32 %v2459, 0.0
      %v2610 = vmax.f32 %v2464, 0.0
      %v2611 = vmax.f32 %v2467, 0.0
      %v2612 = vmax.f32 %v2472, 0.0
      %v2613 = vmax.f32 %v2475, 0.0
      %v2614 = vmax.f32 %v2480, 0.0
      %v2615 = vmax.f32 %v2483, 0.0
      %v2616 = vmax.f32 %v2488, 0.0
      %v2617 = vmax.f32 %v2491, 0.0
      %v2618 = vmax.f32 %v2496, 0.0
      %v2619 = vmax.f32 %v2499, 0.0
      %v2620 = vmax.f32 %v2504, 0.0
      %v2621 = vmax.f32 %v2507, 0.0
      %v2622 = vmax.f32 %v2512, 0.0
      %v2623 = vmax.f32 %v2515, 0.0
      %v2624 = vmax.f32 %v2520, 0.0
      %v2625 = vmax.f32 %v2523, 0.0
      %v2626 = vmax.f32 %v2528, 0.0
      %v2627 = vmax.f32 %v2531, 0.0
      %v2628 = vmax.f32 %v2536, 0.0
      %v2629 = vmax.f32 %v2539, 0.0
      %v2630 = vmax.f32 %v2544, 0.0
      %v2631 = vmax.f32 %v2547, 0.0
      %v2632 = vmax.f32 %v2552, 0.0
      %v2633 = vmax.f32 %v2555, 0.0
      %v2634 = vmax.f32 %v2560, 0.0
      %v2635 = vmax.f32 %v2563, 0.0
      %v2636 = vmax.f32 %v2568, 0.0
      %v2637 = vmax.f32 %v2571, 0.0
      %v2638 = vld [vmem:[%s5] sm:$0xf]
      %v2639 = vld [vmem:[%s5 + $0x4] sm:$0xf]
      %v2640 = vld [vmem:[%s5 + $0x8] sm:$0xf]
      %v2641 = vld [vmem:[%s5 + $0xc] sm:$0xf]
      %v2642 = vld [vmem:[%s6] sm:$0x1]
      %v2643 = vpack.c.bf16 %v2575, %v2574
      %v2644 = vpack.c.bf16 %v2577, %v2576
      %v2645 = vpack.c.bf16 %v2579, %v2578
      %v2646 = vpack.c.bf16 %v2581, %v2580
      %v2647 = vpack.c.bf16 %v2583, %v2582
      %v2648 = vpack.c.bf16 %v2585, %v2584
      %v2649 = vpack.c.bf16 %v2587, %v2586
      %v2650 = vpack.c.bf16 %v2589, %v2588
      %v2651 = vpack.c.bf16 %v2591, %v2590
      %v2652 = vpack.c.bf16 %v2593, %v2592
      %v2653 = vpack.c.bf16 %v2595, %v2594
      %v2654 = vpack.c.bf16 %v2597, %v2596
      %v2655 = vpack.c.bf16 %v2599, %v2598
      %v2656 = vpack.c.bf16 %v2601, %v2600
      %v2657 = vpack.c.bf16 %v2603, %v2602
      %v2658 = vpack.c.bf16 %v2605, %v2604
      %v2659 = vpack.c.bf16 %v2607, %v2606
      %v2660 = vpack.c.bf16 %v2609, %v2608
      %v2661 = vpack.c.bf16 %v2611, %v2610
      %v2662 = vpack.c.bf16 %v2613, %v2612
      %v2663 = vpack.c.bf16 %v2615, %v2614
      %v2664 = vpack.c.bf16 %v2617, %v2616
      %v2665 = vpack.c.bf16 %v2619, %v2618
      %v2666 = vpack.c.bf16 %v2621, %v2620
      %v2667 = vpack.c.bf16 %v2623, %v2622
      %v2668 = vpack.c.bf16 %v2625, %v2624
      %v2669 = vpack.c.bf16 %v2627, %v2626
      %v2670 = vpack.c.bf16 %v2629, %v2628
      %v2671 = vpack.c.bf16 %v2631, %v2630
      %v2672 = vpack.c.bf16 %v2633, %v2632
      %v2673 = vpack.c.bf16 %v2635, %v2634
      %v2674 = vpack.c.bf16 %v2637, %v2636
      %v2676 = vlaneseq
      %v2677 = vshrl.u32 %v2676, 7
      %v2678 = vsub.s32 0, %v2677
      %v2679 = vrot.slane %v2642, %v2678
      %v2685 = vunpack.c.l.b16 %v2638
      %v2686 = vunpack.c.l.b16 %v2639
      %v2687 = vunpack.c.l.b16 %v2640
      %v2688 = vunpack.c.l.b16 %v2641
      %v2689 = vpack.c.b16 %v2686, %v2685
      %v2690 = vpack.c.b16 %v2688, %v2687
      %v2694 = vsel %vm2188, %v2643, 0
      %v2697 = vsel %vm2188, %v2644, 0
      %v2700 = vsel %vm2188, %v2645, 0
      %v2703 = vsel %vm2188, %v2646, 0
      %v2706 = vsel %vm2188, %v2647, 0
      %v2709 = vsel %vm2188, %v2648, 0
      %v2712 = vsel %vm2188, %v2649, 0
      %v2715 = vsel %vm2188, %v2650, 0
      %v2718 = vsel %vm2188, %v2651, 0
      %v2721 = vsel %vm2188, %v2652, 0
      %v2724 = vsel %vm2188, %v2653, 0
      %v2727 = vsel %vm2188, %v2654, 0
      %v2730 = vsel %vm2188, %v2655, 0
      %v2733 = vsel %vm2188, %v2656, 0
      %v2736 = vsel %vm2188, %v2657, 0
      %v2739 = vsel %vm2188, %v2658, 0
      %v2742 = vsel %vm2188, %v2659, 0
      %v2745 = vsel %vm2188, %v2660, 0
      %v2748 = vsel %vm2188, %v2661, 0
      %v2751 = vsel %vm2188, %v2662, 0
      %v2754 = vsel %vm2188, %v2663, 0
      %v2757 = vsel %vm2188, %v2664, 0
      %v2760 = vsel %vm2188, %v2665, 0
      %v2763 = vsel %vm2188, %v2666, 0
      %v2766 = vsel %vm2188, %v2667, 0
      %v2769 = vsel %vm2188, %v2668, 0
      %v2772 = vsel %vm2188, %v2669, 0
      %v2775 = vsel %vm2188, %v2670, 0
      %v2778 = vsel %vm2188, %v2671, 0
      %v2781 = vsel %vm2188, %v2672, 0
      %v2784 = vsel %vm2188, %v2673, 0
      %v2787 = vsel %vm2188, %v2674, 0
      %2789 = vmatprep.subr.bf16.mxu0 0
      %2790 = vmatpush1.bf16.msra.mxu0 %v2689
      %2791 = vmatprep.subr.bf16.mxu0 0
      %2792 = vmatpush1.bf16.msra.mxu0 %v2690
      %2793 = vmatprep.subr.bf16.mxu0 0
      %2794 = vmatpush1.bf16.msra.mxu0 0
      %2795 = vmatprep.subr.bf16.mxu0 0
      %2796 = vmatpush1.bf16.msra.mxu0 0
      %2797 = vmatprep.subr.bf16.mxu0 0
      %2798 = vmatpush1.bf16.msra.mxu0 0
      %2799 = vmatprep.subr.bf16.mxu0 0
      %2800 = vmatpush1.bf16.msra.mxu0 0
      %2801 = vmatprep.subr.bf16.mxu0 0
      %2802 = vmatpush1.bf16.msra.mxu0 0
      %2803 = vmatprep.subr.bf16.mxu0 0
      %2804 = vmatpush1.bf16.msra.mxu0 0
      %2805 = vmatprep.subr.bf16.mxu0 0
      %2806 = vmatpush1.bf16.msra.mxu0 0
      %2807 = vmatprep.subr.bf16.mxu0 0
      %2808 = vmatpush1.bf16.msra.mxu0 0
      %2809 = vmatprep.subr.bf16.mxu0 0
      %2810 = vmatpush1.bf16.msra.mxu0 0
      %2811 = vmatprep.subr.bf16.mxu0 0
      %2812 = vmatpush1.bf16.msra.mxu0 0
      %2813 = vmatprep.subr.bf16.mxu0 0
      %2814 = vmatpush1.bf16.msra.mxu0 0
      %2815 = vmatprep.subr.bf16.mxu0 0
      %2816 = vmatpush1.bf16.msra.mxu0 0
      %2817 = vmatprep.subr.bf16.mxu0 0
      %2818 = vmatpush1.bf16.msra.mxu0 0
      %2819 = vmatprep.subr.bf16.mxu0 0
      %2820 = vmatpush1.bf16.msra.mxu0 0
      %2821 = vmatprep.mubr.bf16.mxu0 0
      %2822 = vmatmul.mubr.bf16.gmra.mrb[0].mxu0 %v2694
      %v2823 = vpop.f32.mrb[0].mxu0
      %v2824 = vadd.f32 %v2679, %v2823
      %v2825 = vpop.f32.mrb[0].mxu0
      %v2826 = vpop.f32.mrb[0].mxu0
      %v2827 = vadd.f32 %v2679, %v2826
      %v2828 = vpop.f32.mrb[0].mxu0
      %2829 = vmatprep.mubr.bf16.mxu0 0
      %2830 = vmatmul.mubr.bf16.gmra.mrb[0].mxu0 %v2697
      %v2831 = vpop.f32.mrb[0].mxu0
      %v2832 = vadd.f32 %v2679, %v2831
      %v2833 = vpop.f32.mrb[0].mxu0
      %v2834 = vpop.f32.mrb[0].mxu0
      %v2835 = vadd.f32 %v2679, %v2834
      %v2836 = vpop.f32.mrb[0].mxu0
      %2837 = vmatprep.mubr.bf16.mxu0 0
      %2838 = vmatmul.mubr.bf16.gmra.mrb[0].mxu0 %v2700
      %v2839 = vpop.f32.mrb[0].mxu0
      %v2840 = vadd.f32 %v2679, %v2839
      %v2841 = vpop.f32.mrb[0].mxu0
      %v2842 = vpop.f32.mrb[0].mxu0
      %v2843 = vadd.f32 %v2679, %v2842
      %v2844 = vpop.f32.mrb[0].mxu0
      %2845 = vmatprep.mubr.bf16.mxu0 0
      %2846 = vmatmul.mubr.bf16.gmra.mrb[0].mxu0 %v2703
      %v2847 = vpop.f32.mrb[0].mxu0
      %v2848 = vadd.f32 %v2679, %v2847
      %v2849 = vpop.f32.mrb[0].mxu0
      %v2850 = vpop.f32.mrb[0].mxu0
      %v2851 = vadd.f32 %v2679, %v2850
      %v2852 = vpop.f32.mrb[0].mxu0
      %2853 = vmatprep.mubr.bf16.mxu0 0
      %2854 = vmatmul.mubr.bf16.gmra.mrb[0].mxu0 %v2706
      %v2855 = vpop.f32.mrb[0].mxu0
      %v2856 = vadd.f32 %v2679, %v2855
      %v2857 = vpop.f32.mrb[0].mxu0
      %v2858 = vpop.f32.mrb[0].mxu0
      %v2859 = vadd.f32 %v2679, %v2858
      %v2860 = vpop.f32.mrb[0].mxu0
      %2861 = vmatprep.mubr.bf16.mxu0 0
      %2862 = vmatmul.mubr.bf16.gmra.mrb[0].mxu0 %v2709
      %v2863 = vpop.f32.mrb[0].mxu0
      %v2864 = vadd.f32 %v2679, %v2863
      %v2865 = vpop.f32.mrb[0].mxu0
      %v2866 = vpop.f32.mrb[0].mxu0
      %v2867 = vadd.f32 %v2679, %v2866
      %v2868 = vpop.f32.mrb[0].mxu0
      %2869 = vmatprep.mubr.bf16.mxu0 0
      %2870 = vmatmul.mubr.bf16.gmra.mrb[0].mxu0 %v2712
      %v2871 = vpop.f32.mrb[0].mxu0
      %v2872 = vadd.f32 %v2679, %v2871
      %v2873 = vpop.f32.mrb[0].mxu0
      %v2874 = vpop.f32.mrb[0].mxu0
      %v2875 = vadd.f32 %v2679, %v2874
      %v2876 = vpop.f32.mrb[0].mxu0
      %2877 = vmatprep.mubr.bf16.mxu0 0
      %2878 = vmatmul.mubr.bf16.gmra.mrb[0].mxu0 %v2715
      %v2879 = vpop.f32.mrb[0].mxu0
      %v2880 = vadd.f32 %v2679, %v2879
      %v2881 = vpop.f32.mrb[0].mxu0
      %v2882 = vpop.f32.mrb[0].mxu0
      %v2883 = vadd.f32 %v2679, %v2882
      %v2884 = vpop.f32.mrb[0].mxu0
      %2885 = vmatprep.mubr.bf16.mxu0 0
      %2886 = vmatmul.mubr.bf16.gmra.mrb[0].mxu0 %v2718
      %v2887 = vpop.f32.mrb[0].mxu0
      %v2888 = vadd.f32 %v2679, %v2887
      %v2889 = vpop.f32.mrb[0].mxu0
      %v2890 = vpop.f32.mrb[0].mxu0
      %v2891 = vadd.f32 %v2679, %v2890
      %v2892 = vpop.f32.mrb[0].mxu0
      %2893 = vmatprep.mubr.bf16.mxu0 0
      %2894 = vmatmul.mubr.bf16.gmra.mrb[0].mxu0 %v2721
      %v2895 = vpop.f32.mrb[0].mxu0
      %v2896 = vadd.f32 %v2679, %v2895
      %v2897 = vpop.f32.mrb[0].mxu0
      %v2898 = vpop.f32.mrb[0].mxu0
      %v2899 = vadd.f32 %v2679, %v2898
      %v2900 = vpop.f32.mrb[0].mxu0
      %2901 = vmatprep.mubr.bf16.mxu0 0
      %2902 = vmatmul.mubr.bf16.gmra.mrb[0].mxu0 %v2724
      %v2903 = vpop.f32.mrb[0].mxu0
      %v2904 = vadd.f32 %v2679, %v2903
      %v2905 = vpop.f32.mrb[0].mxu0
      %v2906 = vpop.f32.mrb[0].mxu0
      %v2907 = vadd.f32 %v2679, %v2906
      %v2908 = vpop.f32.mrb[0].mxu0
      %2909 = vmatprep.mubr.bf16.mxu0 0
      %2910 = vmatmul.mubr.bf16.gmra.mrb[0].mxu0 %v2727
      %v2911 = vpop.f32.mrb[0].mxu0
      %v2912 = vadd.f32 %v2679, %v2911
      %v2913 = vpop.f32.mrb[0].mxu0
      %v2914 = vpop.f32.mrb[0].mxu0
      %v2915 = vadd.f32 %v2679, %v2914
      %v2916 = vpop.f32.mrb[0].mxu0
      %2917 = vmatprep.mubr.bf16.mxu0 0
      %2918 = vmatmul.mubr.bf16.gmra.mrb[0].mxu0 %v2730
      %v2919 = vpop.f32.mrb[0].mxu0
      %v2920 = vadd.f32 %v2679, %v2919
      %v2921 = vpop.f32.mrb[0].mxu0
      %v2922 = vpop.f32.mrb[0].mxu0
      %v2923 = vadd.f32 %v2679, %v2922
      %v2924 = vpop.f32.mrb[0].mxu0
      %2925 = vmatprep.mubr.bf16.mxu0 0
      %2926 = vmatmul.mubr.bf16.gmra.mrb[0].mxu0 %v2733
      %v2927 = vpop.f32.mrb[0].mxu0
      %v2928 = vadd.f32 %v2679, %v2927
      %v2929 = vpop.f32.mrb[0].mxu0
      %v2930 = vpop.f32.mrb[0].mxu0
      %v2931 = vadd.f32 %v2679, %v2930
      %v2932 = vpop.f32.mrb[0].mxu0
      %2933 = vmatprep.mubr.bf16.mxu0 0
      %2934 = vmatmul.mubr.bf16.gmra.mrb[0].mxu0 %v2736
      %v2935 = vpop.f32.mrb[0].mxu0
      %v2936 = vadd.f32 %v2679, %v2935
      %v2937 = vpop.f32.mrb[0].mxu0
      %v2938 = vpop.f32.mrb[0].mxu0
      %v2939 = vadd.f32 %v2679, %v2938
      %v2940 = vpop.f32.mrb[0].mxu0
      %2941 = vmatprep.mubr.bf16.mxu0 0
      %2942 = vmatmul.mubr.bf16.gmra.mrb[0].mxu0 %v2739
      %v2943 = vpop.f32.mrb[0].mxu0
      %v2944 = vadd.f32 %v2679, %v2943
      %v2945 = vpop.f32.mrb[0].mxu0
      %v2946 = vpop.f32.mrb[0].mxu0
      %v2947 = vadd.f32 %v2679, %v2946
      %v2948 = vpop.f32.mrb[0].mxu0
      %2949 = vmatprep.mubr.bf16.mxu0 0
      %2950 = vmatmul.mubr.bf16.gmra.mrb[0].mxu0 %v2742
      %v2951 = vpop.f32.mrb[0].mxu0
      %v2952 = vadd.f32 %v2679, %v2951
      %v2953 = vpop.f32.mrb[0].mxu0
      %v2954 = vpop.f32.mrb[0].mxu0
      %v2955 = vadd.f32 %v2679, %v2954
      %v2956 = vpop.f32.mrb[0].mxu0
      %2957 = vmatprep.mubr.bf16.mxu0 0
      %2958 = vmatmul.mubr.bf16.gmra.mrb[0].mxu0 %v2745
      %v2959 = vpop.f32.mrb[0].mxu0
      %v2960 = vadd.f32 %v2679, %v2959
      %v2961 = vpop.f32.mrb[0].mxu0
      %v2962 = vpop.f32.mrb[0].mxu0
      %v2963 = vadd.f32 %v2679, %v2962
      %v2964 = vpop.f32.mrb[0].mxu0
      %2965 = vmatprep.mubr.bf16.mxu0 0
      %2966 = vmatmul.mubr.bf16.gmra.mrb[0].mxu0 %v2748
      %v2967 = vpop.f32.mrb[0].mxu0
      %v2968 = vadd.f32 %v2679, %v2967
      %v2969 = vpop.f32.mrb[0].mxu0
      %v2970 = vpop.f32.mrb[0].mxu0
      %v2971 = vadd.f32 %v2679, %v2970
      %v2972 = vpop.f32.mrb[0].mxu0
      %2973 = vmatprep.mubr.bf16.mxu0 0
      %2974 = vmatmul.mubr.bf16.gmra.mrb[0].mxu0 %v2751
      %v2975 = vpop.f32.mrb[0].mxu0
      %v2976 = vadd.f32 %v2679, %v2975
      %v2977 = vpop.f32.mrb[0].mxu0
      %v2978 = vpop.f32.mrb[0].mxu0
      %v2979 = vadd.f32 %v2679, %v2978
      %v2980 = vpop.f32.mrb[0].mxu0
      %2981 = vmatprep.mubr.bf16.mxu0 0
      %2982 = vmatmul.mubr.bf16.gmra.mrb[0].mxu0 %v2754
      %v2983 = vpop.f32.mrb[0].mxu0
      %v2984 = vadd.f32 %v2679, %v2983
      %v2985 = vpop.f32.mrb[0].mxu0
      %v2986 = vpop.f32.mrb[0].mxu0
      %v2987 = vadd.f32 %v2679, %v2986
      %v2988 = vpop.f32.mrb[0].mxu0
      %2989 = vmatprep.mubr.bf16.mxu0 0
      %2990 = vmatmul.mubr.bf16.gmra.mrb[0].mxu0 %v2757
      %v2991 = vpop.f32.mrb[0].mxu0
      %v2992 = vadd.f32 %v2679, %v2991
      %v2993 = vpop.f32.mrb[0].mxu0
      %v2994 = vpop.f32.mrb[0].mxu0
      %v2995 = vadd.f32 %v2679, %v2994
      %v2996 = vpop.f32.mrb[0].mxu0
      %2997 = vmatprep.mubr.bf16.mxu0 0
      %2998 = vmatmul.mubr.bf16.gmra.mrb[0].mxu0 %v2760
      %v2999 = vpop.f32.mrb[0].mxu0
      %v3000 = vadd.f32 %v2679, %v2999
      %v3001 = vpop.f32.mrb[0].mxu0
      %v3002 = vpop.f32.mrb[0].mxu0
      %v3003 = vadd.f32 %v2679, %v3002
      %v3004 = vpop.f32.mrb[0].mxu0
      %3005 = vmatprep.mubr.bf16.mxu0 0
      %3006 = vmatmul.mubr.bf16.gmra.mrb[0].mxu0 %v2763
      %v3007 = vpop.f32.mrb[0].mxu0
      %v3008 = vadd.f32 %v2679, %v3007
      %v3009 = vpop.f32.mrb[0].mxu0
      %v3010 = vpop.f32.mrb[0].mxu0
      %v3011 = vadd.f32 %v2679, %v3010
      %v3012 = vpop.f32.mrb[0].mxu0
      %3013 = vmatprep.mubr.bf16.mxu0 0
      %3014 = vmatmul.mubr.bf16.gmra.mrb[0].mxu0 %v2766
      %v3015 = vpop.f32.mrb[0].mxu0
      %v3016 = vadd.f32 %v2679, %v3015
      %v3017 = vpop.f32.mrb[0].mxu0
      %v3018 = vpop.f32.mrb[0].mxu0
      %v3019 = vadd.f32 %v2679, %v3018
      %v3020 = vpop.f32.mrb[0].mxu0
      %3021 = vmatprep.mubr.bf16.mxu0 0
      %3022 = vmatmul.mubr.bf16.gmra.mrb[0].mxu0 %v2769
      %v3023 = vpop.f32.mrb[0].mxu0
      %v3024 = vadd.f32 %v2679, %v3023
      %v3025 = vpop.f32.mrb[0].mxu0
      %v3026 = vpop.f32.mrb[0].mxu0
      %v3027 = vadd.f32 %v2679, %v3026
      %v3028 = vpop.f32.mrb[0].mxu0
      %3029 = vmatprep.mubr.bf16.mxu0 0
      %3030 = vmatmul.mubr.bf16.gmra.mrb[0].mxu0 %v2772
      %v3031 = vpop.f32.mrb[0].mxu0
      %v3032 = vadd.f32 %v2679, %v3031
      %v3033 = vpop.f32.mrb[0].mxu0
      %v3034 = vpop.f32.mrb[0].mxu0
      %v3035 = vadd.f32 %v2679, %v3034
      %v3036 = vpop.f32.mrb[0].mxu0
      %3037 = vmatprep.mubr.bf16.mxu0 0
      %3038 = vmatmul.mubr.bf16.gmra.mrb[0].mxu0 %v2775
      %v3039 = vpop.f32.mrb[0].mxu0
      %v3040 = vadd.f32 %v2679, %v3039
      %v3041 = vpop.f32.mrb[0].mxu0
      %v3042 = vpop.f32.mrb[0].mxu0
      %v3043 = vadd.f32 %v2679, %v3042
      %v3044 = vpop.f32.mrb[0].mxu0
      %3045 = vmatprep.mubr.bf16.mxu0 0
      %3046 = vmatmul.mubr.bf16.gmra.mrb[0].mxu0 %v2778
      %v3047 = vpop.f32.mrb[0].mxu0
      %v3048 = vadd.f32 %v2679, %v3047
      %v3049 = vpop.f32.mrb[0].mxu0
      %v3050 = vpop.f32.mrb[0].mxu0
      %v3051 = vadd.f32 %v2679, %v3050
      %v3052 = vpop.f32.mrb[0].mxu0
      %3053 = vmatprep.mubr.bf16.mxu0 0
      %3054 = vmatmul.mubr.bf16.gmra.mrb[0].mxu0 %v2781
      %v3055 = vpop.f32.mrb[0].mxu0
      %v3056 = vadd.f32 %v2679, %v3055
      %v3057 = vpop.f32.mrb[0].mxu0
      %v3058 = vpop.f32.mrb[0].mxu0
      %v3059 = vadd.f32 %v2679, %v3058
      %v3060 = vpop.f32.mrb[0].mxu0
      %3061 = vmatprep.mubr.bf16.mxu0 0
      %3062 = vmatmul.mubr.bf16.gmra.mrb[0].mxu0 %v2784
      %v3063 = vpop.f32.mrb[0].mxu0
      %v3064 = vadd.f32 %v2679, %v3063
      %v3065 = vpop.f32.mrb[0].mxu0
      %v3066 = vpop.f32.mrb[0].mxu0
      %v3067 = vadd.f32 %v2679, %v3066
      %v3068 = vpop.f32.mrb[0].mxu0
      %3069 = vmatprep.mubr.bf16.mxu0 0
      %3070 = vmatmul.mubr.bf16.gmra.mrb[0].mxu0 %v2787
      %v3071 = vpop.f32.mrb[0].mxu0
      %v3072 = vadd.f32 %v2679, %v3071
      %v3073 = vpop.f32.mrb[0].mxu0
      %v3074 = vpop.f32.mrb[0].mxu0
      %v3075 = vadd.f32 %v2679, %v3074
      %v3076 = vpop.f32.mrb[0].mxu0
      %3077 = vdwg.mxu0
      %v3078 = vmax.f32 %v2824, 0.0
      %v3079 = vmax.f32 %v2827, 0.0
      %v3080 = vmax.f32 %v2832, 0.0
      %v3081 = vmax.f32 %v2835, 0.0
      %v3082 = vmax.f32 %v2840, 0.0
      %v3083 = vmax.f32 %v2843, 0.0
      %v3084 = vmax.f32 %v2848, 0.0
      %v3085 = vmax.f32 %v2851, 0.0
      %v3086 = vmax.f32 %v2856, 0.0
      %v3087 = vmax.f32 %v2859, 0.0
      %v3088 = vmax.f32 %v2864, 0.0
      %v3089 = vmax.f32 %v2867, 0.0
      %v3090 = vmax.f32 %v2872, 0.0
      %v3091 = vmax.f32 %v2875, 0.0
      %v3092 = vmax.f32 %v2880, 0.0
      %v3093 = vmax.f32 %v2883, 0.0
      %v3094 = vmax.f32 %v2888, 0.0
      %v3095 = vmax.f32 %v2891, 0.0
      %v3096 = vmax.f32 %v2896, 0.0
      %v3097 = vmax.f32 %v2899, 0.0
      %v3098 = vmax.f32 %v2904, 0.0
      %v3099 = vmax.f32 %v2907, 0.0
      %v3100 = vmax.f32 %v2912, 0.0
      %v3101 = vmax.f32 %v2915, 0.0
      %v3102 = vmax.f32 %v2920, 0.0
      %v3103 = vmax.f32 %v2923, 0.0
      %v3104 = vmax.f32 %v2928, 0.0
      %v3105 = vmax.f32 %v2931, 0.0
      %v3106 = vmax.f32 %v2936, 0.0
      %v3107 = vmax.f32 %v2939, 0.0
      %v3108 = vmax.f32 %v2944, 0.0
      %v3109 = vmax.f32 %v2947, 0.0
      %v3110 = vmax.f32 %v2952, 0.0
      %v3111 = vmax.f32 %v2955, 0.0
      %v3112 = vmax.f32 %v2960, 0.0
      %v3113 = vmax.f32 %v2963, 0.0
      %v3114 = vmax.f32 %v2968, 0.0
      %v3115 = vmax.f32 %v2971, 0.0
      %v3116 = vmax.f32 %v2976, 0.0
      %v3117 = vmax.f32 %v2979, 0.0
      %v3118 = vmax.f32 %v2984, 0.0
      %v3119 = vmax.f32 %v2987, 0.0
      %v3120 = vmax.f32 %v2992, 0.0
      %v3121 = vmax.f32 %v2995, 0.0
      %v3122 = vmax.f32 %v3000, 0.0
      %v3123 = vmax.f32 %v3003, 0.0
      %v3124 = vmax.f32 %v3008, 0.0
      %v3125 = vmax.f32 %v3011, 0.0
      %v3126 = vmax.f32 %v3016, 0.0
      %v3127 = vmax.f32 %v3019, 0.0
      %v3128 = vmax.f32 %v3024, 0.0
      %v3129 = vmax.f32 %v3027, 0.0
      %v3130 = vmax.f32 %v3032, 0.0
      %v3131 = vmax.f32 %v3035, 0.0
      %v3132 = vmax.f32 %v3040, 0.0
      %v3133 = vmax.f32 %v3043, 0.0
      %v3134 = vmax.f32 %v3048, 0.0
      %v3135 = vmax.f32 %v3051, 0.0
      %v3136 = vmax.f32 %v3056, 0.0
      %v3137 = vmax.f32 %v3059, 0.0
      %v3138 = vmax.f32 %v3064, 0.0
      %v3139 = vmax.f32 %v3067, 0.0
      %v3140 = vmax.f32 %v3072, 0.0
      %v3141 = vmax.f32 %v3075, 0.0
      %v3142 = vld [vmem:[%s7] sm:$0xf]
      %v3143 = vld [vmem:[%s7 + $0x4] sm:$0xf]
      %v3144 = vld [vmem:[%s7 + $0x8] sm:$0xf]
      %v3145 = vld [vmem:[%s7 + $0xc] sm:$0xf]
      %v3146 = vld [vmem:[%s8] sm:$0x1]
      %v3147 = vpack.c.bf16 %v3079, %v3078
      %v3148 = vpack.c.bf16 %v3081, %v3080
      %v3149 = vpack.c.bf16 %v3083, %v3082
      %v3150 = vpack.c.bf16 %v3085, %v3084
      %v3151 = vpack.c.bf16 %v3087, %v3086
      %v3152 = vpack.c.bf16 %v3089, %v3088
      %v3153 = vpack.c.bf16 %v3091, %v3090
      %v3154 = vpack.c.bf16 %v3093, %v3092
      %v3155 = vpack.c.bf16 %v3095, %v3094
      %v3156 = vpack.c.bf16 %v3097, %v3096
      %v3157 = vpack.c.bf16 %v3099, %v3098
      %v3158 = vpack.c.bf16 %v3101, %v3100
      %v3159 = vpack.c.bf16 %v3103, %v3102
      %v3160 = vpack.c.bf16 %v3105, %v3104
      %v3161 = vpack.c.bf16 %v3107, %v3106
      %v3162 = vpack.c.bf16 %v3109, %v3108
      %v3163 = vpack.c.bf16 %v3111, %v3110
      %v3164 = vpack.c.bf16 %v3113, %v3112
      %v3165 = vpack.c.bf16 %v3115, %v3114
      %v3166 = vpack.c.bf16 %v3117, %v3116
      %v3167 = vpack.c.bf16 %v3119, %v3118
      %v3168 = vpack.c.bf16 %v3121, %v3120
      %v3169 = vpack.c.bf16 %v3123, %v3122
      %v3170 = vpack.c.bf16 %v3125, %v3124
      %v3171 = vpack.c.bf16 %v3127, %v3126
      %v3172 = vpack.c.bf16 %v3129, %v3128
      %v3173 = vpack.c.bf16 %v3131, %v3130
      %v3174 = vpack.c.bf16 %v3133, %v3132
      %v3175 = vpack.c.bf16 %v3135, %v3134
      %v3176 = vpack.c.bf16 %v3137, %v3136
      %v3177 = vpack.c.bf16 %v3139, %v3138
      %v3178 = vpack.c.bf16 %v3141, %v3140
      %v3180 = vlaneseq
      %v3181 = vshrl.u32 %v3180, 7
      %v3182 = vsub.s32 0, %v3181
      %v3183 = vrot.slane %v3146, %v3182
      %v3189 = vunpack.c.l.b16 %v3142
      %v3190 = vunpack.c.l.b16 %v3143
      %v3191 = vunpack.c.l.b16 %v3144
      %v3192 = vunpack.c.l.b16 %v3145
      %v3193 = vpack.c.b16 %v3190, %v3189
      %v3194 = vpack.c.b16 %v3192, %v3191
      %v3198 = vsel %vm2188, %v3147, 0
      %v3201 = vsel %vm2188, %v3148, 0
      %v3204 = vsel %vm2188, %v3149, 0
      %v3207 = vsel %vm2188, %v3150, 0
      %v3210 = vsel %vm2188, %v3151, 0
      %v3213 = vsel %vm2188, %v3152, 0
      %v3216 = vsel %vm2188, %v3153, 0
      %v3219 = vsel %vm2188, %v3154, 0
      %v3222 = vsel %vm2188, %v3155, 0
      %v3225 = vsel %vm2188, %v3156, 0
      %v3228 = vsel %vm2188, %v3157, 0
      %v3231 = vsel %vm2188, %v3158, 0
      %v3234 = vsel %vm2188, %v3159, 0
      %v3237 = vsel %vm2188, %v3160, 0
      %v3240 = vsel %vm2188, %v3161, 0
      %v3243 = vsel %vm2188, %v3162, 0
      %v3246 = vsel %vm2188, %v3163, 0
      %v3249 = vsel %vm2188, %v3164, 0
      %v3252 = vsel %vm2188, %v3165, 0
      %v3255 = vsel %vm2188, %v3166, 0
      %v3258 = vsel %vm2188, %v3167, 0
      %v3261 = vsel %vm2188, %v3168, 0
      %v3264 = vsel %vm2188, %v3169, 0
      %v3267 = vsel %vm2188, %v3170, 0
      %v3270 = vsel %vm2188, %v3171, 0
      %v3273 = vsel %vm2188, %v3172, 0
      %v3276 = vsel %vm2188, %v3173, 0
      %v3279 = vsel %vm2188, %v3174, 0
      %v3282 = vsel %vm2188, %v3175, 0
      %v3285 = vsel %vm2188, %v3176, 0
      %v3288 = vsel %vm2188, %v3177, 0
      %v3291 = vsel %vm2188, %v3178, 0
      %3293 = vmatprep.subr.bf16.mxu0 0
      %3294 = vmatpush1.bf16.msra.mxu0 %v3193
      %3295 = vmatprep.subr.bf16.mxu0 0
      %3296 = vmatpush1.bf16.msra.mxu0 %v3194
      %3297 = vmatprep.subr.bf16.mxu0 0
      %3298 = vmatpush1.bf16.msra.mxu0 0
      %3299 = vmatprep.subr.bf16.mxu0 0
      %3300 = vmatpush1.bf16.msra.mxu0 0
      %3301 = vmatprep.subr.bf16.mxu0 0
      %3302 = vmatpush1.bf16.msra.mxu0 0
      %3303 = vmatprep.subr.bf16.mxu0 0
      %3304 = vmatpush1.bf16.msra.mxu0 0
      %3305 = vmatprep.subr.bf16.mxu0 0
      %3306 = vmatpush1.bf16.msra.mxu0 0
      %3307 = vmatprep.subr.bf16.mxu0 0
      %3308 = vmatpush1.bf16.msra.mxu0 0
      %3309 = vmatprep.subr.bf16.mxu0 0
      %3310 = vmatpush1.bf16.msra.mxu0 0
      %3311 = vmatprep.subr.bf16.mxu0 0
      %3312 = vmatpush1.bf16.msra.mxu0 0
      %3313 = vmatprep.subr.bf16.mxu0 0
      %3314 = vmatpush1.bf16.msra.mxu0 0
      %3315 = vmatprep.subr.bf16.mxu0 0
      %3316 = vmatpush1.bf16.msra.mxu0 0
      %3317 = vmatprep.subr.bf16.mxu0 0
      %3318 = vmatpush1.bf16.msra.mxu0 0
      %3319 = vmatprep.subr.bf16.mxu0 0
      %3320 = vmatpush1.bf16.msra.mxu0 0
      %3321 = vmatprep.subr.bf16.mxu0 0
      %3322 = vmatpush1.bf16.msra.mxu0 0
      %3323 = vmatprep.subr.bf16.mxu0 0
      %3324 = vmatpush1.bf16.msra.mxu0 0
      %3325 = vmatprep.mubr.bf16.mxu0 0
      %3326 = vmatmul.mubr.bf16.gmra.mrb[0].mxu0 %v3198
      %v3327 = vpop.f32.mrb[0].mxu0
      %v3328 = vadd.f32 %v3183, %v3327
      %v3329 = vpop.f32.mrb[0].mxu0
      %v3330 = vpop.f32.mrb[0].mxu0
      %v3331 = vadd.f32 %v3183, %v3330
      %v3332 = vpop.f32.mrb[0].mxu0
      %3333 = vmatprep.mubr.bf16.mxu0 0
      %3334 = vmatmul.mubr.bf16.gmra.mrb[0].mxu0 %v3201
      %v3335 = vpop.f32.mrb[0].mxu0
      %v3336 = vadd.f32 %v3183, %v3335
      %v3337 = vpop.f32.mrb[0].mxu0
      %v3338 = vpop.f32.mrb[0].mxu0
      %v3339 = vadd.f32 %v3183, %v3338
      %v3340 = vpop.f32.mrb[0].mxu0
      %3341 = vmatprep.mubr.bf16.mxu0 0
      %3342 = vmatmul.mubr.bf16.gmra.mrb[0].mxu0 %v3204
      %v3343 = vpop.f32.mrb[0].mxu0
      %v3344 = vadd.f32 %v3183, %v3343
      %v3345 = vpop.f32.mrb[0].mxu0
      %v3346 = vpop.f32.mrb[0].mxu0
      %v3347 = vadd.f32 %v3183, %v3346
      %v3348 = vpop.f32.mrb[0].mxu0
      %3349 = vmatprep.mubr.bf16.mxu0 0
      %3350 = vmatmul.mubr.bf16.gmra.mrb[0].mxu0 %v3207
      %v3351 = vpop.f32.mrb[0].mxu0
      %v3352 = vadd.f32 %v3183, %v3351
      %v3353 = vpop.f32.mrb[0].mxu0
      %v3354 = vpop.f32.mrb[0].mxu0
      %v3355 = vadd.f32 %v3183, %v3354
      %v3356 = vpop.f32.mrb[0].mxu0
      %3357 = vmatprep.mubr.bf16.mxu0 0
      %3358 = vmatmul.mubr.bf16.gmra.mrb[0].mxu0 %v3210
      %v3359 = vpop.f32.mrb[0].mxu0
      %v3360 = vadd.f32 %v3183, %v3359
      %v3361 = vpop.f32.mrb[0].mxu0
      %v3362 = vpop.f32.mrb[0].mxu0
      %v3363 = vadd.f32 %v3183, %v3362
      %v3364 = vpop.f32.mrb[0].mxu0
      %3365 = vmatprep.mubr.bf16.mxu0 0
      %3366 = vmatmul.mubr.bf16.gmra.mrb[0].mxu0 %v3213
      %v3367 = vpop.f32.mrb[0].mxu0
      %v3368 = vadd.f32 %v3183, %v3367
      %v3369 = vpop.f32.mrb[0].mxu0
      %v3370 = vpop.f32.mrb[0].mxu0
      %v3371 = vadd.f32 %v3183, %v3370
      %v3372 = vpop.f32.mrb[0].mxu0
      %3373 = vmatprep.mubr.bf16.mxu0 0
      %3374 = vmatmul.mubr.bf16.gmra.mrb[0].mxu0 %v3216
      %v3375 = vpop.f32.mrb[0].mxu0
      %v3376 = vadd.f32 %v3183, %v3375
      %v3377 = vpop.f32.mrb[0].mxu0
      %v3378 = vpop.f32.mrb[0].mxu0
      %v3379 = vadd.f32 %v3183, %v3378
      %v3380 = vpop.f32.mrb[0].mxu0
      %3381 = vmatprep.mubr.bf16.mxu0 0
      %3382 = vmatmul.mubr.bf16.gmra.mrb[0].mxu0 %v3219
      %v3383 = vpop.f32.mrb[0].mxu0
      %v3384 = vadd.f32 %v3183, %v3383
      %v3385 = vpop.f32.mrb[0].mxu0
      %v3386 = vpop.f32.mrb[0].mxu0
      %v3387 = vadd.f32 %v3183, %v3386
      %v3388 = vpop.f32.mrb[0].mxu0
      %3389 = vmatprep.mubr.bf16.mxu0 0
      %3390 = vmatmul.mubr.bf16.gmra.mrb[0].mxu0 %v3222
      %v3391 = vpop.f32.mrb[0].mxu0
      %v3392 = vadd.f32 %v3183, %v3391
      %v3393 = vpop.f32.mrb[0].mxu0
      %v3394 = vpop.f32.mrb[0].mxu0
      %v3395 = vadd.f32 %v3183, %v3394
      %v3396 = vpop.f32.mrb[0].mxu0
      %3397 = vmatprep.mubr.bf16.mxu0 0
      %3398 = vmatmul.mubr.bf16.gmra.mrb[0].mxu0 %v3225
      %v3399 = vpop.f32.mrb[0].mxu0
      %v3400 = vadd.f32 %v3183, %v3399
      %v3401 = vpop.f32.mrb[0].mxu0
      %v3402 = vpop.f32.mrb[0].mxu0
      %v3403 = vadd.f32 %v3183, %v3402
      %v3404 = vpop.f32.mrb[0].mxu0
      %3405 = vmatprep.mubr.bf16.mxu0 0
      %3406 = vmatmul.mubr.bf16.gmra.mrb[0].mxu0 %v3228
      %v3407 = vpop.f32.mrb[0].mxu0
      %v3408 = vadd.f32 %v3183, %v3407
      %v3409 = vpop.f32.mrb[0].mxu0
      %v3410 = vpop.f32.mrb[0].mxu0
      %v3411 = vadd.f32 %v3183, %v3410
      %v3412 = vpop.f32.mrb[0].mxu0
      %3413 = vmatprep.mubr.bf16.mxu0 0
      %3414 = vmatmul.mubr.bf16.gmra.mrb[0].mxu0 %v3231
      %v3415 = vpop.f32.mrb[0].mxu0
      %v3416 = vadd.f32 %v3183, %v3415
      %v3417 = vpop.f32.mrb[0].mxu0
      %v3418 = vpop.f32.mrb[0].mxu0
      %v3419 = vadd.f32 %v3183, %v3418
      %v3420 = vpop.f32.mrb[0].mxu0
      %3421 = vmatprep.mubr.bf16.mxu0 0
      %3422 = vmatmul.mubr.bf16.gmra.mrb[0].mxu0 %v3234
      %v3423 = vpop.f32.mrb[0].mxu0
      %v3424 = vadd.f32 %v3183, %v3423
      %v3425 = vpop.f32.mrb[0].mxu0
      %v3426 = vpop.f32.mrb[0].mxu0
      %v3427 = vadd.f32 %v3183, %v3426
      %v3428 = vpop.f32.mrb[0].mxu0
      %3429 = vmatprep.mubr.bf16.mxu0 0
      %3430 = vmatmul.mubr.bf16.gmra.mrb[0].mxu0 %v3237
      %v3431 = vpop.f32.mrb[0].mxu0
      %v3432 = vadd.f32 %v3183, %v3431
      %v3433 = vpop.f32.mrb[0].mxu0
      %v3434 = vpop.f32.mrb[0].mxu0
      %v3435 = vadd.f32 %v3183, %v3434
      %v3436 = vpop.f32.mrb[0].mxu0
      %3437 = vmatprep.mubr.bf16.mxu0 0
      %3438 = vmatmul.mubr.bf16.gmra.mrb[0].mxu0 %v3240
      %v3439 = vpop.f32.mrb[0].mxu0
      %v3440 = vadd.f32 %v3183, %v3439
      %v3441 = vpop.f32.mrb[0].mxu0
      %v3442 = vpop.f32.mrb[0].mxu0
      %v3443 = vadd.f32 %v3183, %v3442
      %v3444 = vpop.f32.mrb[0].mxu0
      %3445 = vmatprep.mubr.bf16.mxu0 0
      %3446 = vmatmul.mubr.bf16.gmra.mrb[0].mxu0 %v3243
      %v3447 = vpop.f32.mrb[0].mxu0
      %v3448 = vadd.f32 %v3183, %v3447
      %v3449 = vpop.f32.mrb[0].mxu0
      %v3450 = vpop.f32.mrb[0].mxu0
      %v3451 = vadd.f32 %v3183, %v3450
      %v3452 = vpop.f32.mrb[0].mxu0
      %3453 = vmatprep.mubr.bf16.mxu0 0
      %3454 = vmatmul.mubr.bf16.gmra.mrb[0].mxu0 %v3246
      %v3455 = vpop.f32.mrb[0].mxu0
      %v3456 = vadd.f32 %v3183, %v3455
      %v3457 = vpop.f32.mrb[0].mxu0
      %v3458 = vpop.f32.mrb[0].mxu0
      %v3459 = vadd.f32 %v3183, %v3458
      %v3460 = vpop.f32.mrb[0].mxu0
      %3461 = vmatprep.mubr.bf16.mxu0 0
      %3462 = vmatmul.mubr.bf16.gmra.mrb[0].mxu0 %v3249
      %v3463 = vpop.f32.mrb[0].mxu0
      %v3464 = vadd.f32 %v3183, %v3463
      %v3465 = vpop.f32.mrb[0].mxu0
      %v3466 = vpop.f32.mrb[0].mxu0
      %v3467 = vadd.f32 %v3183, %v3466
      %v3468 = vpop.f32.mrb[0].mxu0
      %3469 = vmatprep.mubr.bf16.mxu0 0
      %3470 = vmatmul.mubr.bf16.gmra.mrb[0].mxu0 %v3252
      %v3471 = vpop.f32.mrb[0].mxu0
      %v3472 = vadd.f32 %v3183, %v3471
      %v3473 = vpop.f32.mrb[0].mxu0
      %v3474 = vpop.f32.mrb[0].mxu0
      %v3475 = vadd.f32 %v3183, %v3474
      %v3476 = vpop.f32.mrb[0].mxu0
      %3477 = vmatprep.mubr.bf16.mxu0 0
      %3478 = vmatmul.mubr.bf16.gmra.mrb[0].mxu0 %v3255
      %v3479 = vpop.f32.mrb[0].mxu0
      %v3480 = vadd.f32 %v3183, %v3479
      %v3481 = vpop.f32.mrb[0].mxu0
      %v3482 = vpop.f32.mrb[0].mxu0
      %v3483 = vadd.f32 %v3183, %v3482
      %v3484 = vpop.f32.mrb[0].mxu0
      %3485 = vmatprep.mubr.bf16.mxu0 0
      %3486 = vmatmul.mubr.bf16.gmra.mrb[0].mxu0 %v3258
      %v3487 = vpop.f32.mrb[0].mxu0
      %v3488 = vadd.f32 %v3183, %v3487
      %v3489 = vpop.f32.mrb[0].mxu0
      %v3490 = vpop.f32.mrb[0].mxu0
      %v3491 = vadd.f32 %v3183, %v3490
      %v3492 = vpop.f32.mrb[0].mxu0
      %3493 = vmatprep.mubr.bf16.mxu0 0
      %3494 = vmatmul.mubr.bf16.gmra.mrb[0].mxu0 %v3261
      %v3495 = vpop.f32.mrb[0].mxu0
      %v3496 = vadd.f32 %v3183, %v3495
      %v3497 = vpop.f32.mrb[0].mxu0
      %v3498 = vpop.f32.mrb[0].mxu0
      %v3499 = vadd.f32 %v3183, %v3498
      %v3500 = vpop.f32.mrb[0].mxu0
      %3501 = vmatprep.mubr.bf16.mxu0 0
      %3502 = vmatmul.mubr.bf16.gmra.mrb[0].mxu0 %v3264
      %v3503 = vpop.f32.mrb[0].mxu0
      %v3504 = vadd.f32 %v3183, %v3503
      %v3505 = vpop.f32.mrb[0].mxu0
      %v3506 = vpop.f32.mrb[0].mxu0
      %v3507 = vadd.f32 %v3183, %v3506
      %v3508 = vpop.f32.mrb[0].mxu0
      %3509 = vmatprep.mubr.bf16.mxu0 0
      %3510 = vmatmul.mubr.bf16.gmra.mrb[0].mxu0 %v3267
      %v3511 = vpop.f32.mrb[0].mxu0
      %v3512 = vadd.f32 %v3183, %v3511
      %v3513 = vpop.f32.mrb[0].mxu0
      %v3514 = vpop.f32.mrb[0].mxu0
      %v3515 = vadd.f32 %v3183, %v3514
      %v3516 = vpop.f32.mrb[0].mxu0
      %3517 = vmatprep.mubr.bf16.mxu0 0
      %3518 = vmatmul.mubr.bf16.gmra.mrb[0].mxu0 %v3270
      %v3519 = vpop.f32.mrb[0].mxu0
      %v3520 = vadd.f32 %v3183, %v3519
      %v3521 = vpop.f32.mrb[0].mxu0
      %v3522 = vpop.f32.mrb[0].mxu0
      %v3523 = vadd.f32 %v3183, %v3522
      %v3524 = vpop.f32.mrb[0].mxu0
      %3525 = vmatprep.mubr.bf16.mxu0 0
      %3526 = vmatmul.mubr.bf16.gmra.mrb[0].mxu0 %v3273
      %v3527 = vpop.f32.mrb[0].mxu0
      %v3528 = vadd.f32 %v3183, %v3527
      %v3529 = vpop.f32.mrb[0].mxu0
      %v3530 = vpop.f32.mrb[0].mxu0
      %v3531 = vadd.f32 %v3183, %v3530
      %v3532 = vpop.f32.mrb[0].mxu0
      %3533 = vmatprep.mubr.bf16.mxu0 0
      %3534 = vmatmul.mubr.bf16.gmra.mrb[0].mxu0 %v3276
      %v3535 = vpop.f32.mrb[0].mxu0
      %v3536 = vadd.f32 %v3183, %v3535
      %v3537 = vpop.f32.mrb[0].mxu0
      %v3538 = vpop.f32.mrb[0].mxu0
      %v3539 = vadd.f32 %v3183, %v3538
      %v3540 = vpop.f32.mrb[0].mxu0
      %3541 = vmatprep.mubr.bf16.mxu0 0
      %3542 = vmatmul.mubr.bf16.gmra.mrb[0].mxu0 %v3279
      %v3543 = vpop.f32.mrb[0].mxu0
      %v3544 = vadd.f32 %v3183, %v3543
      %v3545 = vpop.f32.mrb[0].mxu0
      %v3546 = vpop.f32.mrb[0].mxu0
      %v3547 = vadd.f32 %v3183, %v3546
      %v3548 = vpop.f32.mrb[0].mxu0
      %3549 = vmatprep.mubr.bf16.mxu0 0
      %3550 = vmatmul.mubr.bf16.gmra.mrb[0].mxu0 %v3282
      %v3551 = vpop.f32.mrb[0].mxu0
      %v3552 = vadd.f32 %v3183, %v3551
      %v3553 = vpop.f32.mrb[0].mxu0
      %v3554 = vpop.f32.mrb[0].mxu0
      %v3555 = vadd.f32 %v3183, %v3554
      %v3556 = vpop.f32.mrb[0].mxu0
      %3557 = vmatprep.mubr.bf16.mxu0 0
      %3558 = vmatmul.mubr.bf16.gmra.mrb[0].mxu0 %v3285
      %v3559 = vpop.f32.mrb[0].mxu0
      %v3560 = vadd.f32 %v3183, %v3559
      %v3561 = vpop.f32.mrb[0].mxu0
      %v3562 = vpop.f32.mrb[0].mxu0
      %v3563 = vadd.f32 %v3183, %v3562
      %v3564 = vpop.f32.mrb[0].mxu0
      %3565 = vmatprep.mubr.bf16.mxu0 0
      %3566 = vmatmul.mubr.bf16.gmra.mrb[0].mxu0 %v3288
      %v3567 = vpop.f32.mrb[0].mxu0
      %v3568 = vadd.f32 %v3183, %v3567
      %v3569 = vpop.f32.mrb[0].mxu0
      %v3570 = vpop.f32.mrb[0].mxu0
      %v3571 = vadd.f32 %v3183, %v3570
      %v3572 = vpop.f32.mrb[0].mxu0
      %3573 = vmatprep.mubr.bf16.mxu0 0
      %3574 = vmatmul.mubr.bf16.gmra.mrb[0].mxu0 %v3291
      %v3575 = vpop.f32.mrb[0].mxu0
      %v3576 = vadd.f32 %v3183, %v3575
      %v3577 = vpop.f32.mrb[0].mxu0
      %v3578 = vpop.f32.mrb[0].mxu0
      %v3579 = vadd.f32 %v3183, %v3578
      %v3580 = vpop.f32.mrb[0].mxu0
      %3581 = vdwg.mxu0
      %v3582 = vmax.f32 %v3328, 0.0
      %v3583 = vmax.f32 %v3331, 0.0
      %v3584 = vmax.f32 %v3336, 0.0
      %v3585 = vmax.f32 %v3339, 0.0
      %v3586 = vmax.f32 %v3344, 0.0
      %v3587 = vmax.f32 %v3347, 0.0
      %v3588 = vmax.f32 %v3352, 0.0
      %v3589 = vmax.f32 %v3355, 0.0
      %v3590 = vmax.f32 %v3360, 0.0
      %v3591 = vmax.f32 %v3363, 0.0
      %v3592 = vmax.f32 %v3368, 0.0
      %v3593 = vmax.f32 %v3371, 0.0
      %v3594 = vmax.f32 %v3376, 0.0
      %v3595 = vmax.f32 %v3379, 0.0
      %v3596 = vmax.f32 %v3384, 0.0
      %v3597 = vmax.f32 %v3387, 0.0
      %v3598 = vmax.f32 %v3392, 0.0
      %v3599 = vmax.f32 %v3395, 0.0
      %v3600 = vmax.f32 %v3400, 0.0
      %v3601 = vmax.f32 %v3403, 0.0
      %v3602 = vmax.f32 %v3408, 0.0
      %v3603 = vmax.f32 %v3411, 0.0
      %v3604 = vmax.f32 %v3416, 0.0
      %v3605 = vmax.f32 %v3419, 0.0
      %v3606 = vmax.f32 %v3424, 0.0
      %v3607 = vmax.f32 %v3427, 0.0
      %v3608 = vmax.f32 %v3432, 0.0
      %v3609 = vmax.f32 %v3435, 0.0
      %v3610 = vmax.f32 %v3440, 0.0
      %v3611 = vmax.f32 %v3443, 0.0
      %v3612 = vmax.f32 %v3448, 0.0
      %v3613 = vmax.f32 %v3451, 0.0
      %v3614 = vmax.f32 %v3456, 0.0
      %v3615 = vmax.f32 %v3459, 0.0
      %v3616 = vmax.f32 %v3464, 0.0
      %v3617 = vmax.f32 %v3467, 0.0
      %v3618 = vmax.f32 %v3472, 0.0
      %v3619 = vmax.f32 %v3475, 0.0
      %v3620 = vmax.f32 %v3480, 0.0
      %v3621 = vmax.f32 %v3483, 0.0
      %v3622 = vmax.f32 %v3488, 0.0
      %v3623 = vmax.f32 %v3491, 0.0
      %v3624 = vmax.f32 %v3496, 0.0
      %v3625 = vmax.f32 %v3499, 0.0
      %v3626 = vmax.f32 %v3504, 0.0
      %v3627 = vmax.f32 %v3507, 0.0
      %v3628 = vmax.f32 %v3512, 0.0
      %v3629 = vmax.f32 %v3515, 0.0
      %v3630 = vmax.f32 %v3520, 0.0
      %v3631 = vmax.f32 %v3523, 0.0
      %v3632 = vmax.f32 %v3528, 0.0
      %v3633 = vmax.f32 %v3531, 0.0
      %v3634 = vmax.f32 %v3536, 0.0
      %v3635 = vmax.f32 %v3539, 0.0
      %v3636 = vmax.f32 %v3544, 0.0
      %v3637 = vmax.f32 %v3547, 0.0
      %v3638 = vmax.f32 %v3552, 0.0
      %v3639 = vmax.f32 %v3555, 0.0
      %v3640 = vmax.f32 %v3560, 0.0
      %v3641 = vmax.f32 %v3563, 0.0
      %v3642 = vmax.f32 %v3568, 0.0
      %v3643 = vmax.f32 %v3571, 0.0
      %v3644 = vmax.f32 %v3576, 0.0
      %v3645 = vmax.f32 %v3579, 0.0
      %v3646 = vld [vmem:[%s9] sm:$0xf]
      %v3647 = vld [vmem:[%s9 + $0x4] sm:$0xf]
      %v3648 = vld [vmem:[%s9 + $0x8] sm:$0xf]
      %v3649 = vld [vmem:[%s9 + $0xc] sm:$0xf]
      %v3650 = vld [vmem:[%s10] sm:$0x1]
      %v3651 = vpack.c.bf16 %v3583, %v3582
      %v3652 = vpack.c.bf16 %v3585, %v3584
      %v3653 = vpack.c.bf16 %v3587, %v3586
      %v3654 = vpack.c.bf16 %v3589, %v3588
      %v3655 = vpack.c.bf16 %v3591, %v3590
      %v3656 = vpack.c.bf16 %v3593, %v3592
      %v3657 = vpack.c.bf16 %v3595, %v3594
      %v3658 = vpack.c.bf16 %v3597, %v3596
      %v3659 = vpack.c.bf16 %v3599, %v3598
      %v3660 = vpack.c.bf16 %v3601, %v3600
      %v3661 = vpack.c.bf16 %v3603, %v3602
      %v3662 = vpack.c.bf16 %v3605, %v3604
      %v3663 = vpack.c.bf16 %v3607, %v3606
      %v3664 = vpack.c.bf16 %v3609, %v3608
      %v3665 = vpack.c.bf16 %v3611, %v3610
      %v3666 = vpack.c.bf16 %v3613, %v3612
      %v3667 = vpack.c.bf16 %v3615, %v3614
      %v3668 = vpack.c.bf16 %v3617, %v3616
      %v3669 = vpack.c.bf16 %v3619, %v3618
      %v3670 = vpack.c.bf16 %v3621, %v3620
      %v3671 = vpack.c.bf16 %v3623, %v3622
      %v3672 = vpack.c.bf16 %v3625, %v3624
      %v3673 = vpack.c.bf16 %v3627, %v3626
      %v3674 = vpack.c.bf16 %v3629, %v3628
      %v3675 = vpack.c.bf16 %v3631, %v3630
      %v3676 = vpack.c.bf16 %v3633, %v3632
      %v3677 = vpack.c.bf16 %v3635, %v3634
      %v3678 = vpack.c.bf16 %v3637, %v3636
      %v3679 = vpack.c.bf16 %v3639, %v3638
      %v3680 = vpack.c.bf16 %v3641, %v3640
      %v3681 = vpack.c.bf16 %v3643, %v3642
      %v3682 = vpack.c.bf16 %v3645, %v3644
      %v3684 = vlaneseq
      %v3685 = vshrl.u32 %v3684, 7
      %v3686 = vsub.s32 0, %v3685
      %v3687 = vrot.slane %v3650, %v3686
      %v3693 = vunpack.c.l.b16 %v3646
      %v3694 = vunpack.c.l.b16 %v3647
      %v3695 = vunpack.c.l.b16 %v3648
      %v3696 = vunpack.c.l.b16 %v3649
      %v3697 = vpack.c.b16 %v3694, %v3693
      %v3698 = vpack.c.b16 %v3696, %v3695
      %v3702 = vsel %vm2188, %v3651, 0
      %v3705 = vsel %vm2188, %v3652, 0
      %v3708 = vsel %vm2188, %v3653, 0
      %v3711 = vsel %vm2188, %v3654, 0
      %v3714 = vsel %vm2188, %v3655, 0
      %v3717 = vsel %vm2188, %v3656, 0
      %v3720 = vsel %vm2188, %v3657, 0
      %v3723 = vsel %vm2188, %v3658, 0
      %v3726 = vsel %vm2188, %v3659, 0
      %v3729 = vsel %vm2188, %v3660, 0
      %v3732 = vsel %vm2188, %v3661, 0
      %v3735 = vsel %vm2188, %v3662, 0
      %v3738 = vsel %vm2188, %v3663, 0
      %v3741 = vsel %vm2188, %v3664, 0
      %v3744 = vsel %vm2188, %v3665, 0
      %v3747 = vsel %vm2188, %v3666, 0
      %v3750 = vsel %vm2188, %v3667, 0
      %v3753 = vsel %vm2188, %v3668, 0
      %v3756 = vsel %vm2188, %v3669, 0
      %v3759 = vsel %vm2188, %v3670, 0
      %v3762 = vsel %vm2188, %v3671, 0
      %v3765 = vsel %vm2188, %v3672, 0
      %v3768 = vsel %vm2188, %v3673, 0
      %v3771 = vsel %vm2188, %v3674, 0
      %v3774 = vsel %vm2188, %v3675, 0
      %v3777 = vsel %vm2188, %v3676, 0
      %v3780 = vsel %vm2188, %v3677, 0
      %v3783 = vsel %vm2188, %v3678, 0
      %v3786 = vsel %vm2188, %v3679, 0
      %v3789 = vsel %vm2188, %v3680, 0
      %v3792 = vsel %vm2188, %v3681, 0
      %v3795 = vsel %vm2188, %v3682, 0
      %3797 = vmatprep.subr.bf16.mxu0 0
      %3798 = vmatpush1.bf16.msra.mxu0 %v3697
      %3799 = vmatprep.subr.bf16.mxu0 0
      %3800 = vmatpush1.bf16.msra.mxu0 %v3698
      %3801 = vmatprep.subr.bf16.mxu0 0
      %3802 = vmatpush1.bf16.msra.mxu0 0
      %3803 = vmatprep.subr.bf16.mxu0 0
      %3804 = vmatpush1.bf16.msra.mxu0 0
      %3805 = vmatprep.subr.bf16.mxu0 0
      %3806 = vmatpush1.bf16.msra.mxu0 0
      %3807 = vmatprep.subr.bf16.mxu0 0
      %3808 = vmatpush1.bf16.msra.mxu0 0
      %3809 = vmatprep.subr.bf16.mxu0 0
      %3810 = vmatpush1.bf16.msra.mxu0 0
      %3811 = vmatprep.subr.bf16.mxu0 0
      %3812 = vmatpush1.bf16.msra.mxu0 0
      %3813 = vmatprep.subr.bf16.mxu0 0
      %3814 = vmatpush1.bf16.msra.mxu0 0
      %3815 = vmatprep.subr.bf16.mxu0 0
      %3816 = vmatpush1.bf16.msra.mxu0 0
      %3817 = vmatprep.subr.bf16.mxu0 0
      %3818 = vmatpush1.bf16.msra.mxu0 0
      %3819 = vmatprep.subr.bf16.mxu0 0
      %3820 = vmatpush1.bf16.msra.mxu0 0
      %3821 = vmatprep.subr.bf16.mxu0 0
      %3822 = vmatpush1.bf16.msra.mxu0 0
      %3823 = vmatprep.subr.bf16.mxu0 0
      %3824 = vmatpush1.bf16.msra.mxu0 0
      %3825 = vmatprep.subr.bf16.mxu0 0
      %3826 = vmatpush1.bf16.msra.mxu0 0
      %3827 = vmatprep.subr.bf16.mxu0 0
      %3828 = vmatpush1.bf16.msra.mxu0 0
      %3829 = vmatprep.mubr.bf16.mxu0 0
      %3830 = vmatmul.mubr.bf16.gmra.mrb[0].mxu0 %v3702
      %v3831 = vpop.f32.mrb[0].mxu0
      %v3832 = vadd.f32 %v3687, %v3831
      %v3833 = vpop.f32.mrb[0].mxu0
      %v3834 = vpop.f32.mrb[0].mxu0
      %v3835 = vadd.f32 %v3687, %v3834
      %v3836 = vpop.f32.mrb[0].mxu0
      %3837 = vmatprep.mubr.bf16.mxu0 0
      %3838 = vmatmul.mubr.bf16.gmra.mrb[0].mxu0 %v3705
      %v3839 = vpop.f32.mrb[0].mxu0
      %v3840 = vadd.f32 %v3687, %v3839
      %v3841 = vpop.f32.mrb[0].mxu0
      %v3842 = vpop.f32.mrb[0].mxu0
      %v3843 = vadd.f32 %v3687, %v3842
      %v3844 = vpop.f32.mrb[0].mxu0
      %3845 = vmatprep.mubr.bf16.mxu0 0
      %3846 = vmatmul.mubr.bf16.gmra.mrb[0].mxu0 %v3708
      %v3847 = vpop.f32.mrb[0].mxu0
      %v3848 = vadd.f32 %v3687, %v3847
      %v3849 = vpop.f32.mrb[0].mxu0
      %v3850 = vpop.f32.mrb[0].mxu0
      %v3851 = vadd.f32 %v3687, %v3850
      %v3852 = vpop.f32.mrb[0].mxu0
      %3853 = vmatprep.mubr.bf16.mxu0 0
      %3854 = vmatmul.mubr.bf16.gmra.mrb[0].mxu0 %v3711
      %v3855 = vpop.f32.mrb[0].mxu0
      %v3856 = vadd.f32 %v3687, %v3855
      %v3857 = vpop.f32.mrb[0].mxu0
      %v3858 = vpop.f32.mrb[0].mxu0
      %v3859 = vadd.f32 %v3687, %v3858
      %v3860 = vpop.f32.mrb[0].mxu0
      %3861 = vmatprep.mubr.bf16.mxu0 0
      %3862 = vmatmul.mubr.bf16.gmra.mrb[0].mxu0 %v3714
      %v3863 = vpop.f32.mrb[0].mxu0
      %v3864 = vadd.f32 %v3687, %v3863
      %v3865 = vpop.f32.mrb[0].mxu0
      %v3866 = vpop.f32.mrb[0].mxu0
      %v3867 = vadd.f32 %v3687, %v3866
      %v3868 = vpop.f32.mrb[0].mxu0
      %3869 = vmatprep.mubr.bf16.mxu0 0
      %3870 = vmatmul.mubr.bf16.gmra.mrb[0].mxu0 %v3717
      %v3871 = vpop.f32.mrb[0].mxu0
      %v3872 = vadd.f32 %v3687, %v3871
      %v3873 = vpop.f32.mrb[0].mxu0
      %v3874 = vpop.f32.mrb[0].mxu0
      %v3875 = vadd.f32 %v3687, %v3874
      %v3876 = vpop.f32.mrb[0].mxu0
      %3877 = vmatprep.mubr.bf16.mxu0 0
      %3878 = vmatmul.mubr.bf16.gmra.mrb[0].mxu0 %v3720
      %v3879 = vpop.f32.mrb[0].mxu0
      %v3880 = vadd.f32 %v3687, %v3879
      %v3881 = vpop.f32.mrb[0].mxu0
      %v3882 = vpop.f32.mrb[0].mxu0
      %v3883 = vadd.f32 %v3687, %v3882
      %v3884 = vpop.f32.mrb[0].mxu0
      %3885 = vmatprep.mubr.bf16.mxu0 0
      %3886 = vmatmul.mubr.bf16.gmra.mrb[0].mxu0 %v3723
      %v3887 = vpop.f32.mrb[0].mxu0
      %v3888 = vadd.f32 %v3687, %v3887
      %v3889 = vpop.f32.mrb[0].mxu0
      %v3890 = vpop.f32.mrb[0].mxu0
      %v3891 = vadd.f32 %v3687, %v3890
      %v3892 = vpop.f32.mrb[0].mxu0
      %3893 = vmatprep.mubr.bf16.mxu0 0
      %3894 = vmatmul.mubr.bf16.gmra.mrb[0].mxu0 %v3726
      %v3895 = vpop.f32.mrb[0].mxu0
      %v3896 = vadd.f32 %v3687, %v3895
      %v3897 = vpop.f32.mrb[0].mxu0
      %v3898 = vpop.f32.mrb[0].mxu0
      %v3899 = vadd.f32 %v3687, %v3898
      %v3900 = vpop.f32.mrb[0].mxu0
      %3901 = vmatprep.mubr.bf16.mxu0 0
      %3902 = vmatmul.mubr.bf16.gmra.mrb[0].mxu0 %v3729
      %v3903 = vpop.f32.mrb[0].mxu0
      %v3904 = vadd.f32 %v3687, %v3903
      %v3905 = vpop.f32.mrb[0].mxu0
      %v3906 = vpop.f32.mrb[0].mxu0
      %v3907 = vadd.f32 %v3687, %v3906
      %v3908 = vpop.f32.mrb[0].mxu0
      %3909 = vmatprep.mubr.bf16.mxu0 0
      %3910 = vmatmul.mubr.bf16.gmra.mrb[0].mxu0 %v3732
      %v3911 = vpop.f32.mrb[0].mxu0
      %v3912 = vadd.f32 %v3687, %v3911
      %v3913 = vpop.f32.mrb[0].mxu0
      %v3914 = vpop.f32.mrb[0].mxu0
      %v3915 = vadd.f32 %v3687, %v3914
      %v3916 = vpop.f32.mrb[0].mxu0
      %3917 = vmatprep.mubr.bf16.mxu0 0
      %3918 = vmatmul.mubr.bf16.gmra.mrb[0].mxu0 %v3735
      %v3919 = vpop.f32.mrb[0].mxu0
      %v3920 = vadd.f32 %v3687, %v3919
      %v3921 = vpop.f32.mrb[0].mxu0
      %v3922 = vpop.f32.mrb[0].mxu0
      %v3923 = vadd.f32 %v3687, %v3922
      %v3924 = vpop.f32.mrb[0].mxu0
      %3925 = vmatprep.mubr.bf16.mxu0 0
      %3926 = vmatmul.mubr.bf16.gmra.mrb[0].mxu0 %v3738
      %v3927 = vpop.f32.mrb[0].mxu0
      %v3928 = vadd.f32 %v3687, %v3927
      %v3929 = vpop.f32.mrb[0].mxu0
      %v3930 = vpop.f32.mrb[0].mxu0
      %v3931 = vadd.f32 %v3687, %v3930
      %v3932 = vpop.f32.mrb[0].mxu0
      %3933 = vmatprep.mubr.bf16.mxu0 0
      %3934 = vmatmul.mubr.bf16.gmra.mrb[0].mxu0 %v3741
      %v3935 = vpop.f32.mrb[0].mxu0
      %v3936 = vadd.f32 %v3687, %v3935
      %v3937 = vpop.f32.mrb[0].mxu0
      %v3938 = vpop.f32.mrb[0].mxu0
      %v3939 = vadd.f32 %v3687, %v3938
      %v3940 = vpop.f32.mrb[0].mxu0
      %3941 = vmatprep.mubr.bf16.mxu0 0
      %3942 = vmatmul.mubr.bf16.gmra.mrb[0].mxu0 %v3744
      %v3943 = vpop.f32.mrb[0].mxu0
      %v3944 = vadd.f32 %v3687, %v3943
      %v3945 = vpop.f32.mrb[0].mxu0
      %v3946 = vpop.f32.mrb[0].mxu0
      %v3947 = vadd.f32 %v3687, %v3946
      %v3948 = vpop.f32.mrb[0].mxu0
      %3949 = vmatprep.mubr.bf16.mxu0 0
      %3950 = vmatmul.mubr.bf16.gmra.mrb[0].mxu0 %v3747
      %v3951 = vpop.f32.mrb[0].mxu0
      %v3952 = vadd.f32 %v3687, %v3951
      %v3953 = vpop.f32.mrb[0].mxu0
      %v3954 = vpop.f32.mrb[0].mxu0
      %v3955 = vadd.f32 %v3687, %v3954
      %v3956 = vpop.f32.mrb[0].mxu0
      %3957 = vmatprep.mubr.bf16.mxu0 0
      %3958 = vmatmul.mubr.bf16.gmra.mrb[0].mxu0 %v3750
      %v3959 = vpop.f32.mrb[0].mxu0
      %v3960 = vadd.f32 %v3687, %v3959
      %v3961 = vpop.f32.mrb[0].mxu0
      %v3962 = vpop.f32.mrb[0].mxu0
      %v3963 = vadd.f32 %v3687, %v3962
      %v3964 = vpop.f32.mrb[0].mxu0
      %3965 = vmatprep.mubr.bf16.mxu0 0
      %3966 = vmatmul.mubr.bf16.gmra.mrb[0].mxu0 %v3753
      %v3967 = vpop.f32.mrb[0].mxu0
      %v3968 = vadd.f32 %v3687, %v3967
      %v3969 = vpop.f32.mrb[0].mxu0
      %v3970 = vpop.f32.mrb[0].mxu0
      %v3971 = vadd.f32 %v3687, %v3970
      %v3972 = vpop.f32.mrb[0].mxu0
      %3973 = vmatprep.mubr.bf16.mxu0 0
      %3974 = vmatmul.mubr.bf16.gmra.mrb[0].mxu0 %v3756
      %v3975 = vpop.f32.mrb[0].mxu0
      %v3976 = vadd.f32 %v3687, %v3975
      %v3977 = vpop.f32.mrb[0].mxu0
      %v3978 = vpop.f32.mrb[0].mxu0
      %v3979 = vadd.f32 %v3687, %v3978
      %v3980 = vpop.f32.mrb[0].mxu0
      %3981 = vmatprep.mubr.bf16.mxu0 0
      %3982 = vmatmul.mubr.bf16.gmra.mrb[0].mxu0 %v3759
      %v3983 = vpop.f32.mrb[0].mxu0
      %v3984 = vadd.f32 %v3687, %v3983
      %v3985 = vpop.f32.mrb[0].mxu0
      %v3986 = vpop.f32.mrb[0].mxu0
      %v3987 = vadd.f32 %v3687, %v3986
      %v3988 = vpop.f32.mrb[0].mxu0
      %3989 = vmatprep.mubr.bf16.mxu0 0
      %3990 = vmatmul.mubr.bf16.gmra.mrb[0].mxu0 %v3762
      %v3991 = vpop.f32.mrb[0].mxu0
      %v3992 = vadd.f32 %v3687, %v3991
      %v3993 = vpop.f32.mrb[0].mxu0
      %v3994 = vpop.f32.mrb[0].mxu0
      %v3995 = vadd.f32 %v3687, %v3994
      %v3996 = vpop.f32.mrb[0].mxu0
      %3997 = vmatprep.mubr.bf16.mxu0 0
      %3998 = vmatmul.mubr.bf16.gmra.mrb[0].mxu0 %v3765
      %v3999 = vpop.f32.mrb[0].mxu0
      %v4000 = vadd.f32 %v3687, %v3999
      %v4001 = vpop.f32.mrb[0].mxu0
      %v4002 = vpop.f32.mrb[0].mxu0
      %v4003 = vadd.f32 %v3687, %v4002
      %v4004 = vpop.f32.mrb[0].mxu0
      %4005 = vmatprep.mubr.bf16.mxu0 0
      %4006 = vmatmul.mubr.bf16.gmra.mrb[0].mxu0 %v3768
      %v4007 = vpop.f32.mrb[0].mxu0
      %v4008 = vadd.f32 %v3687, %v4007
      %v4009 = vpop.f32.mrb[0].mxu0
      %v4010 = vpop.f32.mrb[0].mxu0
      %v4011 = vadd.f32 %v3687, %v4010
      %v4012 = vpop.f32.mrb[0].mxu0
      %4013 = vmatprep.mubr.bf16.mxu0 0
      %4014 = vmatmul.mubr.bf16.gmra.mrb[0].mxu0 %v3771
      %v4015 = vpop.f32.mrb[0].mxu0
      %v4016 = vadd.f32 %v3687, %v4015
      %v4017 = vpop.f32.mrb[0].mxu0
      %v4018 = vpop.f32.mrb[0].mxu0
      %v4019 = vadd.f32 %v3687, %v4018
      %v4020 = vpop.f32.mrb[0].mxu0
      %4021 = vmatprep.mubr.bf16.mxu0 0
      %4022 = vmatmul.mubr.bf16.gmra.mrb[0].mxu0 %v3774
      %v4023 = vpop.f32.mrb[0].mxu0
      %v4024 = vadd.f32 %v3687, %v4023
      %v4025 = vpop.f32.mrb[0].mxu0
      %v4026 = vpop.f32.mrb[0].mxu0
      %v4027 = vadd.f32 %v3687, %v4026
      %v4028 = vpop.f32.mrb[0].mxu0
      %4029 = vmatprep.mubr.bf16.mxu0 0
      %4030 = vmatmul.mubr.bf16.gmra.mrb[0].mxu0 %v3777
      %v4031 = vpop.f32.mrb[0].mxu0
      %v4032 = vadd.f32 %v3687, %v4031
      %v4033 = vpop.f32.mrb[0].mxu0
      %v4034 = vpop.f32.mrb[0].mxu0
      %v4035 = vadd.f32 %v3687, %v4034
      %v4036 = vpop.f32.mrb[0].mxu0
      %4037 = vmatprep.mubr.bf16.mxu0 0
      %4038 = vmatmul.mubr.bf16.gmra.mrb[0].mxu0 %v3780
      %v4039 = vpop.f32.mrb[0].mxu0
      %v4040 = vadd.f32 %v3687, %v4039
      %v4041 = vpop.f32.mrb[0].mxu0
      %v4042 = vpop.f32.mrb[0].mxu0
      %v4043 = vadd.f32 %v3687, %v4042
      %v4044 = vpop.f32.mrb[0].mxu0
      %4045 = vmatprep.mubr.bf16.mxu0 0
      %4046 = vmatmul.mubr.bf16.gmra.mrb[0].mxu0 %v3783
      %v4047 = vpop.f32.mrb[0].mxu0
      %v4048 = vadd.f32 %v3687, %v4047
      %v4049 = vpop.f32.mrb[0].mxu0
      %v4050 = vpop.f32.mrb[0].mxu0
      %v4051 = vadd.f32 %v3687, %v4050
      %v4052 = vpop.f32.mrb[0].mxu0
      %4053 = vmatprep.mubr.bf16.mxu0 0
      %4054 = vmatmul.mubr.bf16.gmra.mrb[0].mxu0 %v3786
      %v4055 = vpop.f32.mrb[0].mxu0
      %v4056 = vadd.f32 %v3687, %v4055
      %v4057 = vpop.f32.mrb[0].mxu0
      %v4058 = vpop.f32.mrb[0].mxu0
      %v4059 = vadd.f32 %v3687, %v4058
      %v4060 = vpop.f32.mrb[0].mxu0
      %4061 = vmatprep.mubr.bf16.mxu0 0
      %4062 = vmatmul.mubr.bf16.gmra.mrb[0].mxu0 %v3789
      %v4063 = vpop.f32.mrb[0].mxu0
      %v4064 = vadd.f32 %v3687, %v4063
      %v4065 = vpop.f32.mrb[0].mxu0
      %v4066 = vpop.f32.mrb[0].mxu0
      %v4067 = vadd.f32 %v3687, %v4066
      %v4068 = vpop.f32.mrb[0].mxu0
      %4069 = vmatprep.mubr.bf16.mxu0 0
      %4070 = vmatmul.mubr.bf16.gmra.mrb[0].mxu0 %v3792
      %v4071 = vpop.f32.mrb[0].mxu0
      %v4072 = vadd.f32 %v3687, %v4071
      %v4073 = vpop.f32.mrb[0].mxu0
      %v4074 = vpop.f32.mrb[0].mxu0
      %v4075 = vadd.f32 %v3687, %v4074
      %v4076 = vpop.f32.mrb[0].mxu0
      %4077 = vmatprep.mubr.bf16.mxu0 0
      %4078 = vmatmul.mubr.bf16.gmra.mrb[0].mxu0 %v3795
      %v4079 = vpop.f32.mrb[0].mxu0
      %v4080 = vadd.f32 %v3687, %v4079
      %v4081 = vpop.f32.mrb[0].mxu0
      %v4082 = vpop.f32.mrb[0].mxu0
      %v4083 = vadd.f32 %v3687, %v4082
      %v4084 = vpop.f32.mrb[0].mxu0
      %4085 = vdwg.mxu0
      %v4086 = vmax.f32 %v3832, 0.0
      %v4087 = vmax.f32 %v3835, 0.0
      %v4088 = vmax.f32 %v3840, 0.0
      %v4089 = vmax.f32 %v3843, 0.0
      %v4090 = vmax.f32 %v3848, 0.0
      %v4091 = vmax.f32 %v3851, 0.0
      %v4092 = vmax.f32 %v3856, 0.0
      %v4093 = vmax.f32 %v3859, 0.0
      %v4094 = vmax.f32 %v3864, 0.0
      %v4095 = vmax.f32 %v3867, 0.0
      %v4096 = vmax.f32 %v3872, 0.0
      %v4097 = vmax.f32 %v3875, 0.0
      %v4098 = vmax.f32 %v3880, 0.0
      %v4099 = vmax.f32 %v3883, 0.0
      %v4100 = vmax.f32 %v3888, 0.0
      %v4101 = vmax.f32 %v3891, 0.0
      %v4102 = vmax.f32 %v3896, 0.0
      %v4103 = vmax.f32 %v3899, 0.0
      %v4104 = vmax.f32 %v3904, 0.0
      %v4105 = vmax.f32 %v3907, 0.0
      %v4106 = vmax.f32 %v3912, 0.0
      %v4107 = vmax.f32 %v3915, 0.0
      %v4108 = vmax.f32 %v3920, 0.0
      %v4109 = vmax.f32 %v3923, 0.0
      %v4110 = vmax.f32 %v3928, 0.0
      %v4111 = vmax.f32 %v3931, 0.0
      %v4112 = vmax.f32 %v3936, 0.0
      %v4113 = vmax.f32 %v3939, 0.0
      %v4114 = vmax.f32 %v3944, 0.0
      %v4115 = vmax.f32 %v3947, 0.0
      %v4116 = vmax.f32 %v3952, 0.0
      %v4117 = vmax.f32 %v3955, 0.0
      %v4118 = vmax.f32 %v3960, 0.0
      %v4119 = vmax.f32 %v3963, 0.0
      %v4120 = vmax.f32 %v3968, 0.0
      %v4121 = vmax.f32 %v3971, 0.0
      %v4122 = vmax.f32 %v3976, 0.0
      %v4123 = vmax.f32 %v3979, 0.0
      %v4124 = vmax.f32 %v3984, 0.0
      %v4125 = vmax.f32 %v3987, 0.0
      %v4126 = vmax.f32 %v3992, 0.0
      %v4127 = vmax.f32 %v3995, 0.0
      %v4128 = vmax.f32 %v4000, 0.0
      %v4129 = vmax.f32 %v4003, 0.0
      %v4130 = vmax.f32 %v4008, 0.0
      %v4131 = vmax.f32 %v4011, 0.0
      %v4132 = vmax.f32 %v4016, 0.0
      %v4133 = vmax.f32 %v4019, 0.0
      %v4134 = vmax.f32 %v4024, 0.0
      %v4135 = vmax.f32 %v4027, 0.0
      %v4136 = vmax.f32 %v4032, 0.0
      %v4137 = vmax.f32 %v4035, 0.0
      %v4138 = vmax.f32 %v4040, 0.0
      %v4139 = vmax.f32 %v4043, 0.0
      %v4140 = vmax.f32 %v4048, 0.0
      %v4141 = vmax.f32 %v4051, 0.0
      %v4142 = vmax.f32 %v4056, 0.0
      %v4143 = vmax.f32 %v4059, 0.0
      %v4144 = vmax.f32 %v4064, 0.0
      %v4145 = vmax.f32 %v4067, 0.0
      %v4146 = vmax.f32 %v4072, 0.0
      %v4147 = vmax.f32 %v4075, 0.0
      %v4148 = vmax.f32 %v4080, 0.0
      %v4149 = vmax.f32 %v4083, 0.0
      %v4150 = vld [vmem:[%s11] sm:$0x7]
      %v4151 = vld [vmem:[%s12] sm:$0xf]
      %v4152 = vld [vmem:[%s12 + $0x4] sm:$0xf]
      %v4153 = vld [vmem:[%s12 + $0x8] sm:$0xf]
      %v4154 = vld [vmem:[%s12 + $0xc] sm:$0xf]
      %v4155 = vld [vmem:[%s13] sm:$0x1]
      %v4156 = vpack.c.bf16 %v4087, %v4086
      %v4157 = vpack.c.bf16 %v4089, %v4088
      %v4158 = vpack.c.bf16 %v4091, %v4090
      %v4159 = vpack.c.bf16 %v4093, %v4092
      %v4160 = vpack.c.bf16 %v4095, %v4094
      %v4161 = vpack.c.bf16 %v4097, %v4096
      %v4162 = vpack.c.bf16 %v4099, %v4098
      %v4163 = vpack.c.bf16 %v4101, %v4100
      %v4164 = vpack.c.bf16 %v4103, %v4102
      %v4165 = vpack.c.bf16 %v4105, %v4104
      %v4166 = vpack.c.bf16 %v4107, %v4106
      %v4167 = vpack.c.bf16 %v4109, %v4108
      %v4168 = vpack.c.bf16 %v4111, %v4110
      %v4169 = vpack.c.bf16 %v4113, %v4112
      %v4170 = vpack.c.bf16 %v4115, %v4114
      %v4171 = vpack.c.bf16 %v4117, %v4116
      %v4172 = vpack.c.bf16 %v4119, %v4118
      %v4173 = vpack.c.bf16 %v4121, %v4120
      %v4174 = vpack.c.bf16 %v4123, %v4122
      %v4175 = vpack.c.bf16 %v4125, %v4124
      %v4176 = vpack.c.bf16 %v4127, %v4126
      %v4177 = vpack.c.bf16 %v4129, %v4128
      %v4178 = vpack.c.bf16 %v4131, %v4130
      %v4179 = vpack.c.bf16 %v4133, %v4132
      %v4180 = vpack.c.bf16 %v4135, %v4134
      %v4181 = vpack.c.bf16 %v4137, %v4136
      %v4182 = vpack.c.bf16 %v4139, %v4138
      %v4183 = vpack.c.bf16 %v4141, %v4140
      %v4184 = vpack.c.bf16 %v4143, %v4142
      %v4185 = vpack.c.bf16 %v4145, %v4144
      %v4186 = vpack.c.bf16 %v4147, %v4146
      %v4187 = vpack.c.bf16 %v4149, %v4148
      %v4188 = vlaneseq
      %v4189 = vshrl.u32 %v4188, 7
      %v4190 = vsub.s32 0, %v4189
      %v4191 = vrot.slane %v4150, %v4190
      %v4192 = vmul.f32 %v838, %v4191
      %v4193 = vmul.f32 %v843, %v4191
      %v4194 = vmul.f32 %v848, %v4191
      %v4195 = vmul.f32 %v853, %v4191
      %v4196 = vmul.f32 %v858, %v4191
      %v4197 = vmul.f32 %v863, %v4191
      %v4198 = vmul.f32 %v868, %v4191
      %v4199 = vmul.f32 %v873, %v4191
      %v4200 = vmul.f32 %v878, %v4191
      %v4201 = vmul.f32 %v883, %v4191
      %v4202 = vmul.f32 %v888, %v4191
      %v4203 = vmul.f32 %v893, %v4191
      %v4204 = vmul.f32 %v898, %v4191
      %v4205 = vmul.f32 %v903, %v4191
      %v4206 = vmul.f32 %v908, %v4191
      %v4207 = vmul.f32 %v913, %v4191
      %v4208 = vmul.f32 %v918, %v4191
      %v4209 = vmul.f32 %v923, %v4191
      %v4210 = vmul.f32 %v928, %v4191
      %v4211 = vmul.f32 %v933, %v4191
      %v4212 = vmul.f32 %v938, %v4191
      %v4213 = vmul.f32 %v943, %v4191
      %v4214 = vmul.f32 %v948, %v4191
      %v4215 = vmul.f32 %v953, %v4191
      %v4216 = vmul.f32 %v958, %v4191
      %v4217 = vmul.f32 %v963, %v4191
      %v4218 = vmul.f32 %v968, %v4191
      %v4219 = vmul.f32 %v973, %v4191
      %v4220 = vmul.f32 %v978, %v4191
      %v4221 = vmul.f32 %v983, %v4191
      %v4222 = vmul.f32 %v988, %v4191
      %v4223 = vmul.f32 %v993, %v4191
      %v4224 = vmul.f32 %v998, %v4191
      %v4225 = vmul.f32 %v1003, %v4191
      %v4226 = vmul.f32 %v1008, %v4191
      %v4227 = vmul.f32 %v1013, %v4191
      %v4228 = vmul.f32 %v1018, %v4191
      %v4229 = vmul.f32 %v1023, %v4191
      %v4230 = vmul.f32 %v1028, %v4191
      %v4231 = vmul.f32 %v1033, %v4191
      %v4232 = vmul.f32 %v1038, %v4191
      %v4233 = vmul.f32 %v1043, %v4191
      %v4234 = vmul.f32 %v1048, %v4191
      %v4235 = vmul.f32 %v1053, %v4191
      %v4236 = vmul.f32 %v1058, %v4191
      %v4237 = vmul.f32 %v1063, %v4191
      %v4238 = vmul.f32 %v1068, %v4191
      %v4239 = vmul.f32 %v1073, %v4191
      %v4240 = vmul.f32 %v1078, %v4191
      %v4241 = vmul.f32 %v1083, %v4191
      %v4242 = vmul.f32 %v1088, %v4191
      %v4243 = vmul.f32 %v1093, %v4191
      %v4244 = vmul.f32 %v1098, %v4191
      %v4245 = vmul.f32 %v1103, %v4191
      %v4246 = vmul.f32 %v1108, %v4191
      %v4247 = vmul.f32 %v1113, %v4191
      %v4248 = vmul.f32 %v1118, %v4191
      %v4249 = vmul.f32 %v1123, %v4191
      %v4250 = vmul.f32 %v1128, %v4191
      %v4251 = vmul.f32 %v1133, %v4191
      %v4252 = vmul.f32 %v1138, %v4191
      %v4253 = vmul.f32 %v1143, %v4191
      %v4254 = vmul.f32 %v1148, %v4191
      %v4255 = vmul.f32 %v1153, %v4191
      %v4260 = vunpack.c.l.b16 %v4151
      %v4261 = vunpack.c.l.b16 %v4152
      %v4262 = vunpack.c.l.b16 %v4153
      %v4263 = vunpack.c.l.b16 %v4154
      %v4264 = vpack.c.b16 %v4261, %v4260
      %v4265 = vpack.c.b16 %v4263, %v4262
      %v4269 = vsel %vm2188, %v4156, 0
      %v4272 = vsel %vm2188, %v4157, 0
      %v4275 = vsel %vm2188, %v4158, 0
      %v4278 = vsel %vm2188, %v4159, 0
      %v4281 = vsel %vm2188, %v4160, 0
      %v4284 = vsel %vm2188, %v4161, 0
      %v4287 = vsel %vm2188, %v4162, 0
      %v4290 = vsel %vm2188, %v4163, 0
      %v4293 = vsel %vm2188, %v4164, 0
      %v4296 = vsel %vm2188, %v4165, 0
      %v4299 = vsel %vm2188, %v4166, 0
      %v4302 = vsel %vm2188, %v4167, 0
      %v4305 = vsel %vm2188, %v4168, 0
      %v4308 = vsel %vm2188, %v4169, 0
      %v4311 = vsel %vm2188, %v4170, 0
      %v4314 = vsel %vm2188, %v4171, 0
      %v4317 = vsel %vm2188, %v4172, 0
      %v4320 = vsel %vm2188, %v4173, 0
      %v4323 = vsel %vm2188, %v4174, 0
      %v4326 = vsel %vm2188, %v4175, 0
      %v4329 = vsel %vm2188, %v4176, 0
      %v4332 = vsel %vm2188, %v4177, 0
      %v4335 = vsel %vm2188, %v4178, 0
      %v4338 = vsel %vm2188, %v4179, 0
      %v4341 = vsel %vm2188, %v4180, 0
      %v4344 = vsel %vm2188, %v4181, 0
      %v4347 = vsel %vm2188, %v4182, 0
      %v4350 = vsel %vm2188, %v4183, 0
      %v4353 = vsel %vm2188, %v4184, 0
      %v4356 = vsel %vm2188, %v4185, 0
      %v4359 = vsel %vm2188, %v4186, 0
      %v4362 = vsel %vm2188, %v4187, 0
      %4364 = vmatprep.subr.bf16.mxu0 0
      %4365 = vmatpush1.bf16.msra.mxu0 %v4264
      %4366 = vmatprep.subr.bf16.mxu0 0
      %4367 = vmatpush1.bf16.msra.mxu0 %v4265
      %4368 = vmatprep.subr.bf16.mxu0 0
      %4369 = vmatpush1.bf16.msra.mxu0 0
      %4370 = vmatprep.subr.bf16.mxu0 0
      %4371 = vmatpush1.bf16.msra.mxu0 0
      %4372 = vmatprep.subr.bf16.mxu0 0
      %4373 = vmatpush1.bf16.msra.mxu0 0
      %4374 = vmatprep.subr.bf16.mxu0 0
      %4375 = vmatpush1.bf16.msra.mxu0 0
      %4376 = vmatprep.subr.bf16.mxu0 0
      %4377 = vmatpush1.bf16.msra.mxu0 0
      %4378 = vmatprep.subr.bf16.mxu0 0
      %4379 = vmatpush1.bf16.msra.mxu0 0
      %4380 = vmatprep.subr.bf16.mxu0 0
      %4381 = vmatpush1.bf16.msra.mxu0 0
      %4382 = vmatprep.subr.bf16.mxu0 0
      %4383 = vmatpush1.bf16.msra.mxu0 0
      %4384 = vmatprep.subr.bf16.mxu0 0
      %4385 = vmatpush1.bf16.msra.mxu0 0
      %4386 = vmatprep.subr.bf16.mxu0 0
      %4387 = vmatpush1.bf16.msra.mxu0 0
      %4388 = vmatprep.subr.bf16.mxu0 0
      %4389 = vmatpush1.bf16.msra.mxu0 0
      %4390 = vmatprep.subr.bf16.mxu0 0
      %4391 = vmatpush1.bf16.msra.mxu0 0
      %4392 = vmatprep.subr.bf16.mxu0 0
      %4393 = vmatpush1.bf16.msra.mxu0 0
      %4394 = vmatprep.subr.bf16.mxu0 0
      %4395 = vmatpush1.bf16.msra.mxu0 0
      %4396 = vmatprep.mubr.bf16.mxu0 0
      %4397 = vmatmul.mubr.bf16.gmra.mrb[0].mxu0 %v4269
      %v4398 = vpop.f32.mrb[0].mxu0
      %v4399 = vadd.f32 %v4192, %v4398
      %v4400 = vpop.f32.mrb[0].mxu0
      %v4401 = vpop.f32.mrb[0].mxu0
      %v4402 = vadd.f32 %v4193, %v4401
      %v4403 = vpop.f32.mrb[0].mxu0
      %4404 = vmatprep.mubr.bf16.mxu0 0
      %4405 = vmatmul.mubr.bf16.gmra.mrb[0].mxu0 %v4272
      %v4406 = vpop.f32.mrb[0].mxu0
      %v4407 = vadd.f32 %v4194, %v4406
      %v4408 = vpop.f32.mrb[0].mxu0
      %v4409 = vpop.f32.mrb[0].mxu0
      %v4410 = vadd.f32 %v4195, %v4409
      %v4411 = vpop.f32.mrb[0].mxu0
      %4412 = vmatprep.mubr.bf16.mxu0 0
      %4413 = vmatmul.mubr.bf16.gmra.mrb[0].mxu0 %v4275
      %v4414 = vpop.f32.mrb[0].mxu0
      %v4415 = vadd.f32 %v4196, %v4414
      %v4416 = vpop.f32.mrb[0].mxu0
      %v4417 = vpop.f32.mrb[0].mxu0
      %v4418 = vadd.f32 %v4197, %v4417
      %v4419 = vpop.f32.mrb[0].mxu0
      %4420 = vmatprep.mubr.bf16.mxu0 0
      %4421 = vmatmul.mubr.bf16.gmra.mrb[0].mxu0 %v4278
      %v4422 = vpop.f32.mrb[0].mxu0
      %v4423 = vadd.f32 %v4198, %v4422
      %v4424 = vpop.f32.mrb[0].mxu0
      %v4425 = vpop.f32.mrb[0].mxu0
      %v4426 = vadd.f32 %v4199, %v4425
      %v4427 = vpop.f32.mrb[0].mxu0
      %4428 = vmatprep.mubr.bf16.mxu0 0
      %4429 = vmatmul.mubr.bf16.gmra.mrb[0].mxu0 %v4281
      %v4430 = vpop.f32.mrb[0].mxu0
      %v4431 = vadd.f32 %v4200, %v4430
      %v4432 = vpop.f32.mrb[0].mxu0
      %v4433 = vpop.f32.mrb[0].mxu0
      %v4434 = vadd.f32 %v4201, %v4433
      %v4435 = vpop.f32.mrb[0].mxu0
      %4436 = vmatprep.mubr.bf16.mxu0 0
      %4437 = vmatmul.mubr.bf16.gmra.mrb[0].mxu0 %v4284
      %v4438 = vpop.f32.mrb[0].mxu0
      %v4439 = vadd.f32 %v4202, %v4438
      %v4440 = vpop.f32.mrb[0].mxu0
      %v4441 = vpop.f32.mrb[0].mxu0
      %v4442 = vadd.f32 %v4203, %v4441
      %v4443 = vpop.f32.mrb[0].mxu0
      %4444 = vmatprep.mubr.bf16.mxu0 0
      %4445 = vmatmul.mubr.bf16.gmra.mrb[0].mxu0 %v4287
      %v4446 = vpop.f32.mrb[0].mxu0
      %v4447 = vadd.f32 %v4204, %v4446
      %v4448 = vpop.f32.mrb[0].mxu0
      %v4449 = vpop.f32.mrb[0].mxu0
      %v4450 = vadd.f32 %v4205, %v4449
      %v4451 = vpop.f32.mrb[0].mxu0
      %4452 = vmatprep.mubr.bf16.mxu0 0
      %4453 = vmatmul.mubr.bf16.gmra.mrb[0].mxu0 %v4290
      %v4454 = vpop.f32.mrb[0].mxu0
      %v4455 = vadd.f32 %v4206, %v4454
      %v4456 = vpop.f32.mrb[0].mxu0
      %v4457 = vpop.f32.mrb[0].mxu0
      %v4458 = vadd.f32 %v4207, %v4457
      %v4459 = vpop.f32.mrb[0].mxu0
      %4460 = vmatprep.mubr.bf16.mxu0 0
      %4461 = vmatmul.mubr.bf16.gmra.mrb[0].mxu0 %v4293
      %v4462 = vpop.f32.mrb[0].mxu0
      %v4463 = vadd.f32 %v4208, %v4462
      %v4464 = vpop.f32.mrb[0].mxu0
      %v4465 = vpop.f32.mrb[0].mxu0
      %v4466 = vadd.f32 %v4209, %v4465
      %v4467 = vpop.f32.mrb[0].mxu0
      %4468 = vmatprep.mubr.bf16.mxu0 0
      %4469 = vmatmul.mubr.bf16.gmra.mrb[0].mxu0 %v4296
      %v4470 = vpop.f32.mrb[0].mxu0
      %v4471 = vadd.f32 %v4210, %v4470
      %v4472 = vpop.f32.mrb[0].mxu0
      %v4473 = vpop.f32.mrb[0].mxu0
      %v4474 = vadd.f32 %v4211, %v4473
      %v4475 = vpop.f32.mrb[0].mxu0
      %4476 = vmatprep.mubr.bf16.mxu0 0
      %4477 = vmatmul.mubr.bf16.gmra.mrb[0].mxu0 %v4299
      %v4478 = vpop.f32.mrb[0].mxu0
      %v4479 = vadd.f32 %v4212, %v4478
      %v4480 = vpop.f32.mrb[0].mxu0
      %v4481 = vpop.f32.mrb[0].mxu0
      %v4482 = vadd.f32 %v4213, %v4481
      %v4483 = vpop.f32.mrb[0].mxu0
      %4484 = vmatprep.mubr.bf16.mxu0 0
      %4485 = vmatmul.mubr.bf16.gmra.mrb[0].mxu0 %v4302
      %v4486 = vpop.f32.mrb[0].mxu0
      %v4487 = vadd.f32 %v4214, %v4486
      %v4488 = vpop.f32.mrb[0].mxu0
      %v4489 = vpop.f32.mrb[0].mxu0
      %v4490 = vadd.f32 %v4215, %v4489
      %v4491 = vpop.f32.mrb[0].mxu0
      %4492 = vmatprep.mubr.bf16.mxu0 0
      %4493 = vmatmul.mubr.bf16.gmra.mrb[0].mxu0 %v4305
      %v4494 = vpop.f32.mrb[0].mxu0
      %v4495 = vadd.f32 %v4216, %v4494
      %v4496 = vpop.f32.mrb[0].mxu0
      %v4497 = vpop.f32.mrb[0].mxu0
      %v4498 = vadd.f32 %v4217, %v4497
      %v4499 = vpop.f32.mrb[0].mxu0
      %4500 = vmatprep.mubr.bf16.mxu0 0
      %4501 = vmatmul.mubr.bf16.gmra.mrb[0].mxu0 %v4308
      %v4502 = vpop.f32.mrb[0].mxu0
      %v4503 = vadd.f32 %v4218, %v4502
      %v4504 = vpop.f32.mrb[0].mxu0
      %v4505 = vpop.f32.mrb[0].mxu0
      %v4506 = vadd.f32 %v4219, %v4505
      %v4507 = vpop.f32.mrb[0].mxu0
      %4508 = vmatprep.mubr.bf16.mxu0 0
      %4509 = vmatmul.mubr.bf16.gmra.mrb[0].mxu0 %v4311
      %v4510 = vpop.f32.mrb[0].mxu0
      %v4511 = vadd.f32 %v4220, %v4510
      %v4512 = vpop.f32.mrb[0].mxu0
      %v4513 = vpop.f32.mrb[0].mxu0
      %v4514 = vadd.f32 %v4221, %v4513
      %v4515 = vpop.f32.mrb[0].mxu0
      %4516 = vmatprep.mubr.bf16.mxu0 0
      %4517 = vmatmul.mubr.bf16.gmra.mrb[0].mxu0 %v4314
      %v4518 = vpop.f32.mrb[0].mxu0
      %v4519 = vadd.f32 %v4222, %v4518
      %v4520 = vpop.f32.mrb[0].mxu0
      %v4521 = vpop.f32.mrb[0].mxu0
      %v4522 = vadd.f32 %v4223, %v4521
      %v4523 = vpop.f32.mrb[0].mxu0
      %4524 = vmatprep.mubr.bf16.mxu0 0
      %4525 = vmatmul.mubr.bf16.gmra.mrb[0].mxu0 %v4317
      %v4526 = vpop.f32.mrb[0].mxu0
      %v4527 = vadd.f32 %v4224, %v4526
      %v4528 = vpop.f32.mrb[0].mxu0
      %v4529 = vpop.f32.mrb[0].mxu0
      %v4530 = vadd.f32 %v4225, %v4529
      %v4531 = vpop.f32.mrb[0].mxu0
      %4532 = vmatprep.mubr.bf16.mxu0 0
      %4533 = vmatmul.mubr.bf16.gmra.mrb[0].mxu0 %v4320
      %v4534 = vpop.f32.mrb[0].mxu0
      %v4535 = vadd.f32 %v4226, %v4534
      %v4536 = vpop.f32.mrb[0].mxu0
      %v4537 = vpop.f32.mrb[0].mxu0
      %v4538 = vadd.f32 %v4227, %v4537
      %v4539 = vpop.f32.mrb[0].mxu0
      %4540 = vmatprep.mubr.bf16.mxu0 0
      %4541 = vmatmul.mubr.bf16.gmra.mrb[0].mxu0 %v4323
      %v4542 = vpop.f32.mrb[0].mxu0
      %v4543 = vadd.f32 %v4228, %v4542
      %v4544 = vpop.f32.mrb[0].mxu0
      %v4545 = vpop.f32.mrb[0].mxu0
      %v4546 = vadd.f32 %v4229, %v4545
      %v4547 = vpop.f32.mrb[0].mxu0
      %4548 = vmatprep.mubr.bf16.mxu0 0
      %4549 = vmatmul.mubr.bf16.gmra.mrb[0].mxu0 %v4326
      %v4550 = vpop.f32.mrb[0].mxu0
      %v4551 = vadd.f32 %v4230, %v4550
      %v4552 = vpop.f32.mrb[0].mxu0
      %v4553 = vpop.f32.mrb[0].mxu0
      %v4554 = vadd.f32 %v4231, %v4553
      %v4555 = vpop.f32.mrb[0].mxu0
      %4556 = vmatprep.mubr.bf16.mxu0 0
      %4557 = vmatmul.mubr.bf16.gmra.mrb[0].mxu0 %v4329
      %v4558 = vpop.f32.mrb[0].mxu0
      %v4559 = vadd.f32 %v4232, %v4558
      %v4560 = vpop.f32.mrb[0].mxu0
      %v4561 = vpop.f32.mrb[0].mxu0
      %v4562 = vadd.f32 %v4233, %v4561
      %v4563 = vpop.f32.mrb[0].mxu0
      %4564 = vmatprep.mubr.bf16.mxu0 0
      %4565 = vmatmul.mubr.bf16.gmra.mrb[0].mxu0 %v4332
      %v4566 = vpop.f32.mrb[0].mxu0
      %v4567 = vadd.f32 %v4234, %v4566
      %v4568 = vpop.f32.mrb[0].mxu0
      %v4569 = vpop.f32.mrb[0].mxu0
      %v4570 = vadd.f32 %v4235, %v4569
      %v4571 = vpop.f32.mrb[0].mxu0
      %4572 = vmatprep.mubr.bf16.mxu0 0
      %4573 = vmatmul.mubr.bf16.gmra.mrb[0].mxu0 %v4335
      %v4574 = vpop.f32.mrb[0].mxu0
      %v4575 = vadd.f32 %v4236, %v4574
      %v4576 = vpop.f32.mrb[0].mxu0
      %v4577 = vpop.f32.mrb[0].mxu0
      %v4578 = vadd.f32 %v4237, %v4577
      %v4579 = vpop.f32.mrb[0].mxu0
      %4580 = vmatprep.mubr.bf16.mxu0 0
      %4581 = vmatmul.mubr.bf16.gmra.mrb[0].mxu0 %v4338
      %v4582 = vpop.f32.mrb[0].mxu0
      %v4583 = vadd.f32 %v4238, %v4582
      %v4584 = vpop.f32.mrb[0].mxu0
      %v4585 = vpop.f32.mrb[0].mxu0
      %v4586 = vadd.f32 %v4239, %v4585
      %v4587 = vpop.f32.mrb[0].mxu0
      %4588 = vmatprep.mubr.bf16.mxu0 0
      %4589 = vmatmul.mubr.bf16.gmra.mrb[0].mxu0 %v4341
      %v4590 = vpop.f32.mrb[0].mxu0
      %v4591 = vadd.f32 %v4240, %v4590
      %v4592 = vpop.f32.mrb[0].mxu0
      %v4593 = vpop.f32.mrb[0].mxu0
      %v4594 = vadd.f32 %v4241, %v4593
      %v4595 = vpop.f32.mrb[0].mxu0
      %4596 = vmatprep.mubr.bf16.mxu0 0
      %4597 = vmatmul.mubr.bf16.gmra.mrb[0].mxu0 %v4344
      %v4598 = vpop.f32.mrb[0].mxu0
      %v4599 = vadd.f32 %v4242, %v4598
      %v4600 = vpop.f32.mrb[0].mxu0
      %v4601 = vpop.f32.mrb[0].mxu0
      %v4602 = vadd.f32 %v4243, %v4601
      %v4603 = vpop.f32.mrb[0].mxu0
      %4604 = vmatprep.mubr.bf16.mxu0 0
      %4605 = vmatmul.mubr.bf16.gmra.mrb[0].mxu0 %v4347
      %v4606 = vpop.f32.mrb[0].mxu0
      %v4607 = vadd.f32 %v4244, %v4606
      %v4608 = vpop.f32.mrb[0].mxu0
      %v4609 = vpop.f32.mrb[0].mxu0
      %v4610 = vadd.f32 %v4245, %v4609
      %v4611 = vpop.f32.mrb[0].mxu0
      %4612 = vmatprep.mubr.bf16.mxu0 0
      %4613 = vmatmul.mubr.bf16.gmra.mrb[0].mxu0 %v4350
      %v4614 = vpop.f32.mrb[0].mxu0
      %v4615 = vadd.f32 %v4246, %v4614
      %v4616 = vpop.f32.mrb[0].mxu0
      %v4617 = vpop.f32.mrb[0].mxu0
      %v4618 = vadd.f32 %v4247, %v4617
      %v4619 = vpop.f32.mrb[0].mxu0
      %4620 = vmatprep.mubr.bf16.mxu0 0
      %4621 = vmatmul.mubr.bf16.gmra.mrb[0].mxu0 %v4353
      %v4622 = vpop.f32.mrb[0].mxu0
      %v4623 = vadd.f32 %v4248, %v4622
      %v4624 = vpop.f32.mrb[0].mxu0
      %v4625 = vpop.f32.mrb[0].mxu0
      %v4626 = vadd.f32 %v4249, %v4625
      %v4627 = vpop.f32.mrb[0].mxu0
      %4628 = vmatprep.mubr.bf16.mxu0 0
      %4629 = vmatmul.mubr.bf16.gmra.mrb[0].mxu0 %v4356
      %v4630 = vpop.f32.mrb[0].mxu0
      %v4631 = vadd.f32 %v4250, %v4630
      %v4632 = vpop.f32.mrb[0].mxu0
      %v4633 = vpop.f32.mrb[0].mxu0
      %v4634 = vadd.f32 %v4251, %v4633
      %v4635 = vpop.f32.mrb[0].mxu0
      %4636 = vmatprep.mubr.bf16.mxu0 0
      %4637 = vmatmul.mubr.bf16.gmra.mrb[0].mxu0 %v4359
      %v4638 = vpop.f32.mrb[0].mxu0
      %v4639 = vadd.f32 %v4252, %v4638
      %v4640 = vpop.f32.mrb[0].mxu0
      %v4641 = vpop.f32.mrb[0].mxu0
      %v4642 = vadd.f32 %v4253, %v4641
      %v4643 = vpop.f32.mrb[0].mxu0
      %4644 = vmatprep.mubr.bf16.mxu0 0
      %4645 = vmatmul.mubr.bf16.gmra.mrb[0].mxu0 %v4362
      %v4646 = vpop.f32.mrb[0].mxu0
      %v4647 = vadd.f32 %v4254, %v4646
      %v4648 = vpop.f32.mrb[0].mxu0
      %v4649 = vpop.f32.mrb[0].mxu0
      %v4650 = vadd.f32 %v4255, %v4649
      %v4651 = vpop.f32.mrb[0].mxu0
      %4652 = vdwg.mxu0
      %v4653 = vlaneseq
      %v4654 = vshrl.u32 %v4653, 7
      %v4655 = vsub.s32 1, %v4654
      %v4656 = vrot.slane %v4150, %v4655
      %v4657 = vmul.f32 %v1295, %v4656
      %v4658 = vmul.f32 %v1299, %v4656
      %v4659 = vmul.f32 %v1303, %v4656
      %v4660 = vmul.f32 %v1307, %v4656
      %v4661 = vmul.f32 %v1311, %v4656
      %v4662 = vmul.f32 %v1315, %v4656
      %v4663 = vmul.f32 %v1319, %v4656
      %v4664 = vmul.f32 %v1323, %v4656
      %v4665 = vmul.f32 %v1327, %v4656
      %v4666 = vmul.f32 %v1331, %v4656
      %v4667 = vmul.f32 %v1335, %v4656
      %v4668 = vmul.f32 %v1339, %v4656
      %v4669 = vmul.f32 %v1343, %v4656
      %v4670 = vmul.f32 %v1347, %v4656
      %v4671 = vmul.f32 %v1351, %v4656
      %v4672 = vmul.f32 %v1355, %v4656
      %v4673 = vmul.f32 %v1359, %v4656
      %v4674 = vmul.f32 %v1363, %v4656
      %v4675 = vmul.f32 %v1367, %v4656
      %v4676 = vmul.f32 %v1371, %v4656
      %v4677 = vmul.f32 %v1375, %v4656
      %v4678 = vmul.f32 %v1379, %v4656
      %v4679 = vmul.f32 %v1383, %v4656
      %v4680 = vmul.f32 %v1387, %v4656
      %v4681 = vmul.f32 %v1391, %v4656
      %v4682 = vmul.f32 %v1395, %v4656
      %v4683 = vmul.f32 %v1399, %v4656
      %v4684 = vmul.f32 %v1403, %v4656
      %v4685 = vmul.f32 %v1407, %v4656
      %v4686 = vmul.f32 %v1411, %v4656
      %v4687 = vmul.f32 %v1415, %v4656
      %v4688 = vmul.f32 %v1419, %v4656
      %v4689 = vmul.f32 %v1423, %v4656
      %v4690 = vmul.f32 %v1427, %v4656
      %v4691 = vmul.f32 %v1431, %v4656
      %v4692 = vmul.f32 %v1435, %v4656
      %v4693 = vmul.f32 %v1439, %v4656
      %v4694 = vmul.f32 %v1443, %v4656
      %v4695 = vmul.f32 %v1447, %v4656
      %v4696 = vmul.f32 %v1451, %v4656
      %v4697 = vmul.f32 %v1455, %v4656
      %v4698 = vmul.f32 %v1459, %v4656
      %v4699 = vmul.f32 %v1463, %v4656
      %v4700 = vmul.f32 %v1467, %v4656
      %v4701 = vmul.f32 %v1471, %v4656
      %v4702 = vmul.f32 %v1475, %v4656
      %v4703 = vmul.f32 %v1479, %v4656
      %v4704 = vmul.f32 %v1483, %v4656
      %v4705 = vmul.f32 %v1487, %v4656
      %v4706 = vmul.f32 %v1491, %v4656
      %v4707 = vmul.f32 %v1495, %v4656
      %v4708 = vmul.f32 %v1499, %v4656
      %v4709 = vmul.f32 %v1503, %v4656
      %v4710 = vmul.f32 %v1507, %v4656
      %v4711 = vmul.f32 %v1511, %v4656
      %v4712 = vmul.f32 %v1515, %v4656
      %v4713 = vmul.f32 %v1519, %v4656
      %v4714 = vmul.f32 %v1523, %v4656
      %v4715 = vmul.f32 %v1527, %v4656
      %v4716 = vmul.f32 %v1531, %v4656
      %v4717 = vmul.f32 %v1535, %v4656
      %v4718 = vmul.f32 %v1539, %v4656
      %v4719 = vmul.f32 %v1543, %v4656
      %v4720 = vmul.f32 %v1547, %v4656
      %v4721 = vadd.f32 %v4399, %v4657
      %v4722 = vadd.f32 %v4402, %v4658
      %v4723 = vadd.f32 %v4407, %v4659
      %v4724 = vadd.f32 %v4410, %v4660
      %v4725 = vadd.f32 %v4415, %v4661
      %v4726 = vadd.f32 %v4418, %v4662
      %v4727 = vadd.f32 %v4423, %v4663
      %v4728 = vadd.f32 %v4426, %v4664
      %v4729 = vadd.f32 %v4431, %v4665
      %v4730 = vadd.f32 %v4434, %v4666
      %v4731 = vadd.f32 %v4439, %v4667
      %v4732 = vadd.f32 %v4442, %v4668
      %v4733 = vadd.f32 %v4447, %v4669
      %v4734 = vadd.f32 %v4450, %v4670
      %v4735 = vadd.f32 %v4455, %v4671
      %v4736 = vadd.f32 %v4458, %v4672
      %v4737 = vadd.f32 %v4463, %v4673
      %v4738 = vadd.f32 %v4466, %v4674
      %v4739 = vadd.f32 %v4471, %v4675
      %v4740 = vadd.f32 %v4474, %v4676
      %v4741 = vadd.f32 %v4479, %v4677
      %v4742 = vadd.f32 %v4482, %v4678
      %v4743 = vadd.f32 %v4487, %v4679
      %v4744 = vadd.f32 %v4490, %v4680
      %v4745 = vadd.f32 %v4495, %v4681
      %v4746 = vadd.f32 %v4498, %v4682
      %v4747 = vadd.f32 %v4503, %v4683
      %v4748 = vadd.f32 %v4506, %v4684
      %v4749 = vadd.f32 %v4511, %v4685
      %v4750 = vadd.f32 %v4514, %v4686
      %v4751 = vadd.f32 %v4519, %v4687
      %v4752 = vadd.f32 %v4522, %v4688
      %v4753 = vadd.f32 %v4527, %v4689
      %v4754 = vadd.f32 %v4530, %v4690
      %v4755 = vadd.f32 %v4535, %v4691
      %v4756 = vadd.f32 %v4538, %v4692
      %v4757 = vadd.f32 %v4543, %v4693
      %v4758 = vadd.f32 %v4546, %v4694
      %v4759 = vadd.f32 %v4551, %v4695
      %v4760 = vadd.f32 %v4554, %v4696
      %v4761 = vadd.f32 %v4559, %v4697
      %v4762 = vadd.f32 %v4562, %v4698
      %v4763 = vadd.f32 %v4567, %v4699
      %v4764 = vadd.f32 %v4570, %v4700
      %v4765 = vadd.f32 %v4575, %v4701
      %v4766 = vadd.f32 %v4578, %v4702
      %v4767 = vadd.f32 %v4583, %v4703
      %v4768 = vadd.f32 %v4586, %v4704
      %v4769 = vadd.f32 %v4591, %v4705
      %v4770 = vadd.f32 %v4594, %v4706
      %v4771 = vadd.f32 %v4599, %v4707
      %v4772 = vadd.f32 %v4602, %v4708
      %v4773 = vadd.f32 %v4607, %v4709
      %v4774 = vadd.f32 %v4610, %v4710
      %v4775 = vadd.f32 %v4615, %v4711
      %v4776 = vadd.f32 %v4618, %v4712
      %v4777 = vadd.f32 %v4623, %v4713
      %v4778 = vadd.f32 %v4626, %v4714
      %v4779 = vadd.f32 %v4631, %v4715
      %v4780 = vadd.f32 %v4634, %v4716
      %v4781 = vadd.f32 %v4639, %v4717
      %v4782 = vadd.f32 %v4642, %v4718
      %v4783 = vadd.f32 %v4647, %v4719
      %v4784 = vadd.f32 %v4650, %v4720
      %v4785 = vlaneseq
      %v4786 = vshrl.u32 %v4785, 7
      %v4787 = vsub.s32 2, %v4786
      %v4788 = vrot.slane %v4150, %v4787
      %v4789 = vmul.f32 %v1683, %v4788
      %v4790 = vmul.f32 %v1687, %v4788
      %v4791 = vmul.f32 %v1691, %v4788
      %v4792 = vmul.f32 %v1695, %v4788
      %v4793 = vmul.f32 %v1699, %v4788
      %v4794 = vmul.f32 %v1703, %v4788
      %v4795 = vmul.f32 %v1707, %v4788
      %v4796 = vmul.f32 %v1711, %v4788
      %v4797 = vmul.f32 %v1715, %v4788
      %v4798 = vmul.f32 %v1719, %v4788
      %v4799 = vmul.f32 %v1723, %v4788
      %v4800 = vmul.f32 %v1727, %v4788
      %v4801 = vmul.f32 %v1731, %v4788
      %v4802 = vmul.f32 %v1735, %v4788
      %v4803 = vmul.f32 %v1739, %v4788
      %v4804 = vmul.f32 %v1743, %v4788
      %v4805 = vmul.f32 %v1747, %v4788
      %v4806 = vmul.f32 %v1751, %v4788
      %v4807 = vmul.f32 %v1755, %v4788
      %v4808 = vmul.f32 %v1759, %v4788
      %v4809 = vmul.f32 %v1763, %v4788
      %v4810 = vmul.f32 %v1767, %v4788
      %v4811 = vmul.f32 %v1771, %v4788
      %v4812 = vmul.f32 %v1775, %v4788
      %v4813 = vmul.f32 %v1779, %v4788
      %v4814 = vmul.f32 %v1783, %v4788
      %v4815 = vmul.f32 %v1787, %v4788
      %v4816 = vmul.f32 %v1791, %v4788
      %v4817 = vmul.f32 %v1795, %v4788
      %v4818 = vmul.f32 %v1799, %v4788
      %v4819 = vmul.f32 %v1803, %v4788
      %v4820 = vmul.f32 %v1807, %v4788
      %v4821 = vmul.f32 %v1811, %v4788
      %v4822 = vmul.f32 %v1815, %v4788
      %v4823 = vmul.f32 %v1819, %v4788
      %v4824 = vmul.f32 %v1823, %v4788
      %v4825 = vmul.f32 %v1827, %v4788
      %v4826 = vmul.f32 %v1831, %v4788
      %v4827 = vmul.f32 %v1835, %v4788
      %v4828 = vmul.f32 %v1839, %v4788
      %v4829 = vmul.f32 %v1843, %v4788
      %v4830 = vmul.f32 %v1847, %v4788
      %v4831 = vmul.f32 %v1851, %v4788
      %v4832 = vmul.f32 %v1855, %v4788
      %v4833 = vmul.f32 %v1859, %v4788
      %v4834 = vmul.f32 %v1863, %v4788
      %v4835 = vmul.f32 %v1867, %v4788
      %v4836 = vmul.f32 %v1871, %v4788
      %v4837 = vmul.f32 %v1875, %v4788
      %v4838 = vmul.f32 %v1879, %v4788
      %v4839 = vmul.f32 %v1883, %v4788
      %v4840 = vmul.f32 %v1887, %v4788
      %v4841 = vmul.f32 %v1891, %v4788
      %v4842 = vmul.f32 %v1895, %v4788
      %v4843 = vmul.f32 %v1899, %v4788
      %v4844 = vmul.f32 %v1903, %v4788
      %v4845 = vmul.f32 %v1907, %v4788
      %v4846 = vmul.f32 %v1911, %v4788
      %v4847 = vmul.f32 %v1915, %v4788
      %v4848 = vmul.f32 %v1919, %v4788
      %v4849 = vmul.f32 %v1923, %v4788
      %v4850 = vmul.f32 %v1927, %v4788
      %v4851 = vmul.f32 %v1931, %v4788
      %v4852 = vmul.f32 %v1935, %v4788
      %v4853 = vadd.f32 %v4721, %v4789
      %v4854 = vadd.f32 %v4722, %v4790
      %v4855 = vadd.f32 %v4723, %v4791
      %v4856 = vadd.f32 %v4724, %v4792
      %v4857 = vadd.f32 %v4725, %v4793
      %v4858 = vadd.f32 %v4726, %v4794
      %v4859 = vadd.f32 %v4727, %v4795
      %v4860 = vadd.f32 %v4728, %v4796
      %v4861 = vadd.f32 %v4729, %v4797
      %v4862 = vadd.f32 %v4730, %v4798
      %v4863 = vadd.f32 %v4731, %v4799
      %v4864 = vadd.f32 %v4732, %v4800
      %v4865 = vadd.f32 %v4733, %v4801
      %v4866 = vadd.f32 %v4734, %v4802
      %v4867 = vadd.f32 %v4735, %v4803
      %v4868 = vadd.f32 %v4736, %v4804
      %v4869 = vadd.f32 %v4737, %v4805
      %v4870 = vadd.f32 %v4738, %v4806
      %v4871 = vadd.f32 %v4739, %v4807
      %v4872 = vadd.f32 %v4740, %v4808
      %v4873 = vadd.f32 %v4741, %v4809
      %v4874 = vadd.f32 %v4742, %v4810
      %v4875 = vadd.f32 %v4743, %v4811
      %v4876 = vadd.f32 %v4744, %v4812
      %v4877 = vadd.f32 %v4745, %v4813
      %v4878 = vadd.f32 %v4746, %v4814
      %v4879 = vadd.f32 %v4747, %v4815
      %v4880 = vadd.f32 %v4748, %v4816
      %v4881 = vadd.f32 %v4749, %v4817
      %v4882 = vadd.f32 %v4750, %v4818
      %v4883 = vadd.f32 %v4751, %v4819
      %v4884 = vadd.f32 %v4752, %v4820
      %v4885 = vadd.f32 %v4753, %v4821
      %v4886 = vadd.f32 %v4754, %v4822
      %v4887 = vadd.f32 %v4755, %v4823
      %v4888 = vadd.f32 %v4756, %v4824
      %v4889 = vadd.f32 %v4757, %v4825
      %v4890 = vadd.f32 %v4758, %v4826
      %v4891 = vadd.f32 %v4759, %v4827
      %v4892 = vadd.f32 %v4760, %v4828
      %v4893 = vadd.f32 %v4761, %v4829
      %v4894 = vadd.f32 %v4762, %v4830
      %v4895 = vadd.f32 %v4763, %v4831
      %v4896 = vadd.f32 %v4764, %v4832
      %v4897 = vadd.f32 %v4765, %v4833
      %v4898 = vadd.f32 %v4766, %v4834
      %v4899 = vadd.f32 %v4767, %v4835
      %v4900 = vadd.f32 %v4768, %v4836
      %v4901 = vadd.f32 %v4769, %v4837
      %v4902 = vadd.f32 %v4770, %v4838
      %v4903 = vadd.f32 %v4771, %v4839
      %v4904 = vadd.f32 %v4772, %v4840
      %v4905 = vadd.f32 %v4773, %v4841
      %v4906 = vadd.f32 %v4774, %v4842
      %v4907 = vadd.f32 %v4775, %v4843
      %v4908 = vadd.f32 %v4776, %v4844
      %v4909 = vadd.f32 %v4777, %v4845
      %v4910 = vadd.f32 %v4778, %v4846
      %v4911 = vadd.f32 %v4779, %v4847
      %v4912 = vadd.f32 %v4780, %v4848
      %v4913 = vadd.f32 %v4781, %v4849
      %v4914 = vadd.f32 %v4782, %v4850
      %v4915 = vadd.f32 %v4783, %v4851
      %v4916 = vadd.f32 %v4784, %v4852
      %v4918 = vlaneseq
      %v4919 = vshrl.u32 %v4918, 7
      %v4920 = vsub.s32 0, %v4919
      %v4921 = vrot.slane %v4155, %v4920
      %v4923 = vadd.f32 %v4853, %v4921
      %v4924 = vadd.f32 %v4854, %v4921
      %v4925 = vadd.f32 %v4855, %v4921
      %v4926 = vadd.f32 %v4856, %v4921
      %v4927 = vadd.f32 %v4857, %v4921
      %v4928 = vadd.f32 %v4858, %v4921
      %v4929 = vadd.f32 %v4859, %v4921
      %v4930 = vadd.f32 %v4860, %v4921
      %v4931 = vadd.f32 %v4861, %v4921
      %v4932 = vadd.f32 %v4862, %v4921
      %v4933 = vadd.f32 %v4863, %v4921
      %v4934 = vadd.f32 %v4864, %v4921
      %v4935 = vadd.f32 %v4865, %v4921
      %v4936 = vadd.f32 %v4866, %v4921
      %v4937 = vadd.f32 %v4867, %v4921
      %v4938 = vadd.f32 %v4868, %v4921
      %v4939 = vadd.f32 %v4869, %v4921
      %v4940 = vadd.f32 %v4870, %v4921
      %v4941 = vadd.f32 %v4871, %v4921
      %v4942 = vadd.f32 %v4872, %v4921
      %v4943 = vadd.f32 %v4873, %v4921
      %v4944 = vadd.f32 %v4874, %v4921
      %v4945 = vadd.f32 %v4875, %v4921
      %v4946 = vadd.f32 %v4876, %v4921
      %v4947 = vadd.f32 %v4877, %v4921
      %v4948 = vadd.f32 %v4878, %v4921
      %v4949 = vadd.f32 %v4879, %v4921
      %v4950 = vadd.f32 %v4880, %v4921
      %v4951 = vadd.f32 %v4881, %v4921
      %v4952 = vadd.f32 %v4882, %v4921
      %v4953 = vadd.f32 %v4883, %v4921
      %v4954 = vadd.f32 %v4884, %v4921
      %v4955 = vadd.f32 %v4885, %v4921
      %v4956 = vadd.f32 %v4886, %v4921
      %v4957 = vadd.f32 %v4887, %v4921
      %v4958 = vadd.f32 %v4888, %v4921
      %v4959 = vadd.f32 %v4889, %v4921
      %v4960 = vadd.f32 %v4890, %v4921
      %v4961 = vadd.f32 %v4891, %v4921
      %v4962 = vadd.f32 %v4892, %v4921
      %v4963 = vadd.f32 %v4893, %v4921
      %v4964 = vadd.f32 %v4894, %v4921
      %v4965 = vadd.f32 %v4895, %v4921
      %v4966 = vadd.f32 %v4896, %v4921
      %v4967 = vadd.f32 %v4897, %v4921
      %v4968 = vadd.f32 %v4898, %v4921
      %v4969 = vadd.f32 %v4899, %v4921
      %v4970 = vadd.f32 %v4900, %v4921
      %v4971 = vadd.f32 %v4901, %v4921
      %v4972 = vadd.f32 %v4902, %v4921
      %v4973 = vadd.f32 %v4903, %v4921
      %v4974 = vadd.f32 %v4904, %v4921
      %v4975 = vadd.f32 %v4905, %v4921
      %v4976 = vadd.f32 %v4906, %v4921
      %v4977 = vadd.f32 %v4907, %v4921
      %v4978 = vadd.f32 %v4908, %v4921
      %v4979 = vadd.f32 %v4909, %v4921
      %v4980 = vadd.f32 %v4910, %v4921
      %v4981 = vadd.f32 %v4911, %v4921
      %v4982 = vadd.f32 %v4912, %v4921
      %v4983 = vadd.f32 %v4913, %v4921
      %v4984 = vadd.f32 %v4914, %v4921
      %v4985 = vadd.f32 %v4915, %v4921
      %v4986 = vadd.f32 %v4916, %v4921
      %v4987 = vmax.f32 %v4923, 0.0
      %v4988 = vmax.f32 %v4924, 0.0
      %v4989 = vmax.f32 %v4925, 0.0
      %v4990 = vmax.f32 %v4926, 0.0
      %v4991 = vmax.f32 %v4927, 0.0
      %v4992 = vmax.f32 %v4928, 0.0
      %v4993 = vmax.f32 %v4929, 0.0
      %v4994 = vmax.f32 %v4930, 0.0
      %v4995 = vmax.f32 %v4931, 0.0
      %v4996 = vmax.f32 %v4932, 0.0
      %v4997 = vmax.f32 %v4933, 0.0
      %v4998 = vmax.f32 %v4934, 0.0
      %v4999 = vmax.f32 %v4935, 0.0
      %v5000 = vmax.f32 %v4936, 0.0
      %v5001 = vmax.f32 %v4937, 0.0
      %v5002 = vmax.f32 %v4938, 0.0
      %v5003 = vmax.f32 %v4939, 0.0
      %v5004 = vmax.f32 %v4940, 0.0
      %v5005 = vmax.f32 %v4941, 0.0
      %v5006 = vmax.f32 %v4942, 0.0
      %v5007 = vmax.f32 %v4943, 0.0
      %v5008 = vmax.f32 %v4944, 0.0
      %v5009 = vmax.f32 %v4945, 0.0
      %v5010 = vmax.f32 %v4946, 0.0
      %v5011 = vmax.f32 %v4947, 0.0
      %v5012 = vmax.f32 %v4948, 0.0
      %v5013 = vmax.f32 %v4949, 0.0
      %v5014 = vmax.f32 %v4950, 0.0
      %v5015 = vmax.f32 %v4951, 0.0
      %v5016 = vmax.f32 %v4952, 0.0
      %v5017 = vmax.f32 %v4953, 0.0
      %v5018 = vmax.f32 %v4954, 0.0
      %v5019 = vmax.f32 %v4955, 0.0
      %v5020 = vmax.f32 %v4956, 0.0
      %v5021 = vmax.f32 %v4957, 0.0
      %v5022 = vmax.f32 %v4958, 0.0
      %v5023 = vmax.f32 %v4959, 0.0
      %v5024 = vmax.f32 %v4960, 0.0
      %v5025 = vmax.f32 %v4961, 0.0
      %v5026 = vmax.f32 %v4962, 0.0
      %v5027 = vmax.f32 %v4963, 0.0
      %v5028 = vmax.f32 %v4964, 0.0
      %v5029 = vmax.f32 %v4965, 0.0
      %v5030 = vmax.f32 %v4966, 0.0
      %v5031 = vmax.f32 %v4967, 0.0
      %v5032 = vmax.f32 %v4968, 0.0
      %v5033 = vmax.f32 %v4969, 0.0
      %v5034 = vmax.f32 %v4970, 0.0
      %v5035 = vmax.f32 %v4971, 0.0
      %v5036 = vmax.f32 %v4972, 0.0
      %v5037 = vmax.f32 %v4973, 0.0
      %v5038 = vmax.f32 %v4974, 0.0
      %v5039 = vmax.f32 %v4975, 0.0
      %v5040 = vmax.f32 %v4976, 0.0
      %v5041 = vmax.f32 %v4977, 0.0
      %v5042 = vmax.f32 %v4978, 0.0
      %v5043 = vmax.f32 %v4979, 0.0
      %v5044 = vmax.f32 %v4980, 0.0
      %v5045 = vmax.f32 %v4981, 0.0
      %v5046 = vmax.f32 %v4982, 0.0
      %v5047 = vmax.f32 %v4983, 0.0
      %v5048 = vmax.f32 %v4984, 0.0
      %v5049 = vmax.f32 %v4985, 0.0
      %v5050 = vmax.f32 %v4986, 0.0
      %v5051 = vld [vmem:[%s14] sm:$0xf]
      %v5052 = vld [vmem:[%s14 + $0x4] sm:$0xf]
      %v5053 = vld [vmem:[%s14 + $0x8] sm:$0xf]
      %v5054 = vld [vmem:[%s14 + $0xc] sm:$0xf]
      %v5055 = vld [vmem:[%s15] sm:$0x1]
      %v5056 = vpack.c.bf16 %v4988, %v4987
      %v5057 = vpack.c.bf16 %v4990, %v4989
      %v5058 = vpack.c.bf16 %v4992, %v4991
      %v5059 = vpack.c.bf16 %v4994, %v4993
      %v5060 = vpack.c.bf16 %v4996, %v4995
      %v5061 = vpack.c.bf16 %v4998, %v4997
      %v5062 = vpack.c.bf16 %v5000, %v4999
      %v5063 = vpack.c.bf16 %v5002, %v5001
      %v5064 = vpack.c.bf16 %v5004, %v5003
      %v5065 = vpack.c.bf16 %v5006, %v5005
      %v5066 = vpack.c.bf16 %v5008, %v5007
      %v5067 = vpack.c.bf16 %v5010, %v5009
      %v5068 = vpack.c.bf16 %v5012, %v5011
      %v5069 = vpack.c.bf16 %v5014, %v5013
      %v5070 = vpack.c.bf16 %v5016, %v5015
      %v5071 = vpack.c.bf16 %v5018, %v5017
      %v5072 = vpack.c.bf16 %v5020, %v5019
      %v5073 = vpack.c.bf16 %v5022, %v5021
      %v5074 = vpack.c.bf16 %v5024, %v5023
      %v5075 = vpack.c.bf16 %v5026, %v5025
      %v5076 = vpack.c.bf16 %v5028, %v5027
      %v5077 = vpack.c.bf16 %v5030, %v5029
      %v5078 = vpack.c.bf16 %v5032, %v5031
      %v5079 = vpack.c.bf16 %v5034, %v5033
      %v5080 = vpack.c.bf16 %v5036, %v5035
      %v5081 = vpack.c.bf16 %v5038, %v5037
      %v5082 = vpack.c.bf16 %v5040, %v5039
      %v5083 = vpack.c.bf16 %v5042, %v5041
      %v5084 = vpack.c.bf16 %v5044, %v5043
      %v5085 = vpack.c.bf16 %v5046, %v5045
      %v5086 = vpack.c.bf16 %v5048, %v5047
      %v5087 = vpack.c.bf16 %v5050, %v5049
      %v5089 = vlaneseq
      %v5090 = vshrl.u32 %v5089, 7
      %v5091 = vsub.s32 0, %v5090
      %v5092 = vrot.slane %v5055, %v5091
      %v5098 = vunpack.c.l.b16 %v5051
      %v5099 = vunpack.c.l.b16 %v5052
      %v5100 = vunpack.c.l.b16 %v5053
      %v5101 = vunpack.c.l.b16 %v5054
      %v5102 = vpack.c.b16 %v5099, %v5098
      %v5103 = vpack.c.b16 %v5101, %v5100
      %v5107 = vsel %vm2188, %v5056, 0
      %v5110 = vsel %vm2188, %v5057, 0
      %v5113 = vsel %vm2188, %v5058, 0
      %v5116 = vsel %vm2188, %v5059, 0
      %v5119 = vsel %vm2188, %v5060, 0
      %v5122 = vsel %vm2188, %v5061, 0
      %v5125 = vsel %vm2188, %v5062, 0
      %v5128 = vsel %vm2188, %v5063, 0
      %v5131 = vsel %vm2188, %v5064, 0
      %v5134 = vsel %vm2188, %v5065, 0
      %v5137 = vsel %vm2188, %v5066, 0
      %v5140 = vsel %vm2188, %v5067, 0
      %v5143 = vsel %vm2188, %v5068, 0
      %v5146 = vsel %vm2188, %v5069, 0
      %v5149 = vsel %vm2188, %v5070, 0
      %v5152 = vsel %vm2188, %v5071, 0
      %v5155 = vsel %vm2188, %v5072, 0
      %v5158 = vsel %vm2188, %v5073, 0
      %v5161 = vsel %vm2188, %v5074, 0
      %v5164 = vsel %vm2188, %v5075, 0
      %v5167 = vsel %vm2188, %v5076, 0
      %v5170 = vsel %vm2188, %v5077, 0
      %v5173 = vsel %vm2188, %v5078, 0
      %v5176 = vsel %vm2188, %v5079, 0
      %v5179 = vsel %vm2188, %v5080, 0
      %v5182 = vsel %vm2188, %v5081, 0
      %v5185 = vsel %vm2188, %v5082, 0
      %v5188 = vsel %vm2188, %v5083, 0
      %v5191 = vsel %vm2188, %v5084, 0
      %v5194 = vsel %vm2188, %v5085, 0
      %v5197 = vsel %vm2188, %v5086, 0
      %v5200 = vsel %vm2188, %v5087, 0
      %5202 = vmatprep.subr.bf16.mxu0 0
      %5203 = vmatpush1.bf16.msra.mxu0 %v5102
      %5204 = vmatprep.subr.bf16.mxu0 0
      %5205 = vmatpush1.bf16.msra.mxu0 %v5103
      %5206 = vmatprep.subr.bf16.mxu0 0
      %5207 = vmatpush1.bf16.msra.mxu0 0
      %5208 = vmatprep.subr.bf16.mxu0 0
      %5209 = vmatpush1.bf16.msra.mxu0 0
      %5210 = vmatprep.subr.bf16.mxu0 0
      %5211 = vmatpush1.bf16.msra.mxu0 0
      %5212 = vmatprep.subr.bf16.mxu0 0
      %5213 = vmatpush1.bf16.msra.mxu0 0
      %5214 = vmatprep.subr.bf16.mxu0 0
      %5215 = vmatpush1.bf16.msra.mxu0 0
      %5216 = vmatprep.subr.bf16.mxu0 0
      %5217 = vmatpush1.bf16.msra.mxu0 0
      %5218 = vmatprep.subr.bf16.mxu0 0
      %5219 = vmatpush1.bf16.msra.mxu0 0
      %5220 = vmatprep.subr.bf16.mxu0 0
      %5221 = vmatpush1.bf16.msra.mxu0 0
      %5222 = vmatprep.subr.bf16.mxu0 0
      %5223 = vmatpush1.bf16.msra.mxu0 0
      %5224 = vmatprep.subr.bf16.mxu0 0
      %5225 = vmatpush1.bf16.msra.mxu0 0
      %5226 = vmatprep.subr.bf16.mxu0 0
      %5227 = vmatpush1.bf16.msra.mxu0 0
      %5228 = vmatprep.subr.bf16.mxu0 0
      %5229 = vmatpush1.bf16.msra.mxu0 0
      %5230 = vmatprep.subr.bf16.mxu0 0
      %5231 = vmatpush1.bf16.msra.mxu0 0
      %5232 = vmatprep.subr.bf16.mxu0 0
      %5233 = vmatpush1.bf16.msra.mxu0 0
      %5234 = vmatprep.mubr.bf16.mxu0 0
      %5235 = vmatmul.mubr.bf16.gmra.mrb[0].mxu0 %v5107
      %v5236 = vpop.f32.mrb[0].mxu0
      %v5237 = vadd.f32 %v5092, %v5236
      %v5238 = vpop.f32.mrb[0].mxu0
      %v5239 = vpop.f32.mrb[0].mxu0
      %v5240 = vadd.f32 %v5092, %v5239
      %v5241 = vpop.f32.mrb[0].mxu0
      %5242 = vmatprep.mubr.bf16.mxu0 0
      %5243 = vmatmul.mubr.bf16.gmra.mrb[0].mxu0 %v5110
      %v5244 = vpop.f32.mrb[0].mxu0
      %v5245 = vadd.f32 %v5092, %v5244
      %v5246 = vpop.f32.mrb[0].mxu0
      %v5247 = vpop.f32.mrb[0].mxu0
      %v5248 = vadd.f32 %v5092, %v5247
      %v5249 = vpop.f32.mrb[0].mxu0
      %5250 = vmatprep.mubr.bf16.mxu0 0
      %5251 = vmatmul.mubr.bf16.gmra.mrb[0].mxu0 %v5113
      %v5252 = vpop.f32.mrb[0].mxu0
      %v5253 = vadd.f32 %v5092, %v5252
      %v5254 = vpop.f32.mrb[0].mxu0
      %v5255 = vpop.f32.mrb[0].mxu0
      %v5256 = vadd.f32 %v5092, %v5255
      %v5257 = vpop.f32.mrb[0].mxu0
      %5258 = vmatprep.mubr.bf16.mxu0 0
      %5259 = vmatmul.mubr.bf16.gmra.mrb[0].mxu0 %v5116
      %v5260 = vpop.f32.mrb[0].mxu0
      %v5261 = vadd.f32 %v5092, %v5260
      %v5262 = vpop.f32.mrb[0].mxu0
      %v5263 = vpop.f32.mrb[0].mxu0
      %v5264 = vadd.f32 %v5092, %v5263
      %v5265 = vpop.f32.mrb[0].mxu0
      %5266 = vmatprep.mubr.bf16.mxu0 0
      %5267 = vmatmul.mubr.bf16.gmra.mrb[0].mxu0 %v5119
      %v5268 = vpop.f32.mrb[0].mxu0
      %v5269 = vadd.f32 %v5092, %v5268
      %v5270 = vpop.f32.mrb[0].mxu0
      %v5271 = vpop.f32.mrb[0].mxu0
      %v5272 = vadd.f32 %v5092, %v5271
      %v5273 = vpop.f32.mrb[0].mxu0
      %5274 = vmatprep.mubr.bf16.mxu0 0
      %5275 = vmatmul.mubr.bf16.gmra.mrb[0].mxu0 %v5122
      %v5276 = vpop.f32.mrb[0].mxu0
      %v5277 = vadd.f32 %v5092, %v5276
      %v5278 = vpop.f32.mrb[0].mxu0
      %v5279 = vpop.f32.mrb[0].mxu0
      %v5280 = vadd.f32 %v5092, %v5279
      %v5281 = vpop.f32.mrb[0].mxu0
      %5282 = vmatprep.mubr.bf16.mxu0 0
      %5283 = vmatmul.mubr.bf16.gmra.mrb[0].mxu0 %v5125
      %v5284 = vpop.f32.mrb[0].mxu0
      %v5285 = vadd.f32 %v5092, %v5284
      %v5286 = vpop.f32.mrb[0].mxu0
      %v5287 = vpop.f32.mrb[0].mxu0
      %v5288 = vadd.f32 %v5092, %v5287
      %v5289 = vpop.f32.mrb[0].mxu0
      %5290 = vmatprep.mubr.bf16.mxu0 0
      %5291 = vmatmul.mubr.bf16.gmra.mrb[0].mxu0 %v5128
      %v5292 = vpop.f32.mrb[0].mxu0
      %v5293 = vadd.f32 %v5092, %v5292
      %v5294 = vpop.f32.mrb[0].mxu0
      %v5295 = vpop.f32.mrb[0].mxu0
      %v5296 = vadd.f32 %v5092, %v5295
      %v5297 = vpop.f32.mrb[0].mxu0
      %5298 = vmatprep.mubr.bf16.mxu0 0
      %5299 = vmatmul.mubr.bf16.gmra.mrb[0].mxu0 %v5131
      %v5300 = vpop.f32.mrb[0].mxu0
      %v5301 = vadd.f32 %v5092, %v5300
      %v5302 = vpop.f32.mrb[0].mxu0
      %v5303 = vpop.f32.mrb[0].mxu0
      %v5304 = vadd.f32 %v5092, %v5303
      %v5305 = vpop.f32.mrb[0].mxu0
      %5306 = vmatprep.mubr.bf16.mxu0 0
      %5307 = vmatmul.mubr.bf16.gmra.mrb[0].mxu0 %v5134
      %v5308 = vpop.f32.mrb[0].mxu0
      %v5309 = vadd.f32 %v5092, %v5308
      %v5310 = vpop.f32.mrb[0].mxu0
      %v5311 = vpop.f32.mrb[0].mxu0
      %v5312 = vadd.f32 %v5092, %v5311
      %v5313 = vpop.f32.mrb[0].mxu0
      %5314 = vmatprep.mubr.bf16.mxu0 0
      %5315 = vmatmul.mubr.bf16.gmra.mrb[0].mxu0 %v5137
      %v5316 = vpop.f32.mrb[0].mxu0
      %v5317 = vadd.f32 %v5092, %v5316
      %v5318 = vpop.f32.mrb[0].mxu0
      %v5319 = vpop.f32.mrb[0].mxu0
      %v5320 = vadd.f32 %v5092, %v5319
      %v5321 = vpop.f32.mrb[0].mxu0
      %5322 = vmatprep.mubr.bf16.mxu0 0
      %5323 = vmatmul.mubr.bf16.gmra.mrb[0].mxu0 %v5140
      %v5324 = vpop.f32.mrb[0].mxu0
      %v5325 = vadd.f32 %v5092, %v5324
      %v5326 = vpop.f32.mrb[0].mxu0
      %v5327 = vpop.f32.mrb[0].mxu0
      %v5328 = vadd.f32 %v5092, %v5327
      %v5329 = vpop.f32.mrb[0].mxu0
      %5330 = vmatprep.mubr.bf16.mxu0 0
      %5331 = vmatmul.mubr.bf16.gmra.mrb[0].mxu0 %v5143
      %v5332 = vpop.f32.mrb[0].mxu0
      %v5333 = vadd.f32 %v5092, %v5332
      %v5334 = vpop.f32.mrb[0].mxu0
      %v5335 = vpop.f32.mrb[0].mxu0
      %v5336 = vadd.f32 %v5092, %v5335
      %v5337 = vpop.f32.mrb[0].mxu0
      %5338 = vmatprep.mubr.bf16.mxu0 0
      %5339 = vmatmul.mubr.bf16.gmra.mrb[0].mxu0 %v5146
      %v5340 = vpop.f32.mrb[0].mxu0
      %v5341 = vadd.f32 %v5092, %v5340
      %v5342 = vpop.f32.mrb[0].mxu0
      %v5343 = vpop.f32.mrb[0].mxu0
      %v5344 = vadd.f32 %v5092, %v5343
      %v5345 = vpop.f32.mrb[0].mxu0
      %5346 = vmatprep.mubr.bf16.mxu0 0
      %5347 = vmatmul.mubr.bf16.gmra.mrb[0].mxu0 %v5149
      %v5348 = vpop.f32.mrb[0].mxu0
      %v5349 = vadd.f32 %v5092, %v5348
      %v5350 = vpop.f32.mrb[0].mxu0
      %v5351 = vpop.f32.mrb[0].mxu0
      %v5352 = vadd.f32 %v5092, %v5351
      %v5353 = vpop.f32.mrb[0].mxu0
      %5354 = vmatprep.mubr.bf16.mxu0 0
      %5355 = vmatmul.mubr.bf16.gmra.mrb[0].mxu0 %v5152
      %v5356 = vpop.f32.mrb[0].mxu0
      %v5357 = vadd.f32 %v5092, %v5356
      %v5358 = vpop.f32.mrb[0].mxu0
      %v5359 = vpop.f32.mrb[0].mxu0
      %v5360 = vadd.f32 %v5092, %v5359
      %v5361 = vpop.f32.mrb[0].mxu0
      %5362 = vmatprep.mubr.bf16.mxu0 0
      %5363 = vmatmul.mubr.bf16.gmra.mrb[0].mxu0 %v5155
      %v5364 = vpop.f32.mrb[0].mxu0
      %v5365 = vadd.f32 %v5092, %v5364
      %v5366 = vpop.f32.mrb[0].mxu0
      %v5367 = vpop.f32.mrb[0].mxu0
      %v5368 = vadd.f32 %v5092, %v5367
      %v5369 = vpop.f32.mrb[0].mxu0
      %5370 = vmatprep.mubr.bf16.mxu0 0
      %5371 = vmatmul.mubr.bf16.gmra.mrb[0].mxu0 %v5158
      %v5372 = vpop.f32.mrb[0].mxu0
      %v5373 = vadd.f32 %v5092, %v5372
      %v5374 = vpop.f32.mrb[0].mxu0
      %v5375 = vpop.f32.mrb[0].mxu0
      %v5376 = vadd.f32 %v5092, %v5375
      %v5377 = vpop.f32.mrb[0].mxu0
      %5378 = vmatprep.mubr.bf16.mxu0 0
      %5379 = vmatmul.mubr.bf16.gmra.mrb[0].mxu0 %v5161
      %v5380 = vpop.f32.mrb[0].mxu0
      %v5381 = vadd.f32 %v5092, %v5380
      %v5382 = vpop.f32.mrb[0].mxu0
      %v5383 = vpop.f32.mrb[0].mxu0
      %v5384 = vadd.f32 %v5092, %v5383
      %v5385 = vpop.f32.mrb[0].mxu0
      %5386 = vmatprep.mubr.bf16.mxu0 0
      %5387 = vmatmul.mubr.bf16.gmra.mrb[0].mxu0 %v5164
      %v5388 = vpop.f32.mrb[0].mxu0
      %v5389 = vadd.f32 %v5092, %v5388
      %v5390 = vpop.f32.mrb[0].mxu0
      %v5391 = vpop.f32.mrb[0].mxu0
      %v5392 = vadd.f32 %v5092, %v5391
      %v5393 = vpop.f32.mrb[0].mxu0
      %5394 = vmatprep.mubr.bf16.mxu0 0
      %5395 = vmatmul.mubr.bf16.gmra.mrb[0].mxu0 %v5167
      %v5396 = vpop.f32.mrb[0].mxu0
      %v5397 = vadd.f32 %v5092, %v5396
      %v5398 = vpop.f32.mrb[0].mxu0
      %v5399 = vpop.f32.mrb[0].mxu0
      %v5400 = vadd.f32 %v5092, %v5399
      %v5401 = vpop.f32.mrb[0].mxu0
      %5402 = vmatprep.mubr.bf16.mxu0 0
      %5403 = vmatmul.mubr.bf16.gmra.mrb[0].mxu0 %v5170
      %v5404 = vpop.f32.mrb[0].mxu0
      %v5405 = vadd.f32 %v5092, %v5404
      %v5406 = vpop.f32.mrb[0].mxu0
      %v5407 = vpop.f32.mrb[0].mxu0
      %v5408 = vadd.f32 %v5092, %v5407
      %v5409 = vpop.f32.mrb[0].mxu0
      %5410 = vmatprep.mubr.bf16.mxu0 0
      %5411 = vmatmul.mubr.bf16.gmra.mrb[0].mxu0 %v5173
      %v5412 = vpop.f32.mrb[0].mxu0
      %v5413 = vadd.f32 %v5092, %v5412
      %v5414 = vpop.f32.mrb[0].mxu0
      %v5415 = vpop.f32.mrb[0].mxu0
      %v5416 = vadd.f32 %v5092, %v5415
      %v5417 = vpop.f32.mrb[0].mxu0
      %5418 = vmatprep.mubr.bf16.mxu0 0
      %5419 = vmatmul.mubr.bf16.gmra.mrb[0].mxu0 %v5176
      %v5420 = vpop.f32.mrb[0].mxu0
      %v5421 = vadd.f32 %v5092, %v5420
      %v5422 = vpop.f32.mrb[0].mxu0
      %v5423 = vpop.f32.mrb[0].mxu0
      %v5424 = vadd.f32 %v5092, %v5423
      %v5425 = vpop.f32.mrb[0].mxu0
      %5426 = vmatprep.mubr.bf16.mxu0 0
      %5427 = vmatmul.mubr.bf16.gmra.mrb[0].mxu0 %v5179
      %v5428 = vpop.f32.mrb[0].mxu0
      %v5429 = vadd.f32 %v5092, %v5428
      %v5430 = vpop.f32.mrb[0].mxu0
      %v5431 = vpop.f32.mrb[0].mxu0
      %v5432 = vadd.f32 %v5092, %v5431
      %v5433 = vpop.f32.mrb[0].mxu0
      %5434 = vmatprep.mubr.bf16.mxu0 0
      %5435 = vmatmul.mubr.bf16.gmra.mrb[0].mxu0 %v5182
      %v5436 = vpop.f32.mrb[0].mxu0
      %v5437 = vadd.f32 %v5092, %v5436
      %v5438 = vpop.f32.mrb[0].mxu0
      %v5439 = vpop.f32.mrb[0].mxu0
      %v5440 = vadd.f32 %v5092, %v5439
      %v5441 = vpop.f32.mrb[0].mxu0
      %5442 = vmatprep.mubr.bf16.mxu0 0
      %5443 = vmatmul.mubr.bf16.gmra.mrb[0].mxu0 %v5185
      %v5444 = vpop.f32.mrb[0].mxu0
      %v5445 = vadd.f32 %v5092, %v5444
      %v5446 = vpop.f32.mrb[0].mxu0
      %v5447 = vpop.f32.mrb[0].mxu0
      %v5448 = vadd.f32 %v5092, %v5447
      %v5449 = vpop.f32.mrb[0].mxu0
      %5450 = vmatprep.mubr.bf16.mxu0 0
      %5451 = vmatmul.mubr.bf16.gmra.mrb[0].mxu0 %v5188
      %v5452 = vpop.f32.mrb[0].mxu0
      %v5453 = vadd.f32 %v5092, %v5452
      %v5454 = vpop.f32.mrb[0].mxu0
      %v5455 = vpop.f32.mrb[0].mxu0
      %v5456 = vadd.f32 %v5092, %v5455
      %v5457 = vpop.f32.mrb[0].mxu0
      %5458 = vmatprep.mubr.bf16.mxu0 0
      %5459 = vmatmul.mubr.bf16.gmra.mrb[0].mxu0 %v5191
      %v5460 = vpop.f32.mrb[0].mxu0
      %v5461 = vadd.f32 %v5092, %v5460
      %v5462 = vpop.f32.mrb[0].mxu0
      %v5463 = vpop.f32.mrb[0].mxu0
      %v5464 = vadd.f32 %v5092, %v5463
      %v5465 = vpop.f32.mrb[0].mxu0
      %5466 = vmatprep.mubr.bf16.mxu0 0
      %5467 = vmatmul.mubr.bf16.gmra.mrb[0].mxu0 %v5194
      %v5468 = vpop.f32.mrb[0].mxu0
      %v5469 = vadd.f32 %v5092, %v5468
      %v5470 = vpop.f32.mrb[0].mxu0
      %v5471 = vpop.f32.mrb[0].mxu0
      %v5472 = vadd.f32 %v5092, %v5471
      %v5473 = vpop.f32.mrb[0].mxu0
      %5474 = vmatprep.mubr.bf16.mxu0 0
      %5475 = vmatmul.mubr.bf16.gmra.mrb[0].mxu0 %v5197
      %v5476 = vpop.f32.mrb[0].mxu0
      %v5477 = vadd.f32 %v5092, %v5476
      %v5478 = vpop.f32.mrb[0].mxu0
      %v5479 = vpop.f32.mrb[0].mxu0
      %v5480 = vadd.f32 %v5092, %v5479
      %v5481 = vpop.f32.mrb[0].mxu0
      %5482 = vmatprep.mubr.bf16.mxu0 0
      %5483 = vmatmul.mubr.bf16.gmra.mrb[0].mxu0 %v5200
      %v5484 = vpop.f32.mrb[0].mxu0
      %v5485 = vadd.f32 %v5092, %v5484
      %v5486 = vpop.f32.mrb[0].mxu0
      %v5487 = vpop.f32.mrb[0].mxu0
      %v5488 = vadd.f32 %v5092, %v5487
      %v5489 = vpop.f32.mrb[0].mxu0
      %5490 = vdwg.mxu0
      %v5491 = vmax.f32 %v5237, 0.0
      %v5492 = vmax.f32 %v5240, 0.0
      %v5493 = vmax.f32 %v5245, 0.0
      %v5494 = vmax.f32 %v5248, 0.0
      %v5495 = vmax.f32 %v5253, 0.0
      %v5496 = vmax.f32 %v5256, 0.0
      %v5497 = vmax.f32 %v5261, 0.0
      %v5498 = vmax.f32 %v5264, 0.0
      %v5499 = vmax.f32 %v5269, 0.0
      %v5500 = vmax.f32 %v5272, 0.0
      %v5501 = vmax.f32 %v5277, 0.0
      %v5502 = vmax.f32 %v5280, 0.0
      %v5503 = vmax.f32 %v5285, 0.0
      %v5504 = vmax.f32 %v5288, 0.0
      %v5505 = vmax.f32 %v5293, 0.0
      %v5506 = vmax.f32 %v5296, 0.0
      %v5507 = vmax.f32 %v5301, 0.0
      %v5508 = vmax.f32 %v5304, 0.0
      %v5509 = vmax.f32 %v5309, 0.0
      %v5510 = vmax.f32 %v5312, 0.0
      %v5511 = vmax.f32 %v5317, 0.0
      %v5512 = vmax.f32 %v5320, 0.0
      %v5513 = vmax.f32 %v5325, 0.0
      %v5514 = vmax.f32 %v5328, 0.0
      %v5515 = vmax.f32 %v5333, 0.0
      %v5516 = vmax.f32 %v5336, 0.0
      %v5517 = vmax.f32 %v5341, 0.0
      %v5518 = vmax.f32 %v5344, 0.0
      %v5519 = vmax.f32 %v5349, 0.0
      %v5520 = vmax.f32 %v5352, 0.0
      %v5521 = vmax.f32 %v5357, 0.0
      %v5522 = vmax.f32 %v5360, 0.0
      %v5523 = vmax.f32 %v5365, 0.0
      %v5524 = vmax.f32 %v5368, 0.0
      %v5525 = vmax.f32 %v5373, 0.0
      %v5526 = vmax.f32 %v5376, 0.0
      %v5527 = vmax.f32 %v5381, 0.0
      %v5528 = vmax.f32 %v5384, 0.0
      %v5529 = vmax.f32 %v5389, 0.0
      %v5530 = vmax.f32 %v5392, 0.0
      %v5531 = vmax.f32 %v5397, 0.0
      %v5532 = vmax.f32 %v5400, 0.0
      %v5533 = vmax.f32 %v5405, 0.0
      %v5534 = vmax.f32 %v5408, 0.0
      %v5535 = vmax.f32 %v5413, 0.0
      %v5536 = vmax.f32 %v5416, 0.0
      %v5537 = vmax.f32 %v5421, 0.0
      %v5538 = vmax.f32 %v5424, 0.0
      %v5539 = vmax.f32 %v5429, 0.0
      %v5540 = vmax.f32 %v5432, 0.0
      %v5541 = vmax.f32 %v5437, 0.0
      %v5542 = vmax.f32 %v5440, 0.0
      %v5543 = vmax.f32 %v5445, 0.0
      %v5544 = vmax.f32 %v5448, 0.0
      %v5545 = vmax.f32 %v5453, 0.0
      %v5546 = vmax.f32 %v5456, 0.0
      %v5547 = vmax.f32 %v5461, 0.0
      %v5548 = vmax.f32 %v5464, 0.0
      %v5549 = vmax.f32 %v5469, 0.0
      %v5550 = vmax.f32 %v5472, 0.0
      %v5551 = vmax.f32 %v5477, 0.0
      %v5552 = vmax.f32 %v5480, 0.0
      %v5553 = vmax.f32 %v5485, 0.0
      %v5554 = vmax.f32 %v5488, 0.0
      %v5555 = vld [vmem:[%s16] sm:$0xf]
      %v5556 = vld [vmem:[%s16 + $0x4] sm:$0xf]
      %v5557 = vld [vmem:[%s16 + $0x8] sm:$0xf]
      %v5558 = vld [vmem:[%s16 + $0xc] sm:$0xf]
      %v5559 = vld [vmem:[%s17] sm:$0x1]
      %v5560 = vpack.c.bf16 %v5492, %v5491
      %v5561 = vpack.c.bf16 %v5494, %v5493
      %v5562 = vpack.c.bf16 %v5496, %v5495
      %v5563 = vpack.c.bf16 %v5498, %v5497
      %v5564 = vpack.c.bf16 %v5500, %v5499
      %v5565 = vpack.c.bf16 %v5502, %v5501
      %v5566 = vpack.c.bf16 %v5504, %v5503
      %v5567 = vpack.c.bf16 %v5506, %v5505
      %v5568 = vpack.c.bf16 %v5508, %v5507
      %v5569 = vpack.c.bf16 %v5510, %v5509
      %v5570 = vpack.c.bf16 %v5512, %v5511
      %v5571 = vpack.c.bf16 %v5514, %v5513
      %v5572 = vpack.c.bf16 %v5516, %v5515
      %v5573 = vpack.c.bf16 %v5518, %v5517
      %v5574 = vpack.c.bf16 %v5520, %v5519
      %v5575 = vpack.c.bf16 %v5522, %v5521
      %v5576 = vpack.c.bf16 %v5524, %v5523
      %v5577 = vpack.c.bf16 %v5526, %v5525
      %v5578 = vpack.c.bf16 %v5528, %v5527
      %v5579 = vpack.c.bf16 %v5530, %v5529
      %v5580 = vpack.c.bf16 %v5532, %v5531
      %v5581 = vpack.c.bf16 %v5534, %v5533
      %v5582 = vpack.c.bf16 %v5536, %v5535
      %v5583 = vpack.c.bf16 %v5538, %v5537
      %v5584 = vpack.c.bf16 %v5540, %v5539
      %v5585 = vpack.c.bf16 %v5542, %v5541
      %v5586 = vpack.c.bf16 %v5544, %v5543
      %v5587 = vpack.c.bf16 %v5546, %v5545
      %v5588 = vpack.c.bf16 %v5548, %v5547
      %v5589 = vpack.c.bf16 %v5550, %v5549
      %v5590 = vpack.c.bf16 %v5552, %v5551
      %v5591 = vpack.c.bf16 %v5554, %v5553
      %v5593 = vlaneseq
      %v5594 = vshrl.u32 %v5593, 7
      %v5595 = vsub.s32 0, %v5594
      %v5596 = vrot.slane %v5559, %v5595
      %v5602 = vunpack.c.l.b16 %v5555
      %v5603 = vunpack.c.l.b16 %v5556
      %v5604 = vunpack.c.l.b16 %v5557
      %v5605 = vunpack.c.l.b16 %v5558
      %v5606 = vpack.c.b16 %v5603, %v5602
      %v5607 = vpack.c.b16 %v5605, %v5604
      %v5611 = vsel %vm2188, %v5560, 0
      %v5614 = vsel %vm2188, %v5561, 0
      %v5617 = vsel %vm2188, %v5562, 0
      %v5620 = vsel %vm2188, %v5563, 0
      %v5623 = vsel %vm2188, %v5564, 0
      %v5626 = vsel %vm2188, %v5565, 0
      %v5629 = vsel %vm2188, %v5566, 0
      %v5632 = vsel %vm2188, %v5567, 0
      %v5635 = vsel %vm2188, %v5568, 0
      %v5638 = vsel %vm2188, %v5569, 0
      %v5641 = vsel %vm2188, %v5570, 0
      %v5644 = vsel %vm2188, %v5571, 0
      %v5647 = vsel %vm2188, %v5572, 0
      %v5650 = vsel %vm2188, %v5573, 0
      %v5653 = vsel %vm2188, %v5574, 0
      %v5656 = vsel %vm2188, %v5575, 0
      %v5659 = vsel %vm2188, %v5576, 0
      %v5662 = vsel %vm2188, %v5577, 0
      %v5665 = vsel %vm2188, %v5578, 0
      %v5668 = vsel %vm2188, %v5579, 0
      %v5671 = vsel %vm2188, %v5580, 0
      %v5674 = vsel %vm2188, %v5581, 0
      %v5677 = vsel %vm2188, %v5582, 0
      %v5680 = vsel %vm2188, %v5583, 0
      %v5683 = vsel %vm2188, %v5584, 0
      %v5686 = vsel %vm2188, %v5585, 0
      %v5689 = vsel %vm2188, %v5586, 0
      %v5692 = vsel %vm2188, %v5587, 0
      %v5695 = vsel %vm2188, %v5588, 0
      %v5698 = vsel %vm2188, %v5589, 0
      %v5701 = vsel %vm2188, %v5590, 0
      %v5704 = vsel %vm2188, %v5591, 0
      %5706 = vmatprep.subr.bf16.mxu0 0
      %5707 = vmatpush1.bf16.msra.mxu0 %v5606
      %5708 = vmatprep.subr.bf16.mxu0 0
      %5709 = vmatpush1.bf16.msra.mxu0 %v5607
      %5710 = vmatprep.subr.bf16.mxu0 0
      %5711 = vmatpush1.bf16.msra.mxu0 0
      %5712 = vmatprep.subr.bf16.mxu0 0
      %5713 = vmatpush1.bf16.msra.mxu0 0
      %5714 = vmatprep.subr.bf16.mxu0 0
      %5715 = vmatpush1.bf16.msra.mxu0 0
      %5716 = vmatprep.subr.bf16.mxu0 0
      %5717 = vmatpush1.bf16.msra.mxu0 0
      %5718 = vmatprep.subr.bf16.mxu0 0
      %5719 = vmatpush1.bf16.msra.mxu0 0
      %5720 = vmatprep.subr.bf16.mxu0 0
      %5721 = vmatpush1.bf16.msra.mxu0 0
      %5722 = vmatprep.subr.bf16.mxu0 0
      %5723 = vmatpush1.bf16.msra.mxu0 0
      %5724 = vmatprep.subr.bf16.mxu0 0
      %5725 = vmatpush1.bf16.msra.mxu0 0
      %5726 = vmatprep.subr.bf16.mxu0 0
      %5727 = vmatpush1.bf16.msra.mxu0 0
      %5728 = vmatprep.subr.bf16.mxu0 0
      %5729 = vmatpush1.bf16.msra.mxu0 0
      %5730 = vmatprep.subr.bf16.mxu0 0
      %5731 = vmatpush1.bf16.msra.mxu0 0
      %5732 = vmatprep.subr.bf16.mxu0 0
      %5733 = vmatpush1.bf16.msra.mxu0 0
      %5734 = vmatprep.subr.bf16.mxu0 0
      %5735 = vmatpush1.bf16.msra.mxu0 0
      %5736 = vmatprep.subr.bf16.mxu0 0
      %5737 = vmatpush1.bf16.msra.mxu0 0
      %5738 = vmatprep.mubr.bf16.mxu0 0
      %5739 = vmatmul.mubr.bf16.gmra.mrb[0].mxu0 %v5611
      %v5740 = vpop.f32.mrb[0].mxu0
      %v5741 = vadd.f32 %v5596, %v5740
      %v5742 = vpop.f32.mrb[0].mxu0
      %v5743 = vpop.f32.mrb[0].mxu0
      %v5744 = vadd.f32 %v5596, %v5743
      %v5745 = vpop.f32.mrb[0].mxu0
      %5746 = vmatprep.mubr.bf16.mxu0 0
      %5747 = vmatmul.mubr.bf16.gmra.mrb[0].mxu0 %v5614
      %v5748 = vpop.f32.mrb[0].mxu0
      %v5749 = vadd.f32 %v5596, %v5748
      %v5750 = vpop.f32.mrb[0].mxu0
      %v5751 = vpop.f32.mrb[0].mxu0
      %v5752 = vadd.f32 %v5596, %v5751
      %v5753 = vpop.f32.mrb[0].mxu0
      %5754 = vmatprep.mubr.bf16.mxu0 0
      %5755 = vmatmul.mubr.bf16.gmra.mrb[0].mxu0 %v5617
      %v5756 = vpop.f32.mrb[0].mxu0
      %v5757 = vadd.f32 %v5596, %v5756
      %v5758 = vpop.f32.mrb[0].mxu0
      %v5759 = vpop.f32.mrb[0].mxu0
      %v5760 = vadd.f32 %v5596, %v5759
      %v5761 = vpop.f32.mrb[0].mxu0
      %5762 = vmatprep.mubr.bf16.mxu0 0
      %5763 = vmatmul.mubr.bf16.gmra.mrb[0].mxu0 %v5620
      %v5764 = vpop.f32.mrb[0].mxu0
      %v5765 = vadd.f32 %v5596, %v5764
      %v5766 = vpop.f32.mrb[0].mxu0
      %v5767 = vpop.f32.mrb[0].mxu0
      %v5768 = vadd.f32 %v5596, %v5767
      %v5769 = vpop.f32.mrb[0].mxu0
      %5770 = vmatprep.mubr.bf16.mxu0 0
      %5771 = vmatmul.mubr.bf16.gmra.mrb[0].mxu0 %v5623
      %v5772 = vpop.f32.mrb[0].mxu0
      %v5773 = vadd.f32 %v5596, %v5772
      %v5774 = vpop.f32.mrb[0].mxu0
      %v5775 = vpop.f32.mrb[0].mxu0
      %v5776 = vadd.f32 %v5596, %v5775
      %v5777 = vpop.f32.mrb[0].mxu0
      %5778 = vmatprep.mubr.bf16.mxu0 0
      %5779 = vmatmul.mubr.bf16.gmra.mrb[0].mxu0 %v5626
      %v5780 = vpop.f32.mrb[0].mxu0
      %v5781 = vadd.f32 %v5596, %v5780
      %v5782 = vpop.f32.mrb[0].mxu0
      %v5783 = vpop.f32.mrb[0].mxu0
      %v5784 = vadd.f32 %v5596, %v5783
      %v5785 = vpop.f32.mrb[0].mxu0
      %5786 = vmatprep.mubr.bf16.mxu0 0
      %5787 = vmatmul.mubr.bf16.gmra.mrb[0].mxu0 %v5629
      %v5788 = vpop.f32.mrb[0].mxu0
      %v5789 = vadd.f32 %v5596, %v5788
      %v5790 = vpop.f32.mrb[0].mxu0
      %v5791 = vpop.f32.mrb[0].mxu0
      %v5792 = vadd.f32 %v5596, %v5791
      %v5793 = vpop.f32.mrb[0].mxu0
      %5794 = vmatprep.mubr.bf16.mxu0 0
      %5795 = vmatmul.mubr.bf16.gmra.mrb[0].mxu0 %v5632
      %v5796 = vpop.f32.mrb[0].mxu0
      %v5797 = vadd.f32 %v5596, %v5796
      %v5798 = vpop.f32.mrb[0].mxu0
      %v5799 = vpop.f32.mrb[0].mxu0
      %v5800 = vadd.f32 %v5596, %v5799
      %v5801 = vpop.f32.mrb[0].mxu0
      %5802 = vmatprep.mubr.bf16.mxu0 0
      %5803 = vmatmul.mubr.bf16.gmra.mrb[0].mxu0 %v5635
      %v5804 = vpop.f32.mrb[0].mxu0
      %v5805 = vadd.f32 %v5596, %v5804
      %v5806 = vpop.f32.mrb[0].mxu0
      %v5807 = vpop.f32.mrb[0].mxu0
      %v5808 = vadd.f32 %v5596, %v5807
      %v5809 = vpop.f32.mrb[0].mxu0
      %5810 = vmatprep.mubr.bf16.mxu0 0
      %5811 = vmatmul.mubr.bf16.gmra.mrb[0].mxu0 %v5638
      %v5812 = vpop.f32.mrb[0].mxu0
      %v5813 = vadd.f32 %v5596, %v5812
      %v5814 = vpop.f32.mrb[0].mxu0
      %v5815 = vpop.f32.mrb[0].mxu0
      %v5816 = vadd.f32 %v5596, %v5815
      %v5817 = vpop.f32.mrb[0].mxu0
      %5818 = vmatprep.mubr.bf16.mxu0 0
      %5819 = vmatmul.mubr.bf16.gmra.mrb[0].mxu0 %v5641
      %v5820 = vpop.f32.mrb[0].mxu0
      %v5821 = vadd.f32 %v5596, %v5820
      %v5822 = vpop.f32.mrb[0].mxu0
      %v5823 = vpop.f32.mrb[0].mxu0
      %v5824 = vadd.f32 %v5596, %v5823
      %v5825 = vpop.f32.mrb[0].mxu0
      %5826 = vmatprep.mubr.bf16.mxu0 0
      %5827 = vmatmul.mubr.bf16.gmra.mrb[0].mxu0 %v5644
      %v5828 = vpop.f32.mrb[0].mxu0
      %v5829 = vadd.f32 %v5596, %v5828
      %v5830 = vpop.f32.mrb[0].mxu0
      %v5831 = vpop.f32.mrb[0].mxu0
      %v5832 = vadd.f32 %v5596, %v5831
      %v5833 = vpop.f32.mrb[0].mxu0
      %5834 = vmatprep.mubr.bf16.mxu0 0
      %5835 = vmatmul.mubr.bf16.gmra.mrb[0].mxu0 %v5647
      %v5836 = vpop.f32.mrb[0].mxu0
      %v5837 = vadd.f32 %v5596, %v5836
      %v5838 = vpop.f32.mrb[0].mxu0
      %v5839 = vpop.f32.mrb[0].mxu0
      %v5840 = vadd.f32 %v5596, %v5839
      %v5841 = vpop.f32.mrb[0].mxu0
      %5842 = vmatprep.mubr.bf16.mxu0 0
      %5843 = vmatmul.mubr.bf16.gmra.mrb[0].mxu0 %v5650
      %v5844 = vpop.f32.mrb[0].mxu0
      %v5845 = vadd.f32 %v5596, %v5844
      %v5846 = vpop.f32.mrb[0].mxu0
      %v5847 = vpop.f32.mrb[0].mxu0
      %v5848 = vadd.f32 %v5596, %v5847
      %v5849 = vpop.f32.mrb[0].mxu0
      %5850 = vmatprep.mubr.bf16.mxu0 0
      %5851 = vmatmul.mubr.bf16.gmra.mrb[0].mxu0 %v5653
      %v5852 = vpop.f32.mrb[0].mxu0
      %v5853 = vadd.f32 %v5596, %v5852
      %v5854 = vpop.f32.mrb[0].mxu0
      %v5855 = vpop.f32.mrb[0].mxu0
      %v5856 = vadd.f32 %v5596, %v5855
      %v5857 = vpop.f32.mrb[0].mxu0
      %5858 = vmatprep.mubr.bf16.mxu0 0
      %5859 = vmatmul.mubr.bf16.gmra.mrb[0].mxu0 %v5656
      %v5860 = vpop.f32.mrb[0].mxu0
      %v5861 = vadd.f32 %v5596, %v5860
      %v5862 = vpop.f32.mrb[0].mxu0
      %v5863 = vpop.f32.mrb[0].mxu0
      %v5864 = vadd.f32 %v5596, %v5863
      %v5865 = vpop.f32.mrb[0].mxu0
      %5866 = vmatprep.mubr.bf16.mxu0 0
      %5867 = vmatmul.mubr.bf16.gmra.mrb[0].mxu0 %v5659
      %v5868 = vpop.f32.mrb[0].mxu0
      %v5869 = vadd.f32 %v5596, %v5868
      %v5870 = vpop.f32.mrb[0].mxu0
      %v5871 = vpop.f32.mrb[0].mxu0
      %v5872 = vadd.f32 %v5596, %v5871
      %v5873 = vpop.f32.mrb[0].mxu0
      %5874 = vmatprep.mubr.bf16.mxu0 0
      %5875 = vmatmul.mubr.bf16.gmra.mrb[0].mxu0 %v5662
      %v5876 = vpop.f32.mrb[0].mxu0
      %v5877 = vadd.f32 %v5596, %v5876
      %v5878 = vpop.f32.mrb[0].mxu0
      %v5879 = vpop.f32.mrb[0].mxu0
      %v5880 = vadd.f32 %v5596, %v5879
      %v5881 = vpop.f32.mrb[0].mxu0
      %5882 = vmatprep.mubr.bf16.mxu0 0
      %5883 = vmatmul.mubr.bf16.gmra.mrb[0].mxu0 %v5665
      %v5884 = vpop.f32.mrb[0].mxu0
      %v5885 = vadd.f32 %v5596, %v5884
      %v5886 = vpop.f32.mrb[0].mxu0
      %v5887 = vpop.f32.mrb[0].mxu0
      %v5888 = vadd.f32 %v5596, %v5887
      %v5889 = vpop.f32.mrb[0].mxu0
      %5890 = vmatprep.mubr.bf16.mxu0 0
      %5891 = vmatmul.mubr.bf16.gmra.mrb[0].mxu0 %v5668
      %v5892 = vpop.f32.mrb[0].mxu0
      %v5893 = vadd.f32 %v5596, %v5892
      %v5894 = vpop.f32.mrb[0].mxu0
      %v5895 = vpop.f32.mrb[0].mxu0
      %v5896 = vadd.f32 %v5596, %v5895
      %v5897 = vpop.f32.mrb[0].mxu0
      %5898 = vmatprep.mubr.bf16.mxu0 0
      %5899 = vmatmul.mubr.bf16.gmra.mrb[0].mxu0 %v5671
      %v5900 = vpop.f32.mrb[0].mxu0
      %v5901 = vadd.f32 %v5596, %v5900
      %v5902 = vpop.f32.mrb[0].mxu0
      %v5903 = vpop.f32.mrb[0].mxu0
      %v5904 = vadd.f32 %v5596, %v5903
      %v5905 = vpop.f32.mrb[0].mxu0
      %5906 = vmatprep.mubr.bf16.mxu0 0
      %5907 = vmatmul.mubr.bf16.gmra.mrb[0].mxu0 %v5674
      %v5908 = vpop.f32.mrb[0].mxu0
      %v5909 = vadd.f32 %v5596, %v5908
      %v5910 = vpop.f32.mrb[0].mxu0
      %v5911 = vpop.f32.mrb[0].mxu0
      %v5912 = vadd.f32 %v5596, %v5911
      %v5913 = vpop.f32.mrb[0].mxu0
      %5914 = vmatprep.mubr.bf16.mxu0 0
      %5915 = vmatmul.mubr.bf16.gmra.mrb[0].mxu0 %v5677
      %v5916 = vpop.f32.mrb[0].mxu0
      %v5917 = vadd.f32 %v5596, %v5916
      %v5918 = vpop.f32.mrb[0].mxu0
      %v5919 = vpop.f32.mrb[0].mxu0
      %v5920 = vadd.f32 %v5596, %v5919
      %v5921 = vpop.f32.mrb[0].mxu0
      %5922 = vmatprep.mubr.bf16.mxu0 0
      %5923 = vmatmul.mubr.bf16.gmra.mrb[0].mxu0 %v5680
      %v5924 = vpop.f32.mrb[0].mxu0
      %v5925 = vadd.f32 %v5596, %v5924
      %v5926 = vpop.f32.mrb[0].mxu0
      %v5927 = vpop.f32.mrb[0].mxu0
      %v5928 = vadd.f32 %v5596, %v5927
      %v5929 = vpop.f32.mrb[0].mxu0
      %5930 = vmatprep.mubr.bf16.mxu0 0
      %5931 = vmatmul.mubr.bf16.gmra.mrb[0].mxu0 %v5683
      %v5932 = vpop.f32.mrb[0].mxu0
      %v5933 = vadd.f32 %v5596, %v5932
      %v5934 = vpop.f32.mrb[0].mxu0
      %v5935 = vpop.f32.mrb[0].mxu0
      %v5936 = vadd.f32 %v5596, %v5935
      %v5937 = vpop.f32.mrb[0].mxu0
      %5938 = vmatprep.mubr.bf16.mxu0 0
      %5939 = vmatmul.mubr.bf16.gmra.mrb[0].mxu0 %v5686
      %v5940 = vpop.f32.mrb[0].mxu0
      %v5941 = vadd.f32 %v5596, %v5940
      %v5942 = vpop.f32.mrb[0].mxu0
      %v5943 = vpop.f32.mrb[0].mxu0
      %v5944 = vadd.f32 %v5596, %v5943
      %v5945 = vpop.f32.mrb[0].mxu0
      %5946 = vmatprep.mubr.bf16.mxu0 0
      %5947 = vmatmul.mubr.bf16.gmra.mrb[0].mxu0 %v5689
      %v5948 = vpop.f32.mrb[0].mxu0
      %v5949 = vadd.f32 %v5596, %v5948
      %v5950 = vpop.f32.mrb[0].mxu0
      %v5951 = vpop.f32.mrb[0].mxu0
      %v5952 = vadd.f32 %v5596, %v5951
      %v5953 = vpop.f32.mrb[0].mxu0
      %5954 = vmatprep.mubr.bf16.mxu0 0
      %5955 = vmatmul.mubr.bf16.gmra.mrb[0].mxu0 %v5692
      %v5956 = vpop.f32.mrb[0].mxu0
      %v5957 = vadd.f32 %v5596, %v5956
      %v5958 = vpop.f32.mrb[0].mxu0
      %v5959 = vpop.f32.mrb[0].mxu0
      %v5960 = vadd.f32 %v5596, %v5959
      %v5961 = vpop.f32.mrb[0].mxu0
      %5962 = vmatprep.mubr.bf16.mxu0 0
      %5963 = vmatmul.mubr.bf16.gmra.mrb[0].mxu0 %v5695
      %v5964 = vpop.f32.mrb[0].mxu0
      %v5965 = vadd.f32 %v5596, %v5964
      %v5966 = vpop.f32.mrb[0].mxu0
      %v5967 = vpop.f32.mrb[0].mxu0
      %v5968 = vadd.f32 %v5596, %v5967
      %v5969 = vpop.f32.mrb[0].mxu0
      %5970 = vmatprep.mubr.bf16.mxu0 0
      %5971 = vmatmul.mubr.bf16.gmra.mrb[0].mxu0 %v5698
      %v5972 = vpop.f32.mrb[0].mxu0
      %v5973 = vadd.f32 %v5596, %v5972
      %v5974 = vpop.f32.mrb[0].mxu0
      %v5975 = vpop.f32.mrb[0].mxu0
      %v5976 = vadd.f32 %v5596, %v5975
      %v5977 = vpop.f32.mrb[0].mxu0
      %5978 = vmatprep.mubr.bf16.mxu0 0
      %5979 = vmatmul.mubr.bf16.gmra.mrb[0].mxu0 %v5701
      %v5980 = vpop.f32.mrb[0].mxu0
      %v5981 = vadd.f32 %v5596, %v5980
      %v5982 = vpop.f32.mrb[0].mxu0
      %v5983 = vpop.f32.mrb[0].mxu0
      %v5984 = vadd.f32 %v5596, %v5983
      %v5985 = vpop.f32.mrb[0].mxu0
      %5986 = vmatprep.mubr.bf16.mxu0 0
      %5987 = vmatmul.mubr.bf16.gmra.mrb[0].mxu0 %v5704
      %v5988 = vpop.f32.mrb[0].mxu0
      %v5989 = vadd.f32 %v5596, %v5988
      %v5990 = vpop.f32.mrb[0].mxu0
      %v5991 = vpop.f32.mrb[0].mxu0
      %v5992 = vadd.f32 %v5596, %v5991
      %v5993 = vpop.f32.mrb[0].mxu0
      %5994 = vdwg.mxu0
      %v5995 = vmax.f32 %v5741, 0.0
      %v5996 = vmax.f32 %v5744, 0.0
      %v5997 = vmax.f32 %v5749, 0.0
      %v5998 = vmax.f32 %v5752, 0.0
      %v5999 = vmax.f32 %v5757, 0.0
      %v6000 = vmax.f32 %v5760, 0.0
      %v6001 = vmax.f32 %v5765, 0.0
      %v6002 = vmax.f32 %v5768, 0.0
      %v6003 = vmax.f32 %v5773, 0.0
      %v6004 = vmax.f32 %v5776, 0.0
      %v6005 = vmax.f32 %v5781, 0.0
      %v6006 = vmax.f32 %v5784, 0.0
      %v6007 = vmax.f32 %v5789, 0.0
      %v6008 = vmax.f32 %v5792, 0.0
      %v6009 = vmax.f32 %v5797, 0.0
      %v6010 = vmax.f32 %v5800, 0.0
      %v6011 = vmax.f32 %v5805, 0.0
      %v6012 = vmax.f32 %v5808, 0.0
      %v6013 = vmax.f32 %v5813, 0.0
      %v6014 = vmax.f32 %v5816, 0.0
      %v6015 = vmax.f32 %v5821, 0.0
      %v6016 = vmax.f32 %v5824, 0.0
      %v6017 = vmax.f32 %v5829, 0.0
      %v6018 = vmax.f32 %v5832, 0.0
      %v6019 = vmax.f32 %v5837, 0.0
      %v6020 = vmax.f32 %v5840, 0.0
      %v6021 = vmax.f32 %v5845, 0.0
      %v6022 = vmax.f32 %v5848, 0.0
      %v6023 = vmax.f32 %v5853, 0.0
      %v6024 = vmax.f32 %v5856, 0.0
      %v6025 = vmax.f32 %v5861, 0.0
      %v6026 = vmax.f32 %v5864, 0.0
      %v6027 = vmax.f32 %v5869, 0.0
      %v6028 = vmax.f32 %v5872, 0.0
      %v6029 = vmax.f32 %v5877, 0.0
      %v6030 = vmax.f32 %v5880, 0.0
      %v6031 = vmax.f32 %v5885, 0.0
      %v6032 = vmax.f32 %v5888, 0.0
      %v6033 = vmax.f32 %v5893, 0.0
      %v6034 = vmax.f32 %v5896, 0.0
      %v6035 = vmax.f32 %v5901, 0.0
      %v6036 = vmax.f32 %v5904, 0.0
      %v6037 = vmax.f32 %v5909, 0.0
      %v6038 = vmax.f32 %v5912, 0.0
      %v6039 = vmax.f32 %v5917, 0.0
      %v6040 = vmax.f32 %v5920, 0.0
      %v6041 = vmax.f32 %v5925, 0.0
      %v6042 = vmax.f32 %v5928, 0.0
      %v6043 = vmax.f32 %v5933, 0.0
      %v6044 = vmax.f32 %v5936, 0.0
      %v6045 = vmax.f32 %v5941, 0.0
      %v6046 = vmax.f32 %v5944, 0.0
      %v6047 = vmax.f32 %v5949, 0.0
      %v6048 = vmax.f32 %v5952, 0.0
      %v6049 = vmax.f32 %v5957, 0.0
      %v6050 = vmax.f32 %v5960, 0.0
      %v6051 = vmax.f32 %v5965, 0.0
      %v6052 = vmax.f32 %v5968, 0.0
      %v6053 = vmax.f32 %v5973, 0.0
      %v6054 = vmax.f32 %v5976, 0.0
      %v6055 = vmax.f32 %v5981, 0.0
      %v6056 = vmax.f32 %v5984, 0.0
      %v6057 = vmax.f32 %v5989, 0.0
      %v6058 = vmax.f32 %v5992, 0.0
      %v6059 = vld [vmem:[%s18] sm:$0xf]
      %v6060 = vld [vmem:[%s18 + $0x4] sm:$0xf]
      %v6061 = vld [vmem:[%s18 + $0x8] sm:$0xf]
      %v6062 = vld [vmem:[%s18 + $0xc] sm:$0xf]
      %v6063 = vld [vmem:[%s19] sm:$0x1]
      %v6064 = vpack.c.bf16 %v5996, %v5995
      %v6065 = vpack.c.bf16 %v5998, %v5997
      %v6066 = vpack.c.bf16 %v6000, %v5999
      %v6067 = vpack.c.bf16 %v6002, %v6001
      %v6068 = vpack.c.bf16 %v6004, %v6003
      %v6069 = vpack.c.bf16 %v6006, %v6005
      %v6070 = vpack.c.bf16 %v6008, %v6007
      %v6071 = vpack.c.bf16 %v6010, %v6009
      %v6072 = vpack.c.bf16 %v6012, %v6011
      %v6073 = vpack.c.bf16 %v6014, %v6013
      %v6074 = vpack.c.bf16 %v6016, %v6015
      %v6075 = vpack.c.bf16 %v6018, %v6017
      %v6076 = vpack.c.bf16 %v6020, %v6019
      %v6077 = vpack.c.bf16 %v6022, %v6021
      %v6078 = vpack.c.bf16 %v6024, %v6023
      %v6079 = vpack.c.bf16 %v6026, %v6025
      %v6080 = vpack.c.bf16 %v6028, %v6027
      %v6081 = vpack.c.bf16 %v6030, %v6029
      %v6082 = vpack.c.bf16 %v6032, %v6031
      %v6083 = vpack.c.bf16 %v6034, %v6033
      %v6084 = vpack.c.bf16 %v6036, %v6035
      %v6085 = vpack.c.bf16 %v6038, %v6037
      %v6086 = vpack.c.bf16 %v6040, %v6039
      %v6087 = vpack.c.bf16 %v6042, %v6041
      %v6088 = vpack.c.bf16 %v6044, %v6043
      %v6089 = vpack.c.bf16 %v6046, %v6045
      %v6090 = vpack.c.bf16 %v6048, %v6047
      %v6091 = vpack.c.bf16 %v6050, %v6049
      %v6092 = vpack.c.bf16 %v6052, %v6051
      %v6093 = vpack.c.bf16 %v6054, %v6053
      %v6094 = vpack.c.bf16 %v6056, %v6055
      %v6095 = vpack.c.bf16 %v6058, %v6057
      %v6097 = vlaneseq
      %v6098 = vshrl.u32 %v6097, 7
      %v6099 = vsub.s32 0, %v6098
      %v6100 = vrot.slane %v6063, %v6099
      %v6106 = vunpack.c.l.b16 %v6059
      %v6107 = vunpack.c.l.b16 %v6060
      %v6108 = vunpack.c.l.b16 %v6061
      %v6109 = vunpack.c.l.b16 %v6062
      %v6110 = vpack.c.b16 %v6107, %v6106
      %v6111 = vpack.c.b16 %v6109, %v6108
      %v6115 = vsel %vm2188, %v6064, 0
      %v6118 = vsel %vm2188, %v6065, 0
      %v6121 = vsel %vm2188, %v6066, 0
      %v6124 = vsel %vm2188, %v6067, 0
      %v6127 = vsel %vm2188, %v6068, 0
      %v6130 = vsel %vm2188, %v6069, 0
      %v6133 = vsel %vm2188, %v6070, 0
      %v6136 = vsel %vm2188, %v6071, 0
      %v6139 = vsel %vm2188, %v6072, 0
      %v6142 = vsel %vm2188, %v6073, 0
      %v6145 = vsel %vm2188, %v6074, 0
      %v6148 = vsel %vm2188, %v6075, 0
      %v6151 = vsel %vm2188, %v6076, 0
      %v6154 = vsel %vm2188, %v6077, 0
      %v6157 = vsel %vm2188, %v6078, 0
      %v6160 = vsel %vm2188, %v6079, 0
      %v6163 = vsel %vm2188, %v6080, 0
      %v6166 = vsel %vm2188, %v6081, 0
      %v6169 = vsel %vm2188, %v6082, 0
      %v6172 = vsel %vm2188, %v6083, 0
      %v6175 = vsel %vm2188, %v6084, 0
      %v6178 = vsel %vm2188, %v6085, 0
      %v6181 = vsel %vm2188, %v6086, 0
      %v6184 = vsel %vm2188, %v6087, 0
      %v6187 = vsel %vm2188, %v6088, 0
      %v6190 = vsel %vm2188, %v6089, 0
      %v6193 = vsel %vm2188, %v6090, 0
      %v6196 = vsel %vm2188, %v6091, 0
      %v6199 = vsel %vm2188, %v6092, 0
      %v6202 = vsel %vm2188, %v6093, 0
      %v6205 = vsel %vm2188, %v6094, 0
      %v6208 = vsel %vm2188, %v6095, 0
      %6210 = vmatprep.subr.bf16.mxu0 0
      %6211 = vmatpush1.bf16.msra.mxu0 %v6110
      %6212 = vmatprep.subr.bf16.mxu0 0
      %6213 = vmatpush1.bf16.msra.mxu0 %v6111
      %6214 = vmatprep.subr.bf16.mxu0 0
      %6215 = vmatpush1.bf16.msra.mxu0 0
      %6216 = vmatprep.subr.bf16.mxu0 0
      %6217 = vmatpush1.bf16.msra.mxu0 0
      %6218 = vmatprep.subr.bf16.mxu0 0
      %6219 = vmatpush1.bf16.msra.mxu0 0
      %6220 = vmatprep.subr.bf16.mxu0 0
      %6221 = vmatpush1.bf16.msra.mxu0 0
      %6222 = vmatprep.subr.bf16.mxu0 0
      %6223 = vmatpush1.bf16.msra.mxu0 0
      %6224 = vmatprep.subr.bf16.mxu0 0
      %6225 = vmatpush1.bf16.msra.mxu0 0
      %6226 = vmatprep.subr.bf16.mxu0 0
      %6227 = vmatpush1.bf16.msra.mxu0 0
      %6228 = vmatprep.subr.bf16.mxu0 0
      %6229 = vmatpush1.bf16.msra.mxu0 0
      %6230 = vmatprep.subr.bf16.mxu0 0
      %6231 = vmatpush1.bf16.msra.mxu0 0
      %6232 = vmatprep.subr.bf16.mxu0 0
      %6233 = vmatpush1.bf16.msra.mxu0 0
      %6234 = vmatprep.subr.bf16.mxu0 0
      %6235 = vmatpush1.bf16.msra.mxu0 0
      %6236 = vmatprep.subr.bf16.mxu0 0
      %6237 = vmatpush1.bf16.msra.mxu0 0
      %6238 = vmatprep.subr.bf16.mxu0 0
      %6239 = vmatpush1.bf16.msra.mxu0 0
      %6240 = vmatprep.subr.bf16.mxu0 0
      %6241 = vmatpush1.bf16.msra.mxu0 0
      %6242 = vmatprep.mubr.bf16.mxu0 0
      %6243 = vmatmul.mubr.bf16.gmra.mrb[0].mxu0 %v6115
      %v6244 = vpop.f32.mrb[0].mxu0
      %v6245 = vadd.f32 %v6100, %v6244
      %v6246 = vpop.f32.mrb[0].mxu0
      %v6247 = vpop.f32.mrb[0].mxu0
      %v6248 = vadd.f32 %v6100, %v6247
      %v6249 = vpop.f32.mrb[0].mxu0
      %6250 = vmatprep.mubr.bf16.mxu0 0
      %6251 = vmatmul.mubr.bf16.gmra.mrb[0].mxu0 %v6118
      %v6252 = vpop.f32.mrb[0].mxu0
      %v6253 = vadd.f32 %v6100, %v6252
      %v6254 = vpop.f32.mrb[0].mxu0
      %v6255 = vpop.f32.mrb[0].mxu0
      %v6256 = vadd.f32 %v6100, %v6255
      %v6257 = vpop.f32.mrb[0].mxu0
      %6258 = vmatprep.mubr.bf16.mxu0 0
      %6259 = vmatmul.mubr.bf16.gmra.mrb[0].mxu0 %v6121
      %v6260 = vpop.f32.mrb[0].mxu0
      %v6261 = vadd.f32 %v6100, %v6260
      %v6262 = vpop.f32.mrb[0].mxu0
      %v6263 = vpop.f32.mrb[0].mxu0
      %v6264 = vadd.f32 %v6100, %v6263
      %v6265 = vpop.f32.mrb[0].mxu0
      %6266 = vmatprep.mubr.bf16.mxu0 0
      %6267 = vmatmul.mubr.bf16.gmra.mrb[0].mxu0 %v6124
      %v6268 = vpop.f32.mrb[0].mxu0
      %v6269 = vadd.f32 %v6100, %v6268
      %v6270 = vpop.f32.mrb[0].mxu0
      %v6271 = vpop.f32.mrb[0].mxu0
      %v6272 = vadd.f32 %v6100, %v6271
      %v6273 = vpop.f32.mrb[0].mxu0
      %6274 = vmatprep.mubr.bf16.mxu0 0
      %6275 = vmatmul.mubr.bf16.gmra.mrb[0].mxu0 %v6127
      %v6276 = vpop.f32.mrb[0].mxu0
      %v6277 = vadd.f32 %v6100, %v6276
      %v6278 = vpop.f32.mrb[0].mxu0
      %v6279 = vpop.f32.mrb[0].mxu0
      %v6280 = vadd.f32 %v6100, %v6279
      %v6281 = vpop.f32.mrb[0].mxu0
      %6282 = vmatprep.mubr.bf16.mxu0 0
      %6283 = vmatmul.mubr.bf16.gmra.mrb[0].mxu0 %v6130
      %v6284 = vpop.f32.mrb[0].mxu0
      %v6285 = vadd.f32 %v6100, %v6284
      %v6286 = vpop.f32.mrb[0].mxu0
      %v6287 = vpop.f32.mrb[0].mxu0
      %v6288 = vadd.f32 %v6100, %v6287
      %v6289 = vpop.f32.mrb[0].mxu0
      %6290 = vmatprep.mubr.bf16.mxu0 0
      %6291 = vmatmul.mubr.bf16.gmra.mrb[0].mxu0 %v6133
      %v6292 = vpop.f32.mrb[0].mxu0
      %v6293 = vadd.f32 %v6100, %v6292
      %v6294 = vpop.f32.mrb[0].mxu0
      %v6295 = vpop.f32.mrb[0].mxu0
      %v6296 = vadd.f32 %v6100, %v6295
      %v6297 = vpop.f32.mrb[0].mxu0
      %6298 = vmatprep.mubr.bf16.mxu0 0
      %6299 = vmatmul.mubr.bf16.gmra.mrb[0].mxu0 %v6136
      %v6300 = vpop.f32.mrb[0].mxu0
      %v6301 = vadd.f32 %v6100, %v6300
      %v6302 = vpop.f32.mrb[0].mxu0
      %v6303 = vpop.f32.mrb[0].mxu0
      %v6304 = vadd.f32 %v6100, %v6303
      %v6305 = vpop.f32.mrb[0].mxu0
      %6306 = vmatprep.mubr.bf16.mxu0 0
      %6307 = vmatmul.mubr.bf16.gmra.mrb[0].mxu0 %v6139
      %v6308 = vpop.f32.mrb[0].mxu0
      %v6309 = vadd.f32 %v6100, %v6308
      %v6310 = vpop.f32.mrb[0].mxu0
      %v6311 = vpop.f32.mrb[0].mxu0
      %v6312 = vadd.f32 %v6100, %v6311
      %v6313 = vpop.f32.mrb[0].mxu0
      %6314 = vmatprep.mubr.bf16.mxu0 0
      %6315 = vmatmul.mubr.bf16.gmra.mrb[0].mxu0 %v6142
      %v6316 = vpop.f32.mrb[0].mxu0
      %v6317 = vadd.f32 %v6100, %v6316
      %v6318 = vpop.f32.mrb[0].mxu0
      %v6319 = vpop.f32.mrb[0].mxu0
      %v6320 = vadd.f32 %v6100, %v6319
      %v6321 = vpop.f32.mrb[0].mxu0
      %6322 = vmatprep.mubr.bf16.mxu0 0
      %6323 = vmatmul.mubr.bf16.gmra.mrb[0].mxu0 %v6145
      %v6324 = vpop.f32.mrb[0].mxu0
      %v6325 = vadd.f32 %v6100, %v6324
      %v6326 = vpop.f32.mrb[0].mxu0
      %v6327 = vpop.f32.mrb[0].mxu0
      %v6328 = vadd.f32 %v6100, %v6327
      %v6329 = vpop.f32.mrb[0].mxu0
      %6330 = vmatprep.mubr.bf16.mxu0 0
      %6331 = vmatmul.mubr.bf16.gmra.mrb[0].mxu0 %v6148
      %v6332 = vpop.f32.mrb[0].mxu0
      %v6333 = vadd.f32 %v6100, %v6332
      %v6334 = vpop.f32.mrb[0].mxu0
      %v6335 = vpop.f32.mrb[0].mxu0
      %v6336 = vadd.f32 %v6100, %v6335
      %v6337 = vpop.f32.mrb[0].mxu0
      %6338 = vmatprep.mubr.bf16.mxu0 0
      %6339 = vmatmul.mubr.bf16.gmra.mrb[0].mxu0 %v6151
      %v6340 = vpop.f32.mrb[0].mxu0
      %v6341 = vadd.f32 %v6100, %v6340
      %v6342 = vpop.f32.mrb[0].mxu0
      %v6343 = vpop.f32.mrb[0].mxu0
      %v6344 = vadd.f32 %v6100, %v6343
      %v6345 = vpop.f32.mrb[0].mxu0
      %6346 = vmatprep.mubr.bf16.mxu0 0
      %6347 = vmatmul.mubr.bf16.gmra.mrb[0].mxu0 %v6154
      %v6348 = vpop.f32.mrb[0].mxu0
      %v6349 = vadd.f32 %v6100, %v6348
      %v6350 = vpop.f32.mrb[0].mxu0
      %v6351 = vpop.f32.mrb[0].mxu0
      %v6352 = vadd.f32 %v6100, %v6351
      %v6353 = vpop.f32.mrb[0].mxu0
      %6354 = vmatprep.mubr.bf16.mxu0 0
      %6355 = vmatmul.mubr.bf16.gmra.mrb[0].mxu0 %v6157
      %v6356 = vpop.f32.mrb[0].mxu0
      %v6357 = vadd.f32 %v6100, %v6356
      %v6358 = vpop.f32.mrb[0].mxu0
      %v6359 = vpop.f32.mrb[0].mxu0
      %v6360 = vadd.f32 %v6100, %v6359
      %v6361 = vpop.f32.mrb[0].mxu0
      %6362 = vmatprep.mubr.bf16.mxu0 0
      %6363 = vmatmul.mubr.bf16.gmra.mrb[0].mxu0 %v6160
      %v6364 = vpop.f32.mrb[0].mxu0
      %v6365 = vadd.f32 %v6100, %v6364
      %v6366 = vpop.f32.mrb[0].mxu0
      %v6367 = vpop.f32.mrb[0].mxu0
      %v6368 = vadd.f32 %v6100, %v6367
      %v6369 = vpop.f32.mrb[0].mxu0
      %6370 = vmatprep.mubr.bf16.mxu0 0
      %6371 = vmatmul.mubr.bf16.gmra.mrb[0].mxu0 %v6163
      %v6372 = vpop.f32.mrb[0].mxu0
      %v6373 = vadd.f32 %v6100, %v6372
      %v6374 = vpop.f32.mrb[0].mxu0
      %v6375 = vpop.f32.mrb[0].mxu0
      %v6376 = vadd.f32 %v6100, %v6375
      %v6377 = vpop.f32.mrb[0].mxu0
      %6378 = vmatprep.mubr.bf16.mxu0 0
      %6379 = vmatmul.mubr.bf16.gmra.mrb[0].mxu0 %v6166
      %v6380 = vpop.f32.mrb[0].mxu0
      %v6381 = vadd.f32 %v6100, %v6380
      %v6382 = vpop.f32.mrb[0].mxu0
      %v6383 = vpop.f32.mrb[0].mxu0
      %v6384 = vadd.f32 %v6100, %v6383
      %v6385 = vpop.f32.mrb[0].mxu0
      %6386 = vmatprep.mubr.bf16.mxu0 0
      %6387 = vmatmul.mubr.bf16.gmra.mrb[0].mxu0 %v6169
      %v6388 = vpop.f32.mrb[0].mxu0
      %v6389 = vadd.f32 %v6100, %v6388
      %v6390 = vpop.f32.mrb[0].mxu0
      %v6391 = vpop.f32.mrb[0].mxu0
      %v6392 = vadd.f32 %v6100, %v6391
      %v6393 = vpop.f32.mrb[0].mxu0
      %6394 = vmatprep.mubr.bf16.mxu0 0
      %6395 = vmatmul.mubr.bf16.gmra.mrb[0].mxu0 %v6172
      %v6396 = vpop.f32.mrb[0].mxu0
      %v6397 = vadd.f32 %v6100, %v6396
      %v6398 = vpop.f32.mrb[0].mxu0
      %v6399 = vpop.f32.mrb[0].mxu0
      %v6400 = vadd.f32 %v6100, %v6399
      %v6401 = vpop.f32.mrb[0].mxu0
      %6402 = vmatprep.mubr.bf16.mxu0 0
      %6403 = vmatmul.mubr.bf16.gmra.mrb[0].mxu0 %v6175
      %v6404 = vpop.f32.mrb[0].mxu0
      %v6405 = vadd.f32 %v6100, %v6404
      %v6406 = vpop.f32.mrb[0].mxu0
      %v6407 = vpop.f32.mrb[0].mxu0
      %v6408 = vadd.f32 %v6100, %v6407
      %v6409 = vpop.f32.mrb[0].mxu0
      %6410 = vmatprep.mubr.bf16.mxu0 0
      %6411 = vmatmul.mubr.bf16.gmra.mrb[0].mxu0 %v6178
      %v6412 = vpop.f32.mrb[0].mxu0
      %v6413 = vadd.f32 %v6100, %v6412
      %v6414 = vpop.f32.mrb[0].mxu0
      %v6415 = vpop.f32.mrb[0].mxu0
      %v6416 = vadd.f32 %v6100, %v6415
      %v6417 = vpop.f32.mrb[0].mxu0
      %6418 = vmatprep.mubr.bf16.mxu0 0
      %6419 = vmatmul.mubr.bf16.gmra.mrb[0].mxu0 %v6181
      %v6420 = vpop.f32.mrb[0].mxu0
      %v6421 = vadd.f32 %v6100, %v6420
      %v6422 = vpop.f32.mrb[0].mxu0
      %v6423 = vpop.f32.mrb[0].mxu0
      %v6424 = vadd.f32 %v6100, %v6423
      %v6425 = vpop.f32.mrb[0].mxu0
      %6426 = vmatprep.mubr.bf16.mxu0 0
      %6427 = vmatmul.mubr.bf16.gmra.mrb[0].mxu0 %v6184
      %v6428 = vpop.f32.mrb[0].mxu0
      %v6429 = vadd.f32 %v6100, %v6428
      %v6430 = vpop.f32.mrb[0].mxu0
      %v6431 = vpop.f32.mrb[0].mxu0
      %v6432 = vadd.f32 %v6100, %v6431
      %v6433 = vpop.f32.mrb[0].mxu0
      %6434 = vmatprep.mubr.bf16.mxu0 0
      %6435 = vmatmul.mubr.bf16.gmra.mrb[0].mxu0 %v6187
      %v6436 = vpop.f32.mrb[0].mxu0
      %v6437 = vadd.f32 %v6100, %v6436
      %v6438 = vpop.f32.mrb[0].mxu0
      %v6439 = vpop.f32.mrb[0].mxu0
      %v6440 = vadd.f32 %v6100, %v6439
      %v6441 = vpop.f32.mrb[0].mxu0
      %6442 = vmatprep.mubr.bf16.mxu0 0
      %6443 = vmatmul.mubr.bf16.gmra.mrb[0].mxu0 %v6190
      %v6444 = vpop.f32.mrb[0].mxu0
      %v6445 = vadd.f32 %v6100, %v6444
      %v6446 = vpop.f32.mrb[0].mxu0
      %v6447 = vpop.f32.mrb[0].mxu0
      %v6448 = vadd.f32 %v6100, %v6447
      %v6449 = vpop.f32.mrb[0].mxu0
      %6450 = vmatprep.mubr.bf16.mxu0 0
      %6451 = vmatmul.mubr.bf16.gmra.mrb[0].mxu0 %v6193
      %v6452 = vpop.f32.mrb[0].mxu0
      %v6453 = vadd.f32 %v6100, %v6452
      %v6454 = vpop.f32.mrb[0].mxu0
      %v6455 = vpop.f32.mrb[0].mxu0
      %v6456 = vadd.f32 %v6100, %v6455
      %v6457 = vpop.f32.mrb[0].mxu0
      %6458 = vmatprep.mubr.bf16.mxu0 0
      %6459 = vmatmul.mubr.bf16.gmra.mrb[0].mxu0 %v6196
      %v6460 = vpop.f32.mrb[0].mxu0
      %v6461 = vadd.f32 %v6100, %v6460
      %v6462 = vpop.f32.mrb[0].mxu0
      %v6463 = vpop.f32.mrb[0].mxu0
      %v6464 = vadd.f32 %v6100, %v6463
      %v6465 = vpop.f32.mrb[0].mxu0
      %6466 = vmatprep.mubr.bf16.mxu0 0
      %6467 = vmatmul.mubr.bf16.gmra.mrb[0].mxu0 %v6199
      %v6468 = vpop.f32.mrb[0].mxu0
      %v6469 = vadd.f32 %v6100, %v6468
      %v6470 = vpop.f32.mrb[0].mxu0
      %v6471 = vpop.f32.mrb[0].mxu0
      %v6472 = vadd.f32 %v6100, %v6471
      %v6473 = vpop.f32.mrb[0].mxu0
      %6474 = vmatprep.mubr.bf16.mxu0 0
      %6475 = vmatmul.mubr.bf16.gmra.mrb[0].mxu0 %v6202
      %v6476 = vpop.f32.mrb[0].mxu0
      %v6477 = vadd.f32 %v6100, %v6476
      %v6478 = vpop.f32.mrb[0].mxu0
      %v6479 = vpop.f32.mrb[0].mxu0
      %v6480 = vadd.f32 %v6100, %v6479
      %v6481 = vpop.f32.mrb[0].mxu0
      %6482 = vmatprep.mubr.bf16.mxu0 0
      %6483 = vmatmul.mubr.bf16.gmra.mrb[0].mxu0 %v6205
      %v6484 = vpop.f32.mrb[0].mxu0
      %v6485 = vadd.f32 %v6100, %v6484
      %v6486 = vpop.f32.mrb[0].mxu0
      %v6487 = vpop.f32.mrb[0].mxu0
      %v6488 = vadd.f32 %v6100, %v6487
      %v6489 = vpop.f32.mrb[0].mxu0
      %6490 = vmatprep.mubr.bf16.mxu0 0
      %6491 = vmatmul.mubr.bf16.gmra.mrb[0].mxu0 %v6208
      %v6492 = vpop.f32.mrb[0].mxu0
      %v6493 = vadd.f32 %v6100, %v6492
      %v6494 = vpop.f32.mrb[0].mxu0
      %v6495 = vpop.f32.mrb[0].mxu0
      %v6496 = vadd.f32 %v6100, %v6495
      %v6497 = vpop.f32.mrb[0].mxu0
      %6498 = vdwg.mxu0
      %v6499 = vmax.f32 %v6245, 0.0
      %v6500 = vmax.f32 %v6248, 0.0
      %v6501 = vmax.f32 %v6253, 0.0
      %v6502 = vmax.f32 %v6256, 0.0
      %v6503 = vmax.f32 %v6261, 0.0
      %v6504 = vmax.f32 %v6264, 0.0
      %v6505 = vmax.f32 %v6269, 0.0
      %v6506 = vmax.f32 %v6272, 0.0
      %v6507 = vmax.f32 %v6277, 0.0
      %v6508 = vmax.f32 %v6280, 0.0
      %v6509 = vmax.f32 %v6285, 0.0
      %v6510 = vmax.f32 %v6288, 0.0
      %v6511 = vmax.f32 %v6293, 0.0
      %v6512 = vmax.f32 %v6296, 0.0
      %v6513 = vmax.f32 %v6301, 0.0
      %v6514 = vmax.f32 %v6304, 0.0
      %v6515 = vmax.f32 %v6309, 0.0
      %v6516 = vmax.f32 %v6312, 0.0
      %v6517 = vmax.f32 %v6317, 0.0
      %v6518 = vmax.f32 %v6320, 0.0
      %v6519 = vmax.f32 %v6325, 0.0
      %v6520 = vmax.f32 %v6328, 0.0
      %v6521 = vmax.f32 %v6333, 0.0
      %v6522 = vmax.f32 %v6336, 0.0
      %v6523 = vmax.f32 %v6341, 0.0
      %v6524 = vmax.f32 %v6344, 0.0
      %v6525 = vmax.f32 %v6349, 0.0
      %v6526 = vmax.f32 %v6352, 0.0
      %v6527 = vmax.f32 %v6357, 0.0
      %v6528 = vmax.f32 %v6360, 0.0
      %v6529 = vmax.f32 %v6365, 0.0
      %v6530 = vmax.f32 %v6368, 0.0
      %v6531 = vmax.f32 %v6373, 0.0
      %v6532 = vmax.f32 %v6376, 0.0
      %v6533 = vmax.f32 %v6381, 0.0
      %v6534 = vmax.f32 %v6384, 0.0
      %v6535 = vmax.f32 %v6389, 0.0
      %v6536 = vmax.f32 %v6392, 0.0
      %v6537 = vmax.f32 %v6397, 0.0
      %v6538 = vmax.f32 %v6400, 0.0
      %v6539 = vmax.f32 %v6405, 0.0
      %v6540 = vmax.f32 %v6408, 0.0
      %v6541 = vmax.f32 %v6413, 0.0
      %v6542 = vmax.f32 %v6416, 0.0
      %v6543 = vmax.f32 %v6421, 0.0
      %v6544 = vmax.f32 %v6424, 0.0
      %v6545 = vmax.f32 %v6429, 0.0
      %v6546 = vmax.f32 %v6432, 0.0
      %v6547 = vmax.f32 %v6437, 0.0
      %v6548 = vmax.f32 %v6440, 0.0
      %v6549 = vmax.f32 %v6445, 0.0
      %v6550 = vmax.f32 %v6448, 0.0
      %v6551 = vmax.f32 %v6453, 0.0
      %v6552 = vmax.f32 %v6456, 0.0
      %v6553 = vmax.f32 %v6461, 0.0
      %v6554 = vmax.f32 %v6464, 0.0
      %v6555 = vmax.f32 %v6469, 0.0
      %v6556 = vmax.f32 %v6472, 0.0
      %v6557 = vmax.f32 %v6477, 0.0
      %v6558 = vmax.f32 %v6480, 0.0
      %v6559 = vmax.f32 %v6485, 0.0
      %v6560 = vmax.f32 %v6488, 0.0
      %v6561 = vmax.f32 %v6493, 0.0
      %v6562 = vmax.f32 %v6496, 0.0
      %v6563 = vld [vmem:[%s20] sm:$0xf]
      %v6564 = vld [vmem:[%s20 + $0x4] sm:$0xf]
      %v6565 = vld [vmem:[%s20 + $0x8] sm:$0xf]
      %v6566 = vld [vmem:[%s20 + $0xc] sm:$0xf]
      %v6567 = vld [vmem:[%s21] sm:$0x7]
      %v6568 = vld [vmem:[%s22] sm:$0x1]
      %v6569 = vpack.c.bf16 %v6248, %v6245
      %v6570 = vpack.c.bf16 %v6256, %v6253
      %v6571 = vpack.c.bf16 %v6264, %v6261
      %v6572 = vpack.c.bf16 %v6272, %v6269
      %v6573 = vpack.c.bf16 %v6280, %v6277
      %v6574 = vpack.c.bf16 %v6288, %v6285
      %v6575 = vpack.c.bf16 %v6296, %v6293
      %v6576 = vpack.c.bf16 %v6304, %v6301
      %v6577 = vpack.c.bf16 %v6312, %v6309
      %v6578 = vpack.c.bf16 %v6320, %v6317
      %v6579 = vpack.c.bf16 %v6328, %v6325
      %v6580 = vpack.c.bf16 %v6336, %v6333
      %v6581 = vpack.c.bf16 %v6344, %v6341
      %v6582 = vpack.c.bf16 %v6352, %v6349
      %v6583 = vpack.c.bf16 %v6360, %v6357
      %v6584 = vpack.c.bf16 %v6368, %v6365
      %v6585 = vpack.c.bf16 %v6376, %v6373
      %v6586 = vpack.c.bf16 %v6384, %v6381
      %v6587 = vpack.c.bf16 %v6392, %v6389
      %v6588 = vpack.c.bf16 %v6400, %v6397
      %v6589 = vpack.c.bf16 %v6408, %v6405
      %v6590 = vpack.c.bf16 %v6416, %v6413
      %v6591 = vpack.c.bf16 %v6424, %v6421
      %v6592 = vpack.c.bf16 %v6432, %v6429
      %v6593 = vpack.c.bf16 %v6440, %v6437
      %v6594 = vpack.c.bf16 %v6448, %v6445
      %v6595 = vpack.c.bf16 %v6456, %v6453
      %v6596 = vpack.c.bf16 %v6464, %v6461
      %v6597 = vpack.c.bf16 %v6472, %v6469
      %v6598 = vpack.c.bf16 %v6480, %v6477
      %v6599 = vpack.c.bf16 %v6488, %v6485
      %v6600 = vpack.c.bf16 %v6496, %v6493
      %6601 = vset.pattern.permute.xlu0 3
      %6602 = vperm.xlu0 %6601, %v769
      %v6603 = vpop.permute.xlu0 %6602
      %6605 = vset.pattern.permute.xlu0 3
      %6606 = vperm.xlu0 %6605, %v770
      %v6607 = vpop.permute.xlu0 %6606
      %6609 = vset.pattern.permute.xlu0 3
      %6610 = vperm.xlu0 %6609, %v771
      %v6611 = vpop.permute.xlu0 %6610
      %6613 = vset.pattern.permute.xlu0 3
      %6614 = vperm.xlu0 %6613, %v772
      %v6615 = vpop.permute.xlu0 %6614
      %6617 = vset.pattern.permute.xlu0 3
      %6618 = vperm.xlu0 %6617, %v773
      %v6619 = vpop.permute.xlu0 %6618
      %6621 = vset.pattern.permute.xlu0 3
      %6622 = vperm.xlu0 %6621, %v774
      %v6623 = vpop.permute.xlu0 %6622
      %6625 = vset.pattern.permute.xlu0 3
      %6626 = vperm.xlu0 %6625, %v775
      %v6627 = vpop.permute.xlu0 %6626
      %6629 = vset.pattern.permute.xlu0 3
      %6630 = vperm.xlu0 %6629, %v776
      %v6631 = vpop.permute.xlu0 %6630
      %6633 = vset.pattern.permute.xlu0 3
      %6634 = vperm.xlu0 %6633, %v777
      %v6635 = vpop.permute.xlu0 %6634
      %6637 = vset.pattern.permute.xlu0 3
      %6638 = vperm.xlu0 %6637, %v778
      %v6639 = vpop.permute.xlu0 %6638
      %6641 = vset.pattern.permute.xlu0 3
      %6642 = vperm.xlu0 %6641, %v779
      %v6643 = vpop.permute.xlu0 %6642
      %6645 = vset.pattern.permute.xlu0 3
      %6646 = vperm.xlu0 %6645, %v780
      %v6647 = vpop.permute.xlu0 %6646
      %6649 = vset.pattern.permute.xlu0 3
      %6650 = vperm.xlu0 %6649, %v781
      %v6651 = vpop.permute.xlu0 %6650
      %6653 = vset.pattern.permute.xlu0 3
      %6654 = vperm.xlu0 %6653, %v782
      %v6655 = vpop.permute.xlu0 %6654
      %6657 = vset.pattern.permute.xlu0 3
      %6658 = vperm.xlu0 %6657, %v783
      %v6659 = vpop.permute.xlu0 %6658
      %6661 = vset.pattern.permute.xlu0 3
      %6662 = vperm.xlu0 %6661, %v784
      %v6663 = vpop.permute.xlu0 %6662
      %6665 = vset.pattern.permute.xlu0 3
      %6666 = vperm.xlu0 %6665, %v785
      %v6667 = vpop.permute.xlu0 %6666
      %6669 = vset.pattern.permute.xlu0 3
      %6670 = vperm.xlu0 %6669, %v786
      %v6671 = vpop.permute.xlu0 %6670
      %6673 = vset.pattern.permute.xlu0 3
      %6674 = vperm.xlu0 %6673, %v787
      %v6675 = vpop.permute.xlu0 %6674
      %6677 = vset.pattern.permute.xlu0 3
      %6678 = vperm.xlu0 %6677, %v788
      %v6679 = vpop.permute.xlu0 %6678
      %6681 = vset.pattern.permute.xlu0 3
      %6682 = vperm.xlu0 %6681, %v789
      %v6683 = vpop.permute.xlu0 %6682
      %6685 = vset.pattern.permute.xlu0 3
      %6686 = vperm.xlu0 %6685, %v790
      %v6687 = vpop.permute.xlu0 %6686
      %6689 = vset.pattern.permute.xlu0 3
      %6690 = vperm.xlu0 %6689, %v791
      %v6691 = vpop.permute.xlu0 %6690
      %6693 = vset.pattern.permute.xlu0 3
      %6694 = vperm.xlu0 %6693, %v792
      %v6695 = vpop.permute.xlu0 %6694
      %6697 = vset.pattern.permute.xlu0 3
      %6698 = vperm.xlu0 %6697, %v793
      %v6699 = vpop.permute.xlu0 %6698
      %6701 = vset.pattern.permute.xlu0 3
      %6702 = vperm.xlu0 %6701, %v794
      %v6703 = vpop.permute.xlu0 %6702
      %6705 = vset.pattern.permute.xlu0 3
      %6706 = vperm.xlu0 %6705, %v795
      %v6707 = vpop.permute.xlu0 %6706
      %6709 = vset.pattern.permute.xlu0 3
      %6710 = vperm.xlu0 %6709, %v796
      %v6711 = vpop.permute.xlu0 %6710
      %6713 = vset.pattern.permute.xlu0 3
      %6714 = vperm.xlu0 %6713, %v797
      %v6715 = vpop.permute.xlu0 %6714
      %6717 = vset.pattern.permute.xlu0 3
      %6718 = vperm.xlu0 %6717, %v798
      %v6719 = vpop.permute.xlu0 %6718
      %6721 = vset.pattern.permute.xlu0 3
      %6722 = vperm.xlu0 %6721, %v799
      %v6723 = vpop.permute.xlu0 %6722
      %6725 = vset.pattern.permute.xlu0 3
      %6726 = vperm.xlu0 %6725, %v800
      %v6727 = vpop.permute.xlu0 %6726
      %6729 = vset.pattern.permute.xlu0 3
      %6730 = vperm.xlu0 %6729, %v801
      %v6731 = vpop.permute.xlu0 %6730
      %6733 = vset.pattern.permute.xlu0 3
      %6734 = vperm.xlu0 %6733, %v802
      %v6735 = vpop.permute.xlu0 %6734
      %6737 = vset.pattern.permute.xlu0 3
      %6738 = vperm.xlu0 %6737, %v803
      %v6739 = vpop.permute.xlu0 %6738
      %6741 = vset.pattern.permute.xlu0 3
      %6742 = vperm.xlu0 %6741, %v804
      %v6743 = vpop.permute.xlu0 %6742
      %6745 = vset.pattern.permute.xlu0 3
      %6746 = vperm.xlu0 %6745, %v805
      %v6747 = vpop.permute.xlu0 %6746
      %6749 = vset.pattern.permute.xlu0 3
      %6750 = vperm.xlu0 %6749, %v806
      %v6751 = vpop.permute.xlu0 %6750
      %6753 = vset.pattern.permute.xlu0 3
      %6754 = vperm.xlu0 %6753, %v807
      %v6755 = vpop.permute.xlu0 %6754
      %6757 = vset.pattern.permute.xlu0 3
      %6758 = vperm.xlu0 %6757, %v808
      %v6759 = vpop.permute.xlu0 %6758
      %6761 = vset.pattern.permute.xlu0 3
      %6762 = vperm.xlu0 %6761, %v809
      %v6763 = vpop.permute.xlu0 %6762
      %6765 = vset.pattern.permute.xlu0 3
      %6766 = vperm.xlu0 %6765, %v810
      %v6767 = vpop.permute.xlu0 %6766
      %6769 = vset.pattern.permute.xlu0 3
      %6770 = vperm.xlu0 %6769, %v811
      %v6771 = vpop.permute.xlu0 %6770
      %6773 = vset.pattern.permute.xlu0 3
      %6774 = vperm.xlu0 %6773, %v812
      %v6775 = vpop.permute.xlu0 %6774
      %6777 = vset.pattern.permute.xlu0 3
      %6778 = vperm.xlu0 %6777, %v813
      %v6779 = vpop.permute.xlu0 %6778
      %6781 = vset.pattern.permute.xlu0 3
      %6782 = vperm.xlu0 %6781, %v814
      %v6783 = vpop.permute.xlu0 %6782
      %6785 = vset.pattern.permute.xlu0 3
      %6786 = vperm.xlu0 %6785, %v815
      %v6787 = vpop.permute.xlu0 %6786
      %6789 = vset.pattern.permute.xlu0 3
      %6790 = vperm.xlu0 %6789, %v816
      %v6791 = vpop.permute.xlu0 %6790
      %6793 = vset.pattern.permute.xlu0 3
      %6794 = vperm.xlu0 %6793, %v817
      %v6795 = vpop.permute.xlu0 %6794
      %6797 = vset.pattern.permute.xlu0 3
      %6798 = vperm.xlu0 %6797, %v818
      %v6799 = vpop.permute.xlu0 %6798
      %6801 = vset.pattern.permute.xlu0 3
      %6802 = vperm.xlu0 %6801, %v819
      %v6803 = vpop.permute.xlu0 %6802
      %6805 = vset.pattern.permute.xlu0 3
      %6806 = vperm.xlu0 %6805, %v820
      %v6807 = vpop.permute.xlu0 %6806
      %6809 = vset.pattern.permute.xlu0 3
      %6810 = vperm.xlu0 %6809, %v821
      %v6811 = vpop.permute.xlu0 %6810
      %6813 = vset.pattern.permute.xlu0 3
      %6814 = vperm.xlu0 %6813, %v822
      %v6815 = vpop.permute.xlu0 %6814
      %6817 = vset.pattern.permute.xlu0 3
      %6818 = vperm.xlu0 %6817, %v823
      %v6819 = vpop.permute.xlu0 %6818
      %6821 = vset.pattern.permute.xlu0 3
      %6822 = vperm.xlu0 %6821, %v824
      %v6823 = vpop.permute.xlu0 %6822
      %6825 = vset.pattern.permute.xlu0 3
      %6826 = vperm.xlu0 %6825, %v825
      %v6827 = vpop.permute.xlu0 %6826
      %6829 = vset.pattern.permute.xlu0 3
      %6830 = vperm.xlu0 %6829, %v826
      %v6831 = vpop.permute.xlu0 %6830
      %6833 = vset.pattern.permute.xlu0 3
      %6834 = vperm.xlu0 %6833, %v827
      %v6835 = vpop.permute.xlu0 %6834
      %6837 = vset.pattern.permute.xlu0 3
      %6838 = vperm.xlu0 %6837, %v828
      %v6839 = vpop.permute.xlu0 %6838
      %6841 = vset.pattern.permute.xlu0 3
      %6842 = vperm.xlu0 %6841, %v829
      %v6843 = vpop.permute.xlu0 %6842
      %6845 = vset.pattern.permute.xlu0 3
      %6846 = vperm.xlu0 %6845, %v830
      %v6847 = vpop.permute.xlu0 %6846
      %6849 = vset.pattern.permute.xlu0 3
      %6850 = vperm.xlu0 %6849, %v831
      %v6851 = vpop.permute.xlu0 %6850
      %6853 = vset.pattern.permute.xlu0 3
      %6854 = vperm.xlu0 %6853, %v832
      %v6855 = vpop.permute.xlu0 %6854
      %v6857 = vlaneseq
      %v6858 = vshrl.u32 %v6857, 7
      %v6859 = vsub.s32 0, %v6858
      %v6860 = vrot.slane %v6567, %v6859
      %v6861 = vmul.f32 %v6603, %v6860
      %v6862 = vmul.f32 %v6607, %v6860
      %v6863 = vmul.f32 %v6611, %v6860
      %v6864 = vmul.f32 %v6615, %v6860
      %v6865 = vmul.f32 %v6619, %v6860
      %v6866 = vmul.f32 %v6623, %v6860
      %v6867 = vmul.f32 %v6627, %v6860
      %v6868 = vmul.f32 %v6631, %v6860
      %v6869 = vmul.f32 %v6635, %v6860
      %v6870 = vmul.f32 %v6639, %v6860
      %v6871 = vmul.f32 %v6643, %v6860
      %v6872 = vmul.f32 %v6647, %v6860
      %v6873 = vmul.f32 %v6651, %v6860
      %v6874 = vmul.f32 %v6655, %v6860
      %v6875 = vmul.f32 %v6659, %v6860
      %v6876 = vmul.f32 %v6663, %v6860
      %v6877 = vmul.f32 %v6667, %v6860
      %v6878 = vmul.f32 %v6671, %v6860
      %v6879 = vmul.f32 %v6675, %v6860
      %v6880 = vmul.f32 %v6679, %v6860
      %v6881 = vmul.f32 %v6683, %v6860
      %v6882 = vmul.f32 %v6687, %v6860
      %v6883 = vmul.f32 %v6691, %v6860
      %v6884 = vmul.f32 %v6695, %v6860
      %v6885 = vmul.f32 %v6699, %v6860
      %v6886 = vmul.f32 %v6703, %v6860
      %v6887 = vmul.f32 %v6707, %v6860
      %v6888 = vmul.f32 %v6711, %v6860
      %v6889 = vmul.f32 %v6715, %v6860
      %v6890 = vmul.f32 %v6719, %v6860
      %v6891 = vmul.f32 %v6723, %v6860
      %v6892 = vmul.f32 %v6727, %v6860
      %v6893 = vmul.f32 %v6731, %v6860
      %v6894 = vmul.f32 %v6735, %v6860
      %v6895 = vmul.f32 %v6739, %v6860
      %v6896 = vmul.f32 %v6743, %v6860
      %v6897 = vmul.f32 %v6747, %v6860
      %v6898 = vmul.f32 %v6751, %v6860
      %v6899 = vmul.f32 %v6755, %v6860
      %v6900 = vmul.f32 %v6759, %v6860
      %v6901 = vmul.f32 %v6763, %v6860
      %v6902 = vmul.f32 %v6767, %v6860
      %v6903 = vmul.f32 %v6771, %v6860
      %v6904 = vmul.f32 %v6775, %v6860
      %v6905 = vmul.f32 %v6779, %v6860
      %v6906 = vmul.f32 %v6783, %v6860
      %v6907 = vmul.f32 %v6787, %v6860
      %v6908 = vmul.f32 %v6791, %v6860
      %v6909 = vmul.f32 %v6795, %v6860
      %v6910 = vmul.f32 %v6799, %v6860
      %v6911 = vmul.f32 %v6803, %v6860
      %v6912 = vmul.f32 %v6807, %v6860
      %v6913 = vmul.f32 %v6811, %v6860
      %v6914 = vmul.f32 %v6815, %v6860
      %v6915 = vmul.f32 %v6819, %v6860
      %v6916 = vmul.f32 %v6823, %v6860
      %v6917 = vmul.f32 %v6827, %v6860
      %v6918 = vmul.f32 %v6831, %v6860
      %v6919 = vmul.f32 %v6835, %v6860
      %v6920 = vmul.f32 %v6839, %v6860
      %v6921 = vmul.f32 %v6843, %v6860
      %v6922 = vmul.f32 %v6847, %v6860
      %v6923 = vmul.f32 %v6851, %v6860
      %v6924 = vmul.f32 %v6855, %v6860
      %v6929 = vunpack.c.l.b16 %v6563
      %v6930 = vunpack.c.l.b16 %v6564
      %v6931 = vunpack.c.l.b16 %v6565
      %v6932 = vunpack.c.l.b16 %v6566
      %v6933 = vpack.c.b16 %v6930, %v6929
      %v6934 = vpack.c.b16 %v6932, %v6931
      %v6938 = vsel %vm2188, %v6569, 0
      %v6941 = vsel %vm2188, %v6570, 0
      %v6944 = vsel %vm2188, %v6571, 0
      %v6947 = vsel %vm2188, %v6572, 0
      %v6950 = vsel %vm2188, %v6573, 0
      %v6953 = vsel %vm2188, %v6574, 0
      %v6956 = vsel %vm2188, %v6575, 0
      %v6959 = vsel %vm2188, %v6576, 0
      %v6962 = vsel %vm2188, %v6577, 0
      %v6965 = vsel %vm2188, %v6578, 0
      %v6968 = vsel %vm2188, %v6579, 0
      %v6971 = vsel %vm2188, %v6580, 0
      %v6974 = vsel %vm2188, %v6581, 0
      %v6977 = vsel %vm2188, %v6582, 0
      %v6980 = vsel %vm2188, %v6583, 0
      %v6983 = vsel %vm2188, %v6584, 0
      %v6986 = vsel %vm2188, %v6585, 0
      %v6989 = vsel %vm2188, %v6586, 0
      %v6992 = vsel %vm2188, %v6587, 0
      %v6995 = vsel %vm2188, %v6588, 0
      %v6998 = vsel %vm2188, %v6589, 0
      %v7001 = vsel %vm2188, %v6590, 0
      %v7004 = vsel %vm2188, %v6591, 0
      %v7007 = vsel %vm2188, %v6592, 0
      %v7010 = vsel %vm2188, %v6593, 0
      %v7013 = vsel %vm2188, %v6594, 0
      %v7016 = vsel %vm2188, %v6595, 0
      %v7019 = vsel %vm2188, %v6596, 0
      %v7022 = vsel %vm2188, %v6597, 0
      %v7025 = vsel %vm2188, %v6598, 0
      %v7028 = vsel %vm2188, %v6599, 0
      %v7031 = vsel %vm2188, %v6600, 0
      %7033 = vmatprep.subr.bf16.mxu0 0
      %7034 = vmatpush1.bf16.msra.mxu0 %v6933
      %7035 = vmatprep.subr.bf16.mxu0 0
      %7036 = vmatpush1.bf16.msra.mxu0 %v6934
      %7037 = vmatprep.subr.bf16.mxu0 0
      %7038 = vmatpush1.bf16.msra.mxu0 0
      %7039 = vmatprep.subr.bf16.mxu0 0
      %7040 = vmatpush1.bf16.msra.mxu0 0
      %7041 = vmatprep.subr.bf16.mxu0 0
      %7042 = vmatpush1.bf16.msra.mxu0 0
      %7043 = vmatprep.subr.bf16.mxu0 0
      %7044 = vmatpush1.bf16.msra.mxu0 0
      %7045 = vmatprep.subr.bf16.mxu0 0
      %7046 = vmatpush1.bf16.msra.mxu0 0
      %7047 = vmatprep.subr.bf16.mxu0 0
      %7048 = vmatpush1.bf16.msra.mxu0 0
      %7049 = vmatprep.subr.bf16.mxu0 0
      %7050 = vmatpush1.bf16.msra.mxu0 0
      %7051 = vmatprep.subr.bf16.mxu0 0
      %7052 = vmatpush1.bf16.msra.mxu0 0
      %7053 = vmatprep.subr.bf16.mxu0 0
      %7054 = vmatpush1.bf16.msra.mxu0 0
      %7055 = vmatprep.subr.bf16.mxu0 0
      %7056 = vmatpush1.bf16.msra.mxu0 0
      %7057 = vmatprep.subr.bf16.mxu0 0
      %7058 = vmatpush1.bf16.msra.mxu0 0
      %7059 = vmatprep.subr.bf16.mxu0 0
      %7060 = vmatpush1.bf16.msra.mxu0 0
      %7061 = vmatprep.subr.bf16.mxu0 0
      %7062 = vmatpush1.bf16.msra.mxu0 0
      %7063 = vmatprep.subr.bf16.mxu0 0
      %7064 = vmatpush1.bf16.msra.mxu0 0
      %7065 = vmatprep.mubr.bf16.mxu0 0
      %7066 = vmatmul.mubr.bf16.gmra.mrb[0].mxu0 %v6938
      %v7067 = vpop.f32.mrb[0].mxu0
      %v7068 = vadd.f32 %v6861, %v7067
      %v7069 = vpop.f32.mrb[0].mxu0
      %v7070 = vpop.f32.mrb[0].mxu0
      %v7071 = vadd.f32 %v6862, %v7070
      %v7072 = vpop.f32.mrb[0].mxu0
      %7073 = vmatprep.mubr.bf16.mxu0 0
      %7074 = vmatmul.mubr.bf16.gmra.mrb[0].mxu0 %v6941
      %v7075 = vpop.f32.mrb[0].mxu0
      %v7076 = vadd.f32 %v6863, %v7075
      %v7077 = vpop.f32.mrb[0].mxu0
      %v7078 = vpop.f32.mrb[0].mxu0
      %v7079 = vadd.f32 %v6864, %v7078
      %v7080 = vpop.f32.mrb[0].mxu0
      %7081 = vmatprep.mubr.bf16.mxu0 0
      %7082 = vmatmul.mubr.bf16.gmra.mrb[0].mxu0 %v6944
      %v7083 = vpop.f32.mrb[0].mxu0
      %v7084 = vadd.f32 %v6865, %v7083
      %v7085 = vpop.f32.mrb[0].mxu0
      %v7086 = vpop.f32.mrb[0].mxu0
      %v7087 = vadd.f32 %v6866, %v7086
      %v7088 = vpop.f32.mrb[0].mxu0
      %7089 = vmatprep.mubr.bf16.mxu0 0
      %7090 = vmatmul.mubr.bf16.gmra.mrb[0].mxu0 %v6947
      %v7091 = vpop.f32.mrb[0].mxu0
      %v7092 = vadd.f32 %v6867, %v7091
      %v7093 = vpop.f32.mrb[0].mxu0
      %v7094 = vpop.f32.mrb[0].mxu0
      %v7095 = vadd.f32 %v6868, %v7094
      %v7096 = vpop.f32.mrb[0].mxu0
      %7097 = vmatprep.mubr.bf16.mxu0 0
      %7098 = vmatmul.mubr.bf16.gmra.mrb[0].mxu0 %v6950
      %v7099 = vpop.f32.mrb[0].mxu0
      %v7100 = vadd.f32 %v6869, %v7099
      %v7101 = vpop.f32.mrb[0].mxu0
      %v7102 = vpop.f32.mrb[0].mxu0
      %v7103 = vadd.f32 %v6870, %v7102
      %v7104 = vpop.f32.mrb[0].mxu0
      %7105 = vmatprep.mubr.bf16.mxu0 0
      %7106 = vmatmul.mubr.bf16.gmra.mrb[0].mxu0 %v6953
      %v7107 = vpop.f32.mrb[0].mxu0
      %v7108 = vadd.f32 %v6871, %v7107
      %v7109 = vpop.f32.mrb[0].mxu0
      %v7110 = vpop.f32.mrb[0].mxu0
      %v7111 = vadd.f32 %v6872, %v7110
      %v7112 = vpop.f32.mrb[0].mxu0
      %7113 = vmatprep.mubr.bf16.mxu0 0
      %7114 = vmatmul.mubr.bf16.gmra.mrb[0].mxu0 %v6956
      %v7115 = vpop.f32.mrb[0].mxu0
      %v7116 = vadd.f32 %v6873, %v7115
      %v7117 = vpop.f32.mrb[0].mxu0
      %v7118 = vpop.f32.mrb[0].mxu0
      %v7119 = vadd.f32 %v6874, %v7118
      %v7120 = vpop.f32.mrb[0].mxu0
      %7121 = vmatprep.mubr.bf16.mxu0 0
      %7122 = vmatmul.mubr.bf16.gmra.mrb[0].mxu0 %v6959
      %v7123 = vpop.f32.mrb[0].mxu0
      %v7124 = vadd.f32 %v6875, %v7123
      %v7125 = vpop.f32.mrb[0].mxu0
      %v7126 = vpop.f32.mrb[0].mxu0
      %v7127 = vadd.f32 %v6876, %v7126
      %v7128 = vpop.f32.mrb[0].mxu0
      %7129 = vmatprep.mubr.bf16.mxu0 0
      %7130 = vmatmul.mubr.bf16.gmra.mrb[0].mxu0 %v6962
      %v7131 = vpop.f32.mrb[0].mxu0
      %v7132 = vadd.f32 %v6877, %v7131
      %v7133 = vpop.f32.mrb[0].mxu0
      %v7134 = vpop.f32.mrb[0].mxu0
      %v7135 = vadd.f32 %v6878, %v7134
      %v7136 = vpop.f32.mrb[0].mxu0
      %7137 = vmatprep.mubr.bf16.mxu0 0
      %7138 = vmatmul.mubr.bf16.gmra.mrb[0].mxu0 %v6965
      %v7139 = vpop.f32.mrb[0].mxu0
      %v7140 = vadd.f32 %v6879, %v7139
      %v7141 = vpop.f32.mrb[0].mxu0
      %v7142 = vpop.f32.mrb[0].mxu0
      %v7143 = vadd.f32 %v6880, %v7142
      %v7144 = vpop.f32.mrb[0].mxu0
      %7145 = vmatprep.mubr.bf16.mxu0 0
      %7146 = vmatmul.mubr.bf16.gmra.mrb[0].mxu0 %v6968
      %v7147 = vpop.f32.mrb[0].mxu0
      %v7148 = vadd.f32 %v6881, %v7147
      %v7149 = vpop.f32.mrb[0].mxu0
      %v7150 = vpop.f32.mrb[0].mxu0
      %v7151 = vadd.f32 %v6882, %v7150
      %v7152 = vpop.f32.mrb[0].mxu0
      %7153 = vmatprep.mubr.bf16.mxu0 0
      %7154 = vmatmul.mubr.bf16.gmra.mrb[0].mxu0 %v6971
      %v7155 = vpop.f32.mrb[0].mxu0
      %v7156 = vadd.f32 %v6883, %v7155
      %v7157 = vpop.f32.mrb[0].mxu0
      %v7158 = vpop.f32.mrb[0].mxu0
      %v7159 = vadd.f32 %v6884, %v7158
      %v7160 = vpop.f32.mrb[0].mxu0
      %7161 = vmatprep.mubr.bf16.mxu0 0
      %7162 = vmatmul.mubr.bf16.gmra.mrb[0].mxu0 %v6974
      %v7163 = vpop.f32.mrb[0].mxu0
      %v7164 = vadd.f32 %v6885, %v7163
      %v7165 = vpop.f32.mrb[0].mxu0
      %v7166 = vpop.f32.mrb[0].mxu0
      %v7167 = vadd.f32 %v6886, %v7166
      %v7168 = vpop.f32.mrb[0].mxu0
      %7169 = vmatprep.mubr.bf16.mxu0 0
      %7170 = vmatmul.mubr.bf16.gmra.mrb[0].mxu0 %v6977
      %v7171 = vpop.f32.mrb[0].mxu0
      %v7172 = vadd.f32 %v6887, %v7171
      %v7173 = vpop.f32.mrb[0].mxu0
      %v7174 = vpop.f32.mrb[0].mxu0
      %v7175 = vadd.f32 %v6888, %v7174
      %v7176 = vpop.f32.mrb[0].mxu0
      %7177 = vmatprep.mubr.bf16.mxu0 0
      %7178 = vmatmul.mubr.bf16.gmra.mrb[0].mxu0 %v6980
      %v7179 = vpop.f32.mrb[0].mxu0
      %v7180 = vadd.f32 %v6889, %v7179
      %v7181 = vpop.f32.mrb[0].mxu0
      %v7182 = vpop.f32.mrb[0].mxu0
      %v7183 = vadd.f32 %v6890, %v7182
      %v7184 = vpop.f32.mrb[0].mxu0
      %7185 = vmatprep.mubr.bf16.mxu0 0
      %7186 = vmatmul.mubr.bf16.gmra.mrb[0].mxu0 %v6983
      %v7187 = vpop.f32.mrb[0].mxu0
      %v7188 = vadd.f32 %v6891, %v7187
      %v7189 = vpop.f32.mrb[0].mxu0
      %v7190 = vpop.f32.mrb[0].mxu0
      %v7191 = vadd.f32 %v6892, %v7190
      %v7192 = vpop.f32.mrb[0].mxu0
      %7193 = vmatprep.mubr.bf16.mxu0 0
      %7194 = vmatmul.mubr.bf16.gmra.mrb[0].mxu0 %v6986
      %v7195 = vpop.f32.mrb[0].mxu0
      %v7196 = vadd.f32 %v6893, %v7195
      %v7197 = vpop.f32.mrb[0].mxu0
      %v7198 = vpop.f32.mrb[0].mxu0
      %v7199 = vadd.f32 %v6894, %v7198
      %v7200 = vpop.f32.mrb[0].mxu0
      %7201 = vmatprep.mubr.bf16.mxu0 0
      %7202 = vmatmul.mubr.bf16.gmra.mrb[0].mxu0 %v6989
      %v7203 = vpop.f32.mrb[0].mxu0
      %v7204 = vadd.f32 %v6895, %v7203
      %v7205 = vpop.f32.mrb[0].mxu0
      %v7206 = vpop.f32.mrb[0].mxu0
      %v7207 = vadd.f32 %v6896, %v7206
      %v7208 = vpop.f32.mrb[0].mxu0
      %7209 = vmatprep.mubr.bf16.mxu0 0
      %7210 = vmatmul.mubr.bf16.gmra.mrb[0].mxu0 %v6992
      %v7211 = vpop.f32.mrb[0].mxu0
      %v7212 = vadd.f32 %v6897, %v7211
      %v7213 = vpop.f32.mrb[0].mxu0
      %v7214 = vpop.f32.mrb[0].mxu0
      %v7215 = vadd.f32 %v6898, %v7214
      %v7216 = vpop.f32.mrb[0].mxu0
      %7217 = vmatprep.mubr.bf16.mxu0 0
      %7218 = vmatmul.mubr.bf16.gmra.mrb[0].mxu0 %v6995
      %v7219 = vpop.f32.mrb[0].mxu0
      %v7220 = vadd.f32 %v6899, %v7219
      %v7221 = vpop.f32.mrb[0].mxu0
      %v7222 = vpop.f32.mrb[0].mxu0
      %v7223 = vadd.f32 %v6900, %v7222
      %v7224 = vpop.f32.mrb[0].mxu0
      %7225 = vmatprep.mubr.bf16.mxu0 0
      %7226 = vmatmul.mubr.bf16.gmra.mrb[0].mxu0 %v6998
      %v7227 = vpop.f32.mrb[0].mxu0
      %v7228 = vadd.f32 %v6901, %v7227
      %v7229 = vpop.f32.mrb[0].mxu0
      %v7230 = vpop.f32.mrb[0].mxu0
      %v7231 = vadd.f32 %v6902, %v7230
      %v7232 = vpop.f32.mrb[0].mxu0
      %7233 = vmatprep.mubr.bf16.mxu0 0
      %7234 = vmatmul.mubr.bf16.gmra.mrb[0].mxu0 %v7001
      %v7235 = vpop.f32.mrb[0].mxu0
      %v7236 = vadd.f32 %v6903, %v7235
      %v7237 = vpop.f32.mrb[0].mxu0
      %v7238 = vpop.f32.mrb[0].mxu0
      %v7239 = vadd.f32 %v6904, %v7238
      %v7240 = vpop.f32.mrb[0].mxu0
      %7241 = vmatprep.mubr.bf16.mxu0 0
      %7242 = vmatmul.mubr.bf16.gmra.mrb[0].mxu0 %v7004
      %v7243 = vpop.f32.mrb[0].mxu0
      %v7244 = vadd.f32 %v6905, %v7243
      %v7245 = vpop.f32.mrb[0].mxu0
      %v7246 = vpop.f32.mrb[0].mxu0
      %v7247 = vadd.f32 %v6906, %v7246
      %v7248 = vpop.f32.mrb[0].mxu0
      %7249 = vmatprep.mubr.bf16.mxu0 0
      %7250 = vmatmul.mubr.bf16.gmra.mrb[0].mxu0 %v7007
      %v7251 = vpop.f32.mrb[0].mxu0
      %v7252 = vadd.f32 %v6907, %v7251
      %v7253 = vpop.f32.mrb[0].mxu0
      %v7254 = vpop.f32.mrb[0].mxu0
      %v7255 = vadd.f32 %v6908, %v7254
      %v7256 = vpop.f32.mrb[0].mxu0
      %7257 = vmatprep.mubr.bf16.mxu0 0
      %7258 = vmatmul.mubr.bf16.gmra.mrb[0].mxu0 %v7010
      %v7259 = vpop.f32.mrb[0].mxu0
      %v7260 = vadd.f32 %v6909, %v7259
      %v7261 = vpop.f32.mrb[0].mxu0
      %v7262 = vpop.f32.mrb[0].mxu0
      %v7263 = vadd.f32 %v6910, %v7262
      %v7264 = vpop.f32.mrb[0].mxu0
      %7265 = vmatprep.mubr.bf16.mxu0 0
      %7266 = vmatmul.mubr.bf16.gmra.mrb[0].mxu0 %v7013
      %v7267 = vpop.f32.mrb[0].mxu0
      %v7268 = vadd.f32 %v6911, %v7267
      %v7269 = vpop.f32.mrb[0].mxu0
      %v7270 = vpop.f32.mrb[0].mxu0
      %v7271 = vadd.f32 %v6912, %v7270
      %v7272 = vpop.f32.mrb[0].mxu0
      %7273 = vmatprep.mubr.bf16.mxu0 0
      %7274 = vmatmul.mubr.bf16.gmra.mrb[0].mxu0 %v7016
      %v7275 = vpop.f32.mrb[0].mxu0
      %v7276 = vadd.f32 %v6913, %v7275
      %v7277 = vpop.f32.mrb[0].mxu0
      %v7278 = vpop.f32.mrb[0].mxu0
      %v7279 = vadd.f32 %v6914, %v7278
      %v7280 = vpop.f32.mrb[0].mxu0
      %7281 = vmatprep.mubr.bf16.mxu0 0
      %7282 = vmatmul.mubr.bf16.gmra.mrb[0].mxu0 %v7019
      %v7283 = vpop.f32.mrb[0].mxu0
      %v7284 = vadd.f32 %v6915, %v7283
      %v7285 = vpop.f32.mrb[0].mxu0
      %v7286 = vpop.f32.mrb[0].mxu0
      %v7287 = vadd.f32 %v6916, %v7286
      %v7288 = vpop.f32.mrb[0].mxu0
      %7289 = vmatprep.mubr.bf16.mxu0 0
      %7290 = vmatmul.mubr.bf16.gmra.mrb[0].mxu0 %v7022
      %v7291 = vpop.f32.mrb[0].mxu0
      %v7292 = vadd.f32 %v6917, %v7291
      %v7293 = vpop.f32.mrb[0].mxu0
      %v7294 = vpop.f32.mrb[0].mxu0
      %v7295 = vadd.f32 %v6918, %v7294
      %v7296 = vpop.f32.mrb[0].mxu0
      %7297 = vmatprep.mubr.bf16.mxu0 0
      %7298 = vmatmul.mubr.bf16.gmra.mrb[0].mxu0 %v7025
      %v7299 = vpop.f32.mrb[0].mxu0
      %v7300 = vadd.f32 %v6919, %v7299
      %v7301 = vpop.f32.mrb[0].mxu0
      %v7302 = vpop.f32.mrb[0].mxu0
      %v7303 = vadd.f32 %v6920, %v7302
      %v7304 = vpop.f32.mrb[0].mxu0
      %7305 = vmatprep.mubr.bf16.mxu0 0
      %7306 = vmatmul.mubr.bf16.gmra.mrb[0].mxu0 %v7028
      %v7307 = vpop.f32.mrb[0].mxu0
      %v7308 = vadd.f32 %v6921, %v7307
      %v7309 = vpop.f32.mrb[0].mxu0
      %v7310 = vpop.f32.mrb[0].mxu0
      %v7311 = vadd.f32 %v6922, %v7310
      %v7312 = vpop.f32.mrb[0].mxu0
      %7313 = vmatprep.mubr.bf16.mxu0 0
      %7314 = vmatmul.mubr.bf16.gmra.mrb[0].mxu0 %v7031
      %v7315 = vpop.f32.mrb[0].mxu0
      %v7316 = vadd.f32 %v6923, %v7315
      %v7317 = vpop.f32.mrb[0].mxu0
      %v7318 = vpop.f32.mrb[0].mxu0
      %v7319 = vadd.f32 %v6924, %v7318
      %v7320 = vpop.f32.mrb[0].mxu0
      %7321 = vdwg.mxu0
      %7322 = vset.pattern.permute.xlu0 4
      %7323 = vperm.xlu0 %7322, %v769
      %v7324 = vpop.permute.xlu0 %7323
      %7326 = vset.pattern.permute.xlu0 4
      %7327 = vperm.xlu0 %7326, %v770
      %v7328 = vpop.permute.xlu0 %7327
      %7330 = vset.pattern.permute.xlu0 4
      %7331 = vperm.xlu0 %7330, %v771
      %v7332 = vpop.permute.xlu0 %7331
      %7334 = vset.pattern.permute.xlu0 4
      %7335 = vperm.xlu0 %7334, %v772
      %v7336 = vpop.permute.xlu0 %7335
      %7338 = vset.pattern.permute.xlu0 4
      %7339 = vperm.xlu0 %7338, %v773
      %v7340 = vpop.permute.xlu0 %7339
      %7342 = vset.pattern.permute.xlu0 4
      %7343 = vperm.xlu0 %7342, %v774
      %v7344 = vpop.permute.xlu0 %7343
      %7346 = vset.pattern.permute.xlu0 4
      %7347 = vperm.xlu0 %7346, %v775
      %v7348 = vpop.permute.xlu0 %7347
      %7350 = vset.pattern.permute.xlu0 4
      %7351 = vperm.xlu0 %7350, %v776
      %v7352 = vpop.permute.xlu0 %7351
      %7354 = vset.pattern.permute.xlu0 4
      %7355 = vperm.xlu0 %7354, %v777
      %v7356 = vpop.permute.xlu0 %7355
      %7358 = vset.pattern.permute.xlu0 4
      %7359 = vperm.xlu0 %7358, %v778
      %v7360 = vpop.permute.xlu0 %7359
      %7362 = vset.pattern.permute.xlu0 4
      %7363 = vperm.xlu0 %7362, %v779
      %v7364 = vpop.permute.xlu0 %7363
      %7366 = vset.pattern.permute.xlu0 4
      %7367 = vperm.xlu0 %7366, %v780
      %v7368 = vpop.permute.xlu0 %7367
      %7370 = vset.pattern.permute.xlu0 4
      %7371 = vperm.xlu0 %7370, %v781
      %v7372 = vpop.permute.xlu0 %7371
      %7374 = vset.pattern.permute.xlu0 4
      %7375 = vperm.xlu0 %7374, %v782
      %v7376 = vpop.permute.xlu0 %7375
      %7378 = vset.pattern.permute.xlu0 4
      %7379 = vperm.xlu0 %7378, %v783
      %v7380 = vpop.permute.xlu0 %7379
      %7382 = vset.pattern.permute.xlu0 4
      %7383 = vperm.xlu0 %7382, %v784
      %v7384 = vpop.permute.xlu0 %7383
      %7386 = vset.pattern.permute.xlu0 4
      %7387 = vperm.xlu0 %7386, %v785
      %v7388 = vpop.permute.xlu0 %7387
      %7390 = vset.pattern.permute.xlu0 4
      %7391 = vperm.xlu0 %7390, %v786
      %v7392 = vpop.permute.xlu0 %7391
      %7394 = vset.pattern.permute.xlu0 4
      %7395 = vperm.xlu0 %7394, %v787
      %v7396 = vpop.permute.xlu0 %7395
      %7398 = vset.pattern.permute.xlu0 4
      %7399 = vperm.xlu0 %7398, %v788
      %v7400 = vpop.permute.xlu0 %7399
      %7402 = vset.pattern.permute.xlu0 4
      %7403 = vperm.xlu0 %7402, %v789
      %v7404 = vpop.permute.xlu0 %7403
      %7406 = vset.pattern.permute.xlu0 4
      %7407 = vperm.xlu0 %7406, %v790
      %v7408 = vpop.permute.xlu0 %7407
      %7410 = vset.pattern.permute.xlu0 4
      %7411 = vperm.xlu0 %7410, %v791
      %v7412 = vpop.permute.xlu0 %7411
      %7414 = vset.pattern.permute.xlu0 4
      %7415 = vperm.xlu0 %7414, %v792
      %v7416 = vpop.permute.xlu0 %7415
      %7418 = vset.pattern.permute.xlu0 4
      %7419 = vperm.xlu0 %7418, %v793
      %v7420 = vpop.permute.xlu0 %7419
      %7422 = vset.pattern.permute.xlu0 4
      %7423 = vperm.xlu0 %7422, %v794
      %v7424 = vpop.permute.xlu0 %7423
      %7426 = vset.pattern.permute.xlu0 4
      %7427 = vperm.xlu0 %7426, %v795
      %v7428 = vpop.permute.xlu0 %7427
      %7430 = vset.pattern.permute.xlu0 4
      %7431 = vperm.xlu0 %7430, %v796
      %v7432 = vpop.permute.xlu0 %7431
      %7434 = vset.pattern.permute.xlu0 4
      %7435 = vperm.xlu0 %7434, %v797
      %v7436 = vpop.permute.xlu0 %7435
      %7438 = vset.pattern.permute.xlu0 4
      %7439 = vperm.xlu0 %7438, %v798
      %v7440 = vpop.permute.xlu0 %7439
      %7442 = vset.pattern.permute.xlu0 4
      %7443 = vperm.xlu0 %7442, %v799
      %v7444 = vpop.permute.xlu0 %7443
      %7446 = vset.pattern.permute.xlu0 4
      %7447 = vperm.xlu0 %7446, %v800
      %v7448 = vpop.permute.xlu0 %7447
      %7450 = vset.pattern.permute.xlu0 4
      %7451 = vperm.xlu0 %7450, %v801
      %v7452 = vpop.permute.xlu0 %7451
      %7454 = vset.pattern.permute.xlu0 4
      %7455 = vperm.xlu0 %7454, %v802
      %v7456 = vpop.permute.xlu0 %7455
      %7458 = vset.pattern.permute.xlu0 4
      %7459 = vperm.xlu0 %7458, %v803
      %v7460 = vpop.permute.xlu0 %7459
      %7462 = vset.pattern.permute.xlu0 4
      %7463 = vperm.xlu0 %7462, %v804
      %v7464 = vpop.permute.xlu0 %7463
      %7466 = vset.pattern.permute.xlu0 4
      %7467 = vperm.xlu0 %7466, %v805
      %v7468 = vpop.permute.xlu0 %7467
      %7470 = vset.pattern.permute.xlu0 4
      %7471 = vperm.xlu0 %7470, %v806
      %v7472 = vpop.permute.xlu0 %7471
      %7474 = vset.pattern.permute.xlu0 4
      %7475 = vperm.xlu0 %7474, %v807
      %v7476 = vpop.permute.xlu0 %7475
      %7478 = vset.pattern.permute.xlu0 4
      %7479 = vperm.xlu0 %7478, %v808
      %v7480 = vpop.permute.xlu0 %7479
      %7482 = vset.pattern.permute.xlu0 4
      %7483 = vperm.xlu0 %7482, %v809
      %v7484 = vpop.permute.xlu0 %7483
      %7486 = vset.pattern.permute.xlu0 4
      %7487 = vperm.xlu0 %7486, %v810
      %v7488 = vpop.permute.xlu0 %7487
      %7490 = vset.pattern.permute.xlu0 4
      %7491 = vperm.xlu0 %7490, %v811
      %v7492 = vpop.permute.xlu0 %7491
      %7494 = vset.pattern.permute.xlu0 4
      %7495 = vperm.xlu0 %7494, %v812
      %v7496 = vpop.permute.xlu0 %7495
      %7498 = vset.pattern.permute.xlu0 4
      %7499 = vperm.xlu0 %7498, %v813
      %v7500 = vpop.permute.xlu0 %7499
      %7502 = vset.pattern.permute.xlu0 4
      %7503 = vperm.xlu0 %7502, %v814
      %v7504 = vpop.permute.xlu0 %7503
      %7506 = vset.pattern.permute.xlu0 4
      %7507 = vperm.xlu0 %7506, %v815
      %v7508 = vpop.permute.xlu0 %7507
      %7510 = vset.pattern.permute.xlu0 4
      %7511 = vperm.xlu0 %7510, %v816
      %v7512 = vpop.permute.xlu0 %7511
      %7514 = vset.pattern.permute.xlu0 4
      %7515 = vperm.xlu0 %7514, %v817
      %v7516 = vpop.permute.xlu0 %7515
      %7518 = vset.pattern.permute.xlu0 4
      %7519 = vperm.xlu0 %7518, %v818
      %v7520 = vpop.permute.xlu0 %7519
      %7522 = vset.pattern.permute.xlu0 4
      %7523 = vperm.xlu0 %7522, %v819
      %v7524 = vpop.permute.xlu0 %7523
      %7526 = vset.pattern.permute.xlu0 4
      %7527 = vperm.xlu0 %7526, %v820
      %v7528 = vpop.permute.xlu0 %7527
      %7530 = vset.pattern.permute.xlu0 4
      %7531 = vperm.xlu0 %7530, %v821
      %v7532 = vpop.permute.xlu0 %7531
      %7534 = vset.pattern.permute.xlu0 4
      %7535 = vperm.xlu0 %7534, %v822
      %v7536 = vpop.permute.xlu0 %7535
      %7538 = vset.pattern.permute.xlu0 4
      %7539 = vperm.xlu0 %7538, %v823
      %v7540 = vpop.permute.xlu0 %7539
      %7542 = vset.pattern.permute.xlu0 4
      %7543 = vperm.xlu0 %7542, %v824
      %v7544 = vpop.permute.xlu0 %7543
      %7546 = vset.pattern.permute.xlu0 4
      %7547 = vperm.xlu0 %7546, %v825
      %v7548 = vpop.permute.xlu0 %7547
      %7550 = vset.pattern.permute.xlu0 4
      %7551 = vperm.xlu0 %7550, %v826
      %v7552 = vpop.permute.xlu0 %7551
      %7554 = vset.pattern.permute.xlu0 4
      %7555 = vperm.xlu0 %7554, %v827
      %v7556 = vpop.permute.xlu0 %7555
      %7558 = vset.pattern.permute.xlu0 4
      %7559 = vperm.xlu0 %7558, %v828
      %v7560 = vpop.permute.xlu0 %7559
      %7562 = vset.pattern.permute.xlu0 4
      %7563 = vperm.xlu0 %7562, %v829
      %v7564 = vpop.permute.xlu0 %7563
      %7566 = vset.pattern.permute.xlu0 4
      %7567 = vperm.xlu0 %7566, %v830
      %v7568 = vpop.permute.xlu0 %7567
      %7570 = vset.pattern.permute.xlu0 4
      %7571 = vperm.xlu0 %7570, %v831
      %v7572 = vpop.permute.xlu0 %7571
      %7574 = vset.pattern.permute.xlu0 4
      %7575 = vperm.xlu0 %7574, %v832
      %v7576 = vpop.permute.xlu0 %7575
      %v7578 = vlaneseq
      %v7579 = vshrl.u32 %v7578, 7
      %v7580 = vsub.s32 1, %v7579
      %v7581 = vrot.slane %v6567, %v7580
      %v7582 = vmul.f32 %v7324, %v7581
      %v7583 = vmul.f32 %v7328, %v7581
      %v7584 = vmul.f32 %v7332, %v7581
      %v7585 = vmul.f32 %v7336, %v7581
      %v7586 = vmul.f32 %v7340, %v7581
      %v7587 = vmul.f32 %v7344, %v7581
      %v7588 = vmul.f32 %v7348, %v7581
      %v7589 = vmul.f32 %v7352, %v7581
      %v7590 = vmul.f32 %v7356, %v7581
      %v7591 = vmul.f32 %v7360, %v7581
      %v7592 = vmul.f32 %v7364, %v7581
      %v7593 = vmul.f32 %v7368, %v7581
      %v7594 = vmul.f32 %v7372, %v7581
      %v7595 = vmul.f32 %v7376, %v7581
      %v7596 = vmul.f32 %v7380, %v7581
      %v7597 = vmul.f32 %v7384, %v7581
      %v7598 = vmul.f32 %v7388, %v7581
      %v7599 = vmul.f32 %v7392, %v7581
      %v7600 = vmul.f32 %v7396, %v7581
      %v7601 = vmul.f32 %v7400, %v7581
      %v7602 = vmul.f32 %v7404, %v7581
      %v7603 = vmul.f32 %v7408, %v7581
      %v7604 = vmul.f32 %v7412, %v7581
      %v7605 = vmul.f32 %v7416, %v7581
      %v7606 = vmul.f32 %v7420, %v7581
      %v7607 = vmul.f32 %v7424, %v7581
      %v7608 = vmul.f32 %v7428, %v7581
      %v7609 = vmul.f32 %v7432, %v7581
      %v7610 = vmul.f32 %v7436, %v7581
      %v7611 = vmul.f32 %v7440, %v7581
      %v7612 = vmul.f32 %v7444, %v7581
      %v7613 = vmul.f32 %v7448, %v7581
      %v7614 = vmul.f32 %v7452, %v7581
      %v7615 = vmul.f32 %v7456, %v7581
      %v7616 = vmul.f32 %v7460, %v7581
      %v7617 = vmul.f32 %v7464, %v7581
      %v7618 = vmul.f32 %v7468, %v7581
      %v7619 = vmul.f32 %v7472, %v7581
      %v7620 = vmul.f32 %v7476, %v7581
      %v7621 = vmul.f32 %v7480, %v7581
      %v7622 = vmul.f32 %v7484, %v7581
      %v7623 = vmul.f32 %v7488, %v7581
      %v7624 = vmul.f32 %v7492, %v7581
      %v7625 = vmul.f32 %v7496, %v7581
      %v7626 = vmul.f32 %v7500, %v7581
      %v7627 = vmul.f32 %v7504, %v7581
      %v7628 = vmul.f32 %v7508, %v7581
      %v7629 = vmul.f32 %v7512, %v7581
      %v7630 = vmul.f32 %v7516, %v7581
      %v7631 = vmul.f32 %v7520, %v7581
      %v7632 = vmul.f32 %v7524, %v7581
      %v7633 = vmul.f32 %v7528, %v7581
      %v7634 = vmul.f32 %v7532, %v7581
      %v7635 = vmul.f32 %v7536, %v7581
      %v7636 = vmul.f32 %v7540, %v7581
      %v7637 = vmul.f32 %v7544, %v7581
      %v7638 = vmul.f32 %v7548, %v7581
      %v7639 = vmul.f32 %v7552, %v7581
      %v7640 = vmul.f32 %v7556, %v7581
      %v7641 = vmul.f32 %v7560, %v7581
      %v7642 = vmul.f32 %v7564, %v7581
      %v7643 = vmul.f32 %v7568, %v7581
      %v7644 = vmul.f32 %v7572, %v7581
      %v7645 = vmul.f32 %v7576, %v7581
      %v7646 = vadd.f32 %v7068, %v7582
      %v7647 = vadd.f32 %v7071, %v7583
      %v7648 = vadd.f32 %v7076, %v7584
      %v7649 = vadd.f32 %v7079, %v7585
      %v7650 = vadd.f32 %v7084, %v7586
      %v7651 = vadd.f32 %v7087, %v7587
      %v7652 = vadd.f32 %v7092, %v7588
      %v7653 = vadd.f32 %v7095, %v7589
      %v7654 = vadd.f32 %v7100, %v7590
      %v7655 = vadd.f32 %v7103, %v7591
      %v7656 = vadd.f32 %v7108, %v7592
      %v7657 = vadd.f32 %v7111, %v7593
      %v7658 = vadd.f32 %v7116, %v7594
      %v7659 = vadd.f32 %v7119, %v7595
      %v7660 = vadd.f32 %v7124, %v7596
      %v7661 = vadd.f32 %v7127, %v7597
      %v7662 = vadd.f32 %v7132, %v7598
      %v7663 = vadd.f32 %v7135, %v7599
      %v7664 = vadd.f32 %v7140, %v7600
      %v7665 = vadd.f32 %v7143, %v7601
      %v7666 = vadd.f32 %v7148, %v7602
      %v7667 = vadd.f32 %v7151, %v7603
      %v7668 = vadd.f32 %v7156, %v7604
      %v7669 = vadd.f32 %v7159, %v7605
      %v7670 = vadd.f32 %v7164, %v7606
      %v7671 = vadd.f32 %v7167, %v7607
      %v7672 = vadd.f32 %v7172, %v7608
      %v7673 = vadd.f32 %v7175, %v7609
      %v7674 = vadd.f32 %v7180, %v7610
      %v7675 = vadd.f32 %v7183, %v7611
      %v7676 = vadd.f32 %v7188, %v7612
      %v7677 = vadd.f32 %v7191, %v7613
      %v7678 = vadd.f32 %v7196, %v7614
      %v7679 = vadd.f32 %v7199, %v7615
      %v7680 = vadd.f32 %v7204, %v7616
      %v7681 = vadd.f32 %v7207, %v7617
      %v7682 = vadd.f32 %v7212, %v7618
      %v7683 = vadd.f32 %v7215, %v7619
      %v7684 = vadd.f32 %v7220, %v7620
      %v7685 = vadd.f32 %v7223, %v7621
      %v7686 = vadd.f32 %v7228, %v7622
      %v7687 = vadd.f32 %v7231, %v7623
      %v7688 = vadd.f32 %v7236, %v7624
      %v7689 = vadd.f32 %v7239, %v7625
      %v7690 = vadd.f32 %v7244, %v7626
      %v7691 = vadd.f32 %v7247, %v7627
      %v7692 = vadd.f32 %v7252, %v7628
      %v7693 = vadd.f32 %v7255, %v7629
      %v7694 = vadd.f32 %v7260, %v7630
      %v7695 = vadd.f32 %v7263, %v7631
      %v7696 = vadd.f32 %v7268, %v7632
      %v7697 = vadd.f32 %v7271, %v7633
      %v7698 = vadd.f32 %v7276, %v7634
      %v7699 = vadd.f32 %v7279, %v7635
      %v7700 = vadd.f32 %v7284, %v7636
      %v7701 = vadd.f32 %v7287, %v7637
      %v7702 = vadd.f32 %v7292, %v7638
      %v7703 = vadd.f32 %v7295, %v7639
      %v7704 = vadd.f32 %v7300, %v7640
      %v7705 = vadd.f32 %v7303, %v7641
      %v7706 = vadd.f32 %v7308, %v7642
      %v7707 = vadd.f32 %v7311, %v7643
      %v7708 = vadd.f32 %v7316, %v7644
      %v7709 = vadd.f32 %v7319, %v7645
      %7710 = vset.pattern.permute.xlu0 5
      %7711 = vperm.xlu0 %7710, %v769
      %v7712 = vpop.permute.xlu0 %7711
      %7714 = vset.pattern.permute.xlu0 5
      %7715 = vperm.xlu0 %7714, %v770
      %v7716 = vpop.permute.xlu0 %7715
      %7718 = vset.pattern.permute.xlu0 5
      %7719 = vperm.xlu0 %7718, %v771
      %v7720 = vpop.permute.xlu0 %7719
      %7722 = vset.pattern.permute.xlu0 5
      %7723 = vperm.xlu0 %7722, %v772
      %v7724 = vpop.permute.xlu0 %7723
      %7726 = vset.pattern.permute.xlu0 5
      %7727 = vperm.xlu0 %7726, %v773
      %v7728 = vpop.permute.xlu0 %7727
      %7730 = vset.pattern.permute.xlu0 5
      %7731 = vperm.xlu0 %7730, %v774
      %v7732 = vpop.permute.xlu0 %7731
      %7734 = vset.pattern.permute.xlu0 5
      %7735 = vperm.xlu0 %7734, %v775
      %v7736 = vpop.permute.xlu0 %7735
      %7738 = vset.pattern.permute.xlu0 5
      %7739 = vperm.xlu0 %7738, %v776
      %v7740 = vpop.permute.xlu0 %7739
      %7742 = vset.pattern.permute.xlu0 5
      %7743 = vperm.xlu0 %7742, %v777
      %v7744 = vpop.permute.xlu0 %7743
      %7746 = vset.pattern.permute.xlu0 5
      %7747 = vperm.xlu0 %7746, %v778
      %v7748 = vpop.permute.xlu0 %7747
      %7750 = vset.pattern.permute.xlu0 5
      %7751 = vperm.xlu0 %7750, %v779
      %v7752 = vpop.permute.xlu0 %7751
      %7754 = vset.pattern.permute.xlu0 5
      %7755 = vperm.xlu0 %7754, %v780
      %v7756 = vpop.permute.xlu0 %7755
      %7758 = vset.pattern.permute.xlu0 5
      %7759 = vperm.xlu0 %7758, %v781
      %v7760 = vpop.permute.xlu0 %7759
      %7762 = vset.pattern.permute.xlu0 5
      %7763 = vperm.xlu0 %7762, %v782
      %v7764 = vpop.permute.xlu0 %7763
      %7766 = vset.pattern.permute.xlu0 5
      %7767 = vperm.xlu0 %7766, %v783
      %v7768 = vpop.permute.xlu0 %7767
      %7770 = vset.pattern.permute.xlu0 5
      %7771 = vperm.xlu0 %7770, %v784
      %v7772 = vpop.permute.xlu0 %7771
      %7774 = vset.pattern.permute.xlu0 5
      %7775 = vperm.xlu0 %7774, %v785
      %v7776 = vpop.permute.xlu0 %7775
      %7778 = vset.pattern.permute.xlu0 5
      %7779 = vperm.xlu0 %7778, %v786
      %v7780 = vpop.permute.xlu0 %7779
      %7782 = vset.pattern.permute.xlu0 5
      %7783 = vperm.xlu0 %7782, %v787
      %v7784 = vpop.permute.xlu0 %7783
      %7786 = vset.pattern.permute.xlu0 5
      %7787 = vperm.xlu0 %7786, %v788
      %v7788 = vpop.permute.xlu0 %7787
      %7790 = vset.pattern.permute.xlu0 5
      %7791 = vperm.xlu0 %7790, %v789
      %v7792 = vpop.permute.xlu0 %7791
      %7794 = vset.pattern.permute.xlu0 5
      %7795 = vperm.xlu0 %7794, %v790
      %v7796 = vpop.permute.xlu0 %7795
      %7798 = vset.pattern.permute.xlu0 5
      %7799 = vperm.xlu0 %7798, %v791
      %v7800 = vpop.permute.xlu0 %7799
      %7802 = vset.pattern.permute.xlu0 5
      %7803 = vperm.xlu0 %7802, %v792
      %v7804 = vpop.permute.xlu0 %7803
      %7806 = vset.pattern.permute.xlu0 5
      %7807 = vperm.xlu0 %7806, %v793
      %v7808 = vpop.permute.xlu0 %7807
      %7810 = vset.pattern.permute.xlu0 5
      %7811 = vperm.xlu0 %7810, %v794
      %v7812 = vpop.permute.xlu0 %7811
      %7814 = vset.pattern.permute.xlu0 5
      %7815 = vperm.xlu0 %7814, %v795
      %v7816 = vpop.permute.xlu0 %7815
      %7818 = vset.pattern.permute.xlu0 5
      %7819 = vperm.xlu0 %7818, %v796
      %v7820 = vpop.permute.xlu0 %7819
      %7822 = vset.pattern.permute.xlu0 5
      %7823 = vperm.xlu0 %7822, %v797
      %v7824 = vpop.permute.xlu0 %7823
      %7826 = vset.pattern.permute.xlu0 5
      %7827 = vperm.xlu0 %7826, %v798
      %v7828 = vpop.permute.xlu0 %7827
      %7830 = vset.pattern.permute.xlu0 5
      %7831 = vperm.xlu0 %7830, %v799
      %v7832 = vpop.permute.xlu0 %7831
      %7834 = vset.pattern.permute.xlu0 5
      %7835 = vperm.xlu0 %7834, %v800
      %v7836 = vpop.permute.xlu0 %7835
      %7838 = vset.pattern.permute.xlu0 5
      %7839 = vperm.xlu0 %7838, %v801
      %v7840 = vpop.permute.xlu0 %7839
      %7842 = vset.pattern.permute.xlu0 5
      %7843 = vperm.xlu0 %7842, %v802
      %v7844 = vpop.permute.xlu0 %7843
      %7846 = vset.pattern.permute.xlu0 5
      %7847 = vperm.xlu0 %7846, %v803
      %v7848 = vpop.permute.xlu0 %7847
      %7850 = vset.pattern.permute.xlu0 5
      %7851 = vperm.xlu0 %7850, %v804
      %v7852 = vpop.permute.xlu0 %7851
      %7854 = vset.pattern.permute.xlu0 5
      %7855 = vperm.xlu0 %7854, %v805
      %v7856 = vpop.permute.xlu0 %7855
      %7858 = vset.pattern.permute.xlu0 5
      %7859 = vperm.xlu0 %7858, %v806
      %v7860 = vpop.permute.xlu0 %7859
      %7862 = vset.pattern.permute.xlu0 5
      %7863 = vperm.xlu0 %7862, %v807
      %v7864 = vpop.permute.xlu0 %7863
      %7866 = vset.pattern.permute.xlu0 5
      %7867 = vperm.xlu0 %7866, %v808
      %v7868 = vpop.permute.xlu0 %7867
      %7870 = vset.pattern.permute.xlu0 5
      %7871 = vperm.xlu0 %7870, %v809
      %v7872 = vpop.permute.xlu0 %7871
      %7874 = vset.pattern.permute.xlu0 5
      %7875 = vperm.xlu0 %7874, %v810
      %v7876 = vpop.permute.xlu0 %7875
      %7878 = vset.pattern.permute.xlu0 5
      %7879 = vperm.xlu0 %7878, %v811
      %v7880 = vpop.permute.xlu0 %7879
      %7882 = vset.pattern.permute.xlu0 5
      %7883 = vperm.xlu0 %7882, %v812
      %v7884 = vpop.permute.xlu0 %7883
      %7886 = vset.pattern.permute.xlu0 5
      %7887 = vperm.xlu0 %7886, %v813
      %v7888 = vpop.permute.xlu0 %7887
      %7890 = vset.pattern.permute.xlu0 5
      %7891 = vperm.xlu0 %7890, %v814
      %v7892 = vpop.permute.xlu0 %7891
      %7894 = vset.pattern.permute.xlu0 5
      %7895 = vperm.xlu0 %7894, %v815
      %v7896 = vpop.permute.xlu0 %7895
      %7898 = vset.pattern.permute.xlu0 5
      %7899 = vperm.xlu0 %7898, %v816
      %v7900 = vpop.permute.xlu0 %7899
      %7902 = vset.pattern.permute.xlu0 5
      %7903 = vperm.xlu0 %7902, %v817
      %v7904 = vpop.permute.xlu0 %7903
      %7906 = vset.pattern.permute.xlu0 5
      %7907 = vperm.xlu0 %7906, %v818
      %v7908 = vpop.permute.xlu0 %7907
      %7910 = vset.pattern.permute.xlu0 5
      %7911 = vperm.xlu0 %7910, %v819
      %v7912 = vpop.permute.xlu0 %7911
      %7914 = vset.pattern.permute.xlu0 5
      %7915 = vperm.xlu0 %7914, %v820
      %v7916 = vpop.permute.xlu0 %7915
      %7918 = vset.pattern.permute.xlu0 5
      %7919 = vperm.xlu0 %7918, %v821
      %v7920 = vpop.permute.xlu0 %7919
      %7922 = vset.pattern.permute.xlu0 5
      %7923 = vperm.xlu0 %7922, %v822
      %v7924 = vpop.permute.xlu0 %7923
      %7926 = vset.pattern.permute.xlu0 5
      %7927 = vperm.xlu0 %7926, %v823
      %v7928 = vpop.permute.xlu0 %7927
      %7930 = vset.pattern.permute.xlu0 5
      %7931 = vperm.xlu0 %7930, %v824
      %v7932 = vpop.permute.xlu0 %7931
      %7934 = vset.pattern.permute.xlu0 5
      %7935 = vperm.xlu0 %7934, %v825
      %v7936 = vpop.permute.xlu0 %7935
      %7938 = vset.pattern.permute.xlu0 5
      %7939 = vperm.xlu0 %7938, %v826
      %v7940 = vpop.permute.xlu0 %7939
      %7942 = vset.pattern.permute.xlu0 5
      %7943 = vperm.xlu0 %7942, %v827
      %v7944 = vpop.permute.xlu0 %7943
      %7946 = vset.pattern.permute.xlu0 5
      %7947 = vperm.xlu0 %7946, %v828
      %v7948 = vpop.permute.xlu0 %7947
      %7950 = vset.pattern.permute.xlu0 5
      %7951 = vperm.xlu0 %7950, %v829
      %v7952 = vpop.permute.xlu0 %7951
      %7954 = vset.pattern.permute.xlu0 5
      %7955 = vperm.xlu0 %7954, %v830
      %v7956 = vpop.permute.xlu0 %7955
      %7958 = vset.pattern.permute.xlu0 5
      %7959 = vperm.xlu0 %7958, %v831
      %v7960 = vpop.permute.xlu0 %7959
      %7962 = vset.pattern.permute.xlu0 5
      %7963 = vperm.xlu0 %7962, %v832
      %v7964 = vpop.permute.xlu0 %7963
      %v7966 = vlaneseq
      %v7967 = vshrl.u32 %v7966, 7
      %v7968 = vsub.s32 2, %v7967
      %v7969 = vrot.slane %v6567, %v7968
      %v7970 = vmul.f32 %v7712, %v7969
      %v7971 = vmul.f32 %v7716, %v7969
      %v7972 = vmul.f32 %v7720, %v7969
      %v7973 = vmul.f32 %v7724, %v7969
      %v7974 = vmul.f32 %v7728, %v7969
      %v7975 = vmul.f32 %v7732, %v7969
      %v7976 = vmul.f32 %v7736, %v7969
      %v7977 = vmul.f32 %v7740, %v7969
      %v7978 = vmul.f32 %v7744, %v7969
      %v7979 = vmul.f32 %v7748, %v7969
      %v7980 = vmul.f32 %v7752, %v7969
      %v7981 = vmul.f32 %v7756, %v7969
      %v7982 = vmul.f32 %v7760, %v7969
      %v7983 = vmul.f32 %v7764, %v7969
      %v7984 = vmul.f32 %v7768, %v7969
      %v7985 = vmul.f32 %v7772, %v7969
      %v7986 = vmul.f32 %v7776, %v7969
      %v7987 = vmul.f32 %v7780, %v7969
      %v7988 = vmul.f32 %v7784, %v7969
      %v7989 = vmul.f32 %v7788, %v7969
      %v7990 = vmul.f32 %v7792, %v7969
      %v7991 = vmul.f32 %v7796, %v7969
      %v7992 = vmul.f32 %v7800, %v7969
      %v7993 = vmul.f32 %v7804, %v7969
      %v7994 = vmul.f32 %v7808, %v7969
      %v7995 = vmul.f32 %v7812, %v7969
      %v7996 = vmul.f32 %v7816, %v7969
      %v7997 = vmul.f32 %v7820, %v7969
      %v7998 = vmul.f32 %v7824, %v7969
      %v7999 = vmul.f32 %v7828, %v7969
      %v8000 = vmul.f32 %v7832, %v7969
      %v8001 = vmul.f32 %v7836, %v7969
      %v8002 = vmul.f32 %v7840, %v7969
      %v8003 = vmul.f32 %v7844, %v7969
      %v8004 = vmul.f32 %v7848, %v7969
      %v8005 = vmul.f32 %v7852, %v7969
      %v8006 = vmul.f32 %v7856, %v7969
      %v8007 = vmul.f32 %v7860, %v7969
      %v8008 = vmul.f32 %v7864, %v7969
      %v8009 = vmul.f32 %v7868, %v7969
      %v8010 = vmul.f32 %v7872, %v7969
      %v8011 = vmul.f32 %v7876, %v7969
      %v8012 = vmul.f32 %v7880, %v7969
      %v8013 = vmul.f32 %v7884, %v7969
      %v8014 = vmul.f32 %v7888, %v7969
      %v8015 = vmul.f32 %v7892, %v7969
      %v8016 = vmul.f32 %v7896, %v7969
      %v8017 = vmul.f32 %v7900, %v7969
      %v8018 = vmul.f32 %v7904, %v7969
      %v8019 = vmul.f32 %v7908, %v7969
      %v8020 = vmul.f32 %v7912, %v7969
      %v8021 = vmul.f32 %v7916, %v7969
      %v8022 = vmul.f32 %v7920, %v7969
      %v8023 = vmul.f32 %v7924, %v7969
      %v8024 = vmul.f32 %v7928, %v7969
      %v8025 = vmul.f32 %v7932, %v7969
      %v8026 = vmul.f32 %v7936, %v7969
      %v8027 = vmul.f32 %v7940, %v7969
      %v8028 = vmul.f32 %v7944, %v7969
      %v8029 = vmul.f32 %v7948, %v7969
      %v8030 = vmul.f32 %v7952, %v7969
      %v8031 = vmul.f32 %v7956, %v7969
      %v8032 = vmul.f32 %v7960, %v7969
      %v8033 = vmul.f32 %v7964, %v7969
      %v8034 = vadd.f32 %v7646, %v7970
      %v8035 = vadd.f32 %v7647, %v7971
      %v8036 = vadd.f32 %v7648, %v7972
      %v8037 = vadd.f32 %v7649, %v7973
      %v8038 = vadd.f32 %v7650, %v7974
      %v8039 = vadd.f32 %v7651, %v7975
      %v8040 = vadd.f32 %v7652, %v7976
      %v8041 = vadd.f32 %v7653, %v7977
      %v8042 = vadd.f32 %v7654, %v7978
      %v8043 = vadd.f32 %v7655, %v7979
      %v8044 = vadd.f32 %v7656, %v7980
      %v8045 = vadd.f32 %v7657, %v7981
      %v8046 = vadd.f32 %v7658, %v7982
      %v8047 = vadd.f32 %v7659, %v7983
      %v8048 = vadd.f32 %v7660, %v7984
      %v8049 = vadd.f32 %v7661, %v7985
      %v8050 = vadd.f32 %v7662, %v7986
      %v8051 = vadd.f32 %v7663, %v7987
      %v8052 = vadd.f32 %v7664, %v7988
      %v8053 = vadd.f32 %v7665, %v7989
      %v8054 = vadd.f32 %v7666, %v7990
      %v8055 = vadd.f32 %v7667, %v7991
      %v8056 = vadd.f32 %v7668, %v7992
      %v8057 = vadd.f32 %v7669, %v7993
      %v8058 = vadd.f32 %v7670, %v7994
      %v8059 = vadd.f32 %v7671, %v7995
      %v8060 = vadd.f32 %v7672, %v7996
      %v8061 = vadd.f32 %v7673, %v7997
      %v8062 = vadd.f32 %v7674, %v7998
      %v8063 = vadd.f32 %v7675, %v7999
      %v8064 = vadd.f32 %v7676, %v8000
      %v8065 = vadd.f32 %v7677, %v8001
      %v8066 = vadd.f32 %v7678, %v8002
      %v8067 = vadd.f32 %v7679, %v8003
      %v8068 = vadd.f32 %v7680, %v8004
      %v8069 = vadd.f32 %v7681, %v8005
      %v8070 = vadd.f32 %v7682, %v8006
      %v8071 = vadd.f32 %v7683, %v8007
      %v8072 = vadd.f32 %v7684, %v8008
      %v8073 = vadd.f32 %v7685, %v8009
      %v8074 = vadd.f32 %v7686, %v8010
      %v8075 = vadd.f32 %v7687, %v8011
      %v8076 = vadd.f32 %v7688, %v8012
      %v8077 = vadd.f32 %v7689, %v8013
      %v8078 = vadd.f32 %v7690, %v8014
      %v8079 = vadd.f32 %v7691, %v8015
      %v8080 = vadd.f32 %v7692, %v8016
      %v8081 = vadd.f32 %v7693, %v8017
      %v8082 = vadd.f32 %v7694, %v8018
      %v8083 = vadd.f32 %v7695, %v8019
      %v8084 = vadd.f32 %v7696, %v8020
      %v8085 = vadd.f32 %v7697, %v8021
      %v8086 = vadd.f32 %v7698, %v8022
      %v8087 = vadd.f32 %v7699, %v8023
      %v8088 = vadd.f32 %v7700, %v8024
      %v8089 = vadd.f32 %v7701, %v8025
      %v8090 = vadd.f32 %v7702, %v8026
      %v8091 = vadd.f32 %v7703, %v8027
      %v8092 = vadd.f32 %v7704, %v8028
      %v8093 = vadd.f32 %v7705, %v8029
      %v8094 = vadd.f32 %v7706, %v8030
      %v8095 = vadd.f32 %v7707, %v8031
      %v8096 = vadd.f32 %v7708, %v8032
      %v8097 = vadd.f32 %v7709, %v8033
      %v8099 = vlaneseq
      %v8100 = vshrl.u32 %v8099, 7
      %v8101 = vsub.s32 0, %v8100
      %v8102 = vrot.slane %v6568, %v8101
      %v8104 = vadd.f32 %v8034, %v8102
      %v8105 = vadd.f32 %v8035, %v8102
      %v8106 = vadd.f32 %v8036, %v8102
      %v8107 = vadd.f32 %v8037, %v8102
      %v8108 = vadd.f32 %v8038, %v8102
      %v8109 = vadd.f32 %v8039, %v8102
      %v8110 = vadd.f32 %v8040, %v8102
      %v8111 = vadd.f32 %v8041, %v8102
      %v8112 = vadd.f32 %v8042, %v8102
      %v8113 = vadd.f32 %v8043, %v8102
      %v8114 = vadd.f32 %v8044, %v8102
      %v8115 = vadd.f32 %v8045, %v8102
      %v8116 = vadd.f32 %v8046, %v8102
      %v8117 = vadd.f32 %v8047, %v8102
      %v8118 = vadd.f32 %v8048, %v8102
      %v8119 = vadd.f32 %v8049, %v8102
      %v8120 = vadd.f32 %v8050, %v8102
      %v8121 = vadd.f32 %v8051, %v8102
      %v8122 = vadd.f32 %v8052, %v8102
      %v8123 = vadd.f32 %v8053, %v8102
      %v8124 = vadd.f32 %v8054, %v8102
      %v8125 = vadd.f32 %v8055, %v8102
      %v8126 = vadd.f32 %v8056, %v8102
      %v8127 = vadd.f32 %v8057, %v8102
      %v8128 = vadd.f32 %v8058, %v8102
      %v8129 = vadd.f32 %v8059, %v8102
      %v8130 = vadd.f32 %v8060, %v8102
      %v8131 = vadd.f32 %v8061, %v8102
      %v8132 = vadd.f32 %v8062, %v8102
      %v8133 = vadd.f32 %v8063, %v8102
      %v8134 = vadd.f32 %v8064, %v8102
      %v8135 = vadd.f32 %v8065, %v8102
      %v8136 = vadd.f32 %v8066, %v8102
      %v8137 = vadd.f32 %v8067, %v8102
      %v8138 = vadd.f32 %v8068, %v8102
      %v8139 = vadd.f32 %v8069, %v8102
      %v8140 = vadd.f32 %v8070, %v8102
      %v8141 = vadd.f32 %v8071, %v8102
      %v8142 = vadd.f32 %v8072, %v8102
      %v8143 = vadd.f32 %v8073, %v8102
      %v8144 = vadd.f32 %v8074, %v8102
      %v8145 = vadd.f32 %v8075, %v8102
      %v8146 = vadd.f32 %v8076, %v8102
      %v8147 = vadd.f32 %v8077, %v8102
      %v8148 = vadd.f32 %v8078, %v8102
      %v8149 = vadd.f32 %v8079, %v8102
      %v8150 = vadd.f32 %v8080, %v8102
      %v8151 = vadd.f32 %v8081, %v8102
      %v8152 = vadd.f32 %v8082, %v8102
      %v8153 = vadd.f32 %v8083, %v8102
      %v8154 = vadd.f32 %v8084, %v8102
      %v8155 = vadd.f32 %v8085, %v8102
      %v8156 = vadd.f32 %v8086, %v8102
      %v8157 = vadd.f32 %v8087, %v8102
      %v8158 = vadd.f32 %v8088, %v8102
      %v8159 = vadd.f32 %v8089, %v8102
      %v8160 = vadd.f32 %v8090, %v8102
      %v8161 = vadd.f32 %v8091, %v8102
      %v8162 = vadd.f32 %v8092, %v8102
      %v8163 = vadd.f32 %v8093, %v8102
      %v8164 = vadd.f32 %v8094, %v8102
      %v8165 = vadd.f32 %v8095, %v8102
      %v8166 = vadd.f32 %v8096, %v8102
      %v8167 = vadd.f32 %v8097, %v8102
      %v8168 = vmax.f32 %v8104, 0.0
      %v8169 = vmax.f32 %v8105, 0.0
      %v8170 = vmax.f32 %v8106, 0.0
      %v8171 = vmax.f32 %v8107, 0.0
      %v8172 = vmax.f32 %v8108, 0.0
      %v8173 = vmax.f32 %v8109, 0.0
      %v8174 = vmax.f32 %v8110, 0.0
      %v8175 = vmax.f32 %v8111, 0.0
      %v8176 = vmax.f32 %v8112, 0.0
      %v8177 = vmax.f32 %v8113, 0.0
      %v8178 = vmax.f32 %v8114, 0.0
      %v8179 = vmax.f32 %v8115, 0.0
      %v8180 = vmax.f32 %v8116, 0.0
      %v8181 = vmax.f32 %v8117, 0.0
      %v8182 = vmax.f32 %v8118, 0.0
      %v8183 = vmax.f32 %v8119, 0.0
      %v8184 = vmax.f32 %v8120, 0.0
      %v8185 = vmax.f32 %v8121, 0.0
      %v8186 = vmax.f32 %v8122, 0.0
      %v8187 = vmax.f32 %v8123, 0.0
      %v8188 = vmax.f32 %v8124, 0.0
      %v8189 = vmax.f32 %v8125, 0.0
      %v8190 = vmax.f32 %v8126, 0.0
      %v8191 = vmax.f32 %v8127, 0.0
      %v8192 = vmax.f32 %v8128, 0.0
      %v8193 = vmax.f32 %v8129, 0.0
      %v8194 = vmax.f32 %v8130, 0.0
      %v8195 = vmax.f32 %v8131, 0.0
      %v8196 = vmax.f32 %v8132, 0.0
      %v8197 = vmax.f32 %v8133, 0.0
      %v8198 = vmax.f32 %v8134, 0.0
      %v8199 = vmax.f32 %v8135, 0.0
      %v8200 = vmax.f32 %v8136, 0.0
      %v8201 = vmax.f32 %v8137, 0.0
      %v8202 = vmax.f32 %v8138, 0.0
      %v8203 = vmax.f32 %v8139, 0.0
      %v8204 = vmax.f32 %v8140, 0.0
      %v8205 = vmax.f32 %v8141, 0.0
      %v8206 = vmax.f32 %v8142, 0.0
      %v8207 = vmax.f32 %v8143, 0.0
      %v8208 = vmax.f32 %v8144, 0.0
      %v8209 = vmax.f32 %v8145, 0.0
      %v8210 = vmax.f32 %v8146, 0.0
      %v8211 = vmax.f32 %v8147, 0.0
      %v8212 = vmax.f32 %v8148, 0.0
      %v8213 = vmax.f32 %v8149, 0.0
      %v8214 = vmax.f32 %v8150, 0.0
      %v8215 = vmax.f32 %v8151, 0.0
      %v8216 = vmax.f32 %v8152, 0.0
      %v8217 = vmax.f32 %v8153, 0.0
      %v8218 = vmax.f32 %v8154, 0.0
      %v8219 = vmax.f32 %v8155, 0.0
      %v8220 = vmax.f32 %v8156, 0.0
      %v8221 = vmax.f32 %v8157, 0.0
      %v8222 = vmax.f32 %v8158, 0.0
      %v8223 = vmax.f32 %v8159, 0.0
      %v8224 = vmax.f32 %v8160, 0.0
      %v8225 = vmax.f32 %v8161, 0.0
      %v8226 = vmax.f32 %v8162, 0.0
      %v8227 = vmax.f32 %v8163, 0.0
      %v8228 = vmax.f32 %v8164, 0.0
      %v8229 = vmax.f32 %v8165, 0.0
      %v8230 = vmax.f32 %v8166, 0.0
      %v8231 = vmax.f32 %v8167, 0.0
      %v8232 = vld [vmem:[%s23] sm:$0xf]
      %v8233 = vld [vmem:[%s23 + $0x4] sm:$0xf]
      %v8234 = vld [vmem:[%s24] sm:$0x1]
      %v8235 = vpack.c.bf16 %v8169, %v8168
      %v8236 = vpack.c.bf16 %v8171, %v8170
      %v8237 = vpack.c.bf16 %v8173, %v8172
      %v8238 = vpack.c.bf16 %v8175, %v8174
      %v8239 = vpack.c.bf16 %v8177, %v8176
      %v8240 = vpack.c.bf16 %v8179, %v8178
      %v8241 = vpack.c.bf16 %v8181, %v8180
      %v8242 = vpack.c.bf16 %v8183, %v8182
      %v8243 = vpack.c.bf16 %v8185, %v8184
      %v8244 = vpack.c.bf16 %v8187, %v8186
      %v8245 = vpack.c.bf16 %v8189, %v8188
      %v8246 = vpack.c.bf16 %v8191, %v8190
      %v8247 = vpack.c.bf16 %v8193, %v8192
      %v8248 = vpack.c.bf16 %v8195, %v8194
      %v8249 = vpack.c.bf16 %v8197, %v8196
      %v8250 = vpack.c.bf16 %v8199, %v8198
      %v8251 = vpack.c.bf16 %v8201, %v8200
      %v8252 = vpack.c.bf16 %v8203, %v8202
      %v8253 = vpack.c.bf16 %v8205, %v8204
      %v8254 = vpack.c.bf16 %v8207, %v8206
      %v8255 = vpack.c.bf16 %v8209, %v8208
      %v8256 = vpack.c.bf16 %v8211, %v8210
      %v8257 = vpack.c.bf16 %v8213, %v8212
      %v8258 = vpack.c.bf16 %v8215, %v8214
      %v8259 = vpack.c.bf16 %v8217, %v8216
      %v8260 = vpack.c.bf16 %v8219, %v8218
      %v8261 = vpack.c.bf16 %v8221, %v8220
      %v8262 = vpack.c.bf16 %v8223, %v8222
      %v8263 = vpack.c.bf16 %v8225, %v8224
      %v8264 = vpack.c.bf16 %v8227, %v8226
      %v8265 = vpack.c.bf16 %v8229, %v8228
      %v8266 = vpack.c.bf16 %v8231, %v8230
      %v8268 = vlaneseq
      %v8269 = vshrl.u32 %v8268, 7
      %v8270 = vsub.s32 0, %v8269
      %v8271 = vrot.slane %v8234, %v8270
      %v8275 = vunpack.c.l.b16 %v8232
      %v8276 = vunpack.c.l.b16 %v8233
      %v8277 = vpack.c.b16 %v8276, %v8275
      %vm8279 = vcmask 130048
      %v8281 = vsel %vm8279, %v8235, 0
      %v8284 = vsel %vm8279, %v8236, 0
      %v8287 = vsel %vm8279, %v8237, 0
      %v8290 = vsel %vm8279, %v8238, 0
      %v8293 = vsel %vm8279, %v8239, 0
      %v8296 = vsel %vm8279, %v8240, 0
      %v8299 = vsel %vm8279, %v8241, 0
      %v8302 = vsel %vm8279, %v8242, 0
      %v8305 = vsel %vm8279, %v8243, 0
      %v8308 = vsel %vm8279, %v8244, 0
      %v8311 = vsel %vm8279, %v8245, 0
      %v8314 = vsel %vm8279, %v8246, 0
      %v8317 = vsel %vm8279, %v8247, 0
      %v8320 = vsel %vm8279, %v8248, 0
      %v8323 = vsel %vm8279, %v8249, 0
      %v8326 = vsel %vm8279, %v8250, 0
      %v8329 = vsel %vm8279, %v8251, 0
      %v8332 = vsel %vm8279, %v8252, 0
      %v8335 = vsel %vm8279, %v8253, 0
      %v8338 = vsel %vm8279, %v8254, 0
      %v8341 = vsel %vm8279, %v8255, 0
      %v8344 = vsel %vm8279, %v8256, 0
      %v8347 = vsel %vm8279, %v8257, 0
      %v8350 = vsel %vm8279, %v8258, 0
      %v8353 = vsel %vm8279, %v8259, 0
      %v8356 = vsel %vm8279, %v8260, 0
      %v8359 = vsel %vm8279, %v8261, 0
      %v8362 = vsel %vm8279, %v8262, 0
      %v8365 = vsel %vm8279, %v8263, 0
      %v8368 = vsel %vm8279, %v8264, 0
      %v8371 = vsel %vm8279, %v8265, 0
      %v8374 = vsel %vm8279, %v8266, 0
      %8376 = vmatprep.subr.bf16.mxu0 0
      %8377 = vmatpush1.bf16.msra.mxu0 %v8277
      %8378 = vmatprep.subr.bf16.mxu0 0
      %8379 = vmatpush1.bf16.msra.mxu0 0
      %8380 = vmatprep.subr.bf16.mxu0 0
      %8381 = vmatpush1.bf16.msra.mxu0 0
      %8382 = vmatprep.subr.bf16.mxu0 0
      %8383 = vmatpush1.bf16.msra.mxu0 0
      %8384 = vmatprep.subr.bf16.mxu0 0
      %8385 = vmatpush1.bf16.msra.mxu0 0
      %8386 = vmatprep.subr.bf16.mxu0 0
      %8387 = vmatpush1.bf16.msra.mxu0 0
      %8388 = vmatprep.subr.bf16.mxu0 0
      %8389 = vmatpush1.bf16.msra.mxu0 0
      %8390 = vmatprep.subr.bf16.mxu0 0
      %8391 = vmatpush1.bf16.msra.mxu0 0
      %8392 = vmatprep.subr.bf16.mxu0 0
      %8393 = vmatpush1.bf16.msra.mxu0 0
      %8394 = vmatprep.subr.bf16.mxu0 0
      %8395 = vmatpush1.bf16.msra.mxu0 0
      %8396 = vmatprep.subr.bf16.mxu0 0
      %8397 = vmatpush1.bf16.msra.mxu0 0
      %8398 = vmatprep.subr.bf16.mxu0 0
      %8399 = vmatpush1.bf16.msra.mxu0 0
      %8400 = vmatprep.subr.bf16.mxu0 0
      %8401 = vmatpush1.bf16.msra.mxu0 0
      %8402 = vmatprep.subr.bf16.mxu0 0
      %8403 = vmatpush1.bf16.msra.mxu0 0
      %8404 = vmatprep.subr.bf16.mxu0 0
      %8405 = vmatpush1.bf16.msra.mxu0 0
      %8406 = vmatprep.subr.bf16.mxu0 0
      %8407 = vmatpush1.bf16.msra.mxu0 0
      %8408 = vmatprep.mubr.bf16.mxu0 0
      %8409 = vmatmul.mubr.bf16.gmra.mrb[0].mxu0 %v8281
      %v8410 = vpop.f32.mrb[0].mxu0
      %v8411 = vadd.f32 %v8271, %v8410
      %v8412 = vpop.f32.mrb[0].mxu0
      %v8413 = vpop.f32.mrb[0].mxu0
      %v8414 = vadd.f32 %v8271, %v8413
      %v8415 = vpop.f32.mrb[0].mxu0
      %8416 = vmatprep.mubr.bf16.mxu0 0
      %8417 = vmatmul.mubr.bf16.gmra.mrb[0].mxu0 %v8284
      %v8418 = vpop.f32.mrb[0].mxu0
      %v8419 = vadd.f32 %v8271, %v8418
      %v8420 = vpop.f32.mrb[0].mxu0
      %v8421 = vpop.f32.mrb[0].mxu0
      %v8422 = vadd.f32 %v8271, %v8421
      %v8423 = vpop.f32.mrb[0].mxu0
      %8424 = vmatprep.mubr.bf16.mxu0 0
      %8425 = vmatmul.mubr.bf16.gmra.mrb[0].mxu0 %v8287
      %v8426 = vpop.f32.mrb[0].mxu0
      %v8427 = vadd.f32 %v8271, %v8426
      %v8428 = vpop.f32.mrb[0].mxu0
      %v8429 = vpop.f32.mrb[0].mxu0
      %v8430 = vadd.f32 %v8271, %v8429
      %v8431 = vpop.f32.mrb[0].mxu0
      %8432 = vmatprep.mubr.bf16.mxu0 0
      %8433 = vmatmul.mubr.bf16.gmra.mrb[0].mxu0 %v8290
      %v8434 = vpop.f32.mrb[0].mxu0
      %v8435 = vadd.f32 %v8271, %v8434
      %v8436 = vpop.f32.mrb[0].mxu0
      %v8437 = vpop.f32.mrb[0].mxu0
      %v8438 = vadd.f32 %v8271, %v8437
      %v8439 = vpop.f32.mrb[0].mxu0
      %8440 = vmatprep.mubr.bf16.mxu0 0
      %8441 = vmatmul.mubr.bf16.gmra.mrb[0].mxu0 %v8293
      %v8442 = vpop.f32.mrb[0].mxu0
      %v8443 = vadd.f32 %v8271, %v8442
      %v8444 = vpop.f32.mrb[0].mxu0
      %v8445 = vpop.f32.mrb[0].mxu0
      %v8446 = vadd.f32 %v8271, %v8445
      %v8447 = vpop.f32.mrb[0].mxu0
      %8448 = vmatprep.mubr.bf16.mxu0 0
      %8449 = vmatmul.mubr.bf16.gmra.mrb[0].mxu0 %v8296
      %v8450 = vpop.f32.mrb[0].mxu0
      %v8451 = vadd.f32 %v8271, %v8450
      %v8452 = vpop.f32.mrb[0].mxu0
      %v8453 = vpop.f32.mrb[0].mxu0
      %v8454 = vadd.f32 %v8271, %v8453
      %v8455 = vpop.f32.mrb[0].mxu0
      %8456 = vmatprep.mubr.bf16.mxu0 0
      %8457 = vmatmul.mubr.bf16.gmra.mrb[0].mxu0 %v8299
      %v8458 = vpop.f32.mrb[0].mxu0
      %v8459 = vadd.f32 %v8271, %v8458
      %v8460 = vpop.f32.mrb[0].mxu0
      %v8461 = vpop.f32.mrb[0].mxu0
      %v8462 = vadd.f32 %v8271, %v8461
      %v8463 = vpop.f32.mrb[0].mxu0
      %8464 = vmatprep.mubr.bf16.mxu0 0
      %8465 = vmatmul.mubr.bf16.gmra.mrb[0].mxu0 %v8302
      %v8466 = vpop.f32.mrb[0].mxu0
      %v8467 = vadd.f32 %v8271, %v8466
      %v8468 = vpop.f32.mrb[0].mxu0
      %v8469 = vpop.f32.mrb[0].mxu0
      %v8470 = vadd.f32 %v8271, %v8469
      %v8471 = vpop.f32.mrb[0].mxu0
      %8472 = vmatprep.mubr.bf16.mxu0 0
      %8473 = vmatmul.mubr.bf16.gmra.mrb[0].mxu0 %v8305
      %v8474 = vpop.f32.mrb[0].mxu0
      %v8475 = vadd.f32 %v8271, %v8474
      %v8476 = vpop.f32.mrb[0].mxu0
      %v8477 = vpop.f32.mrb[0].mxu0
      %v8478 = vadd.f32 %v8271, %v8477
      %v8479 = vpop.f32.mrb[0].mxu0
      %8480 = vmatprep.mubr.bf16.mxu0 0
      %8481 = vmatmul.mubr.bf16.gmra.mrb[0].mxu0 %v8308
      %v8482 = vpop.f32.mrb[0].mxu0
      %v8483 = vadd.f32 %v8271, %v8482
      %v8484 = vpop.f32.mrb[0].mxu0
      %v8485 = vpop.f32.mrb[0].mxu0
      %v8486 = vadd.f32 %v8271, %v8485
      %v8487 = vpop.f32.mrb[0].mxu0
      %8488 = vmatprep.mubr.bf16.mxu0 0
      %8489 = vmatmul.mubr.bf16.gmra.mrb[0].mxu0 %v8311
      %v8490 = vpop.f32.mrb[0].mxu0
      %v8491 = vadd.f32 %v8271, %v8490
      %v8492 = vpop.f32.mrb[0].mxu0
      %v8493 = vpop.f32.mrb[0].mxu0
      %v8494 = vadd.f32 %v8271, %v8493
      %v8495 = vpop.f32.mrb[0].mxu0
      %8496 = vmatprep.mubr.bf16.mxu0 0
      %8497 = vmatmul.mubr.bf16.gmra.mrb[0].mxu0 %v8314
      %v8498 = vpop.f32.mrb[0].mxu0
      %v8499 = vadd.f32 %v8271, %v8498
      %v8500 = vpop.f32.mrb[0].mxu0
      %v8501 = vpop.f32.mrb[0].mxu0
      %v8502 = vadd.f32 %v8271, %v8501
      %v8503 = vpop.f32.mrb[0].mxu0
      %8504 = vmatprep.mubr.bf16.mxu0 0
      %8505 = vmatmul.mubr.bf16.gmra.mrb[0].mxu0 %v8317
      %v8506 = vpop.f32.mrb[0].mxu0
      %v8507 = vadd.f32 %v8271, %v8506
      %v8508 = vpop.f32.mrb[0].mxu0
      %v8509 = vpop.f32.mrb[0].mxu0
      %v8510 = vadd.f32 %v8271, %v8509
      %v8511 = vpop.f32.mrb[0].mxu0
      %8512 = vmatprep.mubr.bf16.mxu0 0
      %8513 = vmatmul.mubr.bf16.gmra.mrb[0].mxu0 %v8320
      %v8514 = vpop.f32.mrb[0].mxu0
      %v8515 = vadd.f32 %v8271, %v8514
      %v8516 = vpop.f32.mrb[0].mxu0
      %v8517 = vpop.f32.mrb[0].mxu0
      %v8518 = vadd.f32 %v8271, %v8517
      %v8519 = vpop.f32.mrb[0].mxu0
      %8520 = vmatprep.mubr.bf16.mxu0 0
      %8521 = vmatmul.mubr.bf16.gmra.mrb[0].mxu0 %v8323
      %v8522 = vpop.f32.mrb[0].mxu0
      %v8523 = vadd.f32 %v8271, %v8522
      %v8524 = vpop.f32.mrb[0].mxu0
      %v8525 = vpop.f32.mrb[0].mxu0
      %v8526 = vadd.f32 %v8271, %v8525
      %v8527 = vpop.f32.mrb[0].mxu0
      %8528 = vmatprep.mubr.bf16.mxu0 0
      %8529 = vmatmul.mubr.bf16.gmra.mrb[0].mxu0 %v8326
      %v8530 = vpop.f32.mrb[0].mxu0
      %v8531 = vadd.f32 %v8271, %v8530
      %v8532 = vpop.f32.mrb[0].mxu0
      %v8533 = vpop.f32.mrb[0].mxu0
      %v8534 = vadd.f32 %v8271, %v8533
      %v8535 = vpop.f32.mrb[0].mxu0
      %8536 = vmatprep.mubr.bf16.mxu0 0
      %8537 = vmatmul.mubr.bf16.gmra.mrb[0].mxu0 %v8329
      %v8538 = vpop.f32.mrb[0].mxu0
      %v8539 = vadd.f32 %v8271, %v8538
      %v8540 = vpop.f32.mrb[0].mxu0
      %v8541 = vpop.f32.mrb[0].mxu0
      %v8542 = vadd.f32 %v8271, %v8541
      %v8543 = vpop.f32.mrb[0].mxu0
      %8544 = vmatprep.mubr.bf16.mxu0 0
      %8545 = vmatmul.mubr.bf16.gmra.mrb[0].mxu0 %v8332
      %v8546 = vpop.f32.mrb[0].mxu0
      %v8547 = vadd.f32 %v8271, %v8546
      %v8548 = vpop.f32.mrb[0].mxu0
      %v8549 = vpop.f32.mrb[0].mxu0
      %v8550 = vadd.f32 %v8271, %v8549
      %v8551 = vpop.f32.mrb[0].mxu0
      %8552 = vmatprep.mubr.bf16.mxu0 0
      %8553 = vmatmul.mubr.bf16.gmra.mrb[0].mxu0 %v8335
      %v8554 = vpop.f32.mrb[0].mxu0
      %v8555 = vadd.f32 %v8271, %v8554
      %v8556 = vpop.f32.mrb[0].mxu0
      %v8557 = vpop.f32.mrb[0].mxu0
      %v8558 = vadd.f32 %v8271, %v8557
      %v8559 = vpop.f32.mrb[0].mxu0
      %8560 = vmatprep.mubr.bf16.mxu0 0
      %8561 = vmatmul.mubr.bf16.gmra.mrb[0].mxu0 %v8338
      %v8562 = vpop.f32.mrb[0].mxu0
      %v8563 = vadd.f32 %v8271, %v8562
      %v8564 = vpop.f32.mrb[0].mxu0
      %v8565 = vpop.f32.mrb[0].mxu0
      %v8566 = vadd.f32 %v8271, %v8565
      %v8567 = vpop.f32.mrb[0].mxu0
      %8568 = vmatprep.mubr.bf16.mxu0 0
      %8569 = vmatmul.mubr.bf16.gmra.mrb[0].mxu0 %v8341
      %v8570 = vpop.f32.mrb[0].mxu0
      %v8571 = vadd.f32 %v8271, %v8570
      %v8572 = vpop.f32.mrb[0].mxu0
      %v8573 = vpop.f32.mrb[0].mxu0
      %v8574 = vadd.f32 %v8271, %v8573
      %v8575 = vpop.f32.mrb[0].mxu0
      %8576 = vmatprep.mubr.bf16.mxu0 0
      %8577 = vmatmul.mubr.bf16.gmra.mrb[0].mxu0 %v8344
      %v8578 = vpop.f32.mrb[0].mxu0
      %v8579 = vadd.f32 %v8271, %v8578
      %v8580 = vpop.f32.mrb[0].mxu0
      %v8581 = vpop.f32.mrb[0].mxu0
      %v8582 = vadd.f32 %v8271, %v8581
      %v8583 = vpop.f32.mrb[0].mxu0
      %8584 = vmatprep.mubr.bf16.mxu0 0
      %8585 = vmatmul.mubr.bf16.gmra.mrb[0].mxu0 %v8347
      %v8586 = vpop.f32.mrb[0].mxu0
      %v8587 = vadd.f32 %v8271, %v8586
      %v8588 = vpop.f32.mrb[0].mxu0
      %v8589 = vpop.f32.mrb[0].mxu0
      %v8590 = vadd.f32 %v8271, %v8589
      %v8591 = vpop.f32.mrb[0].mxu0
      %8592 = vmatprep.mubr.bf16.mxu0 0
      %8593 = vmatmul.mubr.bf16.gmra.mrb[0].mxu0 %v8350
      %v8594 = vpop.f32.mrb[0].mxu0
      %v8595 = vadd.f32 %v8271, %v8594
      %v8596 = vpop.f32.mrb[0].mxu0
      %v8597 = vpop.f32.mrb[0].mxu0
      %v8598 = vadd.f32 %v8271, %v8597
      %v8599 = vpop.f32.mrb[0].mxu0
      %8600 = vmatprep.mubr.bf16.mxu0 0
      %8601 = vmatmul.mubr.bf16.gmra.mrb[0].mxu0 %v8353
      %v8602 = vpop.f32.mrb[0].mxu0
      %v8603 = vadd.f32 %v8271, %v8602
      %v8604 = vpop.f32.mrb[0].mxu0
      %v8605 = vpop.f32.mrb[0].mxu0
      %v8606 = vadd.f32 %v8271, %v8605
      %v8607 = vpop.f32.mrb[0].mxu0
      %8608 = vmatprep.mubr.bf16.mxu0 0
      %8609 = vmatmul.mubr.bf16.gmra.mrb[0].mxu0 %v8356
      %v8610 = vpop.f32.mrb[0].mxu0
      %v8611 = vadd.f32 %v8271, %v8610
      %v8612 = vpop.f32.mrb[0].mxu0
      %v8613 = vpop.f32.mrb[0].mxu0
      %v8614 = vadd.f32 %v8271, %v8613
      %v8615 = vpop.f32.mrb[0].mxu0
      %8616 = vmatprep.mubr.bf16.mxu0 0
      %8617 = vmatmul.mubr.bf16.gmra.mrb[0].mxu0 %v8359
      %v8618 = vpop.f32.mrb[0].mxu0
      %v8619 = vadd.f32 %v8271, %v8618
      %v8620 = vpop.f32.mrb[0].mxu0
      %v8621 = vpop.f32.mrb[0].mxu0
      %v8622 = vadd.f32 %v8271, %v8621
      %v8623 = vpop.f32.mrb[0].mxu0
      %8624 = vmatprep.mubr.bf16.mxu0 0
      %8625 = vmatmul.mubr.bf16.gmra.mrb[0].mxu0 %v8362
      %v8626 = vpop.f32.mrb[0].mxu0
      %v8627 = vadd.f32 %v8271, %v8626
      %v8628 = vpop.f32.mrb[0].mxu0
      %v8629 = vpop.f32.mrb[0].mxu0
      %v8630 = vadd.f32 %v8271, %v8629
      %v8631 = vpop.f32.mrb[0].mxu0
      %8632 = vmatprep.mubr.bf16.mxu0 0
      %8633 = vmatmul.mubr.bf16.gmra.mrb[0].mxu0 %v8365
      %v8634 = vpop.f32.mrb[0].mxu0
      %v8635 = vadd.f32 %v8271, %v8634
      %v8636 = vpop.f32.mrb[0].mxu0
      %v8637 = vpop.f32.mrb[0].mxu0
      %v8638 = vadd.f32 %v8271, %v8637
      %v8639 = vpop.f32.mrb[0].mxu0
      %8640 = vmatprep.mubr.bf16.mxu0 0
      %8641 = vmatmul.mubr.bf16.gmra.mrb[0].mxu0 %v8368
      %v8642 = vpop.f32.mrb[0].mxu0
      %v8643 = vadd.f32 %v8271, %v8642
      %v8644 = vpop.f32.mrb[0].mxu0
      %v8645 = vpop.f32.mrb[0].mxu0
      %v8646 = vadd.f32 %v8271, %v8645
      %v8647 = vpop.f32.mrb[0].mxu0
      %8648 = vmatprep.mubr.bf16.mxu0 0
      %8649 = vmatmul.mubr.bf16.gmra.mrb[0].mxu0 %v8371
      %v8650 = vpop.f32.mrb[0].mxu0
      %v8651 = vadd.f32 %v8271, %v8650
      %v8652 = vpop.f32.mrb[0].mxu0
      %v8653 = vpop.f32.mrb[0].mxu0
      %v8654 = vadd.f32 %v8271, %v8653
      %v8655 = vpop.f32.mrb[0].mxu0
      %8656 = vmatprep.mubr.bf16.mxu0 0
      %8657 = vmatmul.mubr.bf16.gmra.mrb[0].mxu0 %v8374
      %v8658 = vpop.f32.mrb[0].mxu0
      %v8659 = vadd.f32 %v8271, %v8658
      %v8660 = vpop.f32.mrb[0].mxu0
      %v8661 = vpop.f32.mrb[0].mxu0
      %v8662 = vadd.f32 %v8271, %v8661
      %v8663 = vpop.f32.mrb[0].mxu0
      %8664 = vdwg.mxu0
      %v8665 = vxor.u32 %v8411, 2147483648
      %v8666 = vxor.u32 %v8414, 2147483648
      %v8667 = vxor.u32 %v8419, 2147483648
      %v8668 = vxor.u32 %v8422, 2147483648
      %v8669 = vxor.u32 %v8427, 2147483648
      %v8670 = vxor.u32 %v8430, 2147483648
      %v8671 = vxor.u32 %v8435, 2147483648
      %v8672 = vxor.u32 %v8438, 2147483648
      %v8673 = vxor.u32 %v8443, 2147483648
      %v8674 = vxor.u32 %v8446, 2147483648
      %v8675 = vxor.u32 %v8451, 2147483648
      %v8676 = vxor.u32 %v8454, 2147483648
      %v8677 = vxor.u32 %v8459, 2147483648
      %v8678 = vxor.u32 %v8462, 2147483648
      %v8679 = vxor.u32 %v8467, 2147483648
      %v8680 = vxor.u32 %v8470, 2147483648
      %v8681 = vxor.u32 %v8475, 2147483648
      %v8682 = vxor.u32 %v8478, 2147483648
      %v8683 = vxor.u32 %v8483, 2147483648
      %v8684 = vxor.u32 %v8486, 2147483648
      %v8685 = vxor.u32 %v8491, 2147483648
      %v8686 = vxor.u32 %v8494, 2147483648
      %v8687 = vxor.u32 %v8499, 2147483648
      %v8688 = vxor.u32 %v8502, 2147483648
      %v8689 = vxor.u32 %v8507, 2147483648
      %v8690 = vxor.u32 %v8510, 2147483648
      %v8691 = vxor.u32 %v8515, 2147483648
      %v8692 = vxor.u32 %v8518, 2147483648
      %v8693 = vxor.u32 %v8523, 2147483648
      %v8694 = vxor.u32 %v8526, 2147483648
      %v8695 = vxor.u32 %v8531, 2147483648
      %v8696 = vxor.u32 %v8534, 2147483648
      %v8697 = vxor.u32 %v8539, 2147483648
      %v8698 = vxor.u32 %v8542, 2147483648
      %v8699 = vxor.u32 %v8547, 2147483648
      %v8700 = vxor.u32 %v8550, 2147483648
      %v8701 = vxor.u32 %v8555, 2147483648
      %v8702 = vxor.u32 %v8558, 2147483648
      %v8703 = vxor.u32 %v8563, 2147483648
      %v8704 = vxor.u32 %v8566, 2147483648
      %v8705 = vxor.u32 %v8571, 2147483648
      %v8706 = vxor.u32 %v8574, 2147483648
      %v8707 = vxor.u32 %v8579, 2147483648
      %v8708 = vxor.u32 %v8582, 2147483648
      %v8709 = vxor.u32 %v8587, 2147483648
      %v8710 = vxor.u32 %v8590, 2147483648
      %v8711 = vxor.u32 %v8595, 2147483648
      %v8712 = vxor.u32 %v8598, 2147483648
      %v8713 = vxor.u32 %v8603, 2147483648
      %v8714 = vxor.u32 %v8606, 2147483648
      %v8715 = vxor.u32 %v8611, 2147483648
      %v8716 = vxor.u32 %v8614, 2147483648
      %v8717 = vxor.u32 %v8619, 2147483648
      %v8718 = vxor.u32 %v8622, 2147483648
      %v8719 = vxor.u32 %v8627, 2147483648
      %v8720 = vxor.u32 %v8630, 2147483648
      %v8721 = vxor.u32 %v8635, 2147483648
      %v8722 = vxor.u32 %v8638, 2147483648
      %v8723 = vxor.u32 %v8643, 2147483648
      %v8724 = vxor.u32 %v8646, 2147483648
      %v8725 = vxor.u32 %v8651, 2147483648
      %v8726 = vxor.u32 %v8654, 2147483648
      %v8727 = vxor.u32 %v8659, 2147483648
      %v8728 = vxor.u32 %v8662, 2147483648
      %v8729 = vmul.f32 %v8665, 1.442695
      %v8730 = vpow.pop %v8729
      %v8731 = vmul.f32 %v8666, 1.442695
      %v8732 = vpow.pop %v8731
      %v8733 = vmul.f32 %v8667, 1.442695
      %v8734 = vpow.pop %v8733
      %v8735 = vmul.f32 %v8668, 1.442695
      %v8736 = vpow.pop %v8735
      %v8737 = vmul.f32 %v8669, 1.442695
      %v8738 = vpow.pop %v8737
      %v8739 = vmul.f32 %v8670, 1.442695
      %v8740 = vpow.pop %v8739
      %v8741 = vmul.f32 %v8671, 1.442695
      %v8742 = vpow.pop %v8741
      %v8743 = vmul.f32 %v8672, 1.442695
      %v8744 = vpow.pop %v8743
      %v8745 = vmul.f32 %v8673, 1.442695
      %v8746 = vpow.pop %v8745
      %v8747 = vmul.f32 %v8674, 1.442695
      %v8748 = vpow.pop %v8747
      %v8749 = vmul.f32 %v8675, 1.442695
      %v8750 = vpow.pop %v8749
      %v8751 = vmul.f32 %v8676, 1.442695
      %v8752 = vpow.pop %v8751
      %v8753 = vmul.f32 %v8677, 1.442695
      %v8754 = vpow.pop %v8753
      %v8755 = vmul.f32 %v8678, 1.442695
      %v8756 = vpow.pop %v8755
      %v8757 = vmul.f32 %v8679, 1.442695
      %v8758 = vpow.pop %v8757
      %v8759 = vmul.f32 %v8680, 1.442695
      %v8760 = vpow.pop %v8759
      %v8761 = vmul.f32 %v8681, 1.442695
      %v8762 = vpow.pop %v8761
      %v8763 = vmul.f32 %v8682, 1.442695
      %v8764 = vpow.pop %v8763
      %v8765 = vmul.f32 %v8683, 1.442695
      %v8766 = vpow.pop %v8765
      %v8767 = vmul.f32 %v8684, 1.442695
      %v8768 = vpow.pop %v8767
      %v8769 = vmul.f32 %v8685, 1.442695
      %v8770 = vpow.pop %v8769
      %v8771 = vmul.f32 %v8686, 1.442695
      %v8772 = vpow.pop %v8771
      %v8773 = vmul.f32 %v8687, 1.442695
      %v8774 = vpow.pop %v8773
      %v8775 = vmul.f32 %v8688, 1.442695
      %v8776 = vpow.pop %v8775
      %v8777 = vmul.f32 %v8689, 1.442695
      %v8778 = vpow.pop %v8777
      %v8779 = vmul.f32 %v8690, 1.442695
      %v8780 = vpow.pop %v8779
      %v8781 = vmul.f32 %v8691, 1.442695
      %v8782 = vpow.pop %v8781
      %v8783 = vmul.f32 %v8692, 1.442695
      %v8784 = vpow.pop %v8783
      %v8785 = vmul.f32 %v8693, 1.442695
      %v8786 = vpow.pop %v8785
      %v8787 = vmul.f32 %v8694, 1.442695
      %v8788 = vpow.pop %v8787
      %v8789 = vmul.f32 %v8695, 1.442695
      %v8790 = vpow.pop %v8789
      %v8791 = vmul.f32 %v8696, 1.442695
      %v8792 = vpow.pop %v8791
      %v8793 = vmul.f32 %v8697, 1.442695
      %v8794 = vpow.pop %v8793
      %v8795 = vmul.f32 %v8698, 1.442695
      %v8796 = vpow.pop %v8795
      %v8797 = vmul.f32 %v8699, 1.442695
      %v8798 = vpow.pop %v8797
      %v8799 = vmul.f32 %v8700, 1.442695
      %v8800 = vpow.pop %v8799
      %v8801 = vmul.f32 %v8701, 1.442695
      %v8802 = vpow.pop %v8801
      %v8803 = vmul.f32 %v8702, 1.442695
      %v8804 = vpow.pop %v8803
      %v8805 = vmul.f32 %v8703, 1.442695
      %v8806 = vpow.pop %v8805
      %v8807 = vmul.f32 %v8704, 1.442695
      %v8808 = vpow.pop %v8807
      %v8809 = vmul.f32 %v8705, 1.442695
      %v8810 = vpow.pop %v8809
      %v8811 = vmul.f32 %v8706, 1.442695
      %v8812 = vpow.pop %v8811
      %v8813 = vmul.f32 %v8707, 1.442695
      %v8814 = vpow.pop %v8813
      %v8815 = vmul.f32 %v8708, 1.442695
      %v8816 = vpow.pop %v8815
      %v8817 = vmul.f32 %v8709, 1.442695
      %v8818 = vpow.pop %v8817
      %v8819 = vmul.f32 %v8710, 1.442695
      %v8820 = vpow.pop %v8819
      %v8821 = vmul.f32 %v8711, 1.442695
      %v8822 = vpow.pop %v8821
      %v8823 = vmul.f32 %v8712, 1.442695
      %v8824 = vpow.pop %v8823
      %v8825 = vmul.f32 %v8713, 1.442695
      %v8826 = vpow.pop %v8825
      %v8827 = vmul.f32 %v8714, 1.442695
      %v8828 = vpow.pop %v8827
      %v8829 = vmul.f32 %v8715, 1.442695
      %v8830 = vpow.pop %v8829
      %v8831 = vmul.f32 %v8716, 1.442695
      %v8832 = vpow.pop %v8831
      %v8833 = vmul.f32 %v8717, 1.442695
      %v8834 = vpow.pop %v8833
      %v8835 = vmul.f32 %v8718, 1.442695
      %v8836 = vpow.pop %v8835
      %v8837 = vmul.f32 %v8719, 1.442695
      %v8838 = vpow.pop %v8837
      %v8839 = vmul.f32 %v8720, 1.442695
      %v8840 = vpow.pop %v8839
      %v8841 = vmul.f32 %v8721, 1.442695
      %v8842 = vpow.pop %v8841
      %v8843 = vmul.f32 %v8722, 1.442695
      %v8844 = vpow.pop %v8843
      %v8845 = vmul.f32 %v8723, 1.442695
      %v8846 = vpow.pop %v8845
      %v8847 = vmul.f32 %v8724, 1.442695
      %v8848 = vpow.pop %v8847
      %v8849 = vmul.f32 %v8725, 1.442695
      %v8850 = vpow.pop %v8849
      %v8851 = vmul.f32 %v8726, 1.442695
      %v8852 = vpow.pop %v8851
      %v8853 = vmul.f32 %v8727, 1.442695
      %v8854 = vpow.pop %v8853
      %v8855 = vmul.f32 %v8728, 1.442695
      %v8856 = vpow.pop %v8855
      %v8857 = vadd.f32 %v8730, 1.0
      %v8858 = vadd.f32 %v8732, 1.0
      %v8859 = vadd.f32 %v8734, 1.0
      %v8860 = vadd.f32 %v8736, 1.0
      %v8861 = vadd.f32 %v8738, 1.0
      %v8862 = vadd.f32 %v8740, 1.0
      %v8863 = vadd.f32 %v8742, 1.0
      %v8864 = vadd.f32 %v8744, 1.0
      %v8865 = vadd.f32 %v8746, 1.0
      %v8866 = vadd.f32 %v8748, 1.0
      %v8867 = vadd.f32 %v8750, 1.0
      %v8868 = vadd.f32 %v8752, 1.0
      %v8869 = vadd.f32 %v8754, 1.0
      %v8870 = vadd.f32 %v8756, 1.0
      %v8871 = vadd.f32 %v8758, 1.0
      %v8872 = vadd.f32 %v8760, 1.0
      %v8873 = vadd.f32 %v8762, 1.0
      %v8874 = vadd.f32 %v8764, 1.0
      %v8875 = vadd.f32 %v8766, 1.0
      %v8876 = vadd.f32 %v8768, 1.0
      %v8877 = vadd.f32 %v8770, 1.0
      %v8878 = vadd.f32 %v8772, 1.0
      %v8879 = vadd.f32 %v8774, 1.0
      %v8880 = vadd.f32 %v8776, 1.0
      %v8881 = vadd.f32 %v8778, 1.0
      %v8882 = vadd.f32 %v8780, 1.0
      %v8883 = vadd.f32 %v8782, 1.0
      %v8884 = vadd.f32 %v8784, 1.0
      %v8885 = vadd.f32 %v8786, 1.0
      %v8886 = vadd.f32 %v8788, 1.0
      %v8887 = vadd.f32 %v8790, 1.0
      %v8888 = vadd.f32 %v8792, 1.0
      %v8889 = vadd.f32 %v8794, 1.0
      %v8890 = vadd.f32 %v8796, 1.0
      %v8891 = vadd.f32 %v8798, 1.0
      %v8892 = vadd.f32 %v8800, 1.0
      %v8893 = vadd.f32 %v8802, 1.0
      %v8894 = vadd.f32 %v8804, 1.0
      %v8895 = vadd.f32 %v8806, 1.0
      %v8896 = vadd.f32 %v8808, 1.0
      %v8897 = vadd.f32 %v8810, 1.0
      %v8898 = vadd.f32 %v8812, 1.0
      %v8899 = vadd.f32 %v8814, 1.0
      %v8900 = vadd.f32 %v8816, 1.0
      %v8901 = vadd.f32 %v8818, 1.0
      %v8902 = vadd.f32 %v8820, 1.0
      %v8903 = vadd.f32 %v8822, 1.0
      %v8904 = vadd.f32 %v8824, 1.0
      %v8905 = vadd.f32 %v8826, 1.0
      %v8906 = vadd.f32 %v8828, 1.0
      %v8907 = vadd.f32 %v8830, 1.0
      %v8908 = vadd.f32 %v8832, 1.0
      %v8909 = vadd.f32 %v8834, 1.0
      %v8910 = vadd.f32 %v8836, 1.0
      %v8911 = vadd.f32 %v8838, 1.0
      %v8912 = vadd.f32 %v8840, 1.0
      %v8913 = vadd.f32 %v8842, 1.0
      %v8914 = vadd.f32 %v8844, 1.0
      %v8915 = vadd.f32 %v8846, 1.0
      %v8916 = vadd.f32 %v8848, 1.0
      %v8917 = vadd.f32 %v8850, 1.0
      %v8918 = vadd.f32 %v8852, 1.0
      %v8919 = vadd.f32 %v8854, 1.0
      %v8920 = vadd.f32 %v8856, 1.0
      %v8921 = vrcp.pop %v8857
      %v8922 = vmul.f32 1.0, %v8921
      %v8923 = vrcp.pop %v8858
      %v8924 = vmul.f32 1.0, %v8923
      %v8925 = vrcp.pop %v8859
      %v8926 = vmul.f32 1.0, %v8925
      %v8927 = vrcp.pop %v8860
      %v8928 = vmul.f32 1.0, %v8927
      %v8929 = vrcp.pop %v8861
      %v8930 = vmul.f32 1.0, %v8929
      %v8931 = vrcp.pop %v8862
      %v8932 = vmul.f32 1.0, %v8931
      %v8933 = vrcp.pop %v8863
      %v8934 = vmul.f32 1.0, %v8933
      %v8935 = vrcp.pop %v8864
      %v8936 = vmul.f32 1.0, %v8935
      %v8937 = vrcp.pop %v8865
      %v8938 = vmul.f32 1.0, %v8937
      %v8939 = vrcp.pop %v8866
      %v8940 = vmul.f32 1.0, %v8939
      %v8941 = vrcp.pop %v8867
      %v8942 = vmul.f32 1.0, %v8941
      %v8943 = vrcp.pop %v8868
      %v8944 = vmul.f32 1.0, %v8943
      %v8945 = vrcp.pop %v8869
      %v8946 = vmul.f32 1.0, %v8945
      %v8947 = vrcp.pop %v8870
      %v8948 = vmul.f32 1.0, %v8947
      %v8949 = vrcp.pop %v8871
      %v8950 = vmul.f32 1.0, %v8949
      %v8951 = vrcp.pop %v8872
      %v8952 = vmul.f32 1.0, %v8951
      %v8953 = vrcp.pop %v8873
      %v8954 = vmul.f32 1.0, %v8953
      %v8955 = vrcp.pop %v8874
      %v8956 = vmul.f32 1.0, %v8955
      %v8957 = vrcp.pop %v8875
      %v8958 = vmul.f32 1.0, %v8957
      %v8959 = vrcp.pop %v8876
      %v8960 = vmul.f32 1.0, %v8959
      %v8961 = vrcp.pop %v8877
      %v8962 = vmul.f32 1.0, %v8961
      %v8963 = vrcp.pop %v8878
      %v8964 = vmul.f32 1.0, %v8963
      %v8965 = vrcp.pop %v8879
      %v8966 = vmul.f32 1.0, %v8965
      %v8967 = vrcp.pop %v8880
      %v8968 = vmul.f32 1.0, %v8967
      %v8969 = vrcp.pop %v8881
      %v8970 = vmul.f32 1.0, %v8969
      %v8971 = vrcp.pop %v8882
      %v8972 = vmul.f32 1.0, %v8971
      %v8973 = vrcp.pop %v8883
      %v8974 = vmul.f32 1.0, %v8973
      %v8975 = vrcp.pop %v8884
      %v8976 = vmul.f32 1.0, %v8975
      %v8977 = vrcp.pop %v8885
      %v8978 = vmul.f32 1.0, %v8977
      %v8979 = vrcp.pop %v8886
      %v8980 = vmul.f32 1.0, %v8979
      %v8981 = vrcp.pop %v8887
      %v8982 = vmul.f32 1.0, %v8981
      %v8983 = vrcp.pop %v8888
      %v8984 = vmul.f32 1.0, %v8983
      %v8985 = vrcp.pop %v8889
      %v8986 = vmul.f32 1.0, %v8985
      %v8987 = vrcp.pop %v8890
      %v8988 = vmul.f32 1.0, %v8987
      %v8989 = vrcp.pop %v8891
      %v8990 = vmul.f32 1.0, %v8989
      %v8991 = vrcp.pop %v8892
      %v8992 = vmul.f32 1.0, %v8991
      %v8993 = vrcp.pop %v8893
      %v8994 = vmul.f32 1.0, %v8993
      %v8995 = vrcp.pop %v8894
      %v8996 = vmul.f32 1.0, %v8995
      %v8997 = vrcp.pop %v8895
      %v8998 = vmul.f32 1.0, %v8997
      %v8999 = vrcp.pop %v8896
      %v9000 = vmul.f32 1.0, %v8999
      %v9001 = vrcp.pop %v8897
      %v9002 = vmul.f32 1.0, %v9001
      %v9003 = vrcp.pop %v8898
      %v9004 = vmul.f32 1.0, %v9003
      %v9005 = vrcp.pop %v8899
      %v9006 = vmul.f32 1.0, %v9005
      %v9007 = vrcp.pop %v8900
      %v9008 = vmul.f32 1.0, %v9007
      %v9009 = vrcp.pop %v8901
      %v9010 = vmul.f32 1.0, %v9009
      %v9011 = vrcp.pop %v8902
      %v9012 = vmul.f32 1.0, %v9011
      %v9013 = vrcp.pop %v8903
      %v9014 = vmul.f32 1.0, %v9013
      %v9015 = vrcp.pop %v8904
      %v9016 = vmul.f32 1.0, %v9015
      %v9017 = vrcp.pop %v8905
      %v9018 = vmul.f32 1.0, %v9017
      %v9019 = vrcp.pop %v8906
      %v9020 = vmul.f32 1.0, %v9019
      %v9021 = vrcp.pop %v8907
      %v9022 = vmul.f32 1.0, %v9021
      %v9023 = vrcp.pop %v8908
      %v9024 = vmul.f32 1.0, %v9023
      %v9025 = vrcp.pop %v8909
      %v9026 = vmul.f32 1.0, %v9025
      %v9027 = vrcp.pop %v8910
      %v9028 = vmul.f32 1.0, %v9027
      %v9029 = vrcp.pop %v8911
      %v9030 = vmul.f32 1.0, %v9029
      %v9031 = vrcp.pop %v8912
      %v9032 = vmul.f32 1.0, %v9031
      %v9033 = vrcp.pop %v8913
      %v9034 = vmul.f32 1.0, %v9033
      %v9035 = vrcp.pop %v8914
      %v9036 = vmul.f32 1.0, %v9035
      %v9037 = vrcp.pop %v8915
      %v9038 = vmul.f32 1.0, %v9037
      %v9039 = vrcp.pop %v8916
      %v9040 = vmul.f32 1.0, %v9039
      %v9041 = vrcp.pop %v8917
      %v9042 = vmul.f32 1.0, %v9041
      %v9043 = vrcp.pop %v8918
      %v9044 = vmul.f32 1.0, %v9043
      %v9045 = vrcp.pop %v8919
      %v9046 = vmul.f32 1.0, %v9045
      %v9047 = vrcp.pop %v8920
      %v9048 = vmul.f32 1.0, %v9047
      %9113 = vrot.lane.b32.xlu0 %v6499, 99
      %v9114 = vpop.permute.xlu0 %9113
      %9115 = vrot.lane.b32.xlu0 %v6500, 99
      %v9116 = vpop.permute.xlu0 %9115
      %9117 = vrot.lane.b32.xlu0 %v6501, 99
      %v9118 = vpop.permute.xlu0 %9117
      %9119 = vrot.lane.b32.xlu0 %v6502, 99
      %v9120 = vpop.permute.xlu0 %9119
      %9121 = vrot.lane.b32.xlu0 %v6503, 99
      %v9122 = vpop.permute.xlu0 %9121
      %9123 = vrot.lane.b32.xlu0 %v6504, 99
      %v9124 = vpop.permute.xlu0 %9123
      %9125 = vrot.lane.b32.xlu0 %v6505, 99
      %v9126 = vpop.permute.xlu0 %9125
      %9127 = vrot.lane.b32.xlu0 %v6506, 99
      %v9128 = vpop.permute.xlu0 %9127
      %9129 = vrot.lane.b32.xlu0 %v6507, 99
      %v9130 = vpop.permute.xlu0 %9129
      %9131 = vrot.lane.b32.xlu0 %v6508, 99
      %v9132 = vpop.permute.xlu0 %9131
      %9133 = vrot.lane.b32.xlu0 %v6509, 99
      %v9134 = vpop.permute.xlu0 %9133
      %9135 = vrot.lane.b32.xlu0 %v6510, 99
      %v9136 = vpop.permute.xlu0 %9135
      %9137 = vrot.lane.b32.xlu0 %v6511, 99
      %v9138 = vpop.permute.xlu0 %9137
      %9139 = vrot.lane.b32.xlu0 %v6512, 99
      %v9140 = vpop.permute.xlu0 %9139
      %9141 = vrot.lane.b32.xlu0 %v6513, 99
      %v9142 = vpop.permute.xlu0 %9141
      %9143 = vrot.lane.b32.xlu0 %v6514, 99
      %v9144 = vpop.permute.xlu0 %9143
      %9145 = vrot.lane.b32.xlu0 %v6515, 99
      %v9146 = vpop.permute.xlu0 %9145
      %9147 = vrot.lane.b32.xlu0 %v6516, 99
      %v9148 = vpop.permute.xlu0 %9147
      %9149 = vrot.lane.b32.xlu0 %v6517, 99
      %v9150 = vpop.permute.xlu0 %9149
      %9151 = vrot.lane.b32.xlu0 %v6518, 99
      %v9152 = vpop.permute.xlu0 %9151
      %9153 = vrot.lane.b32.xlu0 %v6519, 99
      %v9154 = vpop.permute.xlu0 %9153
      %9155 = vrot.lane.b32.xlu0 %v6520, 99
      %v9156 = vpop.permute.xlu0 %9155
      %9157 = vrot.lane.b32.xlu0 %v6521, 99
      %v9158 = vpop.permute.xlu0 %9157
      %9159 = vrot.lane.b32.xlu0 %v6522, 99
      %v9160 = vpop.permute.xlu0 %9159
      %9161 = vrot.lane.b32.xlu0 %v6523, 99
      %v9162 = vpop.permute.xlu0 %9161
      %9163 = vrot.lane.b32.xlu0 %v6524, 99
      %v9164 = vpop.permute.xlu0 %9163
      %9165 = vrot.lane.b32.xlu0 %v6525, 99
      %v9166 = vpop.permute.xlu0 %9165
      %9167 = vrot.lane.b32.xlu0 %v6526, 99
      %v9168 = vpop.permute.xlu0 %9167
      %9169 = vrot.lane.b32.xlu0 %v6527, 99
      %v9170 = vpop.permute.xlu0 %9169
      %9171 = vrot.lane.b32.xlu0 %v6528, 99
      %v9172 = vpop.permute.xlu0 %9171
      %9173 = vrot.lane.b32.xlu0 %v6529, 99
      %v9174 = vpop.permute.xlu0 %9173
      %9175 = vrot.lane.b32.xlu0 %v6530, 99
      %v9176 = vpop.permute.xlu0 %9175
      %9177 = vrot.lane.b32.xlu0 %v6531, 99
      %v9178 = vpop.permute.xlu0 %9177
      %9179 = vrot.lane.b32.xlu0 %v6532, 99
      %v9180 = vpop.permute.xlu0 %9179
      %9181 = vrot.lane.b32.xlu0 %v6533, 99
      %v9182 = vpop.permute.xlu0 %9181
      %9183 = vrot.lane.b32.xlu0 %v6534, 99
      %v9184 = vpop.permute.xlu0 %9183
      %9185 = vrot.lane.b32.xlu0 %v6535, 99
      %v9186 = vpop.permute.xlu0 %9185
      %9187 = vrot.lane.b32.xlu0 %v6536, 99
      %v9188 = vpop.permute.xlu0 %9187
      %9189 = vrot.lane.b32.xlu0 %v6537, 99
      %v9190 = vpop.permute.xlu0 %9189
      %9191 = vrot.lane.b32.xlu0 %v6538, 99
      %v9192 = vpop.permute.xlu0 %9191
      %9193 = vrot.lane.b32.xlu0 %v6539, 99
      %v9194 = vpop.permute.xlu0 %9193
      %9195 = vrot.lane.b32.xlu0 %v6540, 99
      %v9196 = vpop.permute.xlu0 %9195
      %9197 = vrot.lane.b32.xlu0 %v6541, 99
      %v9198 = vpop.permute.xlu0 %9197
      %9199 = vrot.lane.b32.xlu0 %v6542, 99
      %v9200 = vpop.permute.xlu0 %9199
      %9201 = vrot.lane.b32.xlu0 %v6543, 99
      %v9202 = vpop.permute.xlu0 %9201
      %9203 = vrot.lane.b32.xlu0 %v6544, 99
      %v9204 = vpop.permute.xlu0 %9203
      %9205 = vrot.lane.b32.xlu0 %v6545, 99
      %v9206 = vpop.permute.xlu0 %9205
      %9207 = vrot.lane.b32.xlu0 %v6546, 99
      %v9208 = vpop.permute.xlu0 %9207
      %9209 = vrot.lane.b32.xlu0 %v6547, 99
      %v9210 = vpop.permute.xlu0 %9209
      %9211 = vrot.lane.b32.xlu0 %v6548, 99
      %v9212 = vpop.permute.xlu0 %9211
      %9213 = vrot.lane.b32.xlu0 %v6549, 99
      %v9214 = vpop.permute.xlu0 %9213
      %9215 = vrot.lane.b32.xlu0 %v6550, 99
      %v9216 = vpop.permute.xlu0 %9215
      %9217 = vrot.lane.b32.xlu0 %v6551, 99
      %v9218 = vpop.permute.xlu0 %9217
      %9219 = vrot.lane.b32.xlu0 %v6552, 99
      %v9220 = vpop.permute.xlu0 %9219
      %9221 = vrot.lane.b32.xlu0 %v6553, 99
      %v9222 = vpop.permute.xlu0 %9221
      %9223 = vrot.lane.b32.xlu0 %v6554, 99
      %v9224 = vpop.permute.xlu0 %9223
      %9225 = vrot.lane.b32.xlu0 %v6555, 99
      %v9226 = vpop.permute.xlu0 %9225
      %9227 = vrot.lane.b32.xlu0 %v6556, 99
      %v9228 = vpop.permute.xlu0 %9227
      %9229 = vrot.lane.b32.xlu0 %v6557, 99
      %v9230 = vpop.permute.xlu0 %9229
      %9231 = vrot.lane.b32.xlu0 %v6558, 99
      %v9232 = vpop.permute.xlu0 %9231
      %9233 = vrot.lane.b32.xlu0 %v6559, 99
      %v9234 = vpop.permute.xlu0 %9233
      %9235 = vrot.lane.b32.xlu0 %v6560, 99
      %v9236 = vpop.permute.xlu0 %9235
      %9237 = vrot.lane.b32.xlu0 %v6561, 99
      %v9238 = vpop.permute.xlu0 %9237
      %9239 = vrot.lane.b32.xlu0 %v6562, 99
      %v9240 = vpop.permute.xlu0 %9239
      %vm9305 = vcmask 23552
      %v9306 = vsel %vm9305, %v8922, %v9114
      %v9307 = vsel %vm9305, %v8924, %v9116
      %v9308 = vsel %vm9305, %v8926, %v9118
      %v9309 = vsel %vm9305, %v8928, %v9120
      %v9310 = vsel %vm9305, %v8930, %v9122
      %v9311 = vsel %vm9305, %v8932, %v9124
      %v9312 = vsel %vm9305, %v8934, %v9126
      %v9313 = vsel %vm9305, %v8936, %v9128
      %v9314 = vsel %vm9305, %v8938, %v9130
      %v9315 = vsel %vm9305, %v8940, %v9132
      %v9316 = vsel %vm9305, %v8942, %v9134
      %v9317 = vsel %vm9305, %v8944, %v9136
      %v9318 = vsel %vm9305, %v8946, %v9138
      %v9319 = vsel %vm9305, %v8948, %v9140
      %v9320 = vsel %vm9305, %v8950, %v9142
      %v9321 = vsel %vm9305, %v8952, %v9144
      %v9322 = vsel %vm9305, %v8954, %v9146
      %v9323 = vsel %vm9305, %v8956, %v9148
      %v9324 = vsel %vm9305, %v8958, %v9150
      %v9325 = vsel %vm9305, %v8960, %v9152
      %v9326 = vsel %vm9305, %v8962, %v9154
      %v9327 = vsel %vm9305, %v8964, %v9156
      %v9328 = vsel %vm9305, %v8966, %v9158
      %v9329 = vsel %vm9305, %v8968, %v9160
      %v9330 = vsel %vm9305, %v8970, %v9162
      %v9331 = vsel %vm9305, %v8972, %v9164
      %v9332 = vsel %vm9305, %v8974, %v9166
      %v9333 = vsel %vm9305, %v8976, %v9168
      %v9334 = vsel %vm9305, %v8978, %v9170
      %v9335 = vsel %vm9305, %v8980, %v9172
      %v9336 = vsel %vm9305, %v8982, %v9174
      %v9337 = vsel %vm9305, %v8984, %v9176
      %v9338 = vsel %vm9305, %v8986, %v9178
      %v9339 = vsel %vm9305, %v8988, %v9180
      %v9340 = vsel %vm9305, %v8990, %v9182
      %v9341 = vsel %vm9305, %v8992, %v9184
      %v9342 = vsel %vm9305, %v8994, %v9186
      %v9343 = vsel %vm9305, %v8996, %v9188
      %v9344 = vsel %vm9305, %v8998, %v9190
      %v9345 = vsel %vm9305, %v9000, %v9192
      %v9346 = vsel %vm9305, %v9002, %v9194
      %v9347 = vsel %vm9305, %v9004, %v9196
      %v9348 = vsel %vm9305, %v9006, %v9198
      %v9349 = vsel %vm9305, %v9008, %v9200
      %v9350 = vsel %vm9305, %v9010, %v9202
      %v9351 = vsel %vm9305, %v9012, %v9204
      %v9352 = vsel %vm9305, %v9014, %v9206
      %v9353 = vsel %vm9305, %v9016, %v9208
      %v9354 = vsel %vm9305, %v9018, %v9210
      %v9355 = vsel %vm9305, %v9020, %v9212
      %v9356 = vsel %vm9305, %v9022, %v9214
      %v9357 = vsel %vm9305, %v9024, %v9216
      %v9358 = vsel %vm9305, %v9026, %v9218
      %v9359 = vsel %vm9305, %v9028, %v9220
      %v9360 = vsel %vm9305, %v9030, %v9222
      %v9361 = vsel %vm9305, %v9032, %v9224
      %v9362 = vsel %vm9305, %v9034, %v9226
      %v9363 = vsel %vm9305, %v9036, %v9228
      %v9364 = vsel %vm9305, %v9038, %v9230
      %v9365 = vsel %vm9305, %v9040, %v9232
      %v9366 = vsel %vm9305, %v9042, %v9234
      %v9367 = vsel %vm9305, %v9044, %v9236
      %v9368 = vsel %vm9305, %v9046, %v9238
      %v9369 = vsel %vm9305, %v9048, %v9240
      %vm9370 = vcmask 31744
      %9371 = vst.msk [vmem:[%s766] sm:$0xff] %vm9370, %v9306
      %9372 = vst.msk [vmem:[%s766 + $0x8] sm:$0xff] %vm9370, %v9307
      %9373 = vst.msk [vmem:[%s766 + $0x10] sm:$0xff] %vm9370, %v9308
      %9374 = vst.msk [vmem:[%s766 + $0x18] sm:$0xff] %vm9370, %v9309
      %9375 = vst.msk [vmem:[%s766 + $0x20] sm:$0xff] %vm9370, %v9310
      %9376 = vst.msk [vmem:[%s766 + $0x28] sm:$0xff] %vm9370, %v9311
      %9377 = vst.msk [vmem:[%s766 + $0x30] sm:$0xff] %vm9370, %v9312
      %9378 = vst.msk [vmem:[%s766 + $0x38] sm:$0xff] %vm9370, %v9313
      %9379 = vst.msk [vmem:[%s766 + $0x40] sm:$0xff] %vm9370, %v9314
      %9380 = vst.msk [vmem:[%s766 + $0x48] sm:$0xff] %vm9370, %v9315
      %9381 = vst.msk [vmem:[%s766 + $0x50] sm:$0xff] %vm9370, %v9316
      %9382 = vst.msk [vmem:[%s766 + $0x58] sm:$0xff] %vm9370, %v9317
      %9383 = vst.msk [vmem:[%s766 + $0x60] sm:$0xff] %vm9370, %v9318
      %9384 = vst.msk [vmem:[%s766 + $0x68] sm:$0xff] %vm9370, %v9319
      %9385 = vst.msk [vmem:[%s766 + $0x70] sm:$0xff] %vm9370, %v9320
      %9386 = vst.msk [vmem:[%s766 + $0x78] sm:$0xff] %vm9370, %v9321
      %9387 = vst.msk [vmem:[%s766 + $0x80] sm:$0xff] %vm9370, %v9322
      %9388 = vst.msk [vmem:[%s766 + $0x88] sm:$0xff] %vm9370, %v9323
      %9389 = vst.msk [vmem:[%s766 + $0x90] sm:$0xff] %vm9370, %v9324
      %9390 = vst.msk [vmem:[%s766 + $0x98] sm:$0xff] %vm9370, %v9325
      %9391 = vst.msk [vmem:[%s766 + $0xa0] sm:$0xff] %vm9370, %v9326
      %9392 = vst.msk [vmem:[%s766 + $0xa8] sm:$0xff] %vm9370, %v9327
      %9393 = vst.msk [vmem:[%s766 + $0xb0] sm:$0xff] %vm9370, %v9328
      %9394 = vst.msk [vmem:[%s766 + $0xb8] sm:$0xff] %vm9370, %v9329
      %9395 = vst.msk [vmem:[%s766 + $0xc0] sm:$0xff] %vm9370, %v9330
      %9396 = vst.msk [vmem:[%s766 + $0xc8] sm:$0xff] %vm9370, %v9331
      %9397 = vst.msk [vmem:[%s766 + $0xd0] sm:$0xff] %vm9370, %v9332
      %9398 = vst.msk [vmem:[%s766 + $0xd8] sm:$0xff] %vm9370, %v9333
      %9399 = vst.msk [vmem:[%s766 + $0xe0] sm:$0xff] %vm9370, %v9334
      %9400 = vst.msk [vmem:[%s766 + $0xe8] sm:$0xff] %vm9370, %v9335
      %9401 = vst.msk [vmem:[%s766 + $0xf0] sm:$0xff] %vm9370, %v9336
      %9402 = vst.msk [vmem:[%s766 + $0xf8] sm:$0xff] %vm9370, %v9337
      %9403 = vst.msk [vmem:[%s766 + $0x100] sm:$0xff] %vm9370, %v9338
      %9404 = vst.msk [vmem:[%s766 + $0x108] sm:$0xff] %vm9370, %v9339
      %9405 = vst.msk [vmem:[%s766 + $0x110] sm:$0xff] %vm9370, %v9340
      %9406 = vst.msk [vmem:[%s766 + $0x118] sm:$0xff] %vm9370, %v9341
      %9407 = vst.msk [vmem:[%s766 + $0x120] sm:$0xff] %vm9370, %v9342
      %9408 = vst.msk [vmem:[%s766 + $0x128] sm:$0xff] %vm9370, %v9343
      %9409 = vst.msk [vmem:[%s766 + $0x130] sm:$0xff] %vm9370, %v9344
      %9410 = vst.msk [vmem:[%s766 + $0x138] sm:$0xff] %vm9370, %v9345
      %9411 = vst.msk [vmem:[%s766 + $0x140] sm:$0xff] %vm9370, %v9346
      %9412 = vst.msk [vmem:[%s766 + $0x148] sm:$0xff] %vm9370, %v9347
      %9413 = vst.msk [vmem:[%s766 + $0x150] sm:$0xff] %vm9370, %v9348
      %9414 = vst.msk [vmem:[%s766 + $0x158] sm:$0xff] %vm9370, %v9349
      %9415 = vst.msk [vmem:[%s766 + $0x160] sm:$0xff] %vm9370, %v9350
      %9416 = vst.msk [vmem:[%s766 + $0x168] sm:$0xff] %vm9370, %v9351
      %9417 = vst.msk [vmem:[%s766 + $0x170] sm:$0xff] %vm9370, %v9352
      %9418 = vst.msk [vmem:[%s766 + $0x178] sm:$0xff] %vm9370, %v9353
      %9419 = vst.msk [vmem:[%s766 + $0x180] sm:$0xff] %vm9370, %v9354
      %9420 = vst.msk [vmem:[%s766 + $0x188] sm:$0xff] %vm9370, %v9355
      %9421 = vst.msk [vmem:[%s766 + $0x190] sm:$0xff] %vm9370, %v9356
      %9422 = vst.msk [vmem:[%s766 + $0x198] sm:$0xff] %vm9370, %v9357
      %9423 = vst.msk [vmem:[%s766 + $0x1a0] sm:$0xff] %vm9370, %v9358
      %9424 = vst.msk [vmem:[%s766 + $0x1a8] sm:$0xff] %vm9370, %v9359
      %9425 = vst.msk [vmem:[%s766 + $0x1b0] sm:$0xff] %vm9370, %v9360
      %9426 = vst.msk [vmem:[%s766 + $0x1b8] sm:$0xff] %vm9370, %v9361
      %9427 = vst.msk [vmem:[%s766 + $0x1c0] sm:$0xff] %vm9370, %v9362
      %9428 = vst.msk [vmem:[%s766 + $0x1c8] sm:$0xff] %vm9370, %v9363
      %9429 = vst.msk [vmem:[%s766 + $0x1d0] sm:$0xff] %vm9370, %v9364
      %9430 = vst.msk [vmem:[%s766 + $0x1d8] sm:$0xff] %vm9370, %v9365
      %9431 = vst.msk [vmem:[%s766 + $0x1e0] sm:$0xff] %vm9370, %v9366
      %9432 = vst.msk [vmem:[%s766 + $0x1e8] sm:$0xff] %vm9370, %v9367
      %9433 = vst.msk [vmem:[%s766 + $0x1f0] sm:$0xff] %vm9370, %v9368
      %9434 = vst.msk [vmem:[%s766 + $0x1f8] sm:$0xff] %vm9370, %v9369
      %s9435 = smul.u32 64, %s36
      %p9436 = scmp.lt.s32.totalorder %s9435, 127
      %s9437 = scalar_select %p9436, %s9435, 127
      %s9438 = smul.addr %s9437, 8
      %s9439 = scalar_lea.vmem %s25, %s9438
      // Predicated region
      $region121: #{tpu_custom_call.1} parent=119 // pred_check
        %p9440 = pneg %p584
      $region122: #{tpu_custom_call.1} parent=119 // pred_check_branch
        %9442 = sbr.rel (%p9440) target = $region124
      $region123: #{tpu_custom_call.1} parent=119 // pred_region
        %s9443 = smul.u32 64, %s36
      $region124: #{tpu_custom_call.1} parent=119 // pred_fallthru
        _
    $region120: #{tpu_custom_call.1} parent=5 // pred_fallthru
      _
    %p9444 = scmp.le.s32.totalorder 2, %s31
    // Predicated region
    $region125: #{tpu_custom_call.1} parent=5 // pred_check
      %p9445 = pneg %p9444
    $region126: #{tpu_custom_call.1} parent=5 // pred_check_branch
      %9447 = sbr.rel (%p9445) target = $region128
    $region127: #{tpu_custom_call.1} parent=5 // pred_region
      %s9448 = ssub.s32 %s31, 2
      // Predicated region
      $region129: #{tpu_custom_call.1} parent=127 // pred_check
        %p9449 = pneg %p590
      $region130: #{tpu_custom_call.1} parent=127 // pred_check_branch
        %9451 = sbr.rel (%p9449) target = $region132
      $region131: #{tpu_custom_call.1} parent=127 // pred_region
        %s9452 = smul.u32 64, %s37
        %p9453 = scmp.lt.s32.totalorder %s9452, 127
        %s9454 = scalar_select %p9453, %s9452, 127
        %s9455 = smul.addr %s9454, 8
        %s9456 = scalar_lea.vmem %s25, %s9455
      $region132: #{tpu_custom_call.1} parent=127 // pred_fallthru
        _
    $region128: #{tpu_custom_call.1} parent=5 // pred_fallthru
      _
  $region6: #{tpu_custom_call.1} parent=0 // loop_footer
    %s35 = sadd.s32 1, %s31
  $region7: #{tpu_custom_call.1} parent=0 // loop_footer_branch
    %30 = sbr.rel target = $region3
  $region8: #{tpu_custom_call.1} parent=0 // loop_exit
    _

</llo_original>
